<compile_context>
chip_gen: v6e
topology: v6e:2x2x1
jax: 0.10.0
libtpu: 0.0.40
codegen_flags: <defaults>
</compile_context>

<pallas_src>
import functools

import jax
import jax.numpy as jnp
from jax.experimental import pallas as pl
from jax.experimental.pallas import tpu as pltpu


def _attention_fusion_kernel(f1_ref, f2_ref,
                             wq_ref, wk_ref, wv_ref,
                             bq_ref, bk_ref, bv_ref,
                             wo_ref, bo_ref,
                             wm_ref, bm_ref,
                             out_ref, *, num_heads):
    TP, B, E = f1_ref.shape
    H = num_heads
    d = E // H
    scale = 1.0 / (d ** 0.5)
    cdt = wq_ref.dtype                      # compute dtype for MXU operands (bf16)

    f1 = f1_ref[...]                        # (TP, B, E) f32
    f2 = f2_ref[...]
    f1_flat = f1.reshape(TP * B, E)         # leading-dim merges are layout-free
    f2_flat = f2.reshape(TP * B, E)

    # Fuse both attention directions (shared weights):
    #   rows [0 : TP*B)        query = f1, key/value = f2   -> gate 1 (mlp)
    #   rows [TP*B : 2*TP*B)   query = f2, key/value = f1   -> gate 2 (mlp2)
    q_in = jnp.concatenate([f1_flat, f2_flat], axis=0).astype(cdt)    # (2*TP*B, E)
    kv_in = jnp.concatenate([f2_flat, f1_flat], axis=0).astype(cdt)   # (2*TP*B, E)

    wq = wq_ref[...]; wk = wk_ref[...]; wv = wv_ref[...]; wo = wo_ref[...]
    bq = bq_ref[...]; bk = bk_ref[...]; bv = bv_ref[...]; bo = bo_ref[...]

    # In-projections once for both directions: (2*TP*B, E) x (E, E), f32 accum.
    q = (jnp.dot(q_in, wq, preferred_element_type=jnp.float32) + bq).astype(cdt)
    k = (jnp.dot(kv_in, wk, preferred_element_type=jnp.float32) + bk).astype(cdt)
    v = (jnp.dot(kv_in, wv, preferred_element_type=jnp.float32) + bv).astype(cdt)

    G = 2 * TP                              # (direction x problem) batch axis
    q3 = q.reshape(G, B, E)
    k3 = k.reshape(G, B, E)
    v3 = v.reshape(G, B, E)

    # Per-head attention, batched over G with single-batch-dim einsums (the
    # known-good Mosaic dot_general pattern).  The out-projection is folded into
    # the head loop (ctx_h @ wo[h*d:(h+1)*d, :]) so no lane concatenate is needed.
    attn = jnp.zeros((G * B, E), jnp.float32)
    for h in range(H):                      # static unroll, H = 4
        sl = slice(h * d, (h + 1) * d)
        s = jnp.einsum('gqd,gkd->gqk', q3[:, :, sl], k3[:, :, sl],
                       preferred_element_type=jnp.float32) * scale    # (G, B, B)
        s = s - jnp.max(s, axis=-1, keepdims=True)
        p = jnp.exp(s)
        p = p * pl.reciprocal(jnp.sum(p, axis=-1, keepdims=True), approx=True)
        ctx = jnp.einsum('gqk,gkd->gqd', p.astype(cdt), v3[:, :, sl],
                         preferred_element_type=jnp.float32)          # (G, B, d)
        attn = attn + jnp.dot(ctx.reshape(G * B, d).astype(cdt), wo[sl, :],
                              preferred_element_type=jnp.float32)
    attn = attn + bo                        # (2*TP*B, E)

    # Fusion gates: mlp and mlp2 (two Linear(E,1)+Sigmoid) as one (E, 2) matmul.
    logits = jnp.dot(attn.astype(cdt), wm_ref[...],
                     preferred_element_type=jnp.float32) + bm_ref[...]   # (2*TP*B, 2)
    n = TP * B
    g1 = jax.nn.sigmoid(logits[:n, 0:1])    # mlp(attention(f1, f2, f2))
    g2 = jax.nn.sigmoid(logits[n:, 1:2])    # mlp2(attention(f2, f1, f1))

    # softmax over the two fusion weights (per row); exact divide (tiny + precise).
    m = jnp.maximum(g1, g2)
    e1 = jnp.exp(g1 - m)
    e2 = jnp.exp(g2 - m)
    denom = e1 + e2
    w1 = e1 / denom
    w2 = e2 / denom

    fuse = w1 * f1_flat + w2 * f2_flat      # f32, (TP*B, E)
    out_ref[...] = fuse.reshape(TP, B, E).astype(out_ref.dtype)


def attention_fusion_transformer2(f1, f2, params, num_heads, *,
                                  problems_per_step=8,
                                  compute_dtype=jnp.bfloat16):
    """f1, f2: (P, B, E) stack of independent problems, or a single (B, E) problem."""
    squeeze = (f1.ndim == 2)
    if squeeze:
        f1 = f1[None]
        f2 = f2[None]
    P, B, E = f1.shape
    assert E % num_heads == 0

    tp = min(problems_per_step, P)
    while P % tp:                           # ensure the grid divides evenly
        tp -= 1
    grid = (P // tp,)

    # bf16 weights: halves weight DMA and feeds the MXU its native operand dtype.
    wq = params["wq_t"].astype(compute_dtype)
    wk = params["wk_t"].astype(compute_dtype)
    wv = params["wv_t"].astype(compute_dtype)
    wo = params["wo_t"].astype(compute_dtype)
    wm = params["wm_t"].astype(compute_dtype)

    kernel = functools.partial(_attention_fusion_kernel, num_heads=num_heads)

    feat_spec = pl.BlockSpec((tp, B, E), lambda p: (p, 0, 0))     # tiled per step
    res_w = pl.BlockSpec((E, E), lambda p: (0, 0))                # resident weights
    res_b = pl.BlockSpec((1, E), lambda p: (0, 0))
    res_wm = pl.BlockSpec((E, 2), lambda p: (0, 0))
    res_bm = pl.BlockSpec((1, 2), lambda p: (0, 0))

    out = pl.pallas_call(
        kernel,
        out_shape=jax.ShapeDtypeStruct((P, B, E), f1.dtype),
        grid=grid,
        in_specs=[feat_spec, feat_spec,
                  res_w, res_w, res_w,
                  res_b, res_b, res_b,
                  res_w, res_b,
                  res_wm, res_bm],
        out_specs=feat_spec,
        compiler_params=pltpu.CompilerParams(
            dimension_semantics=("parallel",)),
    )(f1, f2, wq, wk, wv,
      params["bq"], params["bk"], params["bv"],
      wo, params["bo"], wm, params["bm"])

    return out[0] if squeeze else out


def init_params(key, hidden_size):
    """Deterministic synthetic params matching nn.MultiheadAttention + two Linear(E,1)."""
    E = hidden_size
    ks = jax.random.split(key, 8)
    s = 0.1
    in_proj_w = jax.random.normal(ks[0], (3 * E, E), jnp.float32) * s   # PyTorch layout
    in_proj_b = jax.random.normal(ks[1], (3 * E,), jnp.float32) * s
    wo = jax.random.normal(ks[2], (E, E), jnp.float32) * s              # out_proj (E, E)
    bo = jax.random.normal(ks[3], (E,), jnp.float32) * s
    wm1 = jax.random.normal(ks[4], (1, E), jnp.float32) * s             # mlp  Linear(E,1)
    bm1 = jax.random.normal(ks[5], (1,), jnp.float32) * s
    wm2 = jax.random.normal(ks[6], (1, E), jnp.float32) * s             # mlp2 Linear(E,1)
    bm2 = jax.random.normal(ks[7], (1,), jnp.float32) * s
    return dict(
        wq_t=in_proj_w[0:E].T,
        wk_t=in_proj_w[E:2 * E].T,
        wv_t=in_proj_w[2 * E:3 * E].T,
        bq=in_proj_b[0:E].reshape(1, E),
        bk=in_proj_b[E:2 * E].reshape(1, E),
        bv=in_proj_b[2 * E:3 * E].reshape(1, E),
        wo_t=wo.T,
        bo=bo.reshape(1, E),
        wm_t=jnp.concatenate([wm1.T, wm2.T], axis=1),   # (E, 2)
        bm=jnp.stack([bm1, bm2], axis=1),               # (1, 2)
    )


def reference_forward(f1, f2, params, num_heads, compute_dtype=jnp.bfloat16):
    """Pure-JAX reference for ONE (B, E) problem, mirroring the PyTorch forward.
    MXU operands are cast to compute_dtype exactly like the kernel (f32 accum /
    epilogue), so only approx-reciprocal + summation order differ."""
    B, E = f1.shape
    H = num_heads
    d = E // H
    scale = 1.0 / (d ** 0.5)
    cdt = compute_dtype
    wq = params["wq_t"].astype(cdt)
    wk = params["wk_t"].astype(cdt)
    wv = params["wv_t"].astype(cdt)
    wo = params["wo_t"].astype(cdt)
    wm = params["wm_t"].astype(cdt)

    def mha(q_in, kv_in):
        q = jnp.dot(q_in.astype(cdt), wq, preferred_element_type=jnp.float32) + params["bq"]
        k = jnp.dot(kv_in.astype(cdt), wk, preferred_element_type=jnp.float32) + params["bk"]
        v = jnp.dot(kv_in.astype(cdt), wv, preferred_element_type=jnp.float32) + params["bv"]
        q = q.astype(cdt).reshape(B, H, d)
        k = k.astype(cdt).reshape(B, H, d)
        v = v.astype(cdt).reshape(B, H, d)
        s = jnp.einsum("bhd,chd->hbc", q, k, preferred_element_type=jnp.float32) * scale
        p = jax.nn.softmax(s, axis=-1)
        ctx = jnp.einsum("hbc,chd->bhd", p.astype(cdt), v,
                         preferred_element_type=jnp.float32).reshape(B, E)
        return jnp.dot(ctx.astype(cdt), wo, preferred_element_type=jnp.float32) + params["bo"]

    a1 = mha(f1, f2)
    a2 = mha(f2, f1)
    g1 = jax.nn.sigmoid(jnp.dot(a1.astype(cdt), wm[:, 0:1],
                                preferred_element_type=jnp.float32) + params["bm"][:, 0:1])
    g2 = jax.nn.sigmoid(jnp.dot(a2.astype(cdt), wm[:, 1:2],
                                preferred_element_type=jnp.float32) + params["bm"][:, 1:2])
    w = jax.nn.softmax(jnp.concatenate([g1, g2], axis=1), axis=1)
    return w[:, 0:1] * f1 + w[:, 1:2] * f2


if __name__ == "__main__":
    P = 16           # independent fusion problems (grid axis, "parallel")
    B = 8            # per-problem batch (acts as the attention sequence length)
    hidden = 128     # hidden_size / embedding_dim (module default; lane-dense)
    heads = 4        # num_heads used by SG for 'att6' (head_dim = 32)

    key = jax.random.PRNGKey(0)
    k1, k2, kp = jax.random.split(key, 3)
    feature_1 = jax.random.normal(k1, (P, B, hidden), jnp.float32)
    feature_2 = jax.random.normal(k2, (P, B, hidden), jnp.float32)
    params = init_params(kp, hidden)

    out = attention_fusion_transformer2(feature_1, feature_2, params, heads,
                                        problems_per_step=8)
    out = jax.block_until_ready(out)

    ref = jax.vmap(lambda a, b: reference_forward(a, b, params, heads))(feature_1, feature_2)
    assert out.shape == (P, B, hidden)
    assert jnp.allclose(out, ref, atol=2e-2, rtol=1e-2), (
        "kernel mismatch vs JAX reference: max abs diff "
        f"{float(jnp.max(jnp.abs(out - ref)))}")

    print("KERNEL_OK")
</pallas_src>

<mosaic_0001>
module attributes {stable_mosaic.version = 11 : i64} {
  func.func @_attention_fusion_kernel(%arg0: i32, %arg1: memref<8x8x128xf32, #tpu.memory_space<vmem>>, %arg2: memref<8x8x128xf32, #tpu.memory_space<vmem>>, %arg3: memref<128x128xbf16, #tpu.memory_space<vmem>>, %arg4: memref<128x128xbf16, #tpu.memory_space<vmem>>, %arg5: memref<128x128xbf16, #tpu.memory_space<vmem>>, %arg6: memref<1x128xf32, #tpu.memory_space<vmem>>, %arg7: memref<1x128xf32, #tpu.memory_space<vmem>>, %arg8: memref<1x128xf32, #tpu.memory_space<vmem>>, %arg9: memref<128x128xbf16, #tpu.memory_space<vmem>>, %arg10: memref<1x128xf32, #tpu.memory_space<vmem>>, %arg11: memref<128x2xbf16, #tpu.memory_space<vmem>>, %arg12: memref<1x2xf32, #tpu.memory_space<vmem>>, %arg13: memref<8x8x128xf32, #tpu.memory_space<vmem>>) attributes {dimension_semantics = [#tpu.dimension_semantics<parallel>], iteration_bounds = array<i64: 2>, scalar_prefetch = 0 : i64, scratch_operands = 0 : i64, tpu.core_type = #tpu.core_type<tc>, window_params = [{transform_indices = @transform_0, window_bounds = array<i64: 8, 8, 128>}, {transform_indices = @transform_1, window_bounds = array<i64: 8, 8, 128>}, {pipeline_mode = #tpu.pipeline_mode<synchronous>, transform_indices = @transform_2, window_bounds = array<i64: 128, 128>}, {pipeline_mode = #tpu.pipeline_mode<synchronous>, transform_indices = @transform_3, window_bounds = array<i64: 128, 128>}, {pipeline_mode = #tpu.pipeline_mode<synchronous>, transform_indices = @transform_4, window_bounds = array<i64: 128, 128>}, {pipeline_mode = #tpu.pipeline_mode<synchronous>, transform_indices = @transform_5, window_bounds = array<i64: 1, 128>}, {pipeline_mode = #tpu.pipeline_mode<synchronous>, transform_indices = @transform_6, window_bounds = array<i64: 1, 128>}, {pipeline_mode = #tpu.pipeline_mode<synchronous>, transform_indices = @transform_7, window_bounds = array<i64: 1, 128>}, {pipeline_mode = #tpu.pipeline_mode<synchronous>, transform_indices = @transform_8, window_bounds = array<i64: 128, 128>}, {pipeline_mode = #tpu.pipeline_mode<synchronous>, transform_indices = @transform_9, window_bounds = array<i64: 1, 128>}, {pipeline_mode = #tpu.pipeline_mode<synchronous>, transform_indices = @transform_10, window_bounds = array<i64: 128, 2>}, {pipeline_mode = #tpu.pipeline_mode<synchronous>, transform_indices = @transform_11, window_bounds = array<i64: 1, 2>}, {transform_indices = @transform_12, window_bounds = array<i64: 8, 8, 128>}]} {
    %c0 = arith.constant 0 : index
    %c0_0 = arith.constant 0 : index
    %c0_1 = arith.constant 0 : index
    %0 = vector.load %arg1[%c0, %c0_0, %c0_1] : memref<8x8x128xf32, #tpu.memory_space<vmem>>, vector<8x8x128xf32>
    %c0_2 = arith.constant 0 : index
    %c0_3 = arith.constant 0 : index
    %c0_4 = arith.constant 0 : index
    %1 = vector.load %arg2[%c0_2, %c0_3, %c0_4] : memref<8x8x128xf32, #tpu.memory_space<vmem>>, vector<8x8x128xf32>
    %2 = vector.shape_cast %0 : vector<8x8x128xf32> to vector<64x128xf32>
    %3 = vector.shape_cast %1 : vector<8x8x128xf32> to vector<64x128xf32>
    %4 = tpu.concatenate %2, %3 in 0 : vector<64x128xf32>, vector<64x128xf32> -> vector<128x128xf32>
    %5 = arith.truncf %4 : vector<128x128xf32> to vector<128x128xbf16>
    %6 = tpu.concatenate %3, %2 in 0 : vector<64x128xf32>, vector<64x128xf32> -> vector<128x128xf32>
    %7 = arith.truncf %6 : vector<128x128xf32> to vector<128x128xbf16>
    %c0_5 = arith.constant 0 : index
    %c0_6 = arith.constant 0 : index
    %8 = vector.load %arg3[%c0_5, %c0_6] : memref<128x128xbf16, #tpu.memory_space<vmem>>, vector<128x128xbf16>
    %c0_7 = arith.constant 0 : index
    %c0_8 = arith.constant 0 : index
    %9 = vector.load %arg4[%c0_7, %c0_8] : memref<128x128xbf16, #tpu.memory_space<vmem>>, vector<128x128xbf16>
    %c0_9 = arith.constant 0 : index
    %c0_10 = arith.constant 0 : index
    %10 = vector.load %arg5[%c0_9, %c0_10] : memref<128x128xbf16, #tpu.memory_space<vmem>>, vector<128x128xbf16>
    %c0_11 = arith.constant 0 : index
    %c0_12 = arith.constant 0 : index
    %11 = vector.load %arg9[%c0_11, %c0_12] : memref<128x128xbf16, #tpu.memory_space<vmem>>, vector<128x128xbf16>
    %c0_13 = arith.constant 0 : index
    %c0_14 = arith.constant 0 : index
    %12 = vector.load %arg6[%c0_13, %c0_14] : memref<1x128xf32, #tpu.memory_space<vmem>>, vector<1x128xf32>
    %c0_15 = arith.constant 0 : index
    %c0_16 = arith.constant 0 : index
    %13 = vector.load %arg7[%c0_15, %c0_16] : memref<1x128xf32, #tpu.memory_space<vmem>>, vector<1x128xf32>
    %c0_17 = arith.constant 0 : index
    %c0_18 = arith.constant 0 : index
    %14 = vector.load %arg8[%c0_17, %c0_18] : memref<1x128xf32, #tpu.memory_space<vmem>>, vector<1x128xf32>
    %c0_19 = arith.constant 0 : index
    %c0_20 = arith.constant 0 : index
    %15 = vector.load %arg10[%c0_19, %c0_20] : memref<1x128xf32, #tpu.memory_space<vmem>>, vector<1x128xf32>
    %cst = arith.constant dense<0.000000e+00> : vector<128x128xf32>
    %16 = tpu.matmul %5, %8, %cst {dimension_numbers = #tpu.dot_dimension_numbers<[1], [0], [0], [1], [0, 0, 1, 1], [], []>} : vector<128x128xbf16>, vector<128x128xbf16>, vector<128x128xf32> -> vector<128x128xf32>
    %17 = vector.broadcast %12 : vector<1x128xf32> to vector<128x128xf32>
    %18 = arith.addf %16, %17 : vector<128x128xf32>
    %19 = arith.truncf %18 : vector<128x128xf32> to vector<128x128xbf16>
    %cst_21 = arith.constant dense<0.000000e+00> : vector<128x128xf32>
    %20 = tpu.matmul %7, %9, %cst_21 {dimension_numbers = #tpu.dot_dimension_numbers<[1], [0], [0], [1], [0, 0, 1, 1], [], []>} : vector<128x128xbf16>, vector<128x128xbf16>, vector<128x128xf32> -> vector<128x128xf32>
    %21 = vector.broadcast %13 : vector<1x128xf32> to vector<128x128xf32>
    %22 = arith.addf %20, %21 : vector<128x128xf32>
    %23 = arith.truncf %22 : vector<128x128xf32> to vector<128x128xbf16>
    %cst_22 = arith.constant dense<0.000000e+00> : vector<128x128xf32>
    %24 = tpu.matmul %7, %10, %cst_22 {dimension_numbers = #tpu.dot_dimension_numbers<[1], [0], [0], [1], [0, 0, 1, 1], [], []>} : vector<128x128xbf16>, vector<128x128xbf16>, vector<128x128xf32> -> vector<128x128xf32>
    %25 = vector.broadcast %14 : vector<1x128xf32> to vector<128x128xf32>
    %26 = arith.addf %24, %25 : vector<128x128xf32>
    %27 = arith.truncf %26 : vector<128x128xf32> to vector<128x128xbf16>
    %28 = vector.shape_cast %19 : vector<128x128xbf16> to vector<16x8x128xbf16>
    %29 = vector.shape_cast %23 : vector<128x128xbf16> to vector<16x8x128xbf16>
    %30 = vector.shape_cast %27 : vector<128x128xbf16> to vector<16x8x128xbf16>
    %cst_23 = arith.constant 0.000000e+00 : f32
    %31 = vector.broadcast %cst_23 : f32 to vector<128x128xf32>
    %32 = vector.extract_strided_slice %28 {offsets = [0, 0, 0], sizes = [16, 8, 32], strides = [1, 1, 1]} : vector<16x8x128xbf16> to vector<16x8x32xbf16>
    %33 = vector.extract_strided_slice %29 {offsets = [0, 0, 0], sizes = [16, 8, 32], strides = [1, 1, 1]} : vector<16x8x128xbf16> to vector<16x8x32xbf16>
    "tpu.trace_start"() <{level = 10 : i32, message = "gqd,gkd->gqk"}> : () -> ()
    %cst_24 = arith.constant dense<0.000000e+00> : vector<16x8x8xf32>
    %34 = tpu.matmul %32, %33, %cst_24 {dimension_numbers = #tpu.dot_dimension_numbers<[2], [2], [1], [1], [0, 0, 0, 1, 1, 1], [0], [0]>} : vector<16x8x32xbf16>, vector<16x8x32xbf16>, vector<16x8x8xf32> -> vector<16x8x8xf32>
    "tpu.trace_stop"() : () -> ()
    %cst_25 = arith.constant 0.176776692 : f32
    %35 = vector.broadcast %cst_25 : f32 to vector<16x8x8xf32>
    %36 = arith.mulf %34, %35 : vector<16x8x8xf32>
    %cst_26 = arith.constant dense<0xFF800000> : vector<16x8xf32>
    %37 = vector.multi_reduction <maximumf>, %36, %cst_26 [2] : vector<16x8x8xf32> to vector<16x8xf32>
    %38 = vector.shape_cast %37 : vector<16x8xf32> to vector<16x8x1xf32>
    %39 = vector.broadcast %38 : vector<16x8x1xf32> to vector<16x8x8xf32>
    %40 = arith.subf %36, %39 : vector<16x8x8xf32>
    %41 = math.exp %40 : vector<16x8x8xf32>
    %cst_27 = arith.constant dense<0.000000e+00> : vector<16x8xf32>
    %42 = vector.multi_reduction <add>, %41, %cst_27 [2] : vector<16x8x8xf32> to vector<16x8xf32>
    %43 = vector.shape_cast %42 : vector<16x8xf32> to vector<16x8x1xf32>
    %44 = tpu.reciprocal %43 {approx = true} : vector<16x8x1xf32> -> vector<16x8x1xf32>
    %45 = vector.broadcast %44 : vector<16x8x1xf32> to vector<16x8x8xf32>
    %46 = arith.mulf %41, %45 : vector<16x8x8xf32>
    %47 = arith.truncf %46 : vector<16x8x8xf32> to vector<16x8x8xbf16>
    %48 = vector.extract_strided_slice %30 {offsets = [0, 0, 0], sizes = [16, 8, 32], strides = [1, 1, 1]} : vector<16x8x128xbf16> to vector<16x8x32xbf16>
    "tpu.trace_start"() <{level = 10 : i32, message = "gqk,gkd->gqd"}> : () -> ()
    %cst_28 = arith.constant dense<0.000000e+00> : vector<16x8x32xf32>
    %49 = tpu.matmul %47, %48, %cst_28 {dimension_numbers = #tpu.dot_dimension_numbers<[2], [1], [1], [2], [0, 0, 0, 1, 1, 2], [0], [0]>} : vector<16x8x8xbf16>, vector<16x8x32xbf16>, vector<16x8x32xf32> -> vector<16x8x32xf32>
    "tpu.trace_stop"() : () -> ()
    %50 = vector.shape_cast %49 : vector<16x8x32xf32> to vector<128x32xf32>
    %51 = arith.truncf %50 : vector<128x32xf32> to vector<128x32xbf16>
    %52 = vector.extract_strided_slice %11 {offsets = [0, 0], sizes = [32, 128], strides = [1, 1]} : vector<128x128xbf16> to vector<32x128xbf16>
    %cst_29 = arith.constant dense<0.000000e+00> : vector<128x128xf32>
    %53 = tpu.matmul %51, %52, %cst_29 {dimension_numbers = #tpu.dot_dimension_numbers<[1], [0], [0], [1], [0, 0, 1, 1], [], []>} : vector<128x32xbf16>, vector<32x128xbf16>, vector<128x128xf32> -> vector<128x128xf32>
    %54 = arith.addf %31, %53 : vector<128x128xf32>
    %55 = vector.extract_strided_slice %28 {offsets = [0, 0, 32], sizes = [16, 8, 32], strides = [1, 1, 1]} : vector<16x8x128xbf16> to vector<16x8x32xbf16>
    %56 = vector.extract_strided_slice %29 {offsets = [0, 0, 32], sizes = [16, 8, 32], strides = [1, 1, 1]} : vector<16x8x128xbf16> to vector<16x8x32xbf16>
    "tpu.trace_start"() <{level = 10 : i32, message = "gqd,gkd->gqk"}> : () -> ()
    %cst_30 = arith.constant dense<0.000000e+00> : vector<16x8x8xf32>
    %57 = tpu.matmul %55, %56, %cst_30 {dimension_numbers = #tpu.dot_dimension_numbers<[2], [2], [1], [1], [0, 0, 0, 1, 1, 1], [0], [0]>} : vector<16x8x32xbf16>, vector<16x8x32xbf16>, vector<16x8x8xf32> -> vector<16x8x8xf32>
    "tpu.trace_stop"() : () -> ()
    %cst_31 = arith.constant 0.176776692 : f32
    %58 = vector.broadcast %cst_31 : f32 to vector<16x8x8xf32>
    %59 = arith.mulf %57, %58 : vector<16x8x8xf32>
    %cst_32 = arith.constant dense<0xFF800000> : vector<16x8xf32>
    %60 = vector.multi_reduction <maximumf>, %59, %cst_32 [2] : vector<16x8x8xf32> to vector<16x8xf32>
    %61 = vector.shape_cast %60 : vector<16x8xf32> to vector<16x8x1xf32>
    %62 = vector.broadcast %61 : vector<16x8x1xf32> to vector<16x8x8xf32>
    %63 = arith.subf %59, %62 : vector<16x8x8xf32>
    %64 = math.exp %63 : vector<16x8x8xf32>
    %cst_33 = arith.constant dense<0.000000e+00> : vector<16x8xf32>
    %65 = vector.multi_reduction <add>, %64, %cst_33 [2] : vector<16x8x8xf32> to vector<16x8xf32>
    %66 = vector.shape_cast %65 : vector<16x8xf32> to vector<16x8x1xf32>
    %67 = tpu.reciprocal %66 {approx = true} : vector<16x8x1xf32> -> vector<16x8x1xf32>
    %68 = vector.broadcast %67 : vector<16x8x1xf32> to vector<16x8x8xf32>
    %69 = arith.mulf %64, %68 : vector<16x8x8xf32>
    %70 = arith.truncf %69 : vector<16x8x8xf32> to vector<16x8x8xbf16>
    %71 = vector.extract_strided_slice %30 {offsets = [0, 0, 32], sizes = [16, 8, 32], strides = [1, 1, 1]} : vector<16x8x128xbf16> to vector<16x8x32xbf16>
    "tpu.trace_start"() <{level = 10 : i32, message = "gqk,gkd->gqd"}> : () -> ()
    %cst_34 = arith.constant dense<0.000000e+00> : vector<16x8x32xf32>
    %72 = tpu.matmul %70, %71, %cst_34 {dimension_numbers = #tpu.dot_dimension_numbers<[2], [1], [1], [2], [0, 0, 0, 1, 1, 2], [0], [0]>} : vector<16x8x8xbf16>, vector<16x8x32xbf16>, vector<16x8x32xf32> -> vector<16x8x32xf32>
    "tpu.trace_stop"() : () -> ()
    %73 = vector.shape_cast %72 : vector<16x8x32xf32> to vector<128x32xf32>
    %74 = arith.truncf %73 : vector<128x32xf32> to vector<128x32xbf16>
    %75 = vector.extract_strided_slice %11 {offsets = [32, 0], sizes = [32, 128], strides = [1, 1]} : vector<128x128xbf16> to vector<32x128xbf16>
    %cst_35 = arith.constant dense<0.000000e+00> : vector<128x128xf32>
    %76 = tpu.matmul %74, %75, %cst_35 {dimension_numbers = #tpu.dot_dimension_numbers<[1], [0], [0], [1], [0, 0, 1, 1], [], []>} : vector<128x32xbf16>, vector<32x128xbf16>, vector<128x128xf32> -> vector<128x128xf32>
    %77 = arith.addf %54, %76 : vector<128x128xf32>
    %78 = vector.extract_strided_slice %28 {offsets = [0, 0, 64], sizes = [16, 8, 32], strides = [1, 1, 1]} : vector<16x8x128xbf16> to vector<16x8x32xbf16>
    %79 = vector.extract_strided_slice %29 {offsets = [0, 0, 64], sizes = [16, 8, 32], strides = [1, 1, 1]} : vector<16x8x128xbf16> to vector<16x8x32xbf16>
    "tpu.trace_start"() <{level = 10 : i32, message = "gqd,gkd->gqk"}> : () -> ()
    %cst_36 = arith.constant dense<0.000000e+00> : vector<16x8x8xf32>
    %80 = tpu.matmul %78, %79, %cst_36 {dimension_numbers = #tpu.dot_dimension_numbers<[2], [2], [1], [1], [0, 0, 0, 1, 1, 1], [0], [0]>} : vector<16x8x32xbf16>, vector<16x8x32xbf16>, vector<16x8x8xf32> -> vector<16x8x8xf32>
    "tpu.trace_stop"() : () -> ()
    %cst_37 = arith.constant 0.176776692 : f32
    %81 = vector.broadcast %cst_37 : f32 to vector<16x8x8xf32>
    %82 = arith.mulf %80, %81 : vector<16x8x8xf32>
    %cst_38 = arith.constant dense<0xFF800000> : vector<16x8xf32>
    %83 = vector.multi_reduction <maximumf>, %82, %cst_38 [2] : vector<16x8x8xf32> to vector<16x8xf32>
    %84 = vector.shape_cast %83 : vector<16x8xf32> to vector<16x8x1xf32>
    %85 = vector.broadcast %84 : vector<16x8x1xf32> to vector<16x8x8xf32>
    %86 = arith.subf %82, %85 : vector<16x8x8xf32>
    %87 = math.exp %86 : vector<16x8x8xf32>
    %cst_39 = arith.constant dense<0.000000e+00> : vector<16x8xf32>
    %88 = vector.multi_reduction <add>, %87, %cst_39 [2] : vector<16x8x8xf32> to vector<16x8xf32>
    %89 = vector.shape_cast %88 : vector<16x8xf32> to vector<16x8x1xf32>
    %90 = tpu.reciprocal %89 {approx = true} : vector<16x8x1xf32> -> vector<16x8x1xf32>
    %91 = vector.broadcast %90 : vector<16x8x1xf32> to vector<16x8x8xf32>
    %92 = arith.mulf %87, %91 : vector<16x8x8xf32>
    %93 = arith.truncf %92 : vector<16x8x8xf32> to vector<16x8x8xbf16>
    %94 = vector.extract_strided_slice %30 {offsets = [0, 0, 64], sizes = [16, 8, 32], strides = [1, 1, 1]} : vector<16x8x128xbf16> to vector<16x8x32xbf16>
    "tpu.trace_start"() <{level = 10 : i32, message = "gqk,gkd->gqd"}> : () -> ()
    %cst_40 = arith.constant dense<0.000000e+00> : vector<16x8x32xf32>
    %95 = tpu.matmul %93, %94, %cst_40 {dimension_numbers = #tpu.dot_dimension_numbers<[2], [1], [1], [2], [0, 0, 0, 1, 1, 2], [0], [0]>} : vector<16x8x8xbf16>, vector<16x8x32xbf16>, vector<16x8x32xf32> -> vector<16x8x32xf32>
    "tpu.trace_stop"() : () -> ()
    %96 = vector.shape_cast %95 : vector<16x8x32xf32> to vector<128x32xf32>
    %97 = arith.truncf %96 : vector<128x32xf32> to vector<128x32xbf16>
    %98 = vector.extract_strided_slice %11 {offsets = [64, 0], sizes = [32, 128], strides = [1, 1]} : vector<128x128xbf16> to vector<32x128xbf16>
    %cst_41 = arith.constant dense<0.000000e+00> : vector<128x128xf32>
    %99 = tpu.matmul %97, %98, %cst_41 {dimension_numbers = #tpu.dot_dimension_numbers<[1], [0], [0], [1], [0, 0, 1, 1], [], []>} : vector<128x32xbf16>, vector<32x128xbf16>, vector<128x128xf32> -> vector<128x128xf32>
    %100 = arith.addf %77, %99 : vector<128x128xf32>
    %101 = vector.extract_strided_slice %28 {offsets = [0, 0, 96], sizes = [16, 8, 32], strides = [1, 1, 1]} : vector<16x8x128xbf16> to vector<16x8x32xbf16>
    %102 = vector.extract_strided_slice %29 {offsets = [0, 0, 96], sizes = [16, 8, 32], strides = [1, 1, 1]} : vector<16x8x128xbf16> to vector<16x8x32xbf16>
    "tpu.trace_start"() <{level = 10 : i32, message = "gqd,gkd->gqk"}> : () -> ()
    %cst_42 = arith.constant dense<0.000000e+00> : vector<16x8x8xf32>
    %103 = tpu.matmul %101, %102, %cst_42 {dimension_numbers = #tpu.dot_dimension_numbers<[2], [2], [1], [1], [0, 0, 0, 1, 1, 1], [0], [0]>} : vector<16x8x32xbf16>, vector<16x8x32xbf16>, vector<16x8x8xf32> -> vector<16x8x8xf32>
    "tpu.trace_stop"() : () -> ()
    %cst_43 = arith.constant 0.176776692 : f32
    %104 = vector.broadcast %cst_43 : f32 to vector<16x8x8xf32>
    %105 = arith.mulf %103, %104 : vector<16x8x8xf32>
    %cst_44 = arith.constant dense<0xFF800000> : vector<16x8xf32>
    %106 = vector.multi_reduction <maximumf>, %105, %cst_44 [2] : vector<16x8x8xf32> to vector<16x8xf32>
    %107 = vector.shape_cast %106 : vector<16x8xf32> to vector<16x8x1xf32>
    %108 = vector.broadcast %107 : vector<16x8x1xf32> to vector<16x8x8xf32>
    %109 = arith.subf %105, %108 : vector<16x8x8xf32>
    %110 = math.exp %109 : vector<16x8x8xf32>
    %cst_45 = arith.constant dense<0.000000e+00> : vector<16x8xf32>
    %111 = vector.multi_reduction <add>, %110, %cst_45 [2] : vector<16x8x8xf32> to vector<16x8xf32>
    %112 = vector.shape_cast %111 : vector<16x8xf32> to vector<16x8x1xf32>
    %113 = tpu.reciprocal %112 {approx = true} : vector<16x8x1xf32> -> vector<16x8x1xf32>
    %114 = vector.broadcast %113 : vector<16x8x1xf32> to vector<16x8x8xf32>
    %115 = arith.mulf %110, %114 : vector<16x8x8xf32>
    %116 = arith.truncf %115 : vector<16x8x8xf32> to vector<16x8x8xbf16>
    %117 = vector.extract_strided_slice %30 {offsets = [0, 0, 96], sizes = [16, 8, 32], strides = [1, 1, 1]} : vector<16x8x128xbf16> to vector<16x8x32xbf16>
    "tpu.trace_start"() <{level = 10 : i32, message = "gqk,gkd->gqd"}> : () -> ()
    %cst_46 = arith.constant dense<0.000000e+00> : vector<16x8x32xf32>
    %118 = tpu.matmul %116, %117, %cst_46 {dimension_numbers = #tpu.dot_dimension_numbers<[2], [1], [1], [2], [0, 0, 0, 1, 1, 2], [0], [0]>} : vector<16x8x8xbf16>, vector<16x8x32xbf16>, vector<16x8x32xf32> -> vector<16x8x32xf32>
    "tpu.trace_stop"() : () -> ()
    %119 = vector.shape_cast %118 : vector<16x8x32xf32> to vector<128x32xf32>
    %120 = arith.truncf %119 : vector<128x32xf32> to vector<128x32xbf16>
    %121 = vector.extract_strided_slice %11 {offsets = [96, 0], sizes = [32, 128], strides = [1, 1]} : vector<128x128xbf16> to vector<32x128xbf16>
    %cst_47 = arith.constant dense<0.000000e+00> : vector<128x128xf32>
    %122 = tpu.matmul %120, %121, %cst_47 {dimension_numbers = #tpu.dot_dimension_numbers<[1], [0], [0], [1], [0, 0, 1, 1], [], []>} : vector<128x32xbf16>, vector<32x128xbf16>, vector<128x128xf32> -> vector<128x128xf32>
    %123 = arith.addf %100, %122 : vector<128x128xf32>
    %124 = vector.broadcast %15 : vector<1x128xf32> to vector<128x128xf32>
    %125 = arith.addf %123, %124 : vector<128x128xf32>
    %126 = arith.truncf %125 : vector<128x128xf32> to vector<128x128xbf16>
    %c0_48 = arith.constant 0 : index
    %c0_49 = arith.constant 0 : index
    %127 = vector.load %arg11[%c0_48, %c0_49] : memref<128x2xbf16, #tpu.memory_space<vmem>>, vector<128x2xbf16>
    %cst_50 = arith.constant dense<0.000000e+00> : vector<128x2xf32>
    %128 = tpu.matmul %126, %127, %cst_50 {dimension_numbers = #tpu.dot_dimension_numbers<[1], [0], [0], [1], [0, 0, 1, 1], [], []>} : vector<128x128xbf16>, vector<128x2xbf16>, vector<128x2xf32> -> vector<128x2xf32>
    %c0_51 = arith.constant 0 : index
    %c0_52 = arith.constant 0 : index
    %129 = vector.load %arg12[%c0_51, %c0_52] : memref<1x2xf32, #tpu.memory_space<vmem>>, vector<1x2xf32>
    %130 = vector.broadcast %129 : vector<1x2xf32> to vector<128x2xf32>
    %131 = arith.addf %128, %130 : vector<128x2xf32>
    %132 = vector.extract_strided_slice %131 {offsets = [0, 0], sizes = [64, 1], strides = [1, 1]} : vector<128x2xf32> to vector<64x1xf32>
    %133 = arith.negf %132 : vector<64x1xf32>
    %134 = math.exp %133 : vector<64x1xf32>
    %cst_53 = arith.constant 1.000000e+00 : f32
    %135 = vector.broadcast %cst_53 : f32 to vector<64x1xf32>
    %136 = arith.addf %135, %134 : vector<64x1xf32>
    %137 = arith.divf %135, %136 : vector<64x1xf32>
    %138 = vector.extract_strided_slice %131 {offsets = [64, 1], sizes = [64, 1], strides = [1, 1]} : vector<128x2xf32> to vector<64x1xf32>
    %139 = arith.negf %138 : vector<64x1xf32>
    %140 = math.exp %139 : vector<64x1xf32>
    %cst_54 = arith.constant 1.000000e+00 : f32
    %141 = vector.broadcast %cst_54 : f32 to vector<64x1xf32>
    %142 = arith.addf %141, %140 : vector<64x1xf32>
    %143 = arith.divf %141, %142 : vector<64x1xf32>
    %144 = arith.maximumf %137, %143 : vector<64x1xf32>
    %145 = arith.subf %137, %144 : vector<64x1xf32>
    %146 = math.exp %145 : vector<64x1xf32>
    %147 = arith.subf %143, %144 : vector<64x1xf32>
    %148 = math.exp %147 : vector<64x1xf32>
    %149 = arith.addf %146, %148 : vector<64x1xf32>
    %150 = arith.divf %146, %149 : vector<64x1xf32>
    %151 = arith.divf %148, %149 : vector<64x1xf32>
    %152 = vector.broadcast %150 : vector<64x1xf32> to vector<64x128xf32>
    %153 = arith.mulf %152, %2 : vector<64x128xf32>
    %154 = vector.broadcast %151 : vector<64x1xf32> to vector<64x128xf32>
    %155 = arith.mulf %154, %3 : vector<64x128xf32>
    %156 = arith.addf %153, %155 : vector<64x128xf32>
    %157 = vector.shape_cast %156 : vector<64x128xf32> to vector<8x8x128xf32>
    %c0_55 = arith.constant 0 : index
    %c0_56 = arith.constant 0 : index
    %c0_57 = arith.constant 0 : index
    %158 = vector.load %arg13[%c0_55, %c0_56, %c0_57] : memref<8x8x128xf32, #tpu.memory_space<vmem>>, vector<8x8x128xf32>
    tpu.vector_store %arg13[%c0_55, %c0_56, %c0_57], %157 {strides = array<i32>} : memref<8x8x128xf32, #tpu.memory_space<vmem>>, vector<8x8x128xf32>,
    return
  }
  func.func @transform_0(%arg0: i32) -> (i32, i32, i32) {
    %c0_i32 = arith.constant 0 : i32
    %c0_i32_0 = arith.constant 0 : i32
    %c0_i32_1 = arith.constant 0 : i32
    return %arg0, %c0_i32, %c0_i32_0 : i32, i32, i32
  }
  func.func @transform_1(%arg0: i32) -> (i32, i32, i32) {
    %c0_i32 = arith.constant 0 : i32
    %c0_i32_0 = arith.constant 0 : i32
    %c0_i32_1 = arith.constant 0 : i32
    return %arg0, %c0_i32, %c0_i32_0 : i32, i32, i32
  }
  func.func @transform_2(%arg0: i32) -> (i32, i32) {
    %c0_i32 = arith.constant 0 : i32
    %c0_i32_0 = arith.constant 0 : i32
    %c0_i32_1 = arith.constant 0 : i32
    return %c0_i32, %c0_i32_0 : i32, i32
  }
  func.func @transform_3(%arg0: i32) -> (i32, i32) {
    %c0_i32 = arith.constant 0 : i32
    %c0_i32_0 = arith.constant 0 : i32
    %c0_i32_1 = arith.constant 0 : i32
    return %c0_i32, %c0_i32_0 : i32, i32
  }
  func.func @transform_4(%arg0: i32) -> (i32, i32) {
    %c0_i32 = arith.constant 0 : i32
    %c0_i32_0 = arith.constant 0 : i32
    %c0_i32_1 = arith.constant 0 : i32
    return %c0_i32, %c0_i32_0 : i32, i32
  }
  func.func @transform_5(%arg0: i32) -> (i32, i32) {
    %c0_i32 = arith.constant 0 : i32
    %c0_i32_0 = arith.constant 0 : i32
    %c0_i32_1 = arith.constant 0 : i32
    return %c0_i32, %c0_i32_0 : i32, i32
  }
  func.func @transform_6(%arg0: i32) -> (i32, i32) {
    %c0_i32 = arith.constant 0 : i32
    %c0_i32_0 = arith.constant 0 : i32
    %c0_i32_1 = arith.constant 0 : i32
    return %c0_i32, %c0_i32_0 : i32, i32
  }
  func.func @transform_7(%arg0: i32) -> (i32, i32) {
    %c0_i32 = arith.constant 0 : i32
    %c0_i32_0 = arith.constant 0 : i32
    %c0_i32_1 = arith.constant 0 : i32
    return %c0_i32, %c0_i32_0 : i32, i32
  }
  func.func @transform_8(%arg0: i32) -> (i32, i32) {
    %c0_i32 = arith.constant 0 : i32
    %c0_i32_0 = arith.constant 0 : i32
    %c0_i32_1 = arith.constant 0 : i32
    return %c0_i32, %c0_i32_0 : i32, i32
  }
  func.func @transform_9(%arg0: i32) -> (i32, i32) {
    %c0_i32 = arith.constant 0 : i32
    %c0_i32_0 = arith.constant 0 : i32
    %c0_i32_1 = arith.constant 0 : i32
    return %c0_i32, %c0_i32_0 : i32, i32
  }
  func.func @transform_10(%arg0: i32) -> (i32, i32) {
    %c0_i32 = arith.constant 0 : i32
    %c0_i32_0 = arith.constant 0 : i32
    %c0_i32_1 = arith.constant 0 : i32
    return %c0_i32, %c0_i32_0 : i32, i32
  }
  func.func @transform_11(%arg0: i32) -> (i32, i32) {
    %c0_i32 = arith.constant 0 : i32
    %c0_i32_0 = arith.constant 0 : i32
    %c0_i32_1 = arith.constant 0 : i32
    return %c0_i32, %c0_i32_0 : i32, i32
  }
  func.func @transform_12(%arg0: i32) -> (i32, i32, i32) {
    %c0_i32 = arith.constant 0 : i32
    %c0_i32_0 = arith.constant 0 : i32
    %c0_i32_1 = arith.constant 0 : i32
    return %arg0, %c0_i32, %c0_i32_0 : i32, i32, i32
  }
}

</mosaic_0001>

<llo_original>
// kernel: tpu_custom_call.1
$region0: #{tpu_custom_call.1}
  #allocation0 [shape = 'u32[]', space=smem, size = 0x4, offset = 0x4, fixed_abs, tag = 'smem constant byte address 0x4 - core index']
  #allocation1 [shape = 'u32[144,128]{1,0:T(1,128)}', space=vmem, size = 0x12000, scoped, tag = 'internal scratch']
  %s0 = inlined_call_operand.hbm [shape: f32[16,8,128], index: 0, kind: input, shape index: {}]
  %s1 = inlined_call_operand.hbm [shape: f32[16,8,128], index: 1, kind: input, shape index: {}]
  %s2 = inlined_call_operand.vmem [shape: bf16[128,128], index: 2, kind: input, shape index: {}]
  %s3 = inlined_call_operand.hbm [shape: bf16[128,128], index: 3, kind: input, shape index: {}]
  %s4 = inlined_call_operand.hbm [shape: bf16[128,128], index: 4, kind: input, shape index: {}]
  %s5 = inlined_call_operand.vmem [shape: f32[1,128], index: 5, kind: input, shape index: {}]
  %s6 = inlined_call_operand.vmem [shape: f32[1,128], index: 6, kind: input, shape index: {}]
  %s7 = inlined_call_operand.vmem [shape: f32[1,128], index: 7, kind: input, shape index: {}]
  %s8 = inlined_call_operand.hbm [shape: bf16[128,128], index: 8, kind: input, shape index: {}]
  %s9 = inlined_call_operand.vmem [shape: f32[1,128], index: 9, kind: input, shape index: {}]
  %s10 = inlined_call_operand.vmem [shape: bf16[128,2], index: 10, kind: input, shape index: {}]
  %s11 = inlined_call_operand.vmem [shape: f32[1,2], index: 11, kind: input, shape index: {}]
  %s12 = inlined_call_operand.hbm [shape: f32[16,8,128], index: 12, kind: output, shape index: {}]
  %s13 = sld [smem:[#allocation0]]
  $region101: #{tpu_custom_call.1} parent=0
    _
  %s15 = ssub.s32 1, %s13
  %s16 = scalar_select 0, %s15, %s13
  $region1: #{tpu_custom_call.1} parent=0
    #allocation2 [shape = 'u8[65536]{0}', space=vmem, size = 0x10000, scoped, tag = 'input window, operand 0']
    #allocation3 [shape = 's32[2]{0}', space=sflag, size = 0x8, scoped, tag = 'scoped memory for tpu_custom_call.1']
    #allocation4 [shape = 's32[2]{0}', space=sflag, size = 0x8, scoped, tag = 'scoped memory for tpu_custom_call.1']
    #allocation5 [shape = 'u8[65536]{0}', space=vmem, size = 0x10000, scoped, tag = 'input window, operand 1']
    #allocation6 [shape = 's32[2]{0}', space=sflag, size = 0x8, scoped, tag = 'scoped memory for tpu_custom_call.1']
    #allocation7 [shape = 'u8[32768]{0}', space=vmem, size = 0x8000, scoped, tag = 'input window, operand 3, single buffered']
    #allocation8 [shape = 'u8[32768]{0}', space=vmem, size = 0x8000, scoped, tag = 'input window, operand 4, single buffered']
    #allocation9 [shape = 's32[1]{0}', space=sflag, size = 0x4, scoped, tag = 'scoped memory for tpu_custom_call.1']
    #allocation10 [shape = 'u8[32768]{0}', space=vmem, size = 0x8000, scoped, tag = 'input window, operand 8, single buffered']
    #allocation11 [shape = 'u8[65536]{0}', space=vmem, size = 0x10000, scoped, tag = 'output window, operand 0']
    %17 = vsyncpa [#allocation3], 0
    %s18 = scalar_lea.sflag [#allocation3], 1
    %19 = vsyncpa %s18, 0
    %20 = vsyncpa [#allocation6], 0
    %s21 = scalar_lea.sflag [#allocation6], 1
    %22 = vsyncpa %s21, 0
    %23 = vsyncpa [#allocation9], 0
    %24 = vsyncpa [#allocation4], 0
    %s25 = scalar_lea.sflag [#allocation4], 1
    %26 = vsyncpa %s25, 0
    loop: start=0, step=1, limit=4
    $region2: #{tpu_custom_call.1} parent=1 // loop_pre_header
      _
    $region3: #{tpu_custom_call.1} parent=1 // loop_header
      %s28 = sphi 0, %s32
      %p29 = scmp.ge.s32.totalorder %s28, 4
      %s38 = sphi 0, %s40
      %s41 = sphi 0, %s38
      %s42 = sphi 0, %s41
      %s58 = sphi 0, %s42
      %s64 = sphi 0, %s66
      %s67 = sphi 0, %s64
      %s68 = sphi 0, %s67
      %s84 = sphi 0, %s68
      %s88 = sphi 0, %s88
      %s90 = sphi 0, %s88
      %s91 = sphi 0, %s90
      %s105 = sphi 0, %s91
      %s109 = sphi 0, %s109
      %s111 = sphi 0, %s109
      %s112 = sphi 0, %s111
      %s126 = sphi 0, %s112
      %s130 = sphi 0, %s130
      %s132 = sphi 0, %s130
      %s133 = sphi 0, %s132
      %s147 = sphi 0, %s133
      %s151 = sphi 0, %s151
      %s153 = sphi 0, %s151
      %s154 = sphi 0, %s153
      %s168 = sphi 0, %s154
      %s172 = sphi 0, %s172
      %s174 = sphi 0, %s172
      %s175 = sphi 0, %s174
      %s189 = sphi 0, %s175
      %s193 = sphi 0, %s193
      %s195 = sphi 0, %s193
      %s196 = sphi 0, %s195
      %s210 = sphi 0, %s196
      %s214 = sphi 0, %s214
      %s216 = sphi 0, %s214
      %s217 = sphi 0, %s216
      %s231 = sphi 0, %s217
      %s235 = sphi 0, %s235
      %s237 = sphi 0, %s235
      %s238 = sphi 0, %s237
      %s252 = sphi 0, %s238
      %s256 = sphi 0, %s256
      %s258 = sphi 0, %s256
      %s259 = sphi 0, %s258
      %s273 = sphi 0, %s259
      %s277 = sphi 0, %s277
      %s279 = sphi 0, %s277
      %s280 = sphi 0, %s279
      %s294 = sphi 0, %s280
      %s300 = sphi 0, %s302
      %s303 = sphi 0, %s300
      %s304 = sphi 0, %s303
      %s320 = sphi 0, %s304
    $region4: #{tpu_custom_call.1} parent=1 // loop_header_branch
      %31 = sbr.rel (%p29) target = $region8
    $region5: #{tpu_custom_call.1} parent=1 // loop_body
      %s33 = ssub.s32 %s28, 1
      %s34 = ssub.s32 %s28, 2
      %s35 = sadd.s32 %s28, 1
      %s36 = ssub.s32 %s28, %s35
      %p37 = scmp.eq.s32.totalorder %s36, 0
      %s39 = sadd.s32 %s38, 1
      %s40 = scalar_select %p37, %s38, %s39
      %p43 = pneg %p37
      %p44 = scmp.eq.s32.totalorder %s28, 1
      %p45 = por %p43, %p44
      %p46 = scmp.ne.s32.totalorder %s38, %s41
      %p47 = scmp.eq.s32.totalorder %s28, 0
      %p48 = por %p46, %p47
      %p49 = scmp.ne.s32.totalorder %s38, %s41
      %p50 = scmp.eq.s32.totalorder %s33, 1
      %p51 = por %p49, %p50
      %p52 = scmp.ne.s32.totalorder %s41, %s42
      %p53 = scmp.eq.s32.totalorder %s33, 0
      %p54 = por %p52, %p53
      %p55 = scmp.ne.s32.totalorder %s41, %s42
      %p56 = scmp.eq.s32.totalorder %s34, 1
      %p57 = por %p55, %p56
      %p59 = scmp.ne.s32.totalorder %s42, %s58
      %p60 = scmp.eq.s32.totalorder %s34, 0
      %p61 = por %p59, %p60
      %s62 = ssub.s32 %s28, %s35
      %p63 = scmp.eq.s32.totalorder %s62, 0
      %s65 = sadd.s32 %s64, 1
      %s66 = scalar_select %p63, %s64, %s65
      %p69 = pneg %p63
      %p70 = scmp.eq.s32.totalorder %s28, 1
      %p71 = por %p69, %p70
      %p72 = scmp.ne.s32.totalorder %s64, %s67
      %p73 = scmp.eq.s32.totalorder %s28, 0
      %p74 = por %p72, %p73
      %p75 = scmp.ne.s32.totalorder %s64, %s67
      %p76 = scmp.eq.s32.totalorder %s33, 1
      %p77 = por %p75, %p76
      %p78 = scmp.ne.s32.totalorder %s67, %s68
      %p79 = scmp.eq.s32.totalorder %s33, 0
      %p80 = por %p78, %p79
      %p81 = scmp.ne.s32.totalorder %s67, %s68
      %p82 = scmp.eq.s32.totalorder %s34, 1
      %p83 = por %p81, %p82
      %p85 = scmp.ne.s32.totalorder %s68, %s84
      %p86 = scmp.eq.s32.totalorder %s34, 0
      %p87 = por %p85, %p86
      %s89 = sadd.s32 %s88, 1
      %p92 = scmp.eq.s32.totalorder %s28, 1
      %p93 = scmp.ne.s32.totalorder %s88, %s90
      %p94 = scmp.eq.s32.totalorder %s28, 0
      %p95 = por %p93, %p94
      %p96 = scmp.ne.s32.totalorder %s88, %s90
      %p97 = scmp.eq.s32.totalorder %s33, 1
      %p98 = por %p96, %p97
      %p99 = scmp.ne.s32.totalorder %s90, %s91
      %p100 = scmp.eq.s32.totalorder %s33, 0
      %p101 = por %p99, %p100
      %p102 = scmp.ne.s32.totalorder %s90, %s91
      %p103 = scmp.eq.s32.totalorder %s34, 1
      %p104 = por %p102, %p103
      %p106 = scmp.ne.s32.totalorder %s91, %s105
      %p107 = scmp.eq.s32.totalorder %s34, 0
      %p108 = por %p106, %p107
      %s110 = sadd.s32 %s109, 1
      %p113 = scmp.eq.s32.totalorder %s28, 1
      %p114 = scmp.ne.s32.totalorder %s109, %s111
      %p115 = scmp.eq.s32.totalorder %s28, 0
      %p116 = por %p114, %p115
      %p117 = scmp.ne.s32.totalorder %s109, %s111
      %p118 = scmp.eq.s32.totalorder %s33, 1
      %p119 = por %p117, %p118
      %p120 = scmp.ne.s32.totalorder %s111, %s112
      %p121 = scmp.eq.s32.totalorder %s33, 0
      %p122 = por %p120, %p121
      %p123 = scmp.ne.s32.totalorder %s111, %s112
      %p124 = scmp.eq.s32.totalorder %s34, 1
      %p125 = por %p123, %p124
      %p127 = scmp.ne.s32.totalorder %s112, %s126
      %p128 = scmp.eq.s32.totalorder %s34, 0
      %p129 = por %p127, %p128
      %s131 = sadd.s32 %s130, 1
      %p134 = scmp.eq.s32.totalorder %s28, 1
      %p135 = scmp.ne.s32.totalorder %s130, %s132
      %p136 = scmp.eq.s32.totalorder %s28, 0
      %p137 = por %p135, %p136
      %p138 = scmp.ne.s32.totalorder %s130, %s132
      %p139 = scmp.eq.s32.totalorder %s33, 1
      %p140 = por %p138, %p139
      %p141 = scmp.ne.s32.totalorder %s132, %s133
      %p142 = scmp.eq.s32.totalorder %s33, 0
      %p143 = por %p141, %p142
      %p144 = scmp.ne.s32.totalorder %s132, %s133
      %p145 = scmp.eq.s32.totalorder %s34, 1
      %p146 = por %p144, %p145
      %p148 = scmp.ne.s32.totalorder %s133, %s147
      %p149 = scmp.eq.s32.totalorder %s34, 0
      %p150 = por %p148, %p149
      %s152 = sadd.s32 %s151, 1
      %p155 = scmp.eq.s32.totalorder %s28, 1
      %p156 = scmp.ne.s32.totalorder %s151, %s153
      %p157 = scmp.eq.s32.totalorder %s28, 0
      %p158 = por %p156, %p157
      %p159 = scmp.ne.s32.totalorder %s151, %s153
      %p160 = scmp.eq.s32.totalorder %s33, 1
      %p161 = por %p159, %p160
      %p162 = scmp.ne.s32.totalorder %s153, %s154
      %p163 = scmp.eq.s32.totalorder %s33, 0
      %p164 = por %p162, %p163
      %p165 = scmp.ne.s32.totalorder %s153, %s154
      %p166 = scmp.eq.s32.totalorder %s34, 1
      %p167 = por %p165, %p166
      %p169 = scmp.ne.s32.totalorder %s154, %s168
      %p170 = scmp.eq.s32.totalorder %s34, 0
      %p171 = por %p169, %p170
      %s173 = sadd.s32 %s172, 1
      %p176 = scmp.eq.s32.totalorder %s28, 1
      %p177 = scmp.ne.s32.totalorder %s172, %s174
      %p178 = scmp.eq.s32.totalorder %s28, 0
      %p179 = por %p177, %p178
      %p180 = scmp.ne.s32.totalorder %s172, %s174
      %p181 = scmp.eq.s32.totalorder %s33, 1
      %p182 = por %p180, %p181
      %p183 = scmp.ne.s32.totalorder %s174, %s175
      %p184 = scmp.eq.s32.totalorder %s33, 0
      %p185 = por %p183, %p184
      %p186 = scmp.ne.s32.totalorder %s174, %s175
      %p187 = scmp.eq.s32.totalorder %s34, 1
      %p188 = por %p186, %p187
      %p190 = scmp.ne.s32.totalorder %s175, %s189
      %p191 = scmp.eq.s32.totalorder %s34, 0
      %p192 = por %p190, %p191
      %s194 = sadd.s32 %s193, 1
      %p197 = scmp.eq.s32.totalorder %s28, 1
      %p198 = scmp.ne.s32.totalorder %s193, %s195
      %p199 = scmp.eq.s32.totalorder %s28, 0
      %p200 = por %p198, %p199
      %p201 = scmp.ne.s32.totalorder %s193, %s195
      %p202 = scmp.eq.s32.totalorder %s33, 1
      %p203 = por %p201, %p202
      %p204 = scmp.ne.s32.totalorder %s195, %s196
      %p205 = scmp.eq.s32.totalorder %s33, 0
      %p206 = por %p204, %p205
      %p207 = scmp.ne.s32.totalorder %s195, %s196
      %p208 = scmp.eq.s32.totalorder %s34, 1
      %p209 = por %p207, %p208
      %p211 = scmp.ne.s32.totalorder %s196, %s210
      %p212 = scmp.eq.s32.totalorder %s34, 0
      %p213 = por %p211, %p212
      %s215 = sadd.s32 %s214, 1
      %p218 = scmp.eq.s32.totalorder %s28, 1
      %p219 = scmp.ne.s32.totalorder %s214, %s216
      %p220 = scmp.eq.s32.totalorder %s28, 0
      %p221 = por %p219, %p220
      %p222 = scmp.ne.s32.totalorder %s214, %s216
      %p223 = scmp.eq.s32.totalorder %s33, 1
      %p224 = por %p222, %p223
      %p225 = scmp.ne.s32.totalorder %s216, %s217
      %p226 = scmp.eq.s32.totalorder %s33, 0
      %p227 = por %p225, %p226
      %p228 = scmp.ne.s32.totalorder %s216, %s217
      %p229 = scmp.eq.s32.totalorder %s34, 1
      %p230 = por %p228, %p229
      %p232 = scmp.ne.s32.totalorder %s217, %s231
      %p233 = scmp.eq.s32.totalorder %s34, 0
      %p234 = por %p232, %p233
      %s236 = sadd.s32 %s235, 1
      %p239 = scmp.eq.s32.totalorder %s28, 1
      %p240 = scmp.ne.s32.totalorder %s235, %s237
      %p241 = scmp.eq.s32.totalorder %s28, 0
      %p242 = por %p240, %p241
      %p243 = scmp.ne.s32.totalorder %s235, %s237
      %p244 = scmp.eq.s32.totalorder %s33, 1
      %p245 = por %p243, %p244
      %p246 = scmp.ne.s32.totalorder %s237, %s238
      %p247 = scmp.eq.s32.totalorder %s33, 0
      %p248 = por %p246, %p247
      %p249 = scmp.ne.s32.totalorder %s237, %s238
      %p250 = scmp.eq.s32.totalorder %s34, 1
      %p251 = por %p249, %p250
      %p253 = scmp.ne.s32.totalorder %s238, %s252
      %p254 = scmp.eq.s32.totalorder %s34, 0
      %p255 = por %p253, %p254
      %s257 = sadd.s32 %s256, 1
      %p260 = scmp.eq.s32.totalorder %s28, 1
      %p261 = scmp.ne.s32.totalorder %s256, %s258
      %p262 = scmp.eq.s32.totalorder %s28, 0
      %p263 = por %p261, %p262
      %p264 = scmp.ne.s32.totalorder %s256, %s258
      %p265 = scmp.eq.s32.totalorder %s33, 1
      %p266 = por %p264, %p265
      %p267 = scmp.ne.s32.totalorder %s258, %s259
      %p268 = scmp.eq.s32.totalorder %s33, 0
      %p269 = por %p267, %p268
      %p270 = scmp.ne.s32.totalorder %s258, %s259
      %p271 = scmp.eq.s32.totalorder %s34, 1
      %p272 = por %p270, %p271
      %p274 = scmp.ne.s32.totalorder %s259, %s273
      %p275 = scmp.eq.s32.totalorder %s34, 0
      %p276 = por %p274, %p275
      %s278 = sadd.s32 %s277, 1
      %p281 = scmp.eq.s32.totalorder %s28, 1
      %p282 = scmp.ne.s32.totalorder %s277, %s279
      %p283 = scmp.eq.s32.totalorder %s28, 0
      %p284 = por %p282, %p283
      %p285 = scmp.ne.s32.totalorder %s277, %s279
      %p286 = scmp.eq.s32.totalorder %s33, 1
      %p287 = por %p285, %p286
      %p288 = scmp.ne.s32.totalorder %s279, %s280
      %p289 = scmp.eq.s32.totalorder %s33, 0
      %p290 = por %p288, %p289
      %p291 = scmp.ne.s32.totalorder %s279, %s280
      %p292 = scmp.eq.s32.totalorder %s34, 1
      %p293 = por %p291, %p292
      %p295 = scmp.ne.s32.totalorder %s280, %s294
      %p296 = scmp.eq.s32.totalorder %s34, 0
      %p297 = por %p295, %p296
      %s298 = ssub.s32 %s28, %s35
      %p299 = scmp.eq.s32.totalorder %s298, 0
      %s301 = sadd.s32 %s300, 1
      %s302 = scalar_select %p299, %s300, %s301
      %p305 = pneg %p299
      %p306 = scmp.eq.s32.totalorder %s28, 1
      %p307 = por %p305, %p306
      %p308 = scmp.ne.s32.totalorder %s300, %s303
      %p309 = scmp.eq.s32.totalorder %s28, 0
      %p310 = por %p308, %p309
      %p311 = scmp.ne.s32.totalorder %s300, %s303
      %p312 = scmp.eq.s32.totalorder %s33, 1
      %p313 = por %p311, %p312
      %p314 = scmp.ne.s32.totalorder %s303, %s304
      %p315 = scmp.eq.s32.totalorder %s33, 0
      %p316 = por %p314, %p315
      %p317 = scmp.ne.s32.totalorder %s303, %s304
      %p318 = scmp.eq.s32.totalorder %s34, 1
      %p319 = por %p317, %p318
      %p321 = scmp.ne.s32.totalorder %s304, %s320
      %p322 = scmp.eq.s32.totalorder %s34, 0
      %p323 = por %p321, %p322
      %p324 = scmp.le.s32.totalorder 1, %s28
      %p325 = scmp.lt.s32.totalorder %s28, 3
      %p326 = pnand %p324, %p325
      %p327 = pneg %p326
      // Predicated region
      $region9: #{tpu_custom_call.1} parent=5 // pred_check
        _
      $region10: #{tpu_custom_call.1} parent=5 // pred_check_branch
        %329 = sbr.rel (%p326) target = $region12
      $region11: #{tpu_custom_call.1} parent=5 // pred_region
        %s330 = ssub.s32 %s28, 1
        // Predicated region
        $region13: #{tpu_custom_call.1} parent=11 // pred_check
          %p331 = pneg %p101
        $region14: #{tpu_custom_call.1} parent=11 // pred_check_branch
          %333 = sbr.rel (%p331) target = $region16
        $region15: #{tpu_custom_call.1} parent=11 // pred_region
          _
        $region16: #{tpu_custom_call.1} parent=11 // pred_fallthru
          _
        // Predicated region
        $region17: #{tpu_custom_call.1} parent=11 // pred_check
          %p334 = pneg %p122
        $region18: #{tpu_custom_call.1} parent=11 // pred_check_branch
          %336 = sbr.rel (%p334) target = $region20
        $region19: #{tpu_custom_call.1} parent=11 // pred_region
          %s338 = ssub.s32 1024, 1024
          %339 = vsyncadd [#allocation6], %s338
          %s340 = sshll.u32 [#allocation7], 4
          %s341 = int_to_ptr.vmem [resolvable:$true] %s340
          %346 = dma.hbm_to_vmem [thread:$0]  %s3, 1024, %s341, [#allocation6], 64, 64, 4
        $region20: #{tpu_custom_call.1} parent=11 // pred_fallthru
          _
        // Predicated region
        $region21: #{tpu_custom_call.1} parent=11 // pred_check
          %p347 = pneg %p143
        $region22: #{tpu_custom_call.1} parent=11 // pred_check_branch
          %349 = sbr.rel (%p347) target = $region24
        $region23: #{tpu_custom_call.1} parent=11 // pred_region
          %s351 = ssub.s32 1024, 1024
          %352 = vsyncadd [#allocation9], %s351
          %s353 = sshll.u32 [#allocation8], 4
          %s354 = int_to_ptr.vmem [resolvable:$true] %s353
          %359 = dma.hbm_to_vmem [thread:$0]  %s4, 1024, %s354, [#allocation9], 64, 64, 4
        $region24: #{tpu_custom_call.1} parent=11 // pred_fallthru
          _
        // Predicated region
        $region25: #{tpu_custom_call.1} parent=11 // pred_check
          %p360 = pneg %p164
        $region26: #{tpu_custom_call.1} parent=11 // pred_check_branch
          %362 = sbr.rel (%p360) target = $region28
        $region27: #{tpu_custom_call.1} parent=11 // pred_region
          _
        $region28: #{tpu_custom_call.1} parent=11 // pred_fallthru
          _
        // Predicated region
        $region29: #{tpu_custom_call.1} parent=11 // pred_check
          %p363 = pneg %p185
        $region30: #{tpu_custom_call.1} parent=11 // pred_check_branch
          %365 = sbr.rel (%p363) target = $region32
        $region31: #{tpu_custom_call.1} parent=11 // pred_region
          _
        $region32: #{tpu_custom_call.1} parent=11 // pred_fallthru
          _
        // Predicated region
        $region33: #{tpu_custom_call.1} parent=11 // pred_check
          %p366 = pneg %p206
        $region34: #{tpu_custom_call.1} parent=11 // pred_check_branch
          %368 = sbr.rel (%p366) target = $region36
        $region35: #{tpu_custom_call.1} parent=11 // pred_region
          _
        $region36: #{tpu_custom_call.1} parent=11 // pred_fallthru
          _
        // Predicated region
        $region37: #{tpu_custom_call.1} parent=11 // pred_check
          %p369 = pneg %p227
        $region38: #{tpu_custom_call.1} parent=11 // pred_check_branch
          %371 = sbr.rel (%p369) target = $region40
        $region39: #{tpu_custom_call.1} parent=11 // pred_region
          %s373 = ssub.s32 1024, 1024
          %374 = vsyncadd [#allocation9], %s373
          %s375 = sshll.u32 [#allocation10], 4
          %s376 = int_to_ptr.vmem [resolvable:$true] %s375
          %381 = dma.hbm_to_vmem [thread:$0]  %s8, 1024, %s376, [#allocation9], 64, 64, 4
        $region40: #{tpu_custom_call.1} parent=11 // pred_fallthru
          _
        // Predicated region
        $region41: #{tpu_custom_call.1} parent=11 // pred_check
          %p382 = pneg %p248
        $region42: #{tpu_custom_call.1} parent=11 // pred_check_branch
          %384 = sbr.rel (%p382) target = $region44
        $region43: #{tpu_custom_call.1} parent=11 // pred_region
          _
        $region44: #{tpu_custom_call.1} parent=11 // pred_fallthru
          _
        // Predicated region
        $region45: #{tpu_custom_call.1} parent=11 // pred_check
          %p385 = pneg %p269
        $region46: #{tpu_custom_call.1} parent=11 // pred_check_branch
          %387 = sbr.rel (%p385) target = $region48
        $region47: #{tpu_custom_call.1} parent=11 // pred_region
          _
        $region48: #{tpu_custom_call.1} parent=11 // pred_fallthru
          _
        // Predicated region
        $region49: #{tpu_custom_call.1} parent=11 // pred_check
          %p388 = pneg %p290
        $region50: #{tpu_custom_call.1} parent=11 // pred_check_branch
          %390 = sbr.rel (%p388) target = $region52
        $region51: #{tpu_custom_call.1} parent=11 // pred_region
          _
        $region52: #{tpu_custom_call.1} parent=11 // pred_fallthru
          _
      $region12: #{tpu_custom_call.1} parent=5 // pred_fallthru
        _
      %p391 = scmp.lt.s32.totalorder %s28, 2
      // Predicated region
      $region53: #{tpu_custom_call.1} parent=5 // pred_check
        %p392 = pneg %p391
      $region54: #{tpu_custom_call.1} parent=5 // pred_check_branch
        %394 = sbr.rel (%p392) target = $region56
      $region55: #{tpu_custom_call.1} parent=5 // pred_region
        // Predicated region
        $region57: #{tpu_custom_call.1} parent=55 // pred_check
          %p395 = pneg %p48
        $region58: #{tpu_custom_call.1} parent=55 // pred_check_branch
          %397 = sbr.rel (%p395) target = $region60
        $region59: #{tpu_custom_call.1} parent=55 // pred_region
          %s398 = sand.u32 %s38, 1
          %s399 = scalar_lea.sflag [#allocation3], %s398
          %s400 = sand.u32 %s38, 1
          %s401 = smul.addr %s400, 64
          %s402 = scalar_lea.vmem [#allocation2], %s401
          %s403 = smul.u32 8, %s28
          %s405 = ssub.s32 1024, 1024
          %406 = vsyncadd %s399, %s405
          %s407 = smul.addr %s403, 128
          %s408 = scalar_lea.hbm %s0, %s407
          %s409 = sshll.u32 %s402, 4
          %s410 = int_to_ptr.vmem [resolvable:$true] %s409
          %415 = dma.hbm_to_vmem [thread:$0]  %s408, 1024, %s410, %s399, 128, 128, 8
        $region60: #{tpu_custom_call.1} parent=55 // pred_fallthru
          _
        // Predicated region
        $region61: #{tpu_custom_call.1} parent=55 // pred_check
          %p416 = pneg %p74
        $region62: #{tpu_custom_call.1} parent=55 // pred_check_branch
          %418 = sbr.rel (%p416) target = $region64
        $region63: #{tpu_custom_call.1} parent=55 // pred_region
          %s419 = sand.u32 %s28, 1
          %s420 = scalar_lea.sflag [#allocation6], %s419
          %s421 = sand.u32 %s64, 1
          %s422 = smul.addr %s421, 64
          %s423 = scalar_lea.vmem [#allocation5], %s422
          %s424 = smul.u32 8, %s28
          %s426 = ssub.s32 1024, 1024
          %427 = vsyncadd %s420, %s426
          %s428 = smul.addr %s424, 128
          %s429 = scalar_lea.hbm %s1, %s428
          %s430 = sshll.u32 %s423, 4
          %s431 = int_to_ptr.vmem [resolvable:$true] %s430
          %436 = dma.hbm_to_vmem [thread:$0]  %s429, 1024, %s431, %s420, 128, 128, 8
        $region64: #{tpu_custom_call.1} parent=55 // pred_fallthru
          _
      $region56: #{tpu_custom_call.1} parent=5 // pred_fallthru
        _
      %p437 = scmp.le.s32.totalorder 1, %s28
      %p438 = scmp.lt.s32.totalorder %s28, 3
      %p439 = pnand %p437, %p438
      %p440 = pneg %p439
      // Predicated region
      $region65: #{tpu_custom_call.1} parent=5 // pred_check
        _
      $region66: #{tpu_custom_call.1} parent=5 // pred_check_branch
        %442 = sbr.rel (%p439) target = $region68
      $region67: #{tpu_custom_call.1} parent=5 // pred_region
        %s443 = ssub.s32 %s28, 1
        %s444 = sand.u32 %s41, 1
        %s445 = scalar_lea.sflag [#allocation3], %s444
        %s446 = sand.u32 %s41, 1
        %s447 = smul.addr %s446, 64
        %s448 = scalar_lea.vmem [#allocation2], %s447
        // Predicated region
        $region69: #{tpu_custom_call.1} parent=67 // pred_check
          %p449 = pneg %p54
        $region70: #{tpu_custom_call.1} parent=67 // pred_check_branch
          %451 = sbr.rel (%p449) target = $region72
        $region71: #{tpu_custom_call.1} parent=67 // pred_region
          %452 = dma.done %s445, 1024
        $region72: #{tpu_custom_call.1} parent=67 // pred_fallthru
          _
        %s453 = sand.u32 %s33, 1
        %s454 = scalar_lea.sflag [#allocation6], %s453
        %s455 = sand.u32 %s67, 1
        %s456 = smul.addr %s455, 64
        %s457 = scalar_lea.vmem [#allocation5], %s456
        // Predicated region
        $region73: #{tpu_custom_call.1} parent=67 // pred_check
          %p458 = pneg %p80
        $region74: #{tpu_custom_call.1} parent=67 // pred_check_branch
          %460 = sbr.rel (%p458) target = $region76
        $region75: #{tpu_custom_call.1} parent=67 // pred_region
          %461 = dma.done %s454, 1024
        $region76: #{tpu_custom_call.1} parent=67 // pred_fallthru
          _
        // Predicated region
        $region77: #{tpu_custom_call.1} parent=67 // pred_check
          %p462 = pneg %p122
        $region78: #{tpu_custom_call.1} parent=67 // pred_check_branch
          %464 = sbr.rel (%p462) target = $region80
        $region79: #{tpu_custom_call.1} parent=67 // pred_region
          %465 = dma.done [#allocation6], 1024
        $region80: #{tpu_custom_call.1} parent=67 // pred_fallthru
          _
        // Predicated region
        $region81: #{tpu_custom_call.1} parent=67 // pred_check
          %p466 = pneg %p143
        $region82: #{tpu_custom_call.1} parent=67 // pred_check_branch
          %468 = sbr.rel (%p466) target = $region84
        $region83: #{tpu_custom_call.1} parent=67 // pred_region
          %469 = dma.done [#allocation9], 1024
        $region84: #{tpu_custom_call.1} parent=67 // pred_fallthru
          _
        // Predicated region
        $region85: #{tpu_custom_call.1} parent=67 // pred_check
          %p470 = pneg %p227
        $region86: #{tpu_custom_call.1} parent=67 // pred_check_branch
          %472 = sbr.rel (%p470) target = $region88
        $region87: #{tpu_custom_call.1} parent=67 // pred_region
          %473 = dma.done [#allocation9], 1024
        $region88: #{tpu_custom_call.1} parent=67 // pred_fallthru
          _
        %s474 = sand.u32 %s41, 1
        %s475 = scalar_lea.sflag [#allocation3], %s474
        %s476 = sand.u32 %s41, 1
        %s477 = smul.addr %s476, 64
        %s478 = scalar_lea.vmem [#allocation2], %s477
        %p479 = pneg %p54
        %p480 = pneg %p51
        %s481 = sand.u32 %s33, 1
        %s482 = scalar_lea.sflag [#allocation6], %s481
        %s483 = sand.u32 %s67, 1
        %s484 = smul.addr %s483, 64
        %s485 = scalar_lea.vmem [#allocation5], %s484
        %p486 = pneg %p80
        %p487 = pneg %p77
        %p488 = pneg %p101
        %p489 = pneg %p98
        %p490 = pneg %p122
        %p491 = pneg %p119
        %p492 = pneg %p143
        %p493 = pneg %p140
        %p494 = pneg %p164
        %p495 = pneg %p161
        %p496 = pneg %p185
        %p497 = pneg %p182
        %p498 = pneg %p206
        %p499 = pneg %p203
        %p500 = pneg %p227
        %p501 = pneg %p224
        %p502 = pneg %p248
        %p503 = pneg %p245
        %p504 = pneg %p269
        %p505 = pneg %p266
        %p506 = pneg %p290
        %p507 = pneg %p287
        %p508 = pneg %p316
        %p509 = pneg %p313
        %s510 = sand.u32 %s303, 1
        %s511 = scalar_lea.sflag [#allocation4], %s510
        %s512 = sand.u32 %s303, 1
        %s513 = smul.addr %s512, 64
        %s514 = scalar_lea.vmem [#allocation11], %s513
        %s515 = smul.u32 8, %s33
        %s516 = smul.u32 8, %s33
        %s517 = smul.u32 8, %s33
        %v519 = vld [vmem:[%s448] sm:$0xff]
        %v520 = vld [vmem:[%s448 + $0x8] sm:$0xff]
        %v521 = vld [vmem:[%s448 + $0x10] sm:$0xff]
        %v522 = vld [vmem:[%s448 + $0x18] sm:$0xff]
        %v523 = vld [vmem:[%s448 + $0x20] sm:$0xff]
        %v524 = vld [vmem:[%s448 + $0x28] sm:$0xff]
        %v525 = vld [vmem:[%s448 + $0x30] sm:$0xff]
        %v526 = vld [vmem:[%s448 + $0x38] sm:$0xff]
        %v527 = vld [vmem:[%s457] sm:$0xff]
        %v528 = vld [vmem:[%s457 + $0x8] sm:$0xff]
        %v529 = vld [vmem:[%s457 + $0x10] sm:$0xff]
        %v530 = vld [vmem:[%s457 + $0x18] sm:$0xff]
        %v531 = vld [vmem:[%s457 + $0x20] sm:$0xff]
        %v532 = vld [vmem:[%s457 + $0x28] sm:$0xff]
        %v533 = vld [vmem:[%s457 + $0x30] sm:$0xff]
        %v534 = vld [vmem:[%s457 + $0x38] sm:$0xff]
        %v535 = vpack.c.bf16 %v520, %v519
        %v536 = vpack.c.bf16 %v522, %v521
        %v537 = vpack.c.bf16 %v524, %v523
        %v538 = vpack.c.bf16 %v526, %v525
        %v539 = vpack.c.bf16 %v528, %v527
        %v540 = vpack.c.bf16 %v530, %v529
        %v541 = vpack.c.bf16 %v532, %v531
        %v542 = vpack.c.bf16 %v534, %v533
        %v543 = vld [vmem:[%s2] sm:$0xf]
        %v544 = vld [vmem:[%s2 + $0x4] sm:$0xf]
        %v545 = vld [vmem:[%s2 + $0x8] sm:$0xf]
        %v546 = vld [vmem:[%s2 + $0xc] sm:$0xf]
        %v547 = vld [vmem:[%s2 + $0x10] sm:$0xf]
        %v548 = vld [vmem:[%s2 + $0x14] sm:$0xf]
        %v549 = vld [vmem:[%s2 + $0x18] sm:$0xf]
        %v550 = vld [vmem:[%s2 + $0x1c] sm:$0xf]
        %v551 = vld [vmem:[%s2 + $0x20] sm:$0xf]
        %v552 = vld [vmem:[%s2 + $0x24] sm:$0xf]
        %v553 = vld [vmem:[%s2 + $0x28] sm:$0xf]
        %v554 = vld [vmem:[%s2 + $0x2c] sm:$0xf]
        %v555 = vld [vmem:[%s2 + $0x30] sm:$0xf]
        %v556 = vld [vmem:[%s2 + $0x34] sm:$0xf]
        %v557 = vld [vmem:[%s2 + $0x38] sm:$0xf]
        %v558 = vld [vmem:[%s2 + $0x3c] sm:$0xf]
        %v559 = vld [vmem:[#allocation7] sm:$0xf]
        %v560 = vld [vmem:[#allocation7 + $0x4] sm:$0xf]
        %v561 = vld [vmem:[#allocation7 + $0x8] sm:$0xf]
        %v562 = vld [vmem:[#allocation7 + $0xc] sm:$0xf]
        %v563 = vld [vmem:[#allocation7 + $0x10] sm:$0xf]
        %v564 = vld [vmem:[#allocation7 + $0x14] sm:$0xf]
        %v565 = vld [vmem:[#allocation7 + $0x18] sm:$0xf]
        %v566 = vld [vmem:[#allocation7 + $0x1c] sm:$0xf]
        %v567 = vld [vmem:[#allocation7 + $0x20] sm:$0xf]
        %v568 = vld [vmem:[#allocation7 + $0x24] sm:$0xf]
        %v569 = vld [vmem:[#allocation7 + $0x28] sm:$0xf]
        %v570 = vld [vmem:[#allocation7 + $0x2c] sm:$0xf]
        %v571 = vld [vmem:[#allocation7 + $0x30] sm:$0xf]
        %v572 = vld [vmem:[#allocation7 + $0x34] sm:$0xf]
        %v573 = vld [vmem:[#allocation7 + $0x38] sm:$0xf]
        %v574 = vld [vmem:[#allocation7 + $0x3c] sm:$0xf]
        %v575 = vld [vmem:[#allocation8] sm:$0xf]
        %v576 = vld [vmem:[#allocation8 + $0x4] sm:$0xf]
        %v577 = vld [vmem:[#allocation8 + $0x8] sm:$0xf]
        %v578 = vld [vmem:[#allocation8 + $0xc] sm:$0xf]
        %v579 = vld [vmem:[#allocation8 + $0x10] sm:$0xf]
        %v580 = vld [vmem:[#allocation8 + $0x14] sm:$0xf]
        %v581 = vld [vmem:[#allocation8 + $0x18] sm:$0xf]
        %v582 = vld [vmem:[#allocation8 + $0x1c] sm:$0xf]
        %v583 = vld [vmem:[#allocation8 + $0x20] sm:$0xf]
        %v584 = vld [vmem:[#allocation8 + $0x24] sm:$0xf]
        %v585 = vld [vmem:[#allocation8 + $0x28] sm:$0xf]
        %v586 = vld [vmem:[#allocation8 + $0x2c] sm:$0xf]
        %v587 = vld [vmem:[#allocation8 + $0x30] sm:$0xf]
        %v588 = vld [vmem:[#allocation8 + $0x34] sm:$0xf]
        %v589 = vld [vmem:[#allocation8 + $0x38] sm:$0xf]
        %v590 = vld [vmem:[#allocation8 + $0x3c] sm:$0xf]
        %v591 = vld [vmem:[#allocation10] sm:$0xf]
        %v592 = vld [vmem:[#allocation10 + $0x4] sm:$0xf]
        %v593 = vld [vmem:[#allocation10 + $0x8] sm:$0xf]
        %v594 = vld [vmem:[#allocation10 + $0xc] sm:$0xf]
        %v595 = vld [vmem:[#allocation10 + $0x10] sm:$0xf]
        %v596 = vld [vmem:[#allocation10 + $0x14] sm:$0xf]
        %v597 = vld [vmem:[#allocation10 + $0x18] sm:$0xf]
        %v598 = vld [vmem:[#allocation10 + $0x1c] sm:$0xf]
        %v599 = vld [vmem:[#allocation10 + $0x20] sm:$0xf]
        %v600 = vld [vmem:[#allocation10 + $0x24] sm:$0xf]
        %v601 = vld [vmem:[#allocation10 + $0x28] sm:$0xf]
        %v602 = vld [vmem:[#allocation10 + $0x2c] sm:$0xf]
        %v603 = vld [vmem:[#allocation10 + $0x30] sm:$0xf]
        %v604 = vld [vmem:[#allocation10 + $0x34] sm:$0xf]
        %v605 = vld [vmem:[#allocation10 + $0x38] sm:$0xf]
        %v606 = vld [vmem:[#allocation10 + $0x3c] sm:$0xf]
        %v607 = vld [vmem:[%s5] sm:$0x1]
        %v608 = vld [vmem:[%s6] sm:$0x1]
        %v609 = vld [vmem:[%s7] sm:$0x1]
        %v610 = vld [vmem:[%s9] sm:$0x1]
        %v612 = vlaneseq
        %v613 = vshrl.u32 %v612, 7
        %v614 = vsub.s32 0, %v613
        %v615 = vrot.slane %v607, %v614
        %v633 = vunpack.c.l.b16 %v543
        %v634 = vunpack.c.l.b16 %v544
        %v635 = vunpack.c.l.b16 %v545
        %v636 = vunpack.c.l.b16 %v546
        %v637 = vunpack.c.l.b16 %v547
        %v638 = vunpack.c.l.b16 %v548
        %v639 = vunpack.c.l.b16 %v549
        %v640 = vunpack.c.l.b16 %v550
        %v641 = vunpack.c.l.b16 %v551
        %v642 = vunpack.c.l.b16 %v552
        %v643 = vunpack.c.l.b16 %v553
        %v644 = vunpack.c.l.b16 %v554
        %v645 = vunpack.c.l.b16 %v555
        %v646 = vunpack.c.l.b16 %v556
        %v647 = vunpack.c.l.b16 %v557
        %v648 = vunpack.c.l.b16 %v558
        %v649 = vpack.c.b16 %v634, %v633
        %v650 = vpack.c.b16 %v636, %v635
        %v651 = vpack.c.b16 %v638, %v637
        %v652 = vpack.c.b16 %v640, %v639
        %v653 = vpack.c.b16 %v642, %v641
        %v654 = vpack.c.b16 %v644, %v643
        %v655 = vpack.c.b16 %v646, %v645
        %v656 = vpack.c.b16 %v648, %v647
        %665 = vmatprep.subr.bf16.mxu0 0
        %666 = vmatpush1.bf16.msra.mxu0 %v656
        %667 = vmatprep.subr.bf16.mxu0 0
        %668 = vmatpush1.bf16.msra.mxu0 %v655
        %669 = vmatprep.subr.bf16.mxu0 0
        %670 = vmatpush1.bf16.msra.mxu0 %v654
        %671 = vmatprep.subr.bf16.mxu0 0
        %672 = vmatpush1.bf16.msra.mxu0 %v653
        %673 = vmatprep.subr.bf16.mxu0 0
        %674 = vmatpush1.bf16.msra.mxu0 %v652
        %675 = vmatprep.subr.bf16.mxu0 0
        %676 = vmatpush1.bf16.msra.mxu0 %v651
        %677 = vmatprep.subr.bf16.mxu0 0
        %678 = vmatpush1.bf16.msra.mxu0 %v650
        %679 = vmatprep.subr.bf16.mxu0 0
        %680 = vmatpush1.bf16.msra.mxu0 %v649
        %681 = vmatprep.subr.bf16.mxu0 0
        %682 = vmatpush2.bf16.msra.mxu0 0
        %683 = vmatprep.subr.bf16.mxu0 0
        %684 = vmatpush2.bf16.msra.mxu0 0
        %685 = vmatprep.subr.bf16.mxu0 0
        %686 = vmatpush2.bf16.msra.mxu0 0
        %687 = vmatprep.subr.bf16.mxu0 0
        %688 = vmatpush2.bf16.msra.mxu0 0
        %689 = vmatprep.subr.bf16.mxu0 0
        %690 = vmatpush2.bf16.msra.mxu0 0
        %691 = vmatprep.subr.bf16.mxu0 0
        %692 = vmatpush2.bf16.msra.mxu0 0
        %693 = vmatprep.subr.bf16.mxu0 0
        %694 = vmatpush2.bf16.msra.mxu0 0
        %695 = vmatprep.subr.bf16.mxu0 0
        %696 = vmatpush2.bf16.msra.mxu0 0
        %697 = vmatprep.mubr.bf16.mxu0 0
        %698 = vmatmul.mubr.bf16.gmra.mxu0 %v535
        %v699 = vpop.f32.mrf.mxu0
        %v700 = vadd.f32 %v615, %v699
        %v701 = vpop.f32.mrf.mxu0
        %v702 = vpop.f32.mrf.mxu0
        %v703 = vadd.f32 %v615, %v702
        %v704 = vpop.f32.mrf.mxu0
        %705 = vmatprep.mubr.bf16.mxu0 0
        %706 = vmatmul.mubr.bf16.gmra.mxu0 %v536
        %v707 = vpop.f32.mrf.mxu0
        %v708 = vadd.f32 %v615, %v707
        %v709 = vpop.f32.mrf.mxu0
        %v710 = vpop.f32.mrf.mxu0
        %v711 = vadd.f32 %v615, %v710
        %v712 = vpop.f32.mrf.mxu0
        %713 = vmatprep.mubr.bf16.mxu0 0
        %714 = vmatmul.mubr.bf16.gmra.mxu0 %v537
        %v715 = vpop.f32.mrf.mxu0
        %v716 = vadd.f32 %v615, %v715
        %v717 = vpop.f32.mrf.mxu0
        %v718 = vpop.f32.mrf.mxu0
        %v719 = vadd.f32 %v615, %v718
        %v720 = vpop.f32.mrf.mxu0
        %721 = vmatprep.mubr.bf16.mxu0 0
        %722 = vmatmul.mubr.bf16.gmra.mxu0 %v538
        %v723 = vpop.f32.mrf.mxu0
        %v724 = vadd.f32 %v615, %v723
        %v725 = vpop.f32.mrf.mxu0
        %v726 = vpop.f32.mrf.mxu0
        %v727 = vadd.f32 %v615, %v726
        %v728 = vpop.f32.mrf.mxu0
        %729 = vmatprep.mubr.bf16.mxu0 0
        %730 = vmatmul.mubr.bf16.gmra.mxu0 %v539
        %v731 = vpop.f32.mrf.mxu0
        %v732 = vadd.f32 %v615, %v731
        %v733 = vpop.f32.mrf.mxu0
        %v734 = vpop.f32.mrf.mxu0
        %v735 = vadd.f32 %v615, %v734
        %v736 = vpop.f32.mrf.mxu0
        %737 = vmatprep.mubr.bf16.mxu0 0
        %738 = vmatmul.mubr.bf16.gmra.mxu0 %v540
        %v739 = vpop.f32.mrf.mxu0
        %v740 = vadd.f32 %v615, %v739
        %v741 = vpop.f32.mrf.mxu0
        %v742 = vpop.f32.mrf.mxu0
        %v743 = vadd.f32 %v615, %v742
        %v744 = vpop.f32.mrf.mxu0
        %745 = vmatprep.mubr.bf16.mxu0 0
        %746 = vmatmul.mubr.bf16.gmra.mxu0 %v541
        %v747 = vpop.f32.mrf.mxu0
        %v748 = vadd.f32 %v615, %v747
        %v749 = vpop.f32.mrf.mxu0
        %v750 = vpop.f32.mrf.mxu0
        %v751 = vadd.f32 %v615, %v750
        %v752 = vpop.f32.mrf.mxu0
        %753 = vmatprep.mubr.bf16.mxu0 0
        %754 = vmatmul.mubr.bf16.gmra.mxu0 %v542
        %v755 = vpop.f32.mrf.mxu0
        %v756 = vadd.f32 %v615, %v755
        %v757 = vpop.f32.mrf.mxu0
        %v758 = vpop.f32.mrf.mxu0
        %v759 = vadd.f32 %v615, %v758
        %v760 = vpop.f32.mrf.mxu0
        %761 = vdwg.mxu0
        %v762 = vpack.c.bf16 %v703, %v700
        %v763 = vpack.c.bf16 %v711, %v708
        %v764 = vpack.c.bf16 %v719, %v716
        %v765 = vpack.c.bf16 %v727, %v724
        %v766 = vpack.c.bf16 %v735, %v732
        %v767 = vpack.c.bf16 %v743, %v740
        %v768 = vpack.c.bf16 %v751, %v748
        %v769 = vpack.c.bf16 %v759, %v756
        %v771 = vlaneseq
        %v772 = vshrl.u32 %v771, 7
        %v773 = vsub.s32 0, %v772
        %v774 = vrot.slane %v608, %v773
        %v792 = vunpack.c.l.b16 %v559
        %v793 = vunpack.c.l.b16 %v560
        %v794 = vunpack.c.l.b16 %v561
        %v795 = vunpack.c.l.b16 %v562
        %v796 = vunpack.c.l.b16 %v563
        %v797 = vunpack.c.l.b16 %v564
        %v798 = vunpack.c.l.b16 %v565
        %v799 = vunpack.c.l.b16 %v566
        %v800 = vunpack.c.l.b16 %v567
        %v801 = vunpack.c.l.b16 %v568
        %v802 = vunpack.c.l.b16 %v569
        %v803 = vunpack.c.l.b16 %v570
        %v804 = vunpack.c.l.b16 %v571
        %v805 = vunpack.c.l.b16 %v572
        %v806 = vunpack.c.l.b16 %v573
        %v807 = vunpack.c.l.b16 %v574
        %v808 = vpack.c.b16 %v793, %v792
        %v809 = vpack.c.b16 %v795, %v794
        %v810 = vpack.c.b16 %v797, %v796
        %v811 = vpack.c.b16 %v799, %v798
        %v812 = vpack.c.b16 %v801, %v800
        %v813 = vpack.c.b16 %v803, %v802
        %v814 = vpack.c.b16 %v805, %v804
        %v815 = vpack.c.b16 %v807, %v806
        %824 = vmatprep.subr.bf16.mxu0 0
        %825 = vmatpush1.bf16.msra.mxu0 %v815
        %826 = vmatprep.subr.bf16.mxu0 0
        %827 = vmatpush1.bf16.msra.mxu0 %v814
        %828 = vmatprep.subr.bf16.mxu0 0
        %829 = vmatpush1.bf16.msra.mxu0 %v813
        %830 = vmatprep.subr.bf16.mxu0 0
        %831 = vmatpush1.bf16.msra.mxu0 %v812
        %832 = vmatprep.subr.bf16.mxu0 0
        %833 = vmatpush1.bf16.msra.mxu0 %v811
        %834 = vmatprep.subr.bf16.mxu0 0
        %835 = vmatpush1.bf16.msra.mxu0 %v810
        %836 = vmatprep.subr.bf16.mxu0 0
        %837 = vmatpush1.bf16.msra.mxu0 %v809
        %838 = vmatprep.subr.bf16.mxu0 0
        %839 = vmatpush1.bf16.msra.mxu0 %v808
        %840 = vmatprep.subr.bf16.mxu0 0
        %841 = vmatpush2.bf16.msra.mxu0 0
        %842 = vmatprep.subr.bf16.mxu0 0
        %843 = vmatpush2.bf16.msra.mxu0 0
        %844 = vmatprep.subr.bf16.mxu0 0
        %845 = vmatpush2.bf16.msra.mxu0 0
        %846 = vmatprep.subr.bf16.mxu0 0
        %847 = vmatpush2.bf16.msra.mxu0 0
        %848 = vmatprep.subr.bf16.mxu0 0
        %849 = vmatpush2.bf16.msra.mxu0 0
        %850 = vmatprep.subr.bf16.mxu0 0
        %851 = vmatpush2.bf16.msra.mxu0 0
        %852 = vmatprep.subr.bf16.mxu0 0
        %853 = vmatpush2.bf16.msra.mxu0 0
        %854 = vmatprep.subr.bf16.mxu0 0
        %855 = vmatpush2.bf16.msra.mxu0 0
        %856 = vmatprep.mubr.bf16.mxu0 0
        %857 = vmatmul.mubr.bf16.gmra.mxu0 %v539
        %v858 = vpop.f32.mrf.mxu0
        %v859 = vadd.f32 %v774, %v858
        %v860 = vpop.f32.mrf.mxu0
        %v861 = vpop.f32.mrf.mxu0
        %v862 = vadd.f32 %v774, %v861
        %v863 = vpop.f32.mrf.mxu0
        %864 = vmatprep.mubr.bf16.mxu0 0
        %865 = vmatmul.mubr.bf16.gmra.mxu0 %v540
        %v866 = vpop.f32.mrf.mxu0
        %v867 = vadd.f32 %v774, %v866
        %v868 = vpop.f32.mrf.mxu0
        %v869 = vpop.f32.mrf.mxu0
        %v870 = vadd.f32 %v774, %v869
        %v871 = vpop.f32.mrf.mxu0
        %872 = vmatprep.mubr.bf16.mxu0 0
        %873 = vmatmul.mubr.bf16.gmra.mxu0 %v541
        %v874 = vpop.f32.mrf.mxu0
        %v875 = vadd.f32 %v774, %v874
        %v876 = vpop.f32.mrf.mxu0
        %v877 = vpop.f32.mrf.mxu0
        %v878 = vadd.f32 %v774, %v877
        %v879 = vpop.f32.mrf.mxu0
        %880 = vmatprep.mubr.bf16.mxu0 0
        %881 = vmatmul.mubr.bf16.gmra.mxu0 %v542
        %v882 = vpop.f32.mrf.mxu0
        %v883 = vadd.f32 %v774, %v882
        %v884 = vpop.f32.mrf.mxu0
        %v885 = vpop.f32.mrf.mxu0
        %v886 = vadd.f32 %v774, %v885
        %v887 = vpop.f32.mrf.mxu0
        %888 = vmatprep.mubr.bf16.mxu0 0
        %889 = vmatmul.mubr.bf16.gmra.mxu0 %v535
        %v890 = vpop.f32.mrf.mxu0
        %v891 = vadd.f32 %v774, %v890
        %v892 = vpop.f32.mrf.mxu0
        %v893 = vpop.f32.mrf.mxu0
        %v894 = vadd.f32 %v774, %v893
        %v895 = vpop.f32.mrf.mxu0
        %896 = vmatprep.mubr.bf16.mxu0 0
        %897 = vmatmul.mubr.bf16.gmra.mxu0 %v536
        %v898 = vpop.f32.mrf.mxu0
        %v899 = vadd.f32 %v774, %v898
        %v900 = vpop.f32.mrf.mxu0
        %v901 = vpop.f32.mrf.mxu0
        %v902 = vadd.f32 %v774, %v901
        %v903 = vpop.f32.mrf.mxu0
        %904 = vmatprep.mubr.bf16.mxu0 0
        %905 = vmatmul.mubr.bf16.gmra.mxu0 %v537
        %v906 = vpop.f32.mrf.mxu0
        %v907 = vadd.f32 %v774, %v906
        %v908 = vpop.f32.mrf.mxu0
        %v909 = vpop.f32.mrf.mxu0
        %v910 = vadd.f32 %v774, %v909
        %v911 = vpop.f32.mrf.mxu0
        %912 = vmatprep.mubr.bf16.mxu0 0
        %913 = vmatmul.mubr.bf16.gmra.mxu0 %v538
        %v914 = vpop.f32.mrf.mxu0
        %v915 = vadd.f32 %v774, %v914
        %v916 = vpop.f32.mrf.mxu0
        %v917 = vpop.f32.mrf.mxu0
        %v918 = vadd.f32 %v774, %v917
        %v919 = vpop.f32.mrf.mxu0
        %920 = vdwg.mxu0
        %v921 = vpack.c.bf16 %v862, %v859
        %v922 = vpack.c.bf16 %v870, %v867
        %v923 = vpack.c.bf16 %v878, %v875
        %v924 = vpack.c.bf16 %v886, %v883
        %v925 = vpack.c.bf16 %v894, %v891
        %v926 = vpack.c.bf16 %v902, %v899
        %v927 = vpack.c.bf16 %v910, %v907
        %v928 = vpack.c.bf16 %v918, %v915
        %v930 = vlaneseq
        %v931 = vshrl.u32 %v930, 7
        %v932 = vsub.s32 0, %v931
        %v933 = vrot.slane %v609, %v932
        %v951 = vunpack.c.l.b16 %v575
        %v952 = vunpack.c.l.b16 %v576
        %v953 = vunpack.c.l.b16 %v577
        %v954 = vunpack.c.l.b16 %v578
        %v955 = vunpack.c.l.b16 %v579
        %v956 = vunpack.c.l.b16 %v580
        %v957 = vunpack.c.l.b16 %v581
        %v958 = vunpack.c.l.b16 %v582
        %v959 = vunpack.c.l.b16 %v583
        %v960 = vunpack.c.l.b16 %v584
        %v961 = vunpack.c.l.b16 %v585
        %v962 = vunpack.c.l.b16 %v586
        %v963 = vunpack.c.l.b16 %v587
        %v964 = vunpack.c.l.b16 %v588
        %v965 = vunpack.c.l.b16 %v589
        %v966 = vunpack.c.l.b16 %v590
        %v967 = vpack.c.b16 %v952, %v951
        %v968 = vpack.c.b16 %v954, %v953
        %v969 = vpack.c.b16 %v956, %v955
        %v970 = vpack.c.b16 %v958, %v957
        %v971 = vpack.c.b16 %v960, %v959
        %v972 = vpack.c.b16 %v962, %v961
        %v973 = vpack.c.b16 %v964, %v963
        %v974 = vpack.c.b16 %v966, %v965
        %983 = vmatprep.subr.bf16.mxu0 0
        %984 = vmatpush1.bf16.msra.mxu0 %v974
        %985 = vmatprep.subr.bf16.mxu0 0
        %986 = vmatpush1.bf16.msra.mxu0 %v973
        %987 = vmatprep.subr.bf16.mxu0 0
        %988 = vmatpush1.bf16.msra.mxu0 %v972
        %989 = vmatprep.subr.bf16.mxu0 0
        %990 = vmatpush1.bf16.msra.mxu0 %v971
        %991 = vmatprep.subr.bf16.mxu0 0
        %992 = vmatpush1.bf16.msra.mxu0 %v970
        %993 = vmatprep.subr.bf16.mxu0 0
        %994 = vmatpush1.bf16.msra.mxu0 %v969
        %995 = vmatprep.subr.bf16.mxu0 0
        %996 = vmatpush1.bf16.msra.mxu0 %v968
        %997 = vmatprep.subr.bf16.mxu0 0
        %998 = vmatpush1.bf16.msra.mxu0 %v967
        %999 = vmatprep.subr.bf16.mxu0 0
        %1000 = vmatpush2.bf16.msra.mxu0 0
        %1001 = vmatprep.subr.bf16.mxu0 0
        %1002 = vmatpush2.bf16.msra.mxu0 0
        %1003 = vmatprep.subr.bf16.mxu0 0
        %1004 = vmatpush2.bf16.msra.mxu0 0
        %1005 = vmatprep.subr.bf16.mxu0 0
        %1006 = vmatpush2.bf16.msra.mxu0 0
        %1007 = vmatprep.subr.bf16.mxu0 0
        %1008 = vmatpush2.bf16.msra.mxu0 0
        %1009 = vmatprep.subr.bf16.mxu0 0
        %1010 = vmatpush2.bf16.msra.mxu0 0
        %1011 = vmatprep.subr.bf16.mxu0 0
        %1012 = vmatpush2.bf16.msra.mxu0 0
        %1013 = vmatprep.subr.bf16.mxu0 0
        %1014 = vmatpush2.bf16.msra.mxu0 0
        %1015 = vmatprep.mubr.bf16.mxu0 0
        %1016 = vmatmul.mubr.bf16.gmra.mxu0 %v539
        %v1017 = vpop.f32.mrf.mxu0
        %v1018 = vadd.f32 %v933, %v1017
        %v1019 = vpop.f32.mrf.mxu0
        %v1020 = vpop.f32.mrf.mxu0
        %v1021 = vadd.f32 %v933, %v1020
        %v1022 = vpop.f32.mrf.mxu0
        %1023 = vmatprep.mubr.bf16.mxu0 0
        %1024 = vmatmul.mubr.bf16.gmra.mxu0 %v540
        %v1025 = vpop.f32.mrf.mxu0
        %v1026 = vadd.f32 %v933, %v1025
        %v1027 = vpop.f32.mrf.mxu0
        %v1028 = vpop.f32.mrf.mxu0
        %v1029 = vadd.f32 %v933, %v1028
        %v1030 = vpop.f32.mrf.mxu0
        %1031 = vmatprep.mubr.bf16.mxu0 0
        %1032 = vmatmul.mubr.bf16.gmra.mxu0 %v541
        %v1033 = vpop.f32.mrf.mxu0
        %v1034 = vadd.f32 %v933, %v1033
        %v1035 = vpop.f32.mrf.mxu0
        %v1036 = vpop.f32.mrf.mxu0
        %v1037 = vadd.f32 %v933, %v1036
        %v1038 = vpop.f32.mrf.mxu0
        %1039 = vmatprep.mubr.bf16.mxu0 0
        %1040 = vmatmul.mubr.bf16.gmra.mxu0 %v542
        %v1041 = vpop.f32.mrf.mxu0
        %v1042 = vadd.f32 %v933, %v1041
        %v1043 = vpop.f32.mrf.mxu0
        %v1044 = vpop.f32.mrf.mxu0
        %v1045 = vadd.f32 %v933, %v1044
        %v1046 = vpop.f32.mrf.mxu0
        %1047 = vmatprep.mubr.bf16.mxu0 0
        %1048 = vmatmul.mubr.bf16.gmra.mxu0 %v535
        %v1049 = vpop.f32.mrf.mxu0
        %v1050 = vadd.f32 %v933, %v1049
        %v1051 = vpop.f32.mrf.mxu0
        %v1052 = vpop.f32.mrf.mxu0
        %v1053 = vadd.f32 %v933, %v1052
        %v1054 = vpop.f32.mrf.mxu0
        %1055 = vmatprep.mubr.bf16.mxu0 0
        %1056 = vmatmul.mubr.bf16.gmra.mxu0 %v536
        %v1057 = vpop.f32.mrf.mxu0
        %v1058 = vadd.f32 %v933, %v1057
        %v1059 = vpop.f32.mrf.mxu0
        %v1060 = vpop.f32.mrf.mxu0
        %v1061 = vadd.f32 %v933, %v1060
        %v1062 = vpop.f32.mrf.mxu0
        %1063 = vmatprep.mubr.bf16.mxu0 0
        %1064 = vmatmul.mubr.bf16.gmra.mxu0 %v537
        %v1065 = vpop.f32.mrf.mxu0
        %v1066 = vadd.f32 %v933, %v1065
        %v1067 = vpop.f32.mrf.mxu0
        %v1068 = vpop.f32.mrf.mxu0
        %v1069 = vadd.f32 %v933, %v1068
        %v1070 = vpop.f32.mrf.mxu0
        %1071 = vmatprep.mubr.bf16.mxu0 0
        %1072 = vmatmul.mubr.bf16.gmra.mxu0 %v538
        %v1073 = vpop.f32.mrf.mxu0
        %v1074 = vadd.f32 %v933, %v1073
        %v1075 = vpop.f32.mrf.mxu0
        %v1076 = vpop.f32.mrf.mxu0
        %v1077 = vadd.f32 %v933, %v1076
        %v1078 = vpop.f32.mrf.mxu0
        %1079 = vdwg.mxu0
        %v1080 = vpack.c.bf16 %v1021, %v1018
        %v1081 = vpack.c.bf16 %v1029, %v1026
        %v1082 = vpack.c.bf16 %v1037, %v1034
        %v1083 = vpack.c.bf16 %v1045, %v1042
        %v1084 = vpack.c.bf16 %v1053, %v1050
        %v1085 = vpack.c.bf16 %v1061, %v1058
        %v1086 = vpack.c.bf16 %v1069, %v1066
        %v1087 = vpack.c.bf16 %v1077, %v1074
        %v1096 = vunpack.c.l.b16 %v762
        %v1097 = vunpack.c.h.b16 %v762
        %v1098 = vunpack.c.l.b16 %v763
        %v1099 = vunpack.c.h.b16 %v763
        %v1100 = vunpack.c.l.b16 %v764
        %v1101 = vunpack.c.h.b16 %v764
        %v1102 = vunpack.c.l.b16 %v765
        %v1103 = vunpack.c.h.b16 %v765
        %v1104 = vunpack.c.l.b16 %v766
        %v1105 = vunpack.c.h.b16 %v766
        %v1106 = vunpack.c.l.b16 %v767
        %v1107 = vunpack.c.h.b16 %v767
        %v1108 = vunpack.c.l.b16 %v768
        %v1109 = vunpack.c.h.b16 %v768
        %v1110 = vunpack.c.l.b16 %v769
        %v1111 = vunpack.c.h.b16 %v769
        %v1112 = vpack.c.b16 %v1096, %v1096
        %v1113 = vpack.c.b16 %v1097, %v1097
        %v1114 = vpack.c.b16 %v1098, %v1098
        %v1115 = vpack.c.b16 %v1099, %v1099
        %v1116 = vpack.c.b16 %v1100, %v1100
        %v1117 = vpack.c.b16 %v1101, %v1101
        %v1118 = vpack.c.b16 %v1102, %v1102
        %v1119 = vpack.c.b16 %v1103, %v1103
        %v1120 = vpack.c.b16 %v1104, %v1104
        %v1121 = vpack.c.b16 %v1105, %v1105
        %v1122 = vpack.c.b16 %v1106, %v1106
        %v1123 = vpack.c.b16 %v1107, %v1107
        %v1124 = vpack.c.b16 %v1108, %v1108
        %v1125 = vpack.c.b16 %v1109, %v1109
        %v1126 = vpack.c.b16 %v1110, %v1110
        %v1127 = vpack.c.b16 %v1111, %v1111
        %v1136 = vunpack.c.l.b16 %v921
        %v1137 = vunpack.c.h.b16 %v921
        %v1138 = vunpack.c.l.b16 %v922
        %v1139 = vunpack.c.h.b16 %v922
        %v1140 = vunpack.c.l.b16 %v923
        %v1141 = vunpack.c.h.b16 %v923
        %v1142 = vunpack.c.l.b16 %v924
        %v1143 = vunpack.c.h.b16 %v924
        %v1144 = vunpack.c.l.b16 %v925
        %v1145 = vunpack.c.h.b16 %v925
        %v1146 = vunpack.c.l.b16 %v926
        %v1147 = vunpack.c.h.b16 %v926
        %v1148 = vunpack.c.l.b16 %v927
        %v1149 = vunpack.c.h.b16 %v927
        %v1150 = vunpack.c.l.b16 %v928
        %v1151 = vunpack.c.h.b16 %v928
        %v1152 = vpack.c.b16 %v1136, %v1136
        %v1153 = vpack.c.b16 %v1137, %v1137
        %v1154 = vpack.c.b16 %v1138, %v1138
        %v1155 = vpack.c.b16 %v1139, %v1139
        %v1156 = vpack.c.b16 %v1140, %v1140
        %v1157 = vpack.c.b16 %v1141, %v1141
        %v1158 = vpack.c.b16 %v1142, %v1142
        %v1159 = vpack.c.b16 %v1143, %v1143
        %v1160 = vpack.c.b16 %v1144, %v1144
        %v1161 = vpack.c.b16 %v1145, %v1145
        %v1162 = vpack.c.b16 %v1146, %v1146
        %v1163 = vpack.c.b16 %v1147, %v1147
        %v1164 = vpack.c.b16 %v1148, %v1148
        %v1165 = vpack.c.b16 %v1149, %v1149
        %v1166 = vpack.c.b16 %v1150, %v1150
        %v1167 = vpack.c.b16 %v1151, %v1151
        %v1176 = vunpack.c.l.b16 %v1080
        %v1177 = vunpack.c.h.b16 %v1080
        %v1178 = vunpack.c.l.b16 %v1081
        %v1179 = vunpack.c.h.b16 %v1081
        %v1180 = vunpack.c.l.b16 %v1082
        %v1181 = vunpack.c.h.b16 %v1082
        %v1182 = vunpack.c.l.b16 %v1083
        %v1183 = vunpack.c.h.b16 %v1083
        %v1184 = vunpack.c.l.b16 %v1084
        %v1185 = vunpack.c.h.b16 %v1084
        %v1186 = vunpack.c.l.b16 %v1085
        %v1187 = vunpack.c.h.b16 %v1085
        %v1188 = vunpack.c.l.b16 %v1086
        %v1189 = vunpack.c.h.b16 %v1086
        %v1190 = vunpack.c.l.b16 %v1087
        %v1191 = vunpack.c.h.b16 %v1087
        %v1192 = vpack.c.b16 %v1176, %v1176
        %v1193 = vpack.c.b16 %v1177, %v1177
        %v1194 = vpack.c.b16 %v1178, %v1178
        %v1195 = vpack.c.b16 %v1179, %v1179
        %v1196 = vpack.c.b16 %v1180, %v1180
        %v1197 = vpack.c.b16 %v1181, %v1181
        %v1198 = vpack.c.b16 %v1182, %v1182
        %v1199 = vpack.c.b16 %v1183, %v1183
        %v1200 = vpack.c.b16 %v1184, %v1184
        %v1201 = vpack.c.b16 %v1185, %v1185
        %v1202 = vpack.c.b16 %v1186, %v1186
        %v1203 = vpack.c.b16 %v1187, %v1187
        %v1204 = vpack.c.b16 %v1188, %v1188
        %v1205 = vpack.c.b16 %v1189, %v1189
        %v1206 = vpack.c.b16 %v1190, %v1190
        %v1207 = vpack.c.b16 %v1191, %v1191
        %vm1208 = vcmask 261120
        %v1210 = vsel %vm1208, %v1112, 0
        %v1213 = vsel %vm1208, %v1152, 0
        %1215 = vmatprep.subr.bf16.mxu0 0
        %1216 = vmatpush1.bf16.xpose.msra.mxu0 0
        %1217 = vmatprep.subr.bf16.mxu0 0
        %1218 = vmatpush1.bf16.xpose.msra.mxu0 0
        %1219 = vmatprep.subr.bf16.mxu0 0
        %1220 = vmatpush1.bf16.xpose.msra.mxu0 0
        %1221 = vmatprep.subr.bf16.mxu0 0
        %1222 = vmatpush1.bf16.xpose.msra.mxu0 0
        %1223 = vmatprep.subr.bf16.mxu0 0
        %1224 = vmatpush1.bf16.xpose.msra.mxu0 0
        %1225 = vmatprep.subr.bf16.mxu0 0
        %1226 = vmatpush1.bf16.xpose.msra.mxu0 0
        %1227 = vmatprep.subr.bf16.mxu0 0
        %1228 = vmatpush1.bf16.xpose.msra.mxu0 0
        %1229 = vmatprep.subr.bf16.mxu0 0
        %1230 = vmatpush1.bf16.xpose.msra.mxu0 %v1213
        %1231 = vmatprep.subr.bf16.mxu0 0
        %1232 = vmatpush2.bf16.xpose.msra.mxu0 0
        %1233 = vmatprep.subr.bf16.mxu0 0
        %1234 = vmatpush2.bf16.xpose.msra.mxu0 0
        %1235 = vmatprep.subr.bf16.mxu0 0
        %1236 = vmatpush2.bf16.xpose.msra.mxu0 0
        %1237 = vmatprep.subr.bf16.mxu0 0
        %1238 = vmatpush2.bf16.xpose.msra.mxu0 0
        %1239 = vmatprep.subr.bf16.mxu0 0
        %1240 = vmatpush2.bf16.xpose.msra.mxu0 0
        %1241 = vmatprep.subr.bf16.mxu0 0
        %1242 = vmatpush2.bf16.xpose.msra.mxu0 0
        %1243 = vmatprep.subr.bf16.mxu0 0
        %1244 = vmatpush2.bf16.xpose.msra.mxu0 0
        %1245 = vmatprep.subr.bf16.mxu0 0
        %1246 = vmatpush2.bf16.xpose.msra.mxu0 0
        %1247 = vmatprep.mubr.bf16.mxu0 0
        %1248 = vmatmul.mubr.bf16.gmra.mxu0 %v1210
        %v1249 = vpop.f32.mrf.mxu0
        %v1250 = vadd.f32 0.0, %v1249
        %v1251 = vpop.f32.mrf.mxu0
        %v1252 = vpop.f32.mrf.mxu0
        %v1253 = vpop.f32.mrf.mxu0
        %1254 = vdwg.mxu0
        %v1256 = vsel %vm1208, %v1113, 0
        %v1259 = vsel %vm1208, %v1153, 0
        %1261 = vmatprep.subr.bf16.mxu0 0
        %1262 = vmatpush1.bf16.xpose.msra.mxu0 0
        %1263 = vmatprep.subr.bf16.mxu0 0
        %1264 = vmatpush1.bf16.xpose.msra.mxu0 0
        %1265 = vmatprep.subr.bf16.mxu0 0
        %1266 = vmatpush1.bf16.xpose.msra.mxu0 0
        %1267 = vmatprep.subr.bf16.mxu0 0
        %1268 = vmatpush1.bf16.xpose.msra.mxu0 0
        %1269 = vmatprep.subr.bf16.mxu0 0
        %1270 = vmatpush1.bf16.xpose.msra.mxu0 0
        %1271 = vmatprep.subr.bf16.mxu0 0
        %1272 = vmatpush1.bf16.xpose.msra.mxu0 0
        %1273 = vmatprep.subr.bf16.mxu0 0
        %1274 = vmatpush1.bf16.xpose.msra.mxu0 0
        %1275 = vmatprep.subr.bf16.mxu0 0
        %1276 = vmatpush1.bf16.xpose.msra.mxu0 %v1259
        %1277 = vmatprep.subr.bf16.mxu0 0
        %1278 = vmatpush2.bf16.xpose.msra.mxu0 0
        %1279 = vmatprep.subr.bf16.mxu0 0
        %1280 = vmatpush2.bf16.xpose.msra.mxu0 0
        %1281 = vmatprep.subr.bf16.mxu0 0
        %1282 = vmatpush2.bf16.xpose.msra.mxu0 0
        %1283 = vmatprep.subr.bf16.mxu0 0
        %1284 = vmatpush2.bf16.xpose.msra.mxu0 0
        %1285 = vmatprep.subr.bf16.mxu0 0
        %1286 = vmatpush2.bf16.xpose.msra.mxu0 0
        %1287 = vmatprep.subr.bf16.mxu0 0
        %1288 = vmatpush2.bf16.xpose.msra.mxu0 0
        %1289 = vmatprep.subr.bf16.mxu0 0
        %1290 = vmatpush2.bf16.xpose.msra.mxu0 0
        %1291 = vmatprep.subr.bf16.mxu0 0
        %1292 = vmatpush2.bf16.xpose.msra.mxu0 0
        %1293 = vmatprep.mubr.bf16.mxu0 0
        %1294 = vmatmul.mubr.bf16.gmra.mxu0 %v1256
        %v1295 = vpop.f32.mrf.mxu0
        %v1296 = vadd.f32 0.0, %v1295
        %v1297 = vpop.f32.mrf.mxu0
        %v1298 = vpop.f32.mrf.mxu0
        %v1299 = vpop.f32.mrf.mxu0
        %1300 = vdwg.mxu0
        %v1302 = vsel %vm1208, %v1114, 0
        %v1305 = vsel %vm1208, %v1154, 0
        %1307 = vmatprep.subr.bf16.mxu0 0
        %1308 = vmatpush1.bf16.xpose.msra.mxu0 0
        %1309 = vmatprep.subr.bf16.mxu0 0
        %1310 = vmatpush1.bf16.xpose.msra.mxu0 0
        %1311 = vmatprep.subr.bf16.mxu0 0
        %1312 = vmatpush1.bf16.xpose.msra.mxu0 0
        %1313 = vmatprep.subr.bf16.mxu0 0
        %1314 = vmatpush1.bf16.xpose.msra.mxu0 0
        %1315 = vmatprep.subr.bf16.mxu0 0
        %1316 = vmatpush1.bf16.xpose.msra.mxu0 0
        %1317 = vmatprep.subr.bf16.mxu0 0
        %1318 = vmatpush1.bf16.xpose.msra.mxu0 0
        %1319 = vmatprep.subr.bf16.mxu0 0
        %1320 = vmatpush1.bf16.xpose.msra.mxu0 0
        %1321 = vmatprep.subr.bf16.mxu0 0
        %1322 = vmatpush1.bf16.xpose.msra.mxu0 %v1305
        %1323 = vmatprep.subr.bf16.mxu0 0
        %1324 = vmatpush2.bf16.xpose.msra.mxu0 0
        %1325 = vmatprep.subr.bf16.mxu0 0
        %1326 = vmatpush2.bf16.xpose.msra.mxu0 0
        %1327 = vmatprep.subr.bf16.mxu0 0
        %1328 = vmatpush2.bf16.xpose.msra.mxu0 0
        %1329 = vmatprep.subr.bf16.mxu0 0
        %1330 = vmatpush2.bf16.xpose.msra.mxu0 0
        %1331 = vmatprep.subr.bf16.mxu0 0
        %1332 = vmatpush2.bf16.xpose.msra.mxu0 0
        %1333 = vmatprep.subr.bf16.mxu0 0
        %1334 = vmatpush2.bf16.xpose.msra.mxu0 0
        %1335 = vmatprep.subr.bf16.mxu0 0
        %1336 = vmatpush2.bf16.xpose.msra.mxu0 0
        %1337 = vmatprep.subr.bf16.mxu0 0
        %1338 = vmatpush2.bf16.xpose.msra.mxu0 0
        %1339 = vmatprep.mubr.bf16.mxu0 0
        %1340 = vmatmul.mubr.bf16.gmra.mxu0 %v1302
        %v1341 = vpop.f32.mrf.mxu0
        %v1342 = vadd.f32 0.0, %v1341
        %v1343 = vpop.f32.mrf.mxu0
        %v1344 = vpop.f32.mrf.mxu0
        %v1345 = vpop.f32.mrf.mxu0
        %1346 = vdwg.mxu0
        %v1348 = vsel %vm1208, %v1115, 0
        %v1351 = vsel %vm1208, %v1155, 0
        %1353 = vmatprep.subr.bf16.mxu0 0
        %1354 = vmatpush1.bf16.xpose.msra.mxu0 0
        %1355 = vmatprep.subr.bf16.mxu0 0
        %1356 = vmatpush1.bf16.xpose.msra.mxu0 0
        %1357 = vmatprep.subr.bf16.mxu0 0
        %1358 = vmatpush1.bf16.xpose.msra.mxu0 0
        %1359 = vmatprep.subr.bf16.mxu0 0
        %1360 = vmatpush1.bf16.xpose.msra.mxu0 0
        %1361 = vmatprep.subr.bf16.mxu0 0
        %1362 = vmatpush1.bf16.xpose.msra.mxu0 0
        %1363 = vmatprep.subr.bf16.mxu0 0
        %1364 = vmatpush1.bf16.xpose.msra.mxu0 0
        %1365 = vmatprep.subr.bf16.mxu0 0
        %1366 = vmatpush1.bf16.xpose.msra.mxu0 0
        %1367 = vmatprep.subr.bf16.mxu0 0
        %1368 = vmatpush1.bf16.xpose.msra.mxu0 %v1351
        %1369 = vmatprep.subr.bf16.mxu0 0
        %1370 = vmatpush2.bf16.xpose.msra.mxu0 0
        %1371 = vmatprep.subr.bf16.mxu0 0
        %1372 = vmatpush2.bf16.xpose.msra.mxu0 0
        %1373 = vmatprep.subr.bf16.mxu0 0
        %1374 = vmatpush2.bf16.xpose.msra.mxu0 0
        %1375 = vmatprep.subr.bf16.mxu0 0
        %1376 = vmatpush2.bf16.xpose.msra.mxu0 0
        %1377 = vmatprep.subr.bf16.mxu0 0
        %1378 = vmatpush2.bf16.xpose.msra.mxu0 0
        %1379 = vmatprep.subr.bf16.mxu0 0
        %1380 = vmatpush2.bf16.xpose.msra.mxu0 0
        %1381 = vmatprep.subr.bf16.mxu0 0
        %1382 = vmatpush2.bf16.xpose.msra.mxu0 0
        %1383 = vmatprep.subr.bf16.mxu0 0
        %1384 = vmatpush2.bf16.xpose.msra.mxu0 0
        %1385 = vmatprep.mubr.bf16.mxu0 0
        %1386 = vmatmul.mubr.bf16.gmra.mxu0 %v1348
        %v1387 = vpop.f32.mrf.mxu0
        %v1388 = vadd.f32 0.0, %v1387
        %v1389 = vpop.f32.mrf.mxu0
        %v1390 = vpop.f32.mrf.mxu0
        %v1391 = vpop.f32.mrf.mxu0
        %1392 = vdwg.mxu0
        %v1394 = vsel %vm1208, %v1116, 0
        %v1397 = vsel %vm1208, %v1156, 0
        %1399 = vmatprep.subr.bf16.mxu0 0
        %1400 = vmatpush1.bf16.xpose.msra.mxu0 0
        %1401 = vmatprep.subr.bf16.mxu0 0
        %1402 = vmatpush1.bf16.xpose.msra.mxu0 0
        %1403 = vmatprep.subr.bf16.mxu0 0
        %1404 = vmatpush1.bf16.xpose.msra.mxu0 0
        %1405 = vmatprep.subr.bf16.mxu0 0
        %1406 = vmatpush1.bf16.xpose.msra.mxu0 0
        %1407 = vmatprep.subr.bf16.mxu0 0
        %1408 = vmatpush1.bf16.xpose.msra.mxu0 0
        %1409 = vmatprep.subr.bf16.mxu0 0
        %1410 = vmatpush1.bf16.xpose.msra.mxu0 0
        %1411 = vmatprep.subr.bf16.mxu0 0
        %1412 = vmatpush1.bf16.xpose.msra.mxu0 0
        %1413 = vmatprep.subr.bf16.mxu0 0
        %1414 = vmatpush1.bf16.xpose.msra.mxu0 %v1397
        %1415 = vmatprep.subr.bf16.mxu0 0
        %1416 = vmatpush2.bf16.xpose.msra.mxu0 0
        %1417 = vmatprep.subr.bf16.mxu0 0
        %1418 = vmatpush2.bf16.xpose.msra.mxu0 0
        %1419 = vmatprep.subr.bf16.mxu0 0
        %1420 = vmatpush2.bf16.xpose.msra.mxu0 0
        %1421 = vmatprep.subr.bf16.mxu0 0
        %1422 = vmatpush2.bf16.xpose.msra.mxu0 0
        %1423 = vmatprep.subr.bf16.mxu0 0
        %1424 = vmatpush2.bf16.xpose.msra.mxu0 0
        %1425 = vmatprep.subr.bf16.mxu0 0
        %1426 = vmatpush2.bf16.xpose.msra.mxu0 0
        %1427 = vmatprep.subr.bf16.mxu0 0
        %1428 = vmatpush2.bf16.xpose.msra.mxu0 0
        %1429 = vmatprep.subr.bf16.mxu0 0
        %1430 = vmatpush2.bf16.xpose.msra.mxu0 0
        %1431 = vmatprep.mubr.bf16.mxu0 0
        %1432 = vmatmul.mubr.bf16.gmra.mxu0 %v1394
        %v1433 = vpop.f32.mrf.mxu0
        %v1434 = vadd.f32 0.0, %v1433
        %v1435 = vpop.f32.mrf.mxu0
        %v1436 = vpop.f32.mrf.mxu0
        %v1437 = vpop.f32.mrf.mxu0
        %1438 = vdwg.mxu0
        %v1440 = vsel %vm1208, %v1117, 0
        %v1443 = vsel %vm1208, %v1157, 0
        %1445 = vmatprep.subr.bf16.mxu0 0
        %1446 = vmatpush1.bf16.xpose.msra.mxu0 0
        %1447 = vmatprep.subr.bf16.mxu0 0
        %1448 = vmatpush1.bf16.xpose.msra.mxu0 0
        %1449 = vmatprep.subr.bf16.mxu0 0
        %1450 = vmatpush1.bf16.xpose.msra.mxu0 0
        %1451 = vmatprep.subr.bf16.mxu0 0
        %1452 = vmatpush1.bf16.xpose.msra.mxu0 0
        %1453 = vmatprep.subr.bf16.mxu0 0
        %1454 = vmatpush1.bf16.xpose.msra.mxu0 0
        %1455 = vmatprep.subr.bf16.mxu0 0
        %1456 = vmatpush1.bf16.xpose.msra.mxu0 0
        %1457 = vmatprep.subr.bf16.mxu0 0
        %1458 = vmatpush1.bf16.xpose.msra.mxu0 0
        %1459 = vmatprep.subr.bf16.mxu0 0
        %1460 = vmatpush1.bf16.xpose.msra.mxu0 %v1443
        %1461 = vmatprep.subr.bf16.mxu0 0
        %1462 = vmatpush2.bf16.xpose.msra.mxu0 0
        %1463 = vmatprep.subr.bf16.mxu0 0
        %1464 = vmatpush2.bf16.xpose.msra.mxu0 0
        %1465 = vmatprep.subr.bf16.mxu0 0
        %1466 = vmatpush2.bf16.xpose.msra.mxu0 0
        %1467 = vmatprep.subr.bf16.mxu0 0
        %1468 = vmatpush2.bf16.xpose.msra.mxu0 0
        %1469 = vmatprep.subr.bf16.mxu0 0
        %1470 = vmatpush2.bf16.xpose.msra.mxu0 0
        %1471 = vmatprep.subr.bf16.mxu0 0
        %1472 = vmatpush2.bf16.xpose.msra.mxu0 0
        %1473 = vmatprep.subr.bf16.mxu0 0
        %1474 = vmatpush2.bf16.xpose.msra.mxu0 0
        %1475 = vmatprep.subr.bf16.mxu0 0
        %1476 = vmatpush2.bf16.xpose.msra.mxu0 0
        %1477 = vmatprep.mubr.bf16.mxu0 0
        %1478 = vmatmul.mubr.bf16.gmra.mxu0 %v1440
        %v1479 = vpop.f32.mrf.mxu0
        %v1480 = vadd.f32 0.0, %v1479
        %v1481 = vpop.f32.mrf.mxu0
        %v1482 = vpop.f32.mrf.mxu0
        %v1483 = vpop.f32.mrf.mxu0
        %1484 = vdwg.mxu0
        %v1486 = vsel %vm1208, %v1118, 0
        %v1489 = vsel %vm1208, %v1158, 0
        %1491 = vmatprep.subr.bf16.mxu0 0
        %1492 = vmatpush1.bf16.xpose.msra.mxu0 0
        %1493 = vmatprep.subr.bf16.mxu0 0
        %1494 = vmatpush1.bf16.xpose.msra.mxu0 0
        %1495 = vmatprep.subr.bf16.mxu0 0
        %1496 = vmatpush1.bf16.xpose.msra.mxu0 0
        %1497 = vmatprep.subr.bf16.mxu0 0
        %1498 = vmatpush1.bf16.xpose.msra.mxu0 0
        %1499 = vmatprep.subr.bf16.mxu0 0
        %1500 = vmatpush1.bf16.xpose.msra.mxu0 0
        %1501 = vmatprep.subr.bf16.mxu0 0
        %1502 = vmatpush1.bf16.xpose.msra.mxu0 0
        %1503 = vmatprep.subr.bf16.mxu0 0
        %1504 = vmatpush1.bf16.xpose.msra.mxu0 0
        %1505 = vmatprep.subr.bf16.mxu0 0
        %1506 = vmatpush1.bf16.xpose.msra.mxu0 %v1489
        %1507 = vmatprep.subr.bf16.mxu0 0
        %1508 = vmatpush2.bf16.xpose.msra.mxu0 0
        %1509 = vmatprep.subr.bf16.mxu0 0
        %1510 = vmatpush2.bf16.xpose.msra.mxu0 0
        %1511 = vmatprep.subr.bf16.mxu0 0
        %1512 = vmatpush2.bf16.xpose.msra.mxu0 0
        %1513 = vmatprep.subr.bf16.mxu0 0
        %1514 = vmatpush2.bf16.xpose.msra.mxu0 0
        %1515 = vmatprep.subr.bf16.mxu0 0
        %1516 = vmatpush2.bf16.xpose.msra.mxu0 0
        %1517 = vmatprep.subr.bf16.mxu0 0
        %1518 = vmatpush2.bf16.xpose.msra.mxu0 0
        %1519 = vmatprep.subr.bf16.mxu0 0
        %1520 = vmatpush2.bf16.xpose.msra.mxu0 0
        %1521 = vmatprep.subr.bf16.mxu0 0
        %1522 = vmatpush2.bf16.xpose.msra.mxu0 0
        %1523 = vmatprep.mubr.bf16.mxu0 0
        %1524 = vmatmul.mubr.bf16.gmra.mxu0 %v1486
        %v1525 = vpop.f32.mrf.mxu0
        %v1526 = vadd.f32 0.0, %v1525
        %v1527 = vpop.f32.mrf.mxu0
        %v1528 = vpop.f32.mrf.mxu0
        %v1529 = vpop.f32.mrf.mxu0
        %1530 = vdwg.mxu0
        %v1532 = vsel %vm1208, %v1119, 0
        %v1535 = vsel %vm1208, %v1159, 0
        %1537 = vmatprep.subr.bf16.mxu0 0
        %1538 = vmatpush1.bf16.xpose.msra.mxu0 0
        %1539 = vmatprep.subr.bf16.mxu0 0
        %1540 = vmatpush1.bf16.xpose.msra.mxu0 0
        %1541 = vmatprep.subr.bf16.mxu0 0
        %1542 = vmatpush1.bf16.xpose.msra.mxu0 0
        %1543 = vmatprep.subr.bf16.mxu0 0
        %1544 = vmatpush1.bf16.xpose.msra.mxu0 0
        %1545 = vmatprep.subr.bf16.mxu0 0
        %1546 = vmatpush1.bf16.xpose.msra.mxu0 0
        %1547 = vmatprep.subr.bf16.mxu0 0
        %1548 = vmatpush1.bf16.xpose.msra.mxu0 0
        %1549 = vmatprep.subr.bf16.mxu0 0
        %1550 = vmatpush1.bf16.xpose.msra.mxu0 0
        %1551 = vmatprep.subr.bf16.mxu0 0
        %1552 = vmatpush1.bf16.xpose.msra.mxu0 %v1535
        %1553 = vmatprep.subr.bf16.mxu0 0
        %1554 = vmatpush2.bf16.xpose.msra.mxu0 0
        %1555 = vmatprep.subr.bf16.mxu0 0
        %1556 = vmatpush2.bf16.xpose.msra.mxu0 0
        %1557 = vmatprep.subr.bf16.mxu0 0
        %1558 = vmatpush2.bf16.xpose.msra.mxu0 0
        %1559 = vmatprep.subr.bf16.mxu0 0
        %1560 = vmatpush2.bf16.xpose.msra.mxu0 0
        %1561 = vmatprep.subr.bf16.mxu0 0
        %1562 = vmatpush2.bf16.xpose.msra.mxu0 0
        %1563 = vmatprep.subr.bf16.mxu0 0
        %1564 = vmatpush2.bf16.xpose.msra.mxu0 0
        %1565 = vmatprep.subr.bf16.mxu0 0
        %1566 = vmatpush2.bf16.xpose.msra.mxu0 0
        %1567 = vmatprep.subr.bf16.mxu0 0
        %1568 = vmatpush2.bf16.xpose.msra.mxu0 0
        %1569 = vmatprep.mubr.bf16.mxu0 0
        %1570 = vmatmul.mubr.bf16.gmra.mxu0 %v1532
        %v1571 = vpop.f32.mrf.mxu0
        %v1572 = vadd.f32 0.0, %v1571
        %v1573 = vpop.f32.mrf.mxu0
        %v1574 = vpop.f32.mrf.mxu0
        %v1575 = vpop.f32.mrf.mxu0
        %1576 = vdwg.mxu0
        %v1578 = vsel %vm1208, %v1120, 0
        %v1581 = vsel %vm1208, %v1160, 0
        %1583 = vmatprep.subr.bf16.mxu0 0
        %1584 = vmatpush1.bf16.xpose.msra.mxu0 0
        %1585 = vmatprep.subr.bf16.mxu0 0
        %1586 = vmatpush1.bf16.xpose.msra.mxu0 0
        %1587 = vmatprep.subr.bf16.mxu0 0
        %1588 = vmatpush1.bf16.xpose.msra.mxu0 0
        %1589 = vmatprep.subr.bf16.mxu0 0
        %1590 = vmatpush1.bf16.xpose.msra.mxu0 0
        %1591 = vmatprep.subr.bf16.mxu0 0
        %1592 = vmatpush1.bf16.xpose.msra.mxu0 0
        %1593 = vmatprep.subr.bf16.mxu0 0
        %1594 = vmatpush1.bf16.xpose.msra.mxu0 0
        %1595 = vmatprep.subr.bf16.mxu0 0
        %1596 = vmatpush1.bf16.xpose.msra.mxu0 0
        %1597 = vmatprep.subr.bf16.mxu0 0
        %1598 = vmatpush1.bf16.xpose.msra.mxu0 %v1581
        %1599 = vmatprep.subr.bf16.mxu0 0
        %1600 = vmatpush2.bf16.xpose.msra.mxu0 0
        %1601 = vmatprep.subr.bf16.mxu0 0
        %1602 = vmatpush2.bf16.xpose.msra.mxu0 0
        %1603 = vmatprep.subr.bf16.mxu0 0
        %1604 = vmatpush2.bf16.xpose.msra.mxu0 0
        %1605 = vmatprep.subr.bf16.mxu0 0
        %1606 = vmatpush2.bf16.xpose.msra.mxu0 0
        %1607 = vmatprep.subr.bf16.mxu0 0
        %1608 = vmatpush2.bf16.xpose.msra.mxu0 0
        %1609 = vmatprep.subr.bf16.mxu0 0
        %1610 = vmatpush2.bf16.xpose.msra.mxu0 0
        %1611 = vmatprep.subr.bf16.mxu0 0
        %1612 = vmatpush2.bf16.xpose.msra.mxu0 0
        %1613 = vmatprep.subr.bf16.mxu0 0
        %1614 = vmatpush2.bf16.xpose.msra.mxu0 0
        %1615 = vmatprep.mubr.bf16.mxu0 0
        %1616 = vmatmul.mubr.bf16.gmra.mxu0 %v1578
        %v1617 = vpop.f32.mrf.mxu0
        %v1618 = vadd.f32 0.0, %v1617
        %v1619 = vpop.f32.mrf.mxu0
        %v1620 = vpop.f32.mrf.mxu0
        %v1621 = vpop.f32.mrf.mxu0
        %1622 = vdwg.mxu0
        %v1624 = vsel %vm1208, %v1121, 0
        %v1627 = vsel %vm1208, %v1161, 0
        %1629 = vmatprep.subr.bf16.mxu0 0
        %1630 = vmatpush1.bf16.xpose.msra.mxu0 0
        %1631 = vmatprep.subr.bf16.mxu0 0
        %1632 = vmatpush1.bf16.xpose.msra.mxu0 0
        %1633 = vmatprep.subr.bf16.mxu0 0
        %1634 = vmatpush1.bf16.xpose.msra.mxu0 0
        %1635 = vmatprep.subr.bf16.mxu0 0
        %1636 = vmatpush1.bf16.xpose.msra.mxu0 0
        %1637 = vmatprep.subr.bf16.mxu0 0
        %1638 = vmatpush1.bf16.xpose.msra.mxu0 0
        %1639 = vmatprep.subr.bf16.mxu0 0
        %1640 = vmatpush1.bf16.xpose.msra.mxu0 0
        %1641 = vmatprep.subr.bf16.mxu0 0
        %1642 = vmatpush1.bf16.xpose.msra.mxu0 0
        %1643 = vmatprep.subr.bf16.mxu0 0
        %1644 = vmatpush1.bf16.xpose.msra.mxu0 %v1627
        %1645 = vmatprep.subr.bf16.mxu0 0
        %1646 = vmatpush2.bf16.xpose.msra.mxu0 0
        %1647 = vmatprep.subr.bf16.mxu0 0
        %1648 = vmatpush2.bf16.xpose.msra.mxu0 0
        %1649 = vmatprep.subr.bf16.mxu0 0
        %1650 = vmatpush2.bf16.xpose.msra.mxu0 0
        %1651 = vmatprep.subr.bf16.mxu0 0
        %1652 = vmatpush2.bf16.xpose.msra.mxu0 0
        %1653 = vmatprep.subr.bf16.mxu0 0
        %1654 = vmatpush2.bf16.xpose.msra.mxu0 0
        %1655 = vmatprep.subr.bf16.mxu0 0
        %1656 = vmatpush2.bf16.xpose.msra.mxu0 0
        %1657 = vmatprep.subr.bf16.mxu0 0
        %1658 = vmatpush2.bf16.xpose.msra.mxu0 0
        %1659 = vmatprep.subr.bf16.mxu0 0
        %1660 = vmatpush2.bf16.xpose.msra.mxu0 0
        %1661 = vmatprep.mubr.bf16.mxu0 0
        %1662 = vmatmul.mubr.bf16.gmra.mxu0 %v1624
        %v1663 = vpop.f32.mrf.mxu0
        %v1664 = vadd.f32 0.0, %v1663
        %v1665 = vpop.f32.mrf.mxu0
        %v1666 = vpop.f32.mrf.mxu0
        %v1667 = vpop.f32.mrf.mxu0
        %1668 = vdwg.mxu0
        %v1670 = vsel %vm1208, %v1122, 0
        %v1673 = vsel %vm1208, %v1162, 0
        %1675 = vmatprep.subr.bf16.mxu0 0
        %1676 = vmatpush1.bf16.xpose.msra.mxu0 0
        %1677 = vmatprep.subr.bf16.mxu0 0
        %1678 = vmatpush1.bf16.xpose.msra.mxu0 0
        %1679 = vmatprep.subr.bf16.mxu0 0
        %1680 = vmatpush1.bf16.xpose.msra.mxu0 0
        %1681 = vmatprep.subr.bf16.mxu0 0
        %1682 = vmatpush1.bf16.xpose.msra.mxu0 0
        %1683 = vmatprep.subr.bf16.mxu0 0
        %1684 = vmatpush1.bf16.xpose.msra.mxu0 0
        %1685 = vmatprep.subr.bf16.mxu0 0
        %1686 = vmatpush1.bf16.xpose.msra.mxu0 0
        %1687 = vmatprep.subr.bf16.mxu0 0
        %1688 = vmatpush1.bf16.xpose.msra.mxu0 0
        %1689 = vmatprep.subr.bf16.mxu0 0
        %1690 = vmatpush1.bf16.xpose.msra.mxu0 %v1673
        %1691 = vmatprep.subr.bf16.mxu0 0
        %1692 = vmatpush2.bf16.xpose.msra.mxu0 0
        %1693 = vmatprep.subr.bf16.mxu0 0
        %1694 = vmatpush2.bf16.xpose.msra.mxu0 0
        %1695 = vmatprep.subr.bf16.mxu0 0
        %1696 = vmatpush2.bf16.xpose.msra.mxu0 0
        %1697 = vmatprep.subr.bf16.mxu0 0
        %1698 = vmatpush2.bf16.xpose.msra.mxu0 0
        %1699 = vmatprep.subr.bf16.mxu0 0
        %1700 = vmatpush2.bf16.xpose.msra.mxu0 0
        %1701 = vmatprep.subr.bf16.mxu0 0
        %1702 = vmatpush2.bf16.xpose.msra.mxu0 0
        %1703 = vmatprep.subr.bf16.mxu0 0
        %1704 = vmatpush2.bf16.xpose.msra.mxu0 0
        %1705 = vmatprep.subr.bf16.mxu0 0
        %1706 = vmatpush2.bf16.xpose.msra.mxu0 0
        %1707 = vmatprep.mubr.bf16.mxu0 0
        %1708 = vmatmul.mubr.bf16.gmra.mxu0 %v1670
        %v1709 = vpop.f32.mrf.mxu0
        %v1710 = vadd.f32 0.0, %v1709
        %v1711 = vpop.f32.mrf.mxu0
        %v1712 = vpop.f32.mrf.mxu0
        %v1713 = vpop.f32.mrf.mxu0
        %1714 = vdwg.mxu0
        %v1716 = vsel %vm1208, %v1123, 0
        %v1719 = vsel %vm1208, %v1163, 0
        %1721 = vmatprep.subr.bf16.mxu0 0
        %1722 = vmatpush1.bf16.xpose.msra.mxu0 0
        %1723 = vmatprep.subr.bf16.mxu0 0
        %1724 = vmatpush1.bf16.xpose.msra.mxu0 0
        %1725 = vmatprep.subr.bf16.mxu0 0
        %1726 = vmatpush1.bf16.xpose.msra.mxu0 0
        %1727 = vmatprep.subr.bf16.mxu0 0
        %1728 = vmatpush1.bf16.xpose.msra.mxu0 0
        %1729 = vmatprep.subr.bf16.mxu0 0
        %1730 = vmatpush1.bf16.xpose.msra.mxu0 0
        %1731 = vmatprep.subr.bf16.mxu0 0
        %1732 = vmatpush1.bf16.xpose.msra.mxu0 0
        %1733 = vmatprep.subr.bf16.mxu0 0
        %1734 = vmatpush1.bf16.xpose.msra.mxu0 0
        %1735 = vmatprep.subr.bf16.mxu0 0
        %1736 = vmatpush1.bf16.xpose.msra.mxu0 %v1719
        %1737 = vmatprep.subr.bf16.mxu0 0
        %1738 = vmatpush2.bf16.xpose.msra.mxu0 0
        %1739 = vmatprep.subr.bf16.mxu0 0
        %1740 = vmatpush2.bf16.xpose.msra.mxu0 0
        %1741 = vmatprep.subr.bf16.mxu0 0
        %1742 = vmatpush2.bf16.xpose.msra.mxu0 0
        %1743 = vmatprep.subr.bf16.mxu0 0
        %1744 = vmatpush2.bf16.xpose.msra.mxu0 0
        %1745 = vmatprep.subr.bf16.mxu0 0
        %1746 = vmatpush2.bf16.xpose.msra.mxu0 0
        %1747 = vmatprep.subr.bf16.mxu0 0
        %1748 = vmatpush2.bf16.xpose.msra.mxu0 0
        %1749 = vmatprep.subr.bf16.mxu0 0
        %1750 = vmatpush2.bf16.xpose.msra.mxu0 0
        %1751 = vmatprep.subr.bf16.mxu0 0
        %1752 = vmatpush2.bf16.xpose.msra.mxu0 0
        %1753 = vmatprep.mubr.bf16.mxu0 0
        %1754 = vmatmul.mubr.bf16.gmra.mxu0 %v1716
        %v1755 = vpop.f32.mrf.mxu0
        %v1756 = vadd.f32 0.0, %v1755
        %v1757 = vpop.f32.mrf.mxu0
        %v1758 = vpop.f32.mrf.mxu0
        %v1759 = vpop.f32.mrf.mxu0
        %1760 = vdwg.mxu0
        %v1762 = vsel %vm1208, %v1124, 0
        %v1765 = vsel %vm1208, %v1164, 0
        %1767 = vmatprep.subr.bf16.mxu0 0
        %1768 = vmatpush1.bf16.xpose.msra.mxu0 0
        %1769 = vmatprep.subr.bf16.mxu0 0
        %1770 = vmatpush1.bf16.xpose.msra.mxu0 0
        %1771 = vmatprep.subr.bf16.mxu0 0
        %1772 = vmatpush1.bf16.xpose.msra.mxu0 0
        %1773 = vmatprep.subr.bf16.mxu0 0
        %1774 = vmatpush1.bf16.xpose.msra.mxu0 0
        %1775 = vmatprep.subr.bf16.mxu0 0
        %1776 = vmatpush1.bf16.xpose.msra.mxu0 0
        %1777 = vmatprep.subr.bf16.mxu0 0
        %1778 = vmatpush1.bf16.xpose.msra.mxu0 0
        %1779 = vmatprep.subr.bf16.mxu0 0
        %1780 = vmatpush1.bf16.xpose.msra.mxu0 0
        %1781 = vmatprep.subr.bf16.mxu0 0
        %1782 = vmatpush1.bf16.xpose.msra.mxu0 %v1765
        %1783 = vmatprep.subr.bf16.mxu0 0
        %1784 = vmatpush2.bf16.xpose.msra.mxu0 0
        %1785 = vmatprep.subr.bf16.mxu0 0
        %1786 = vmatpush2.bf16.xpose.msra.mxu0 0
        %1787 = vmatprep.subr.bf16.mxu0 0
        %1788 = vmatpush2.bf16.xpose.msra.mxu0 0
        %1789 = vmatprep.subr.bf16.mxu0 0
        %1790 = vmatpush2.bf16.xpose.msra.mxu0 0
        %1791 = vmatprep.subr.bf16.mxu0 0
        %1792 = vmatpush2.bf16.xpose.msra.mxu0 0
        %1793 = vmatprep.subr.bf16.mxu0 0
        %1794 = vmatpush2.bf16.xpose.msra.mxu0 0
        %1795 = vmatprep.subr.bf16.mxu0 0
        %1796 = vmatpush2.bf16.xpose.msra.mxu0 0
        %1797 = vmatprep.subr.bf16.mxu0 0
        %1798 = vmatpush2.bf16.xpose.msra.mxu0 0
        %1799 = vmatprep.mubr.bf16.mxu0 0
        %1800 = vmatmul.mubr.bf16.gmra.mxu0 %v1762
        %v1801 = vpop.f32.mrf.mxu0
        %v1802 = vadd.f32 0.0, %v1801
        %v1803 = vpop.f32.mrf.mxu0
        %v1804 = vpop.f32.mrf.mxu0
        %v1805 = vpop.f32.mrf.mxu0
        %1806 = vdwg.mxu0
        %v1808 = vsel %vm1208, %v1125, 0
        %v1811 = vsel %vm1208, %v1165, 0
        %1813 = vmatprep.subr.bf16.mxu0 0
        %1814 = vmatpush1.bf16.xpose.msra.mxu0 0
        %1815 = vmatprep.subr.bf16.mxu0 0
        %1816 = vmatpush1.bf16.xpose.msra.mxu0 0
        %1817 = vmatprep.subr.bf16.mxu0 0
        %1818 = vmatpush1.bf16.xpose.msra.mxu0 0
        %1819 = vmatprep.subr.bf16.mxu0 0
        %1820 = vmatpush1.bf16.xpose.msra.mxu0 0
        %1821 = vmatprep.subr.bf16.mxu0 0
        %1822 = vmatpush1.bf16.xpose.msra.mxu0 0
        %1823 = vmatprep.subr.bf16.mxu0 0
        %1824 = vmatpush1.bf16.xpose.msra.mxu0 0
        %1825 = vmatprep.subr.bf16.mxu0 0
        %1826 = vmatpush1.bf16.xpose.msra.mxu0 0
        %1827 = vmatprep.subr.bf16.mxu0 0
        %1828 = vmatpush1.bf16.xpose.msra.mxu0 %v1811
        %1829 = vmatprep.subr.bf16.mxu0 0
        %1830 = vmatpush2.bf16.xpose.msra.mxu0 0
        %1831 = vmatprep.subr.bf16.mxu0 0
        %1832 = vmatpush2.bf16.xpose.msra.mxu0 0
        %1833 = vmatprep.subr.bf16.mxu0 0
        %1834 = vmatpush2.bf16.xpose.msra.mxu0 0
        %1835 = vmatprep.subr.bf16.mxu0 0
        %1836 = vmatpush2.bf16.xpose.msra.mxu0 0
        %1837 = vmatprep.subr.bf16.mxu0 0
        %1838 = vmatpush2.bf16.xpose.msra.mxu0 0
        %1839 = vmatprep.subr.bf16.mxu0 0
        %1840 = vmatpush2.bf16.xpose.msra.mxu0 0
        %1841 = vmatprep.subr.bf16.mxu0 0
        %1842 = vmatpush2.bf16.xpose.msra.mxu0 0
        %1843 = vmatprep.subr.bf16.mxu0 0
        %1844 = vmatpush2.bf16.xpose.msra.mxu0 0
        %1845 = vmatprep.mubr.bf16.mxu0 0
        %1846 = vmatmul.mubr.bf16.gmra.mxu0 %v1808
        %v1847 = vpop.f32.mrf.mxu0
        %v1848 = vadd.f32 0.0, %v1847
        %v1849 = vpop.f32.mrf.mxu0
        %v1850 = vpop.f32.mrf.mxu0
        %v1851 = vpop.f32.mrf.mxu0
        %1852 = vdwg.mxu0
        %v1854 = vsel %vm1208, %v1126, 0
        %v1857 = vsel %vm1208, %v1166, 0
        %1859 = vmatprep.subr.bf16.mxu0 0
        %1860 = vmatpush1.bf16.xpose.msra.mxu0 0
        %1861 = vmatprep.subr.bf16.mxu0 0
        %1862 = vmatpush1.bf16.xpose.msra.mxu0 0
        %1863 = vmatprep.subr.bf16.mxu0 0
        %1864 = vmatpush1.bf16.xpose.msra.mxu0 0
        %1865 = vmatprep.subr.bf16.mxu0 0
        %1866 = vmatpush1.bf16.xpose.msra.mxu0 0
        %1867 = vmatprep.subr.bf16.mxu0 0
        %1868 = vmatpush1.bf16.xpose.msra.mxu0 0
        %1869 = vmatprep.subr.bf16.mxu0 0
        %1870 = vmatpush1.bf16.xpose.msra.mxu0 0
        %1871 = vmatprep.subr.bf16.mxu0 0
        %1872 = vmatpush1.bf16.xpose.msra.mxu0 0
        %1873 = vmatprep.subr.bf16.mxu0 0
        %1874 = vmatpush1.bf16.xpose.msra.mxu0 %v1857
        %1875 = vmatprep.subr.bf16.mxu0 0
        %1876 = vmatpush2.bf16.xpose.msra.mxu0 0
        %1877 = vmatprep.subr.bf16.mxu0 0
        %1878 = vmatpush2.bf16.xpose.msra.mxu0 0
        %1879 = vmatprep.subr.bf16.mxu0 0
        %1880 = vmatpush2.bf16.xpose.msra.mxu0 0
        %1881 = vmatprep.subr.bf16.mxu0 0
        %1882 = vmatpush2.bf16.xpose.msra.mxu0 0
        %1883 = vmatprep.subr.bf16.mxu0 0
        %1884 = vmatpush2.bf16.xpose.msra.mxu0 0
        %1885 = vmatprep.subr.bf16.mxu0 0
        %1886 = vmatpush2.bf16.xpose.msra.mxu0 0
        %1887 = vmatprep.subr.bf16.mxu0 0
        %1888 = vmatpush2.bf16.xpose.msra.mxu0 0
        %1889 = vmatprep.subr.bf16.mxu0 0
        %1890 = vmatpush2.bf16.xpose.msra.mxu0 0
        %1891 = vmatprep.mubr.bf16.mxu0 0
        %1892 = vmatmul.mubr.bf16.gmra.mxu0 %v1854
        %v1893 = vpop.f32.mrf.mxu0
        %v1894 = vadd.f32 0.0, %v1893
        %v1895 = vpop.f32.mrf.mxu0
        %v1896 = vpop.f32.mrf.mxu0
        %v1897 = vpop.f32.mrf.mxu0
        %1898 = vdwg.mxu0
        %v1900 = vsel %vm1208, %v1127, 0
        %v1903 = vsel %vm1208, %v1167, 0
        %1905 = vmatprep.subr.bf16.mxu0 0
        %1906 = vmatpush1.bf16.xpose.msra.mxu0 0
        %1907 = vmatprep.subr.bf16.mxu0 0
        %1908 = vmatpush1.bf16.xpose.msra.mxu0 0
        %1909 = vmatprep.subr.bf16.mxu0 0
        %1910 = vmatpush1.bf16.xpose.msra.mxu0 0
        %1911 = vmatprep.subr.bf16.mxu0 0
        %1912 = vmatpush1.bf16.xpose.msra.mxu0 0
        %1913 = vmatprep.subr.bf16.mxu0 0
        %1914 = vmatpush1.bf16.xpose.msra.mxu0 0
        %1915 = vmatprep.subr.bf16.mxu0 0
        %1916 = vmatpush1.bf16.xpose.msra.mxu0 0
        %1917 = vmatprep.subr.bf16.mxu0 0
        %1918 = vmatpush1.bf16.xpose.msra.mxu0 0
        %1919 = vmatprep.subr.bf16.mxu0 0
        %1920 = vmatpush1.bf16.xpose.msra.mxu0 %v1903
        %1921 = vmatprep.subr.bf16.mxu0 0
        %1922 = vmatpush2.bf16.xpose.msra.mxu0 0
        %1923 = vmatprep.subr.bf16.mxu0 0
        %1924 = vmatpush2.bf16.xpose.msra.mxu0 0
        %1925 = vmatprep.subr.bf16.mxu0 0
        %1926 = vmatpush2.bf16.xpose.msra.mxu0 0
        %1927 = vmatprep.subr.bf16.mxu0 0
        %1928 = vmatpush2.bf16.xpose.msra.mxu0 0
        %1929 = vmatprep.subr.bf16.mxu0 0
        %1930 = vmatpush2.bf16.xpose.msra.mxu0 0
        %1931 = vmatprep.subr.bf16.mxu0 0
        %1932 = vmatpush2.bf16.xpose.msra.mxu0 0
        %1933 = vmatprep.subr.bf16.mxu0 0
        %1934 = vmatpush2.bf16.xpose.msra.mxu0 0
        %1935 = vmatprep.subr.bf16.mxu0 0
        %1936 = vmatpush2.bf16.xpose.msra.mxu0 0
        %1937 = vmatprep.mubr.bf16.mxu0 0
        %1938 = vmatmul.mubr.bf16.gmra.mxu0 %v1900
        %v1939 = vpop.f32.mrf.mxu0
        %v1940 = vadd.f32 0.0, %v1939
        %v1941 = vpop.f32.mrf.mxu0
        %v1942 = vpop.f32.mrf.mxu0
        %v1943 = vpop.f32.mrf.mxu0
        %1944 = vdwg.mxu0
        %v1945 = vmul.f32 %v1250, 0.17677669
        %v1946 = vmul.f32 %v1296, 0.17677669
        %v1947 = vmul.f32 %v1342, 0.17677669
        %v1948 = vmul.f32 %v1388, 0.17677669
        %v1949 = vmul.f32 %v1434, 0.17677669
        %v1950 = vmul.f32 %v1480, 0.17677669
        %v1951 = vmul.f32 %v1526, 0.17677669
        %v1952 = vmul.f32 %v1572, 0.17677669
        %v1953 = vmul.f32 %v1618, 0.17677669
        %v1954 = vmul.f32 %v1664, 0.17677669
        %v1955 = vmul.f32 %v1710, 0.17677669
        %v1956 = vmul.f32 %v1756, 0.17677669
        %v1957 = vmul.f32 %v1802, 0.17677669
        %v1958 = vmul.f32 %v1848, 0.17677669
        %v1959 = vmul.f32 %v1894, 0.17677669
        %v1960 = vmul.f32 %v1940, 0.17677669
        %vm1961 = vcmask 64512
        %v1962 = vsel %vm1961, %v1945, -inf
        %1963 = vmax.xlane.f32.xlu0 %v1962
        %v1964 = vpop.xlane.xlu0 %1963
        %v1965 = vsel %vm1961, %v1946, -inf
        %1966 = vmax.xlane.f32.xlu0 %v1965
        %v1967 = vpop.xlane.xlu0 %1966
        %v1968 = vsel %vm1961, %v1947, -inf
        %1969 = vmax.xlane.f32.xlu0 %v1968
        %v1970 = vpop.xlane.xlu0 %1969
        %v1971 = vsel %vm1961, %v1948, -inf
        %1972 = vmax.xlane.f32.xlu0 %v1971
        %v1973 = vpop.xlane.xlu0 %1972
        %v1974 = vsel %vm1961, %v1949, -inf
        %1975 = vmax.xlane.f32.xlu0 %v1974
        %v1976 = vpop.xlane.xlu0 %1975
        %v1977 = vsel %vm1961, %v1950, -inf
        %1978 = vmax.xlane.f32.xlu0 %v1977
        %v1979 = vpop.xlane.xlu0 %1978
        %v1980 = vsel %vm1961, %v1951, -inf
        %1981 = vmax.xlane.f32.xlu0 %v1980
        %v1982 = vpop.xlane.xlu0 %1981
        %v1983 = vsel %vm1961, %v1952, -inf
        %1984 = vmax.xlane.f32.xlu0 %v1983
        %v1985 = vpop.xlane.xlu0 %1984
        %v1986 = vsel %vm1961, %v1953, -inf
        %1987 = vmax.xlane.f32.xlu0 %v1986
        %v1988 = vpop.xlane.xlu0 %1987
        %v1989 = vsel %vm1961, %v1954, -inf
        %1990 = vmax.xlane.f32.xlu0 %v1989
        %v1991 = vpop.xlane.xlu0 %1990
        %v1992 = vsel %vm1961, %v1955, -inf
        %1993 = vmax.xlane.f32.xlu0 %v1992
        %v1994 = vpop.xlane.xlu0 %1993
        %v1995 = vsel %vm1961, %v1956, -inf
        %1996 = vmax.xlane.f32.xlu0 %v1995
        %v1997 = vpop.xlane.xlu0 %1996
        %v1998 = vsel %vm1961, %v1957, -inf
        %1999 = vmax.xlane.f32.xlu0 %v1998
        %v2000 = vpop.xlane.xlu0 %1999
        %v2001 = vsel %vm1961, %v1958, -inf
        %2002 = vmax.xlane.f32.xlu0 %v2001
        %v2003 = vpop.xlane.xlu0 %2002
        %v2004 = vsel %vm1961, %v1959, -inf
        %2005 = vmax.xlane.f32.xlu0 %v2004
        %v2006 = vpop.xlane.xlu0 %2005
        %v2007 = vsel %vm1961, %v1960, -inf
        %2008 = vmax.xlane.f32.xlu0 %v2007
        %v2009 = vpop.xlane.xlu0 %2008
        %v2010 = vsub.f32 %v1945, %v1964
        %v2011 = vsub.f32 %v1946, %v1967
        %v2012 = vsub.f32 %v1947, %v1970
        %v2013 = vsub.f32 %v1948, %v1973
        %v2014 = vsub.f32 %v1949, %v1976
        %v2015 = vsub.f32 %v1950, %v1979
        %v2016 = vsub.f32 %v1951, %v1982
        %v2017 = vsub.f32 %v1952, %v1985
        %v2018 = vsub.f32 %v1953, %v1988
        %v2019 = vsub.f32 %v1954, %v1991
        %v2020 = vsub.f32 %v1955, %v1994
        %v2021 = vsub.f32 %v1956, %v1997
        %v2022 = vsub.f32 %v1957, %v2000
        %v2023 = vsub.f32 %v1958, %v2003
        %v2024 = vsub.f32 %v1959, %v2006
        %v2025 = vsub.f32 %v1960, %v2009
        %v2026 = vmul.f32 %v2010, 1.442695
        %v2027 = vpow.pop %v2026
        %v2028 = vmul.f32 %v2011, 1.442695
        %v2029 = vpow.pop %v2028
        %v2030 = vmul.f32 %v2012, 1.442695
        %v2031 = vpow.pop %v2030
        %v2032 = vmul.f32 %v2013, 1.442695
        %v2033 = vpow.pop %v2032
        %v2034 = vmul.f32 %v2014, 1.442695
        %v2035 = vpow.pop %v2034
        %v2036 = vmul.f32 %v2015, 1.442695
        %v2037 = vpow.pop %v2036
        %v2038 = vmul.f32 %v2016, 1.442695
        %v2039 = vpow.pop %v2038
        %v2040 = vmul.f32 %v2017, 1.442695
        %v2041 = vpow.pop %v2040
        %v2042 = vmul.f32 %v2018, 1.442695
        %v2043 = vpow.pop %v2042
        %v2044 = vmul.f32 %v2019, 1.442695
        %v2045 = vpow.pop %v2044
        %v2046 = vmul.f32 %v2020, 1.442695
        %v2047 = vpow.pop %v2046
        %v2048 = vmul.f32 %v2021, 1.442695
        %v2049 = vpow.pop %v2048
        %v2050 = vmul.f32 %v2022, 1.442695
        %v2051 = vpow.pop %v2050
        %v2052 = vmul.f32 %v2023, 1.442695
        %v2053 = vpow.pop %v2052
        %v2054 = vmul.f32 %v2024, 1.442695
        %v2055 = vpow.pop %v2054
        %v2056 = vmul.f32 %v2025, 1.442695
        %v2057 = vpow.pop %v2056
        %v2058 = vsel %vm1961, %v2027, 0.0
        %2059 = vadd.xlane.f32.xlu0 %v2058
        %v2060 = vpop.xlane.xlu0 %2059
        %v2061 = vsel %vm1961, %v2029, 0.0
        %2062 = vadd.xlane.f32.xlu0 %v2061
        %v2063 = vpop.xlane.xlu0 %2062
        %v2064 = vsel %vm1961, %v2031, 0.0
        %2065 = vadd.xlane.f32.xlu0 %v2064
        %v2066 = vpop.xlane.xlu0 %2065
        %v2067 = vsel %vm1961, %v2033, 0.0
        %2068 = vadd.xlane.f32.xlu0 %v2067
        %v2069 = vpop.xlane.xlu0 %2068
        %v2070 = vsel %vm1961, %v2035, 0.0
        %2071 = vadd.xlane.f32.xlu0 %v2070
        %v2072 = vpop.xlane.xlu0 %2071
        %v2073 = vsel %vm1961, %v2037, 0.0
        %2074 = vadd.xlane.f32.xlu0 %v2073
        %v2075 = vpop.xlane.xlu0 %2074
        %v2076 = vsel %vm1961, %v2039, 0.0
        %2077 = vadd.xlane.f32.xlu0 %v2076
        %v2078 = vpop.xlane.xlu0 %2077
        %v2079 = vsel %vm1961, %v2041, 0.0
        %2080 = vadd.xlane.f32.xlu0 %v2079
        %v2081 = vpop.xlane.xlu0 %2080
        %v2082 = vsel %vm1961, %v2043, 0.0
        %2083 = vadd.xlane.f32.xlu0 %v2082
        %v2084 = vpop.xlane.xlu0 %2083
        %v2085 = vsel %vm1961, %v2045, 0.0
        %2086 = vadd.xlane.f32.xlu0 %v2085
        %v2087 = vpop.xlane.xlu0 %2086
        %v2088 = vsel %vm1961, %v2047, 0.0
        %2089 = vadd.xlane.f32.xlu0 %v2088
        %v2090 = vpop.xlane.xlu0 %2089
        %v2091 = vsel %vm1961, %v2049, 0.0
        %2092 = vadd.xlane.f32.xlu0 %v2091
        %v2093 = vpop.xlane.xlu0 %2092
        %v2094 = vsel %vm1961, %v2051, 0.0
        %2095 = vadd.xlane.f32.xlu0 %v2094
        %v2096 = vpop.xlane.xlu0 %2095
        %v2097 = vsel %vm1961, %v2053, 0.0
        %2098 = vadd.xlane.f32.xlu0 %v2097
        %v2099 = vpop.xlane.xlu0 %2098
        %v2100 = vsel %vm1961, %v2055, 0.0
        %2101 = vadd.xlane.f32.xlu0 %v2100
        %v2102 = vpop.xlane.xlu0 %2101
        %v2103 = vsel %vm1961, %v2057, 0.0
        %2104 = vadd.xlane.f32.xlu0 %v2103
        %v2105 = vpop.xlane.xlu0 %2104
        %v2106 = vrcp.pop %v2060
        %v2107 = vrcp.pop %v2063
        %v2108 = vrcp.pop %v2066
        %v2109 = vrcp.pop %v2069
        %v2110 = vrcp.pop %v2072
        %v2111 = vrcp.pop %v2075
        %v2112 = vrcp.pop %v2078
        %v2113 = vrcp.pop %v2081
        %v2114 = vrcp.pop %v2084
        %v2115 = vrcp.pop %v2087
        %v2116 = vrcp.pop %v2090
        %v2117 = vrcp.pop %v2093
        %v2118 = vrcp.pop %v2096
        %v2119 = vrcp.pop %v2099
        %v2120 = vrcp.pop %v2102
        %v2121 = vrcp.pop %v2105
        %v2122 = vmul.f32 %v2027, %v2106
        %v2123 = vmul.f32 %v2029, %v2107
        %v2124 = vmul.f32 %v2031, %v2108
        %v2125 = vmul.f32 %v2033, %v2109
        %v2126 = vmul.f32 %v2035, %v2110
        %v2127 = vmul.f32 %v2037, %v2111
        %v2128 = vmul.f32 %v2039, %v2112
        %v2129 = vmul.f32 %v2041, %v2113
        %v2130 = vmul.f32 %v2043, %v2114
        %v2131 = vmul.f32 %v2045, %v2115
        %v2132 = vmul.f32 %v2047, %v2116
        %v2133 = vmul.f32 %v2049, %v2117
        %v2134 = vmul.f32 %v2051, %v2118
        %v2135 = vmul.f32 %v2053, %v2119
        %v2136 = vmul.f32 %v2055, %v2120
        %v2137 = vmul.f32 %v2057, %v2121
        %v2138 = vpack.c.bf16 %v2122, %v2122
        %v2139 = vpack.c.bf16 %v2123, %v2123
        %v2140 = vpack.c.bf16 %v2124, %v2124
        %v2141 = vpack.c.bf16 %v2125, %v2125
        %v2142 = vpack.c.bf16 %v2126, %v2126
        %v2143 = vpack.c.bf16 %v2127, %v2127
        %v2144 = vpack.c.bf16 %v2128, %v2128
        %v2145 = vpack.c.bf16 %v2129, %v2129
        %v2146 = vpack.c.bf16 %v2130, %v2130
        %v2147 = vpack.c.bf16 %v2131, %v2131
        %v2148 = vpack.c.bf16 %v2132, %v2132
        %v2149 = vpack.c.bf16 %v2133, %v2133
        %v2150 = vpack.c.bf16 %v2134, %v2134
        %v2151 = vpack.c.bf16 %v2135, %v2135
        %v2152 = vpack.c.bf16 %v2136, %v2136
        %v2153 = vpack.c.bf16 %v2137, %v2137
        %v2155 = vsel %vm1961, %v2138, 0
        %vm2157 = vcmask 1043456
        %v2159 = vsel %vm2157, %v1192, 0
        %2161 = vmatprep.subr.bf16.mxu0 0
        %2162 = vmatpush1.bf16.msra.mxu0 0
        %2163 = vmatprep.subr.bf16.mxu0 0
        %2164 = vmatpush1.bf16.msra.mxu0 0
        %2165 = vmatprep.subr.bf16.mxu0 0
        %2166 = vmatpush1.bf16.msra.mxu0 0
        %2167 = vmatprep.subr.bf16.mxu0 0
        %2168 = vmatpush1.bf16.msra.mxu0 0
        %2169 = vmatprep.subr.bf16.mxu0 0
        %2170 = vmatpush1.bf16.msra.mxu0 0
        %2171 = vmatprep.subr.bf16.mxu0 0
        %2172 = vmatpush1.bf16.msra.mxu0 0
        %2173 = vmatprep.subr.bf16.mxu0 0
        %2174 = vmatpush1.bf16.msra.mxu0 0
        %2175 = vmatprep.subr.bf16.mxu0 0
        %2176 = vmatpush1.bf16.msra.mxu0 %v2159
        %2177 = vmatprep.subr.bf16.mxu0 0
        %2178 = vmatpush2.bf16.msra.mxu0 0
        %2179 = vmatprep.subr.bf16.mxu0 0
        %2180 = vmatpush2.bf16.msra.mxu0 0
        %2181 = vmatprep.subr.bf16.mxu0 0
        %2182 = vmatpush2.bf16.msra.mxu0 0
        %2183 = vmatprep.subr.bf16.mxu0 0
        %2184 = vmatpush2.bf16.msra.mxu0 0
        %2185 = vmatprep.subr.bf16.mxu0 0
        %2186 = vmatpush2.bf16.msra.mxu0 0
        %2187 = vmatprep.subr.bf16.mxu0 0
        %2188 = vmatpush2.bf16.msra.mxu0 0
        %2189 = vmatprep.subr.bf16.mxu0 0
        %2190 = vmatpush2.bf16.msra.mxu0 0
        %2191 = vmatprep.subr.bf16.mxu0 0
        %2192 = vmatpush2.bf16.msra.mxu0 0
        %2193 = vmatprep.mubr.bf16.mxu0 0
        %2194 = vmatmul.mubr.bf16.gmra.mxu0 %v2155
        %v2195 = vpop.f32.mrf.mxu0
        %v2196 = vadd.f32 0.0, %v2195
        %v2197 = vpop.f32.mrf.mxu0
        %v2198 = vpop.f32.mrf.mxu0
        %v2199 = vpop.f32.mrf.mxu0
        %2200 = vdwg.mxu0
        %v2202 = vsel %vm1961, %v2139, 0
        %v2205 = vsel %vm2157, %v1193, 0
        %2207 = vmatprep.subr.bf16.mxu0 0
        %2208 = vmatpush1.bf16.msra.mxu0 0
        %2209 = vmatprep.subr.bf16.mxu0 0
        %2210 = vmatpush1.bf16.msra.mxu0 0
        %2211 = vmatprep.subr.bf16.mxu0 0
        %2212 = vmatpush1.bf16.msra.mxu0 0
        %2213 = vmatprep.subr.bf16.mxu0 0
        %2214 = vmatpush1.bf16.msra.mxu0 0
        %2215 = vmatprep.subr.bf16.mxu0 0
        %2216 = vmatpush1.bf16.msra.mxu0 0
        %2217 = vmatprep.subr.bf16.mxu0 0
        %2218 = vmatpush1.bf16.msra.mxu0 0
        %2219 = vmatprep.subr.bf16.mxu0 0
        %2220 = vmatpush1.bf16.msra.mxu0 0
        %2221 = vmatprep.subr.bf16.mxu0 0
        %2222 = vmatpush1.bf16.msra.mxu0 %v2205
        %2223 = vmatprep.subr.bf16.mxu0 0
        %2224 = vmatpush2.bf16.msra.mxu0 0
        %2225 = vmatprep.subr.bf16.mxu0 0
        %2226 = vmatpush2.bf16.msra.mxu0 0
        %2227 = vmatprep.subr.bf16.mxu0 0
        %2228 = vmatpush2.bf16.msra.mxu0 0
        %2229 = vmatprep.subr.bf16.mxu0 0
        %2230 = vmatpush2.bf16.msra.mxu0 0
        %2231 = vmatprep.subr.bf16.mxu0 0
        %2232 = vmatpush2.bf16.msra.mxu0 0
        %2233 = vmatprep.subr.bf16.mxu0 0
        %2234 = vmatpush2.bf16.msra.mxu0 0
        %2235 = vmatprep.subr.bf16.mxu0 0
        %2236 = vmatpush2.bf16.msra.mxu0 0
        %2237 = vmatprep.subr.bf16.mxu0 0
        %2238 = vmatpush2.bf16.msra.mxu0 0
        %2239 = vmatprep.mubr.bf16.mxu0 0
        %2240 = vmatmul.mubr.bf16.gmra.mxu0 %v2202
        %v2241 = vpop.f32.mrf.mxu0
        %v2242 = vadd.f32 0.0, %v2241
        %v2243 = vpop.f32.mrf.mxu0
        %v2244 = vpop.f32.mrf.mxu0
        %v2245 = vpop.f32.mrf.mxu0
        %2246 = vdwg.mxu0
        %v2248 = vsel %vm1961, %v2140, 0
        %v2251 = vsel %vm2157, %v1194, 0
        %2253 = vmatprep.subr.bf16.mxu0 0
        %2254 = vmatpush1.bf16.msra.mxu0 0
        %2255 = vmatprep.subr.bf16.mxu0 0
        %2256 = vmatpush1.bf16.msra.mxu0 0
        %2257 = vmatprep.subr.bf16.mxu0 0
        %2258 = vmatpush1.bf16.msra.mxu0 0
        %2259 = vmatprep.subr.bf16.mxu0 0
        %2260 = vmatpush1.bf16.msra.mxu0 0
        %2261 = vmatprep.subr.bf16.mxu0 0
        %2262 = vmatpush1.bf16.msra.mxu0 0
        %2263 = vmatprep.subr.bf16.mxu0 0
        %2264 = vmatpush1.bf16.msra.mxu0 0
        %2265 = vmatprep.subr.bf16.mxu0 0
        %2266 = vmatpush1.bf16.msra.mxu0 0
        %2267 = vmatprep.subr.bf16.mxu0 0
        %2268 = vmatpush1.bf16.msra.mxu0 %v2251
        %2269 = vmatprep.subr.bf16.mxu0 0
        %2270 = vmatpush2.bf16.msra.mxu0 0
        %2271 = vmatprep.subr.bf16.mxu0 0
        %2272 = vmatpush2.bf16.msra.mxu0 0
        %2273 = vmatprep.subr.bf16.mxu0 0
        %2274 = vmatpush2.bf16.msra.mxu0 0
        %2275 = vmatprep.subr.bf16.mxu0 0
        %2276 = vmatpush2.bf16.msra.mxu0 0
        %2277 = vmatprep.subr.bf16.mxu0 0
        %2278 = vmatpush2.bf16.msra.mxu0 0
        %2279 = vmatprep.subr.bf16.mxu0 0
        %2280 = vmatpush2.bf16.msra.mxu0 0
        %2281 = vmatprep.subr.bf16.mxu0 0
        %2282 = vmatpush2.bf16.msra.mxu0 0
        %2283 = vmatprep.subr.bf16.mxu0 0
        %2284 = vmatpush2.bf16.msra.mxu0 0
        %2285 = vmatprep.mubr.bf16.mxu0 0
        %2286 = vmatmul.mubr.bf16.gmra.mxu0 %v2248
        %v2287 = vpop.f32.mrf.mxu0
        %v2288 = vadd.f32 0.0, %v2287
        %v2289 = vpop.f32.mrf.mxu0
        %v2290 = vpop.f32.mrf.mxu0
        %v2291 = vpop.f32.mrf.mxu0
        %2292 = vdwg.mxu0
        %v2294 = vsel %vm1961, %v2141, 0
        %v2297 = vsel %vm2157, %v1195, 0
        %2299 = vmatprep.subr.bf16.mxu0 0
        %2300 = vmatpush1.bf16.msra.mxu0 0
        %2301 = vmatprep.subr.bf16.mxu0 0
        %2302 = vmatpush1.bf16.msra.mxu0 0
        %2303 = vmatprep.subr.bf16.mxu0 0
        %2304 = vmatpush1.bf16.msra.mxu0 0
        %2305 = vmatprep.subr.bf16.mxu0 0
        %2306 = vmatpush1.bf16.msra.mxu0 0
        %2307 = vmatprep.subr.bf16.mxu0 0
        %2308 = vmatpush1.bf16.msra.mxu0 0
        %2309 = vmatprep.subr.bf16.mxu0 0
        %2310 = vmatpush1.bf16.msra.mxu0 0
        %2311 = vmatprep.subr.bf16.mxu0 0
        %2312 = vmatpush1.bf16.msra.mxu0 0
        %2313 = vmatprep.subr.bf16.mxu0 0
        %2314 = vmatpush1.bf16.msra.mxu0 %v2297
        %2315 = vmatprep.subr.bf16.mxu0 0
        %2316 = vmatpush2.bf16.msra.mxu0 0
        %2317 = vmatprep.subr.bf16.mxu0 0
        %2318 = vmatpush2.bf16.msra.mxu0 0
        %2319 = vmatprep.subr.bf16.mxu0 0
        %2320 = vmatpush2.bf16.msra.mxu0 0
        %2321 = vmatprep.subr.bf16.mxu0 0
        %2322 = vmatpush2.bf16.msra.mxu0 0
        %2323 = vmatprep.subr.bf16.mxu0 0
        %2324 = vmatpush2.bf16.msra.mxu0 0
        %2325 = vmatprep.subr.bf16.mxu0 0
        %2326 = vmatpush2.bf16.msra.mxu0 0
        %2327 = vmatprep.subr.bf16.mxu0 0
        %2328 = vmatpush2.bf16.msra.mxu0 0
        %2329 = vmatprep.subr.bf16.mxu0 0
        %2330 = vmatpush2.bf16.msra.mxu0 0
        %2331 = vmatprep.mubr.bf16.mxu0 0
        %2332 = vmatmul.mubr.bf16.gmra.mxu0 %v2294
        %v2333 = vpop.f32.mrf.mxu0
        %v2334 = vadd.f32 0.0, %v2333
        %v2335 = vpop.f32.mrf.mxu0
        %v2336 = vpop.f32.mrf.mxu0
        %v2337 = vpop.f32.mrf.mxu0
        %2338 = vdwg.mxu0
        %v2340 = vsel %vm1961, %v2142, 0
        %v2343 = vsel %vm2157, %v1196, 0
        %2345 = vmatprep.subr.bf16.mxu0 0
        %2346 = vmatpush1.bf16.msra.mxu0 0
        %2347 = vmatprep.subr.bf16.mxu0 0
        %2348 = vmatpush1.bf16.msra.mxu0 0
        %2349 = vmatprep.subr.bf16.mxu0 0
        %2350 = vmatpush1.bf16.msra.mxu0 0
        %2351 = vmatprep.subr.bf16.mxu0 0
        %2352 = vmatpush1.bf16.msra.mxu0 0
        %2353 = vmatprep.subr.bf16.mxu0 0
        %2354 = vmatpush1.bf16.msra.mxu0 0
        %2355 = vmatprep.subr.bf16.mxu0 0
        %2356 = vmatpush1.bf16.msra.mxu0 0
        %2357 = vmatprep.subr.bf16.mxu0 0
        %2358 = vmatpush1.bf16.msra.mxu0 0
        %2359 = vmatprep.subr.bf16.mxu0 0
        %2360 = vmatpush1.bf16.msra.mxu0 %v2343
        %2361 = vmatprep.subr.bf16.mxu0 0
        %2362 = vmatpush2.bf16.msra.mxu0 0
        %2363 = vmatprep.subr.bf16.mxu0 0
        %2364 = vmatpush2.bf16.msra.mxu0 0
        %2365 = vmatprep.subr.bf16.mxu0 0
        %2366 = vmatpush2.bf16.msra.mxu0 0
        %2367 = vmatprep.subr.bf16.mxu0 0
        %2368 = vmatpush2.bf16.msra.mxu0 0
        %2369 = vmatprep.subr.bf16.mxu0 0
        %2370 = vmatpush2.bf16.msra.mxu0 0
        %2371 = vmatprep.subr.bf16.mxu0 0
        %2372 = vmatpush2.bf16.msra.mxu0 0
        %2373 = vmatprep.subr.bf16.mxu0 0
        %2374 = vmatpush2.bf16.msra.mxu0 0
        %2375 = vmatprep.subr.bf16.mxu0 0
        %2376 = vmatpush2.bf16.msra.mxu0 0
        %2377 = vmatprep.mubr.bf16.mxu0 0
        %2378 = vmatmul.mubr.bf16.gmra.mxu0 %v2340
        %v2379 = vpop.f32.mrf.mxu0
        %v2380 = vadd.f32 0.0, %v2379
        %v2381 = vpop.f32.mrf.mxu0
        %v2382 = vpop.f32.mrf.mxu0
        %v2383 = vpop.f32.mrf.mxu0
        %2384 = vdwg.mxu0
        %v2386 = vsel %vm1961, %v2143, 0
        %v2389 = vsel %vm2157, %v1197, 0
        %2391 = vmatprep.subr.bf16.mxu0 0
        %2392 = vmatpush1.bf16.msra.mxu0 0
        %2393 = vmatprep.subr.bf16.mxu0 0
        %2394 = vmatpush1.bf16.msra.mxu0 0
        %2395 = vmatprep.subr.bf16.mxu0 0
        %2396 = vmatpush1.bf16.msra.mxu0 0
        %2397 = vmatprep.subr.bf16.mxu0 0
        %2398 = vmatpush1.bf16.msra.mxu0 0
        %2399 = vmatprep.subr.bf16.mxu0 0
        %2400 = vmatpush1.bf16.msra.mxu0 0
        %2401 = vmatprep.subr.bf16.mxu0 0
        %2402 = vmatpush1.bf16.msra.mxu0 0
        %2403 = vmatprep.subr.bf16.mxu0 0
        %2404 = vmatpush1.bf16.msra.mxu0 0
        %2405 = vmatprep.subr.bf16.mxu0 0
        %2406 = vmatpush1.bf16.msra.mxu0 %v2389
        %2407 = vmatprep.subr.bf16.mxu0 0
        %2408 = vmatpush2.bf16.msra.mxu0 0
        %2409 = vmatprep.subr.bf16.mxu0 0
        %2410 = vmatpush2.bf16.msra.mxu0 0
        %2411 = vmatprep.subr.bf16.mxu0 0
        %2412 = vmatpush2.bf16.msra.mxu0 0
        %2413 = vmatprep.subr.bf16.mxu0 0
        %2414 = vmatpush2.bf16.msra.mxu0 0
        %2415 = vmatprep.subr.bf16.mxu0 0
        %2416 = vmatpush2.bf16.msra.mxu0 0
        %2417 = vmatprep.subr.bf16.mxu0 0
        %2418 = vmatpush2.bf16.msra.mxu0 0
        %2419 = vmatprep.subr.bf16.mxu0 0
        %2420 = vmatpush2.bf16.msra.mxu0 0
        %2421 = vmatprep.subr.bf16.mxu0 0
        %2422 = vmatpush2.bf16.msra.mxu0 0
        %2423 = vmatprep.mubr.bf16.mxu0 0
        %2424 = vmatmul.mubr.bf16.gmra.mxu0 %v2386
        %v2425 = vpop.f32.mrf.mxu0
        %v2426 = vadd.f32 0.0, %v2425
        %v2427 = vpop.f32.mrf.mxu0
        %v2428 = vpop.f32.mrf.mxu0
        %v2429 = vpop.f32.mrf.mxu0
        %2430 = vdwg.mxu0
        %v2432 = vsel %vm1961, %v2144, 0
        %v2435 = vsel %vm2157, %v1198, 0
        %2437 = vmatprep.subr.bf16.mxu0 0
        %2438 = vmatpush1.bf16.msra.mxu0 0
        %2439 = vmatprep.subr.bf16.mxu0 0
        %2440 = vmatpush1.bf16.msra.mxu0 0
        %2441 = vmatprep.subr.bf16.mxu0 0
        %2442 = vmatpush1.bf16.msra.mxu0 0
        %2443 = vmatprep.subr.bf16.mxu0 0
        %2444 = vmatpush1.bf16.msra.mxu0 0
        %2445 = vmatprep.subr.bf16.mxu0 0
        %2446 = vmatpush1.bf16.msra.mxu0 0
        %2447 = vmatprep.subr.bf16.mxu0 0
        %2448 = vmatpush1.bf16.msra.mxu0 0
        %2449 = vmatprep.subr.bf16.mxu0 0
        %2450 = vmatpush1.bf16.msra.mxu0 0
        %2451 = vmatprep.subr.bf16.mxu0 0
        %2452 = vmatpush1.bf16.msra.mxu0 %v2435
        %2453 = vmatprep.subr.bf16.mxu0 0
        %2454 = vmatpush2.bf16.msra.mxu0 0
        %2455 = vmatprep.subr.bf16.mxu0 0
        %2456 = vmatpush2.bf16.msra.mxu0 0
        %2457 = vmatprep.subr.bf16.mxu0 0
        %2458 = vmatpush2.bf16.msra.mxu0 0
        %2459 = vmatprep.subr.bf16.mxu0 0
        %2460 = vmatpush2.bf16.msra.mxu0 0
        %2461 = vmatprep.subr.bf16.mxu0 0
        %2462 = vmatpush2.bf16.msra.mxu0 0
        %2463 = vmatprep.subr.bf16.mxu0 0
        %2464 = vmatpush2.bf16.msra.mxu0 0
        %2465 = vmatprep.subr.bf16.mxu0 0
        %2466 = vmatpush2.bf16.msra.mxu0 0
        %2467 = vmatprep.subr.bf16.mxu0 0
        %2468 = vmatpush2.bf16.msra.mxu0 0
        %2469 = vmatprep.mubr.bf16.mxu0 0
        %2470 = vmatmul.mubr.bf16.gmra.mxu0 %v2432
        %v2471 = vpop.f32.mrf.mxu0
        %v2472 = vadd.f32 0.0, %v2471
        %v2473 = vpop.f32.mrf.mxu0
        %v2474 = vpop.f32.mrf.mxu0
        %v2475 = vpop.f32.mrf.mxu0
        %2476 = vdwg.mxu0
        %v2478 = vsel %vm1961, %v2145, 0
        %v2481 = vsel %vm2157, %v1199, 0
        %2483 = vmatprep.subr.bf16.mxu0 0
        %2484 = vmatpush1.bf16.msra.mxu0 0
        %2485 = vmatprep.subr.bf16.mxu0 0
        %2486 = vmatpush1.bf16.msra.mxu0 0
        %2487 = vmatprep.subr.bf16.mxu0 0
        %2488 = vmatpush1.bf16.msra.mxu0 0
        %2489 = vmatprep.subr.bf16.mxu0 0
        %2490 = vmatpush1.bf16.msra.mxu0 0
        %2491 = vmatprep.subr.bf16.mxu0 0
        %2492 = vmatpush1.bf16.msra.mxu0 0
        %2493 = vmatprep.subr.bf16.mxu0 0
        %2494 = vmatpush1.bf16.msra.mxu0 0
        %2495 = vmatprep.subr.bf16.mxu0 0
        %2496 = vmatpush1.bf16.msra.mxu0 0
        %2497 = vmatprep.subr.bf16.mxu0 0
        %2498 = vmatpush1.bf16.msra.mxu0 %v2481
        %2499 = vmatprep.subr.bf16.mxu0 0
        %2500 = vmatpush2.bf16.msra.mxu0 0
        %2501 = vmatprep.subr.bf16.mxu0 0
        %2502 = vmatpush2.bf16.msra.mxu0 0
        %2503 = vmatprep.subr.bf16.mxu0 0
        %2504 = vmatpush2.bf16.msra.mxu0 0
        %2505 = vmatprep.subr.bf16.mxu0 0
        %2506 = vmatpush2.bf16.msra.mxu0 0
        %2507 = vmatprep.subr.bf16.mxu0 0
        %2508 = vmatpush2.bf16.msra.mxu0 0
        %2509 = vmatprep.subr.bf16.mxu0 0
        %2510 = vmatpush2.bf16.msra.mxu0 0
        %2511 = vmatprep.subr.bf16.mxu0 0
        %2512 = vmatpush2.bf16.msra.mxu0 0
        %2513 = vmatprep.subr.bf16.mxu0 0
        %2514 = vmatpush2.bf16.msra.mxu0 0
        %2515 = vmatprep.mubr.bf16.mxu0 0
        %2516 = vmatmul.mubr.bf16.gmra.mxu0 %v2478
        %v2517 = vpop.f32.mrf.mxu0
        %v2518 = vadd.f32 0.0, %v2517
        %v2519 = vpop.f32.mrf.mxu0
        %v2520 = vpop.f32.mrf.mxu0
        %v2521 = vpop.f32.mrf.mxu0
        %2522 = vdwg.mxu0
        %v2524 = vsel %vm1961, %v2146, 0
        %v2527 = vsel %vm2157, %v1200, 0
        %2529 = vmatprep.subr.bf16.mxu0 0
        %2530 = vmatpush1.bf16.msra.mxu0 0
        %2531 = vmatprep.subr.bf16.mxu0 0
        %2532 = vmatpush1.bf16.msra.mxu0 0
        %2533 = vmatprep.subr.bf16.mxu0 0
        %2534 = vmatpush1.bf16.msra.mxu0 0
        %2535 = vmatprep.subr.bf16.mxu0 0
        %2536 = vmatpush1.bf16.msra.mxu0 0
        %2537 = vmatprep.subr.bf16.mxu0 0
        %2538 = vmatpush1.bf16.msra.mxu0 0
        %2539 = vmatprep.subr.bf16.mxu0 0
        %2540 = vmatpush1.bf16.msra.mxu0 0
        %2541 = vmatprep.subr.bf16.mxu0 0
        %2542 = vmatpush1.bf16.msra.mxu0 0
        %2543 = vmatprep.subr.bf16.mxu0 0
        %2544 = vmatpush1.bf16.msra.mxu0 %v2527
        %2545 = vmatprep.subr.bf16.mxu0 0
        %2546 = vmatpush2.bf16.msra.mxu0 0
        %2547 = vmatprep.subr.bf16.mxu0 0
        %2548 = vmatpush2.bf16.msra.mxu0 0
        %2549 = vmatprep.subr.bf16.mxu0 0
        %2550 = vmatpush2.bf16.msra.mxu0 0
        %2551 = vmatprep.subr.bf16.mxu0 0
        %2552 = vmatpush2.bf16.msra.mxu0 0
        %2553 = vmatprep.subr.bf16.mxu0 0
        %2554 = vmatpush2.bf16.msra.mxu0 0
        %2555 = vmatprep.subr.bf16.mxu0 0
        %2556 = vmatpush2.bf16.msra.mxu0 0
        %2557 = vmatprep.subr.bf16.mxu0 0
        %2558 = vmatpush2.bf16.msra.mxu0 0
        %2559 = vmatprep.subr.bf16.mxu0 0
        %2560 = vmatpush2.bf16.msra.mxu0 0
        %2561 = vmatprep.mubr.bf16.mxu0 0
        %2562 = vmatmul.mubr.bf16.gmra.mxu0 %v2524
        %v2563 = vpop.f32.mrf.mxu0
        %v2564 = vadd.f32 0.0, %v2563
        %v2565 = vpop.f32.mrf.mxu0
        %v2566 = vpop.f32.mrf.mxu0
        %v2567 = vpop.f32.mrf.mxu0
        %2568 = vdwg.mxu0
        %v2570 = vsel %vm1961, %v2147, 0
        %v2573 = vsel %vm2157, %v1201, 0
        %2575 = vmatprep.subr.bf16.mxu0 0
        %2576 = vmatpush1.bf16.msra.mxu0 0
        %2577 = vmatprep.subr.bf16.mxu0 0
        %2578 = vmatpush1.bf16.msra.mxu0 0
        %2579 = vmatprep.subr.bf16.mxu0 0
        %2580 = vmatpush1.bf16.msra.mxu0 0
        %2581 = vmatprep.subr.bf16.mxu0 0
        %2582 = vmatpush1.bf16.msra.mxu0 0
        %2583 = vmatprep.subr.bf16.mxu0 0
        %2584 = vmatpush1.bf16.msra.mxu0 0
        %2585 = vmatprep.subr.bf16.mxu0 0
        %2586 = vmatpush1.bf16.msra.mxu0 0
        %2587 = vmatprep.subr.bf16.mxu0 0
        %2588 = vmatpush1.bf16.msra.mxu0 0
        %2589 = vmatprep.subr.bf16.mxu0 0
        %2590 = vmatpush1.bf16.msra.mxu0 %v2573
        %2591 = vmatprep.subr.bf16.mxu0 0
        %2592 = vmatpush2.bf16.msra.mxu0 0
        %2593 = vmatprep.subr.bf16.mxu0 0
        %2594 = vmatpush2.bf16.msra.mxu0 0
        %2595 = vmatprep.subr.bf16.mxu0 0
        %2596 = vmatpush2.bf16.msra.mxu0 0
        %2597 = vmatprep.subr.bf16.mxu0 0
        %2598 = vmatpush2.bf16.msra.mxu0 0
        %2599 = vmatprep.subr.bf16.mxu0 0
        %2600 = vmatpush2.bf16.msra.mxu0 0
        %2601 = vmatprep.subr.bf16.mxu0 0
        %2602 = vmatpush2.bf16.msra.mxu0 0
        %2603 = vmatprep.subr.bf16.mxu0 0
        %2604 = vmatpush2.bf16.msra.mxu0 0
        %2605 = vmatprep.subr.bf16.mxu0 0
        %2606 = vmatpush2.bf16.msra.mxu0 0
        %2607 = vmatprep.mubr.bf16.mxu0 0
        %2608 = vmatmul.mubr.bf16.gmra.mxu0 %v2570
        %v2609 = vpop.f32.mrf.mxu0
        %v2610 = vadd.f32 0.0, %v2609
        %v2611 = vpop.f32.mrf.mxu0
        %v2612 = vpop.f32.mrf.mxu0
        %v2613 = vpop.f32.mrf.mxu0
        %2614 = vdwg.mxu0
        %v2616 = vsel %vm1961, %v2148, 0
        %v2619 = vsel %vm2157, %v1202, 0
        %2621 = vmatprep.subr.bf16.mxu0 0
        %2622 = vmatpush1.bf16.msra.mxu0 0
        %2623 = vmatprep.subr.bf16.mxu0 0
        %2624 = vmatpush1.bf16.msra.mxu0 0
        %2625 = vmatprep.subr.bf16.mxu0 0
        %2626 = vmatpush1.bf16.msra.mxu0 0
        %2627 = vmatprep.subr.bf16.mxu0 0
        %2628 = vmatpush1.bf16.msra.mxu0 0
        %2629 = vmatprep.subr.bf16.mxu0 0
        %2630 = vmatpush1.bf16.msra.mxu0 0
        %2631 = vmatprep.subr.bf16.mxu0 0
        %2632 = vmatpush1.bf16.msra.mxu0 0
        %2633 = vmatprep.subr.bf16.mxu0 0
        %2634 = vmatpush1.bf16.msra.mxu0 0
        %2635 = vmatprep.subr.bf16.mxu0 0
        %2636 = vmatpush1.bf16.msra.mxu0 %v2619
        %2637 = vmatprep.subr.bf16.mxu0 0
        %2638 = vmatpush2.bf16.msra.mxu0 0
        %2639 = vmatprep.subr.bf16.mxu0 0
        %2640 = vmatpush2.bf16.msra.mxu0 0
        %2641 = vmatprep.subr.bf16.mxu0 0
        %2642 = vmatpush2.bf16.msra.mxu0 0
        %2643 = vmatprep.subr.bf16.mxu0 0
        %2644 = vmatpush2.bf16.msra.mxu0 0
        %2645 = vmatprep.subr.bf16.mxu0 0
        %2646 = vmatpush2.bf16.msra.mxu0 0
        %2647 = vmatprep.subr.bf16.mxu0 0
        %2648 = vmatpush2.bf16.msra.mxu0 0
        %2649 = vmatprep.subr.bf16.mxu0 0
        %2650 = vmatpush2.bf16.msra.mxu0 0
        %2651 = vmatprep.subr.bf16.mxu0 0
        %2652 = vmatpush2.bf16.msra.mxu0 0
        %2653 = vmatprep.mubr.bf16.mxu0 0
        %2654 = vmatmul.mubr.bf16.gmra.mxu0 %v2616
        %v2655 = vpop.f32.mrf.mxu0
        %v2656 = vadd.f32 0.0, %v2655
        %v2657 = vpop.f32.mrf.mxu0
        %v2658 = vpop.f32.mrf.mxu0
        %v2659 = vpop.f32.mrf.mxu0
        %2660 = vdwg.mxu0
        %v2662 = vsel %vm1961, %v2149, 0
        %v2665 = vsel %vm2157, %v1203, 0
        %2667 = vmatprep.subr.bf16.mxu0 0
        %2668 = vmatpush1.bf16.msra.mxu0 0
        %2669 = vmatprep.subr.bf16.mxu0 0
        %2670 = vmatpush1.bf16.msra.mxu0 0
        %2671 = vmatprep.subr.bf16.mxu0 0
        %2672 = vmatpush1.bf16.msra.mxu0 0
        %2673 = vmatprep.subr.bf16.mxu0 0
        %2674 = vmatpush1.bf16.msra.mxu0 0
        %2675 = vmatprep.subr.bf16.mxu0 0
        %2676 = vmatpush1.bf16.msra.mxu0 0
        %2677 = vmatprep.subr.bf16.mxu0 0
        %2678 = vmatpush1.bf16.msra.mxu0 0
        %2679 = vmatprep.subr.bf16.mxu0 0
        %2680 = vmatpush1.bf16.msra.mxu0 0
        %2681 = vmatprep.subr.bf16.mxu0 0
        %2682 = vmatpush1.bf16.msra.mxu0 %v2665
        %2683 = vmatprep.subr.bf16.mxu0 0
        %2684 = vmatpush2.bf16.msra.mxu0 0
        %2685 = vmatprep.subr.bf16.mxu0 0
        %2686 = vmatpush2.bf16.msra.mxu0 0
        %2687 = vmatprep.subr.bf16.mxu0 0
        %2688 = vmatpush2.bf16.msra.mxu0 0
        %2689 = vmatprep.subr.bf16.mxu0 0
        %2690 = vmatpush2.bf16.msra.mxu0 0
        %2691 = vmatprep.subr.bf16.mxu0 0
        %2692 = vmatpush2.bf16.msra.mxu0 0
        %2693 = vmatprep.subr.bf16.mxu0 0
        %2694 = vmatpush2.bf16.msra.mxu0 0
        %2695 = vmatprep.subr.bf16.mxu0 0
        %2696 = vmatpush2.bf16.msra.mxu0 0
        %2697 = vmatprep.subr.bf16.mxu0 0
        %2698 = vmatpush2.bf16.msra.mxu0 0
        %2699 = vmatprep.mubr.bf16.mxu0 0
        %2700 = vmatmul.mubr.bf16.gmra.mxu0 %v2662
        %v2701 = vpop.f32.mrf.mxu0
        %v2702 = vadd.f32 0.0, %v2701
        %v2703 = vpop.f32.mrf.mxu0
        %v2704 = vpop.f32.mrf.mxu0
        %v2705 = vpop.f32.mrf.mxu0
        %2706 = vdwg.mxu0
        %v2708 = vsel %vm1961, %v2150, 0
        %v2711 = vsel %vm2157, %v1204, 0
        %2713 = vmatprep.subr.bf16.mxu0 0
        %2714 = vmatpush1.bf16.msra.mxu0 0
        %2715 = vmatprep.subr.bf16.mxu0 0
        %2716 = vmatpush1.bf16.msra.mxu0 0
        %2717 = vmatprep.subr.bf16.mxu0 0
        %2718 = vmatpush1.bf16.msra.mxu0 0
        %2719 = vmatprep.subr.bf16.mxu0 0
        %2720 = vmatpush1.bf16.msra.mxu0 0
        %2721 = vmatprep.subr.bf16.mxu0 0
        %2722 = vmatpush1.bf16.msra.mxu0 0
        %2723 = vmatprep.subr.bf16.mxu0 0
        %2724 = vmatpush1.bf16.msra.mxu0 0
        %2725 = vmatprep.subr.bf16.mxu0 0
        %2726 = vmatpush1.bf16.msra.mxu0 0
        %2727 = vmatprep.subr.bf16.mxu0 0
        %2728 = vmatpush1.bf16.msra.mxu0 %v2711
        %2729 = vmatprep.subr.bf16.mxu0 0
        %2730 = vmatpush2.bf16.msra.mxu0 0
        %2731 = vmatprep.subr.bf16.mxu0 0
        %2732 = vmatpush2.bf16.msra.mxu0 0
        %2733 = vmatprep.subr.bf16.mxu0 0
        %2734 = vmatpush2.bf16.msra.mxu0 0
        %2735 = vmatprep.subr.bf16.mxu0 0
        %2736 = vmatpush2.bf16.msra.mxu0 0
        %2737 = vmatprep.subr.bf16.mxu0 0
        %2738 = vmatpush2.bf16.msra.mxu0 0
        %2739 = vmatprep.subr.bf16.mxu0 0
        %2740 = vmatpush2.bf16.msra.mxu0 0
        %2741 = vmatprep.subr.bf16.mxu0 0
        %2742 = vmatpush2.bf16.msra.mxu0 0
        %2743 = vmatprep.subr.bf16.mxu0 0
        %2744 = vmatpush2.bf16.msra.mxu0 0
        %2745 = vmatprep.mubr.bf16.mxu0 0
        %2746 = vmatmul.mubr.bf16.gmra.mxu0 %v2708
        %v2747 = vpop.f32.mrf.mxu0
        %v2748 = vadd.f32 0.0, %v2747
        %v2749 = vpop.f32.mrf.mxu0
        %v2750 = vpop.f32.mrf.mxu0
        %v2751 = vpop.f32.mrf.mxu0
        %2752 = vdwg.mxu0
        %v2754 = vsel %vm1961, %v2151, 0
        %v2757 = vsel %vm2157, %v1205, 0
        %2759 = vmatprep.subr.bf16.mxu0 0
        %2760 = vmatpush1.bf16.msra.mxu0 0
        %2761 = vmatprep.subr.bf16.mxu0 0
        %2762 = vmatpush1.bf16.msra.mxu0 0
        %2763 = vmatprep.subr.bf16.mxu0 0
        %2764 = vmatpush1.bf16.msra.mxu0 0
        %2765 = vmatprep.subr.bf16.mxu0 0
        %2766 = vmatpush1.bf16.msra.mxu0 0
        %2767 = vmatprep.subr.bf16.mxu0 0
        %2768 = vmatpush1.bf16.msra.mxu0 0
        %2769 = vmatprep.subr.bf16.mxu0 0
        %2770 = vmatpush1.bf16.msra.mxu0 0
        %2771 = vmatprep.subr.bf16.mxu0 0
        %2772 = vmatpush1.bf16.msra.mxu0 0
        %2773 = vmatprep.subr.bf16.mxu0 0
        %2774 = vmatpush1.bf16.msra.mxu0 %v2757
        %2775 = vmatprep.subr.bf16.mxu0 0
        %2776 = vmatpush2.bf16.msra.mxu0 0
        %2777 = vmatprep.subr.bf16.mxu0 0
        %2778 = vmatpush2.bf16.msra.mxu0 0
        %2779 = vmatprep.subr.bf16.mxu0 0
        %2780 = vmatpush2.bf16.msra.mxu0 0
        %2781 = vmatprep.subr.bf16.mxu0 0
        %2782 = vmatpush2.bf16.msra.mxu0 0
        %2783 = vmatprep.subr.bf16.mxu0 0
        %2784 = vmatpush2.bf16.msra.mxu0 0
        %2785 = vmatprep.subr.bf16.mxu0 0
        %2786 = vmatpush2.bf16.msra.mxu0 0
        %2787 = vmatprep.subr.bf16.mxu0 0
        %2788 = vmatpush2.bf16.msra.mxu0 0
        %2789 = vmatprep.subr.bf16.mxu0 0
        %2790 = vmatpush2.bf16.msra.mxu0 0
        %2791 = vmatprep.mubr.bf16.mxu0 0
        %2792 = vmatmul.mubr.bf16.gmra.mxu0 %v2754
        %v2793 = vpop.f32.mrf.mxu0
        %v2794 = vadd.f32 0.0, %v2793
        %v2795 = vpop.f32.mrf.mxu0
        %v2796 = vpop.f32.mrf.mxu0
        %v2797 = vpop.f32.mrf.mxu0
        %2798 = vdwg.mxu0
        %v2800 = vsel %vm1961, %v2152, 0
        %v2803 = vsel %vm2157, %v1206, 0
        %2805 = vmatprep.subr.bf16.mxu0 0
        %2806 = vmatpush1.bf16.msra.mxu0 0
        %2807 = vmatprep.subr.bf16.mxu0 0
        %2808 = vmatpush1.bf16.msra.mxu0 0
        %2809 = vmatprep.subr.bf16.mxu0 0
        %2810 = vmatpush1.bf16.msra.mxu0 0
        %2811 = vmatprep.subr.bf16.mxu0 0
        %2812 = vmatpush1.bf16.msra.mxu0 0
        %2813 = vmatprep.subr.bf16.mxu0 0
        %2814 = vmatpush1.bf16.msra.mxu0 0
        %2815 = vmatprep.subr.bf16.mxu0 0
        %2816 = vmatpush1.bf16.msra.mxu0 0
        %2817 = vmatprep.subr.bf16.mxu0 0
        %2818 = vmatpush1.bf16.msra.mxu0 0
        %2819 = vmatprep.subr.bf16.mxu0 0
        %2820 = vmatpush1.bf16.msra.mxu0 %v2803
        %2821 = vmatprep.subr.bf16.mxu0 0
        %2822 = vmatpush2.bf16.msra.mxu0 0
        %2823 = vmatprep.subr.bf16.mxu0 0
        %2824 = vmatpush2.bf16.msra.mxu0 0
        %2825 = vmatprep.subr.bf16.mxu0 0
        %2826 = vmatpush2.bf16.msra.mxu0 0
        %2827 = vmatprep.subr.bf16.mxu0 0
        %2828 = vmatpush2.bf16.msra.mxu0 0
        %2829 = vmatprep.subr.bf16.mxu0 0
        %2830 = vmatpush2.bf16.msra.mxu0 0
        %2831 = vmatprep.subr.bf16.mxu0 0
        %2832 = vmatpush2.bf16.msra.mxu0 0
        %2833 = vmatprep.subr.bf16.mxu0 0
        %2834 = vmatpush2.bf16.msra.mxu0 0
        %2835 = vmatprep.subr.bf16.mxu0 0
        %2836 = vmatpush2.bf16.msra.mxu0 0
        %2837 = vmatprep.mubr.bf16.mxu0 0
        %2838 = vmatmul.mubr.bf16.gmra.mxu0 %v2800
        %v2839 = vpop.f32.mrf.mxu0
        %v2840 = vadd.f32 0.0, %v2839
        %v2841 = vpop.f32.mrf.mxu0
        %v2842 = vpop.f32.mrf.mxu0
        %v2843 = vpop.f32.mrf.mxu0
        %2844 = vdwg.mxu0
        %v2846 = vsel %vm1961, %v2153, 0
        %v2849 = vsel %vm2157, %v1207, 0
        %2851 = vmatprep.subr.bf16.mxu0 0
        %2852 = vmatpush1.bf16.msra.mxu0 0
        %2853 = vmatprep.subr.bf16.mxu0 0
        %2854 = vmatpush1.bf16.msra.mxu0 0
        %2855 = vmatprep.subr.bf16.mxu0 0
        %2856 = vmatpush1.bf16.msra.mxu0 0
        %2857 = vmatprep.subr.bf16.mxu0 0
        %2858 = vmatpush1.bf16.msra.mxu0 0
        %2859 = vmatprep.subr.bf16.mxu0 0
        %2860 = vmatpush1.bf16.msra.mxu0 0
        %2861 = vmatprep.subr.bf16.mxu0 0
        %2862 = vmatpush1.bf16.msra.mxu0 0
        %2863 = vmatprep.subr.bf16.mxu0 0
        %2864 = vmatpush1.bf16.msra.mxu0 0
        %2865 = vmatprep.subr.bf16.mxu0 0
        %2866 = vmatpush1.bf16.msra.mxu0 %v2849
        %2867 = vmatprep.subr.bf16.mxu0 0
        %2868 = vmatpush2.bf16.msra.mxu0 0
        %2869 = vmatprep.subr.bf16.mxu0 0
        %2870 = vmatpush2.bf16.msra.mxu0 0
        %2871 = vmatprep.subr.bf16.mxu0 0
        %2872 = vmatpush2.bf16.msra.mxu0 0
        %2873 = vmatprep.subr.bf16.mxu0 0
        %2874 = vmatpush2.bf16.msra.mxu0 0
        %2875 = vmatprep.subr.bf16.mxu0 0
        %2876 = vmatpush2.bf16.msra.mxu0 0
        %2877 = vmatprep.subr.bf16.mxu0 0
        %2878 = vmatpush2.bf16.msra.mxu0 0
        %2879 = vmatprep.subr.bf16.mxu0 0
        %2880 = vmatpush2.bf16.msra.mxu0 0
        %2881 = vmatprep.subr.bf16.mxu0 0
        %2882 = vmatpush2.bf16.msra.mxu0 0
        %2883 = vmatprep.mubr.bf16.mxu0 0
        %2884 = vmatmul.mubr.bf16.gmra.mxu0 %v2846
        %v2885 = vpop.f32.mrf.mxu0
        %v2886 = vadd.f32 0.0, %v2885
        %v2887 = vpop.f32.mrf.mxu0
        %v2888 = vpop.f32.mrf.mxu0
        %v2889 = vpop.f32.mrf.mxu0
        %2890 = vdwg.mxu0
        %v2891 = vpack.c.bf16 %v2242, %v2196
        %v2892 = vpack.c.bf16 %v2334, %v2288
        %v2893 = vpack.c.bf16 %v2426, %v2380
        %v2894 = vpack.c.bf16 %v2518, %v2472
        %v2895 = vpack.c.bf16 %v2610, %v2564
        %v2896 = vpack.c.bf16 %v2702, %v2656
        %v2897 = vpack.c.bf16 %v2794, %v2748
        %v2898 = vpack.c.bf16 %v2886, %v2840
        %2899 = vrot.lane.b32.xlu0 %v1112, 96
        %v2900 = vpop.permute.xlu0 %2899
        %2901 = vrot.lane.b32.xlu0 %v1152, 96
        %v2902 = vpop.permute.xlu0 %2901
        %v2904 = vsel %vm1208, %v2900, 0
        %v2907 = vsel %vm1208, %v2902, 0
        %2909 = vmatprep.subr.bf16.mxu0 0
        %2910 = vmatpush1.bf16.xpose.msra.mxu0 0
        %2911 = vmatprep.subr.bf16.mxu0 0
        %2912 = vmatpush1.bf16.xpose.msra.mxu0 0
        %2913 = vmatprep.subr.bf16.mxu0 0
        %2914 = vmatpush1.bf16.xpose.msra.mxu0 0
        %2915 = vmatprep.subr.bf16.mxu0 0
        %2916 = vmatpush1.bf16.xpose.msra.mxu0 0
        %2917 = vmatprep.subr.bf16.mxu0 0
        %2918 = vmatpush1.bf16.xpose.msra.mxu0 0
        %2919 = vmatprep.subr.bf16.mxu0 0
        %2920 = vmatpush1.bf16.xpose.msra.mxu0 0
        %2921 = vmatprep.subr.bf16.mxu0 0
        %2922 = vmatpush1.bf16.xpose.msra.mxu0 0
        %2923 = vmatprep.subr.bf16.mxu0 0
        %2924 = vmatpush1.bf16.xpose.msra.mxu0 %v2907
        %2925 = vmatprep.subr.bf16.mxu0 0
        %2926 = vmatpush2.bf16.xpose.msra.mxu0 0
        %2927 = vmatprep.subr.bf16.mxu0 0
        %2928 = vmatpush2.bf16.xpose.msra.mxu0 0
        %2929 = vmatprep.subr.bf16.mxu0 0
        %2930 = vmatpush2.bf16.xpose.msra.mxu0 0
        %2931 = vmatprep.subr.bf16.mxu0 0
        %2932 = vmatpush2.bf16.xpose.msra.mxu0 0
        %2933 = vmatprep.subr.bf16.mxu0 0
        %2934 = vmatpush2.bf16.xpose.msra.mxu0 0
        %2935 = vmatprep.subr.bf16.mxu0 0
        %2936 = vmatpush2.bf16.xpose.msra.mxu0 0
        %2937 = vmatprep.subr.bf16.mxu0 0
        %2938 = vmatpush2.bf16.xpose.msra.mxu0 0
        %2939 = vmatprep.subr.bf16.mxu0 0
        %2940 = vmatpush2.bf16.xpose.msra.mxu0 0
        %2941 = vmatprep.mubr.bf16.mxu0 0
        %2942 = vmatmul.mubr.bf16.gmra.mxu0 %v2904
        %v2943 = vpop.f32.mrf.mxu0
        %v2944 = vadd.f32 0.0, %v2943
        %v2945 = vpop.f32.mrf.mxu0
        %v2946 = vpop.f32.mrf.mxu0
        %v2947 = vpop.f32.mrf.mxu0
        %2948 = vdwg.mxu0
        %2949 = vrot.lane.b32.xlu0 %v1113, 96
        %v2950 = vpop.permute.xlu0 %2949
        %2951 = vrot.lane.b32.xlu0 %v1153, 96
        %v2952 = vpop.permute.xlu0 %2951
        %v2954 = vsel %vm1208, %v2950, 0
        %v2957 = vsel %vm1208, %v2952, 0
        %2959 = vmatprep.subr.bf16.mxu0 0
        %2960 = vmatpush1.bf16.xpose.msra.mxu0 0
        %2961 = vmatprep.subr.bf16.mxu0 0
        %2962 = vmatpush1.bf16.xpose.msra.mxu0 0
        %2963 = vmatprep.subr.bf16.mxu0 0
        %2964 = vmatpush1.bf16.xpose.msra.mxu0 0
        %2965 = vmatprep.subr.bf16.mxu0 0
        %2966 = vmatpush1.bf16.xpose.msra.mxu0 0
        %2967 = vmatprep.subr.bf16.mxu0 0
        %2968 = vmatpush1.bf16.xpose.msra.mxu0 0
        %2969 = vmatprep.subr.bf16.mxu0 0
        %2970 = vmatpush1.bf16.xpose.msra.mxu0 0
        %2971 = vmatprep.subr.bf16.mxu0 0
        %2972 = vmatpush1.bf16.xpose.msra.mxu0 0
        %2973 = vmatprep.subr.bf16.mxu0 0
        %2974 = vmatpush1.bf16.xpose.msra.mxu0 %v2957
        %2975 = vmatprep.subr.bf16.mxu0 0
        %2976 = vmatpush2.bf16.xpose.msra.mxu0 0
        %2977 = vmatprep.subr.bf16.mxu0 0
        %2978 = vmatpush2.bf16.xpose.msra.mxu0 0
        %2979 = vmatprep.subr.bf16.mxu0 0
        %2980 = vmatpush2.bf16.xpose.msra.mxu0 0
        %2981 = vmatprep.subr.bf16.mxu0 0
        %2982 = vmatpush2.bf16.xpose.msra.mxu0 0
        %2983 = vmatprep.subr.bf16.mxu0 0
        %2984 = vmatpush2.bf16.xpose.msra.mxu0 0
        %2985 = vmatprep.subr.bf16.mxu0 0
        %2986 = vmatpush2.bf16.xpose.msra.mxu0 0
        %2987 = vmatprep.subr.bf16.mxu0 0
        %2988 = vmatpush2.bf16.xpose.msra.mxu0 0
        %2989 = vmatprep.subr.bf16.mxu0 0
        %2990 = vmatpush2.bf16.xpose.msra.mxu0 0
        %2991 = vmatprep.mubr.bf16.mxu0 0
        %2992 = vmatmul.mubr.bf16.gmra.mxu0 %v2954
        %v2993 = vpop.f32.mrf.mxu0
        %v2994 = vadd.f32 0.0, %v2993
        %v2995 = vpop.f32.mrf.mxu0
        %v2996 = vpop.f32.mrf.mxu0
        %v2997 = vpop.f32.mrf.mxu0
        %2998 = vdwg.mxu0
        %2999 = vrot.lane.b32.xlu0 %v1114, 96
        %v3000 = vpop.permute.xlu0 %2999
        %3001 = vrot.lane.b32.xlu0 %v1154, 96
        %v3002 = vpop.permute.xlu0 %3001
        %v3004 = vsel %vm1208, %v3000, 0
        %v3007 = vsel %vm1208, %v3002, 0
        %3009 = vmatprep.subr.bf16.mxu0 0
        %3010 = vmatpush1.bf16.xpose.msra.mxu0 0
        %3011 = vmatprep.subr.bf16.mxu0 0
        %3012 = vmatpush1.bf16.xpose.msra.mxu0 0
        %3013 = vmatprep.subr.bf16.mxu0 0
        %3014 = vmatpush1.bf16.xpose.msra.mxu0 0
        %3015 = vmatprep.subr.bf16.mxu0 0
        %3016 = vmatpush1.bf16.xpose.msra.mxu0 0
        %3017 = vmatprep.subr.bf16.mxu0 0
        %3018 = vmatpush1.bf16.xpose.msra.mxu0 0
        %3019 = vmatprep.subr.bf16.mxu0 0
        %3020 = vmatpush1.bf16.xpose.msra.mxu0 0
        %3021 = vmatprep.subr.bf16.mxu0 0
        %3022 = vmatpush1.bf16.xpose.msra.mxu0 0
        %3023 = vmatprep.subr.bf16.mxu0 0
        %3024 = vmatpush1.bf16.xpose.msra.mxu0 %v3007
        %3025 = vmatprep.subr.bf16.mxu0 0
        %3026 = vmatpush2.bf16.xpose.msra.mxu0 0
        %3027 = vmatprep.subr.bf16.mxu0 0
        %3028 = vmatpush2.bf16.xpose.msra.mxu0 0
        %3029 = vmatprep.subr.bf16.mxu0 0
        %3030 = vmatpush2.bf16.xpose.msra.mxu0 0
        %3031 = vmatprep.subr.bf16.mxu0 0
        %3032 = vmatpush2.bf16.xpose.msra.mxu0 0
        %3033 = vmatprep.subr.bf16.mxu0 0
        %3034 = vmatpush2.bf16.xpose.msra.mxu0 0
        %3035 = vmatprep.subr.bf16.mxu0 0
        %3036 = vmatpush2.bf16.xpose.msra.mxu0 0
        %3037 = vmatprep.subr.bf16.mxu0 0
        %3038 = vmatpush2.bf16.xpose.msra.mxu0 0
        %3039 = vmatprep.subr.bf16.mxu0 0
        %3040 = vmatpush2.bf16.xpose.msra.mxu0 0
        %3041 = vmatprep.mubr.bf16.mxu0 0
        %3042 = vmatmul.mubr.bf16.gmra.mxu0 %v3004
        %v3043 = vpop.f32.mrf.mxu0
        %v3044 = vadd.f32 0.0, %v3043
        %v3045 = vpop.f32.mrf.mxu0
        %v3046 = vpop.f32.mrf.mxu0
        %v3047 = vpop.f32.mrf.mxu0
        %3048 = vdwg.mxu0
        %3049 = vrot.lane.b32.xlu0 %v1115, 96
        %v3050 = vpop.permute.xlu0 %3049
        %3051 = vrot.lane.b32.xlu0 %v1155, 96
        %v3052 = vpop.permute.xlu0 %3051
        %v3054 = vsel %vm1208, %v3050, 0
        %v3057 = vsel %vm1208, %v3052, 0
        %3059 = vmatprep.subr.bf16.mxu0 0
        %3060 = vmatpush1.bf16.xpose.msra.mxu0 0
        %3061 = vmatprep.subr.bf16.mxu0 0
        %3062 = vmatpush1.bf16.xpose.msra.mxu0 0
        %3063 = vmatprep.subr.bf16.mxu0 0
        %3064 = vmatpush1.bf16.xpose.msra.mxu0 0
        %3065 = vmatprep.subr.bf16.mxu0 0
        %3066 = vmatpush1.bf16.xpose.msra.mxu0 0
        %3067 = vmatprep.subr.bf16.mxu0 0
        %3068 = vmatpush1.bf16.xpose.msra.mxu0 0
        %3069 = vmatprep.subr.bf16.mxu0 0
        %3070 = vmatpush1.bf16.xpose.msra.mxu0 0
        %3071 = vmatprep.subr.bf16.mxu0 0
        %3072 = vmatpush1.bf16.xpose.msra.mxu0 0
        %3073 = vmatprep.subr.bf16.mxu0 0
        %3074 = vmatpush1.bf16.xpose.msra.mxu0 %v3057
        %3075 = vmatprep.subr.bf16.mxu0 0
        %3076 = vmatpush2.bf16.xpose.msra.mxu0 0
        %3077 = vmatprep.subr.bf16.mxu0 0
        %3078 = vmatpush2.bf16.xpose.msra.mxu0 0
        %3079 = vmatprep.subr.bf16.mxu0 0
        %3080 = vmatpush2.bf16.xpose.msra.mxu0 0
        %3081 = vmatprep.subr.bf16.mxu0 0
        %3082 = vmatpush2.bf16.xpose.msra.mxu0 0
        %3083 = vmatprep.subr.bf16.mxu0 0
        %3084 = vmatpush2.bf16.xpose.msra.mxu0 0
        %3085 = vmatprep.subr.bf16.mxu0 0
        %3086 = vmatpush2.bf16.xpose.msra.mxu0 0
        %3087 = vmatprep.subr.bf16.mxu0 0
        %3088 = vmatpush2.bf16.xpose.msra.mxu0 0
        %3089 = vmatprep.subr.bf16.mxu0 0
        %3090 = vmatpush2.bf16.xpose.msra.mxu0 0
        %3091 = vmatprep.mubr.bf16.mxu0 0
        %3092 = vmatmul.mubr.bf16.gmra.mxu0 %v3054
        %v3093 = vpop.f32.mrf.mxu0
        %v3094 = vadd.f32 0.0, %v3093
        %v3095 = vpop.f32.mrf.mxu0
        %v3096 = vpop.f32.mrf.mxu0
        %v3097 = vpop.f32.mrf.mxu0
        %3098 = vdwg.mxu0
        %3099 = vrot.lane.b32.xlu0 %v1116, 96
        %v3100 = vpop.permute.xlu0 %3099
        %3101 = vrot.lane.b32.xlu0 %v1156, 96
        %v3102 = vpop.permute.xlu0 %3101
        %v3104 = vsel %vm1208, %v3100, 0
        %v3107 = vsel %vm1208, %v3102, 0
        %3109 = vmatprep.subr.bf16.mxu0 0
        %3110 = vmatpush1.bf16.xpose.msra.mxu0 0
        %3111 = vmatprep.subr.bf16.mxu0 0
        %3112 = vmatpush1.bf16.xpose.msra.mxu0 0
        %3113 = vmatprep.subr.bf16.mxu0 0
        %3114 = vmatpush1.bf16.xpose.msra.mxu0 0
        %3115 = vmatprep.subr.bf16.mxu0 0
        %3116 = vmatpush1.bf16.xpose.msra.mxu0 0
        %3117 = vmatprep.subr.bf16.mxu0 0
        %3118 = vmatpush1.bf16.xpose.msra.mxu0 0
        %3119 = vmatprep.subr.bf16.mxu0 0
        %3120 = vmatpush1.bf16.xpose.msra.mxu0 0
        %3121 = vmatprep.subr.bf16.mxu0 0
        %3122 = vmatpush1.bf16.xpose.msra.mxu0 0
        %3123 = vmatprep.subr.bf16.mxu0 0
        %3124 = vmatpush1.bf16.xpose.msra.mxu0 %v3107
        %3125 = vmatprep.subr.bf16.mxu0 0
        %3126 = vmatpush2.bf16.xpose.msra.mxu0 0
        %3127 = vmatprep.subr.bf16.mxu0 0
        %3128 = vmatpush2.bf16.xpose.msra.mxu0 0
        %3129 = vmatprep.subr.bf16.mxu0 0
        %3130 = vmatpush2.bf16.xpose.msra.mxu0 0
        %3131 = vmatprep.subr.bf16.mxu0 0
        %3132 = vmatpush2.bf16.xpose.msra.mxu0 0
        %3133 = vmatprep.subr.bf16.mxu0 0
        %3134 = vmatpush2.bf16.xpose.msra.mxu0 0
        %3135 = vmatprep.subr.bf16.mxu0 0
        %3136 = vmatpush2.bf16.xpose.msra.mxu0 0
        %3137 = vmatprep.subr.bf16.mxu0 0
        %3138 = vmatpush2.bf16.xpose.msra.mxu0 0
        %3139 = vmatprep.subr.bf16.mxu0 0
        %3140 = vmatpush2.bf16.xpose.msra.mxu0 0
        %3141 = vmatprep.mubr.bf16.mxu0 0
        %3142 = vmatmul.mubr.bf16.gmra.mxu0 %v3104
        %v3143 = vpop.f32.mrf.mxu0
        %v3144 = vadd.f32 0.0, %v3143
        %v3145 = vpop.f32.mrf.mxu0
        %v3146 = vpop.f32.mrf.mxu0
        %v3147 = vpop.f32.mrf.mxu0
        %3148 = vdwg.mxu0
        %3149 = vrot.lane.b32.xlu0 %v1117, 96
        %v3150 = vpop.permute.xlu0 %3149
        %3151 = vrot.lane.b32.xlu0 %v1157, 96
        %v3152 = vpop.permute.xlu0 %3151
        %v3154 = vsel %vm1208, %v3150, 0
        %v3157 = vsel %vm1208, %v3152, 0
        %3159 = vmatprep.subr.bf16.mxu0 0
        %3160 = vmatpush1.bf16.xpose.msra.mxu0 0
        %3161 = vmatprep.subr.bf16.mxu0 0
        %3162 = vmatpush1.bf16.xpose.msra.mxu0 0
        %3163 = vmatprep.subr.bf16.mxu0 0
        %3164 = vmatpush1.bf16.xpose.msra.mxu0 0
        %3165 = vmatprep.subr.bf16.mxu0 0
        %3166 = vmatpush1.bf16.xpose.msra.mxu0 0
        %3167 = vmatprep.subr.bf16.mxu0 0
        %3168 = vmatpush1.bf16.xpose.msra.mxu0 0
        %3169 = vmatprep.subr.bf16.mxu0 0
        %3170 = vmatpush1.bf16.xpose.msra.mxu0 0
        %3171 = vmatprep.subr.bf16.mxu0 0
        %3172 = vmatpush1.bf16.xpose.msra.mxu0 0
        %3173 = vmatprep.subr.bf16.mxu0 0
        %3174 = vmatpush1.bf16.xpose.msra.mxu0 %v3157
        %3175 = vmatprep.subr.bf16.mxu0 0
        %3176 = vmatpush2.bf16.xpose.msra.mxu0 0
        %3177 = vmatprep.subr.bf16.mxu0 0
        %3178 = vmatpush2.bf16.xpose.msra.mxu0 0
        %3179 = vmatprep.subr.bf16.mxu0 0
        %3180 = vmatpush2.bf16.xpose.msra.mxu0 0
        %3181 = vmatprep.subr.bf16.mxu0 0
        %3182 = vmatpush2.bf16.xpose.msra.mxu0 0
        %3183 = vmatprep.subr.bf16.mxu0 0
        %3184 = vmatpush2.bf16.xpose.msra.mxu0 0
        %3185 = vmatprep.subr.bf16.mxu0 0
        %3186 = vmatpush2.bf16.xpose.msra.mxu0 0
        %3187 = vmatprep.subr.bf16.mxu0 0
        %3188 = vmatpush2.bf16.xpose.msra.mxu0 0
        %3189 = vmatprep.subr.bf16.mxu0 0
        %3190 = vmatpush2.bf16.xpose.msra.mxu0 0
        %3191 = vmatprep.mubr.bf16.mxu0 0
        %3192 = vmatmul.mubr.bf16.gmra.mxu0 %v3154
        %v3193 = vpop.f32.mrf.mxu0
        %v3194 = vadd.f32 0.0, %v3193
        %v3195 = vpop.f32.mrf.mxu0
        %v3196 = vpop.f32.mrf.mxu0
        %v3197 = vpop.f32.mrf.mxu0
        %3198 = vdwg.mxu0
        %3199 = vrot.lane.b32.xlu0 %v1118, 96
        %v3200 = vpop.permute.xlu0 %3199
        %3201 = vrot.lane.b32.xlu0 %v1158, 96
        %v3202 = vpop.permute.xlu0 %3201
        %v3204 = vsel %vm1208, %v3200, 0
        %v3207 = vsel %vm1208, %v3202, 0
        %3209 = vmatprep.subr.bf16.mxu0 0
        %3210 = vmatpush1.bf16.xpose.msra.mxu0 0
        %3211 = vmatprep.subr.bf16.mxu0 0
        %3212 = vmatpush1.bf16.xpose.msra.mxu0 0
        %3213 = vmatprep.subr.bf16.mxu0 0
        %3214 = vmatpush1.bf16.xpose.msra.mxu0 0
        %3215 = vmatprep.subr.bf16.mxu0 0
        %3216 = vmatpush1.bf16.xpose.msra.mxu0 0
        %3217 = vmatprep.subr.bf16.mxu0 0
        %3218 = vmatpush1.bf16.xpose.msra.mxu0 0
        %3219 = vmatprep.subr.bf16.mxu0 0
        %3220 = vmatpush1.bf16.xpose.msra.mxu0 0
        %3221 = vmatprep.subr.bf16.mxu0 0
        %3222 = vmatpush1.bf16.xpose.msra.mxu0 0
        %3223 = vmatprep.subr.bf16.mxu0 0
        %3224 = vmatpush1.bf16.xpose.msra.mxu0 %v3207
        %3225 = vmatprep.subr.bf16.mxu0 0
        %3226 = vmatpush2.bf16.xpose.msra.mxu0 0
        %3227 = vmatprep.subr.bf16.mxu0 0
        %3228 = vmatpush2.bf16.xpose.msra.mxu0 0
        %3229 = vmatprep.subr.bf16.mxu0 0
        %3230 = vmatpush2.bf16.xpose.msra.mxu0 0
        %3231 = vmatprep.subr.bf16.mxu0 0
        %3232 = vmatpush2.bf16.xpose.msra.mxu0 0
        %3233 = vmatprep.subr.bf16.mxu0 0
        %3234 = vmatpush2.bf16.xpose.msra.mxu0 0
        %3235 = vmatprep.subr.bf16.mxu0 0
        %3236 = vmatpush2.bf16.xpose.msra.mxu0 0
        %3237 = vmatprep.subr.bf16.mxu0 0
        %3238 = vmatpush2.bf16.xpose.msra.mxu0 0
        %3239 = vmatprep.subr.bf16.mxu0 0
        %3240 = vmatpush2.bf16.xpose.msra.mxu0 0
        %3241 = vmatprep.mubr.bf16.mxu0 0
        %3242 = vmatmul.mubr.bf16.gmra.mxu0 %v3204
        %v3243 = vpop.f32.mrf.mxu0
        %v3244 = vadd.f32 0.0, %v3243
        %v3245 = vpop.f32.mrf.mxu0
        %v3246 = vpop.f32.mrf.mxu0
        %v3247 = vpop.f32.mrf.mxu0
        %3248 = vdwg.mxu0
        %3249 = vrot.lane.b32.xlu0 %v1119, 96
        %v3250 = vpop.permute.xlu0 %3249
        %3251 = vrot.lane.b32.xlu0 %v1159, 96
        %v3252 = vpop.permute.xlu0 %3251
        %v3254 = vsel %vm1208, %v3250, 0
        %v3257 = vsel %vm1208, %v3252, 0
        %3259 = vmatprep.subr.bf16.mxu0 0
        %3260 = vmatpush1.bf16.xpose.msra.mxu0 0
        %3261 = vmatprep.subr.bf16.mxu0 0
        %3262 = vmatpush1.bf16.xpose.msra.mxu0 0
        %3263 = vmatprep.subr.bf16.mxu0 0
        %3264 = vmatpush1.bf16.xpose.msra.mxu0 0
        %3265 = vmatprep.subr.bf16.mxu0 0
        %3266 = vmatpush1.bf16.xpose.msra.mxu0 0
        %3267 = vmatprep.subr.bf16.mxu0 0
        %3268 = vmatpush1.bf16.xpose.msra.mxu0 0
        %3269 = vmatprep.subr.bf16.mxu0 0
        %3270 = vmatpush1.bf16.xpose.msra.mxu0 0
        %3271 = vmatprep.subr.bf16.mxu0 0
        %3272 = vmatpush1.bf16.xpose.msra.mxu0 0
        %3273 = vmatprep.subr.bf16.mxu0 0
        %3274 = vmatpush1.bf16.xpose.msra.mxu0 %v3257
        %3275 = vmatprep.subr.bf16.mxu0 0
        %3276 = vmatpush2.bf16.xpose.msra.mxu0 0
        %3277 = vmatprep.subr.bf16.mxu0 0
        %3278 = vmatpush2.bf16.xpose.msra.mxu0 0
        %3279 = vmatprep.subr.bf16.mxu0 0
        %3280 = vmatpush2.bf16.xpose.msra.mxu0 0
        %3281 = vmatprep.subr.bf16.mxu0 0
        %3282 = vmatpush2.bf16.xpose.msra.mxu0 0
        %3283 = vmatprep.subr.bf16.mxu0 0
        %3284 = vmatpush2.bf16.xpose.msra.mxu0 0
        %3285 = vmatprep.subr.bf16.mxu0 0
        %3286 = vmatpush2.bf16.xpose.msra.mxu0 0
        %3287 = vmatprep.subr.bf16.mxu0 0
        %3288 = vmatpush2.bf16.xpose.msra.mxu0 0
        %3289 = vmatprep.subr.bf16.mxu0 0
        %3290 = vmatpush2.bf16.xpose.msra.mxu0 0
        %3291 = vmatprep.mubr.bf16.mxu0 0
        %3292 = vmatmul.mubr.bf16.gmra.mxu0 %v3254
        %v3293 = vpop.f32.mrf.mxu0
        %v3294 = vadd.f32 0.0, %v3293
        %v3295 = vpop.f32.mrf.mxu0
        %v3296 = vpop.f32.mrf.mxu0
        %v3297 = vpop.f32.mrf.mxu0
        %3298 = vdwg.mxu0
        %3299 = vrot.lane.b32.xlu0 %v1120, 96
        %v3300 = vpop.permute.xlu0 %3299
        %3301 = vrot.lane.b32.xlu0 %v1160, 96
        %v3302 = vpop.permute.xlu0 %3301
        %v3304 = vsel %vm1208, %v3300, 0
        %v3307 = vsel %vm1208, %v3302, 0
        %3309 = vmatprep.subr.bf16.mxu0 0
        %3310 = vmatpush1.bf16.xpose.msra.mxu0 0
        %3311 = vmatprep.subr.bf16.mxu0 0
        %3312 = vmatpush1.bf16.xpose.msra.mxu0 0
        %3313 = vmatprep.subr.bf16.mxu0 0
        %3314 = vmatpush1.bf16.xpose.msra.mxu0 0
        %3315 = vmatprep.subr.bf16.mxu0 0
        %3316 = vmatpush1.bf16.xpose.msra.mxu0 0
        %3317 = vmatprep.subr.bf16.mxu0 0
        %3318 = vmatpush1.bf16.xpose.msra.mxu0 0
        %3319 = vmatprep.subr.bf16.mxu0 0
        %3320 = vmatpush1.bf16.xpose.msra.mxu0 0
        %3321 = vmatprep.subr.bf16.mxu0 0
        %3322 = vmatpush1.bf16.xpose.msra.mxu0 0
        %3323 = vmatprep.subr.bf16.mxu0 0
        %3324 = vmatpush1.bf16.xpose.msra.mxu0 %v3307
        %3325 = vmatprep.subr.bf16.mxu0 0
        %3326 = vmatpush2.bf16.xpose.msra.mxu0 0
        %3327 = vmatprep.subr.bf16.mxu0 0
        %3328 = vmatpush2.bf16.xpose.msra.mxu0 0
        %3329 = vmatprep.subr.bf16.mxu0 0
        %3330 = vmatpush2.bf16.xpose.msra.mxu0 0
        %3331 = vmatprep.subr.bf16.mxu0 0
        %3332 = vmatpush2.bf16.xpose.msra.mxu0 0
        %3333 = vmatprep.subr.bf16.mxu0 0
        %3334 = vmatpush2.bf16.xpose.msra.mxu0 0
        %3335 = vmatprep.subr.bf16.mxu0 0
        %3336 = vmatpush2.bf16.xpose.msra.mxu0 0
        %3337 = vmatprep.subr.bf16.mxu0 0
        %3338 = vmatpush2.bf16.xpose.msra.mxu0 0
        %3339 = vmatprep.subr.bf16.mxu0 0
        %3340 = vmatpush2.bf16.xpose.msra.mxu0 0
        %3341 = vmatprep.mubr.bf16.mxu0 0
        %3342 = vmatmul.mubr.bf16.gmra.mxu0 %v3304
        %v3343 = vpop.f32.mrf.mxu0
        %v3344 = vadd.f32 0.0, %v3343
        %v3345 = vpop.f32.mrf.mxu0
        %v3346 = vpop.f32.mrf.mxu0
        %v3347 = vpop.f32.mrf.mxu0
        %3348 = vdwg.mxu0
        %3349 = vrot.lane.b32.xlu0 %v1121, 96
        %v3350 = vpop.permute.xlu0 %3349
        %3351 = vrot.lane.b32.xlu0 %v1161, 96
        %v3352 = vpop.permute.xlu0 %3351
        %v3354 = vsel %vm1208, %v3350, 0
        %v3357 = vsel %vm1208, %v3352, 0
        %3359 = vmatprep.subr.bf16.mxu0 0
        %3360 = vmatpush1.bf16.xpose.msra.mxu0 0
        %3361 = vmatprep.subr.bf16.mxu0 0
        %3362 = vmatpush1.bf16.xpose.msra.mxu0 0
        %3363 = vmatprep.subr.bf16.mxu0 0
        %3364 = vmatpush1.bf16.xpose.msra.mxu0 0
        %3365 = vmatprep.subr.bf16.mxu0 0
        %3366 = vmatpush1.bf16.xpose.msra.mxu0 0
        %3367 = vmatprep.subr.bf16.mxu0 0
        %3368 = vmatpush1.bf16.xpose.msra.mxu0 0
        %3369 = vmatprep.subr.bf16.mxu0 0
        %3370 = vmatpush1.bf16.xpose.msra.mxu0 0
        %3371 = vmatprep.subr.bf16.mxu0 0
        %3372 = vmatpush1.bf16.xpose.msra.mxu0 0
        %3373 = vmatprep.subr.bf16.mxu0 0
        %3374 = vmatpush1.bf16.xpose.msra.mxu0 %v3357
        %3375 = vmatprep.subr.bf16.mxu0 0
        %3376 = vmatpush2.bf16.xpose.msra.mxu0 0
        %3377 = vmatprep.subr.bf16.mxu0 0
        %3378 = vmatpush2.bf16.xpose.msra.mxu0 0
        %3379 = vmatprep.subr.bf16.mxu0 0
        %3380 = vmatpush2.bf16.xpose.msra.mxu0 0
        %3381 = vmatprep.subr.bf16.mxu0 0
        %3382 = vmatpush2.bf16.xpose.msra.mxu0 0
        %3383 = vmatprep.subr.bf16.mxu0 0
        %3384 = vmatpush2.bf16.xpose.msra.mxu0 0
        %3385 = vmatprep.subr.bf16.mxu0 0
        %3386 = vmatpush2.bf16.xpose.msra.mxu0 0
        %3387 = vmatprep.subr.bf16.mxu0 0
        %3388 = vmatpush2.bf16.xpose.msra.mxu0 0
        %3389 = vmatprep.subr.bf16.mxu0 0
        %3390 = vmatpush2.bf16.xpose.msra.mxu0 0
        %3391 = vmatprep.mubr.bf16.mxu0 0
        %3392 = vmatmul.mubr.bf16.gmra.mxu0 %v3354
        %v3393 = vpop.f32.mrf.mxu0
        %v3394 = vadd.f32 0.0, %v3393
        %v3395 = vpop.f32.mrf.mxu0
        %v3396 = vpop.f32.mrf.mxu0
        %v3397 = vpop.f32.mrf.mxu0
        %3398 = vdwg.mxu0
        %3399 = vrot.lane.b32.xlu0 %v1122, 96
        %v3400 = vpop.permute.xlu0 %3399
        %3401 = vrot.lane.b32.xlu0 %v1162, 96
        %v3402 = vpop.permute.xlu0 %3401
        %v3404 = vsel %vm1208, %v3400, 0
        %v3407 = vsel %vm1208, %v3402, 0
        %3409 = vmatprep.subr.bf16.mxu0 0
        %3410 = vmatpush1.bf16.xpose.msra.mxu0 0
        %3411 = vmatprep.subr.bf16.mxu0 0
        %3412 = vmatpush1.bf16.xpose.msra.mxu0 0
        %3413 = vmatprep.subr.bf16.mxu0 0
        %3414 = vmatpush1.bf16.xpose.msra.mxu0 0
        %3415 = vmatprep.subr.bf16.mxu0 0
        %3416 = vmatpush1.bf16.xpose.msra.mxu0 0
        %3417 = vmatprep.subr.bf16.mxu0 0
        %3418 = vmatpush1.bf16.xpose.msra.mxu0 0
        %3419 = vmatprep.subr.bf16.mxu0 0
        %3420 = vmatpush1.bf16.xpose.msra.mxu0 0
        %3421 = vmatprep.subr.bf16.mxu0 0
        %3422 = vmatpush1.bf16.xpose.msra.mxu0 0
        %3423 = vmatprep.subr.bf16.mxu0 0
        %3424 = vmatpush1.bf16.xpose.msra.mxu0 %v3407
        %3425 = vmatprep.subr.bf16.mxu0 0
        %3426 = vmatpush2.bf16.xpose.msra.mxu0 0
        %3427 = vmatprep.subr.bf16.mxu0 0
        %3428 = vmatpush2.bf16.xpose.msra.mxu0 0
        %3429 = vmatprep.subr.bf16.mxu0 0
        %3430 = vmatpush2.bf16.xpose.msra.mxu0 0
        %3431 = vmatprep.subr.bf16.mxu0 0
        %3432 = vmatpush2.bf16.xpose.msra.mxu0 0
        %3433 = vmatprep.subr.bf16.mxu0 0
        %3434 = vmatpush2.bf16.xpose.msra.mxu0 0
        %3435 = vmatprep.subr.bf16.mxu0 0
        %3436 = vmatpush2.bf16.xpose.msra.mxu0 0
        %3437 = vmatprep.subr.bf16.mxu0 0
        %3438 = vmatpush2.bf16.xpose.msra.mxu0 0
        %3439 = vmatprep.subr.bf16.mxu0 0
        %3440 = vmatpush2.bf16.xpose.msra.mxu0 0
        %3441 = vmatprep.mubr.bf16.mxu0 0
        %3442 = vmatmul.mubr.bf16.gmra.mxu0 %v3404
        %v3443 = vpop.f32.mrf.mxu0
        %v3444 = vadd.f32 0.0, %v3443
        %v3445 = vpop.f32.mrf.mxu0
        %v3446 = vpop.f32.mrf.mxu0
        %v3447 = vpop.f32.mrf.mxu0
        %3448 = vdwg.mxu0
        %3449 = vrot.lane.b32.xlu0 %v1123, 96
        %v3450 = vpop.permute.xlu0 %3449
        %3451 = vrot.lane.b32.xlu0 %v1163, 96
        %v3452 = vpop.permute.xlu0 %3451
        %v3454 = vsel %vm1208, %v3450, 0
        %v3457 = vsel %vm1208, %v3452, 0
        %3459 = vmatprep.subr.bf16.mxu0 0
        %3460 = vmatpush1.bf16.xpose.msra.mxu0 0
        %3461 = vmatprep.subr.bf16.mxu0 0
        %3462 = vmatpush1.bf16.xpose.msra.mxu0 0
        %3463 = vmatprep.subr.bf16.mxu0 0
        %3464 = vmatpush1.bf16.xpose.msra.mxu0 0
        %3465 = vmatprep.subr.bf16.mxu0 0
        %3466 = vmatpush1.bf16.xpose.msra.mxu0 0
        %3467 = vmatprep.subr.bf16.mxu0 0
        %3468 = vmatpush1.bf16.xpose.msra.mxu0 0
        %3469 = vmatprep.subr.bf16.mxu0 0
        %3470 = vmatpush1.bf16.xpose.msra.mxu0 0
        %3471 = vmatprep.subr.bf16.mxu0 0
        %3472 = vmatpush1.bf16.xpose.msra.mxu0 0
        %3473 = vmatprep.subr.bf16.mxu0 0
        %3474 = vmatpush1.bf16.xpose.msra.mxu0 %v3457
        %3475 = vmatprep.subr.bf16.mxu0 0
        %3476 = vmatpush2.bf16.xpose.msra.mxu0 0
        %3477 = vmatprep.subr.bf16.mxu0 0
        %3478 = vmatpush2.bf16.xpose.msra.mxu0 0
        %3479 = vmatprep.subr.bf16.mxu0 0
        %3480 = vmatpush2.bf16.xpose.msra.mxu0 0
        %3481 = vmatprep.subr.bf16.mxu0 0
        %3482 = vmatpush2.bf16.xpose.msra.mxu0 0
        %3483 = vmatprep.subr.bf16.mxu0 0
        %3484 = vmatpush2.bf16.xpose.msra.mxu0 0
        %3485 = vmatprep.subr.bf16.mxu0 0
        %3486 = vmatpush2.bf16.xpose.msra.mxu0 0
        %3487 = vmatprep.subr.bf16.mxu0 0
        %3488 = vmatpush2.bf16.xpose.msra.mxu0 0
        %3489 = vmatprep.subr.bf16.mxu0 0
        %3490 = vmatpush2.bf16.xpose.msra.mxu0 0
        %3491 = vmatprep.mubr.bf16.mxu0 0
        %3492 = vmatmul.mubr.bf16.gmra.mxu0 %v3454
        %v3493 = vpop.f32.mrf.mxu0
        %v3494 = vadd.f32 0.0, %v3493
        %v3495 = vpop.f32.mrf.mxu0
        %v3496 = vpop.f32.mrf.mxu0
        %v3497 = vpop.f32.mrf.mxu0
        %3498 = vdwg.mxu0
        %3499 = vrot.lane.b32.xlu0 %v1124, 96
        %v3500 = vpop.permute.xlu0 %3499
        %3501 = vrot.lane.b32.xlu0 %v1164, 96
        %v3502 = vpop.permute.xlu0 %3501
        %v3504 = vsel %vm1208, %v3500, 0
        %v3507 = vsel %vm1208, %v3502, 0
        %3509 = vmatprep.subr.bf16.mxu0 0
        %3510 = vmatpush1.bf16.xpose.msra.mxu0 0
        %3511 = vmatprep.subr.bf16.mxu0 0
        %3512 = vmatpush1.bf16.xpose.msra.mxu0 0
        %3513 = vmatprep.subr.bf16.mxu0 0
        %3514 = vmatpush1.bf16.xpose.msra.mxu0 0
        %3515 = vmatprep.subr.bf16.mxu0 0
        %3516 = vmatpush1.bf16.xpose.msra.mxu0 0
        %3517 = vmatprep.subr.bf16.mxu0 0
        %3518 = vmatpush1.bf16.xpose.msra.mxu0 0
        %3519 = vmatprep.subr.bf16.mxu0 0
        %3520 = vmatpush1.bf16.xpose.msra.mxu0 0
        %3521 = vmatprep.subr.bf16.mxu0 0
        %3522 = vmatpush1.bf16.xpose.msra.mxu0 0
        %3523 = vmatprep.subr.bf16.mxu0 0
        %3524 = vmatpush1.bf16.xpose.msra.mxu0 %v3507
        %3525 = vmatprep.subr.bf16.mxu0 0
        %3526 = vmatpush2.bf16.xpose.msra.mxu0 0
        %3527 = vmatprep.subr.bf16.mxu0 0
        %3528 = vmatpush2.bf16.xpose.msra.mxu0 0
        %3529 = vmatprep.subr.bf16.mxu0 0
        %3530 = vmatpush2.bf16.xpose.msra.mxu0 0
        %3531 = vmatprep.subr.bf16.mxu0 0
        %3532 = vmatpush2.bf16.xpose.msra.mxu0 0
        %3533 = vmatprep.subr.bf16.mxu0 0
        %3534 = vmatpush2.bf16.xpose.msra.mxu0 0
        %3535 = vmatprep.subr.bf16.mxu0 0
        %3536 = vmatpush2.bf16.xpose.msra.mxu0 0
        %3537 = vmatprep.subr.bf16.mxu0 0
        %3538 = vmatpush2.bf16.xpose.msra.mxu0 0
        %3539 = vmatprep.subr.bf16.mxu0 0
        %3540 = vmatpush2.bf16.xpose.msra.mxu0 0
        %3541 = vmatprep.mubr.bf16.mxu0 0
        %3542 = vmatmul.mubr.bf16.gmra.mxu0 %v3504
        %v3543 = vpop.f32.mrf.mxu0
        %v3544 = vadd.f32 0.0, %v3543
        %v3545 = vpop.f32.mrf.mxu0
        %v3546 = vpop.f32.mrf.mxu0
        %v3547 = vpop.f32.mrf.mxu0
        %3548 = vdwg.mxu0
        %3549 = vrot.lane.b32.xlu0 %v1125, 96
        %v3550 = vpop.permute.xlu0 %3549
        %3551 = vrot.lane.b32.xlu0 %v1165, 96
        %v3552 = vpop.permute.xlu0 %3551
        %v3554 = vsel %vm1208, %v3550, 0
        %v3557 = vsel %vm1208, %v3552, 0
        %3559 = vmatprep.subr.bf16.mxu0 0
        %3560 = vmatpush1.bf16.xpose.msra.mxu0 0
        %3561 = vmatprep.subr.bf16.mxu0 0
        %3562 = vmatpush1.bf16.xpose.msra.mxu0 0
        %3563 = vmatprep.subr.bf16.mxu0 0
        %3564 = vmatpush1.bf16.xpose.msra.mxu0 0
        %3565 = vmatprep.subr.bf16.mxu0 0
        %3566 = vmatpush1.bf16.xpose.msra.mxu0 0
        %3567 = vmatprep.subr.bf16.mxu0 0
        %3568 = vmatpush1.bf16.xpose.msra.mxu0 0
        %3569 = vmatprep.subr.bf16.mxu0 0
        %3570 = vmatpush1.bf16.xpose.msra.mxu0 0
        %3571 = vmatprep.subr.bf16.mxu0 0
        %3572 = vmatpush1.bf16.xpose.msra.mxu0 0
        %3573 = vmatprep.subr.bf16.mxu0 0
        %3574 = vmatpush1.bf16.xpose.msra.mxu0 %v3557
        %3575 = vmatprep.subr.bf16.mxu0 0
        %3576 = vmatpush2.bf16.xpose.msra.mxu0 0
        %3577 = vmatprep.subr.bf16.mxu0 0
        %3578 = vmatpush2.bf16.xpose.msra.mxu0 0
        %3579 = vmatprep.subr.bf16.mxu0 0
        %3580 = vmatpush2.bf16.xpose.msra.mxu0 0
        %3581 = vmatprep.subr.bf16.mxu0 0
        %3582 = vmatpush2.bf16.xpose.msra.mxu0 0
        %3583 = vmatprep.subr.bf16.mxu0 0
        %3584 = vmatpush2.bf16.xpose.msra.mxu0 0
        %3585 = vmatprep.subr.bf16.mxu0 0
        %3586 = vmatpush2.bf16.xpose.msra.mxu0 0
        %3587 = vmatprep.subr.bf16.mxu0 0
        %3588 = vmatpush2.bf16.xpose.msra.mxu0 0
        %3589 = vmatprep.subr.bf16.mxu0 0
        %3590 = vmatpush2.bf16.xpose.msra.mxu0 0
        %3591 = vmatprep.mubr.bf16.mxu0 0
        %3592 = vmatmul.mubr.bf16.gmra.mxu0 %v3554
        %v3593 = vpop.f32.mrf.mxu0
        %v3594 = vadd.f32 0.0, %v3593
        %v3595 = vpop.f32.mrf.mxu0
        %v3596 = vpop.f32.mrf.mxu0
        %v3597 = vpop.f32.mrf.mxu0
        %3598 = vdwg.mxu0
        %3599 = vrot.lane.b32.xlu0 %v1126, 96
        %v3600 = vpop.permute.xlu0 %3599
        %3601 = vrot.lane.b32.xlu0 %v1166, 96
        %v3602 = vpop.permute.xlu0 %3601
        %v3604 = vsel %vm1208, %v3600, 0
        %v3607 = vsel %vm1208, %v3602, 0
        %3609 = vmatprep.subr.bf16.mxu0 0
        %3610 = vmatpush1.bf16.xpose.msra.mxu0 0
        %3611 = vmatprep.subr.bf16.mxu0 0
        %3612 = vmatpush1.bf16.xpose.msra.mxu0 0
        %3613 = vmatprep.subr.bf16.mxu0 0
        %3614 = vmatpush1.bf16.xpose.msra.mxu0 0
        %3615 = vmatprep.subr.bf16.mxu0 0
        %3616 = vmatpush1.bf16.xpose.msra.mxu0 0
        %3617 = vmatprep.subr.bf16.mxu0 0
        %3618 = vmatpush1.bf16.xpose.msra.mxu0 0
        %3619 = vmatprep.subr.bf16.mxu0 0
        %3620 = vmatpush1.bf16.xpose.msra.mxu0 0
        %3621 = vmatprep.subr.bf16.mxu0 0
        %3622 = vmatpush1.bf16.xpose.msra.mxu0 0
        %3623 = vmatprep.subr.bf16.mxu0 0
        %3624 = vmatpush1.bf16.xpose.msra.mxu0 %v3607
        %3625 = vmatprep.subr.bf16.mxu0 0
        %3626 = vmatpush2.bf16.xpose.msra.mxu0 0
        %3627 = vmatprep.subr.bf16.mxu0 0
        %3628 = vmatpush2.bf16.xpose.msra.mxu0 0
        %3629 = vmatprep.subr.bf16.mxu0 0
        %3630 = vmatpush2.bf16.xpose.msra.mxu0 0
        %3631 = vmatprep.subr.bf16.mxu0 0
        %3632 = vmatpush2.bf16.xpose.msra.mxu0 0
        %3633 = vmatprep.subr.bf16.mxu0 0
        %3634 = vmatpush2.bf16.xpose.msra.mxu0 0
        %3635 = vmatprep.subr.bf16.mxu0 0
        %3636 = vmatpush2.bf16.xpose.msra.mxu0 0
        %3637 = vmatprep.subr.bf16.mxu0 0
        %3638 = vmatpush2.bf16.xpose.msra.mxu0 0
        %3639 = vmatprep.subr.bf16.mxu0 0
        %3640 = vmatpush2.bf16.xpose.msra.mxu0 0
        %3641 = vmatprep.mubr.bf16.mxu0 0
        %3642 = vmatmul.mubr.bf16.gmra.mxu0 %v3604
        %v3643 = vpop.f32.mrf.mxu0
        %v3644 = vadd.f32 0.0, %v3643
        %v3645 = vpop.f32.mrf.mxu0
        %v3646 = vpop.f32.mrf.mxu0
        %v3647 = vpop.f32.mrf.mxu0
        %3648 = vdwg.mxu0
        %3649 = vrot.lane.b32.xlu0 %v1127, 96
        %v3650 = vpop.permute.xlu0 %3649
        %3651 = vrot.lane.b32.xlu0 %v1167, 96
        %v3652 = vpop.permute.xlu0 %3651
        %v3654 = vsel %vm1208, %v3650, 0
        %v3657 = vsel %vm1208, %v3652, 0
        %3659 = vmatprep.subr.bf16.mxu0 0
        %3660 = vmatpush1.bf16.xpose.msra.mxu0 0
        %3661 = vmatprep.subr.bf16.mxu0 0
        %3662 = vmatpush1.bf16.xpose.msra.mxu0 0
        %3663 = vmatprep.subr.bf16.mxu0 0
        %3664 = vmatpush1.bf16.xpose.msra.mxu0 0
        %3665 = vmatprep.subr.bf16.mxu0 0
        %3666 = vmatpush1.bf16.xpose.msra.mxu0 0
        %3667 = vmatprep.subr.bf16.mxu0 0
        %3668 = vmatpush1.bf16.xpose.msra.mxu0 0
        %3669 = vmatprep.subr.bf16.mxu0 0
        %3670 = vmatpush1.bf16.xpose.msra.mxu0 0
        %3671 = vmatprep.subr.bf16.mxu0 0
        %3672 = vmatpush1.bf16.xpose.msra.mxu0 0
        %3673 = vmatprep.subr.bf16.mxu0 0
        %3674 = vmatpush1.bf16.xpose.msra.mxu0 %v3657
        %3675 = vmatprep.subr.bf16.mxu0 0
        %3676 = vmatpush2.bf16.xpose.msra.mxu0 0
        %3677 = vmatprep.subr.bf16.mxu0 0
        %3678 = vmatpush2.bf16.xpose.msra.mxu0 0
        %3679 = vmatprep.subr.bf16.mxu0 0
        %3680 = vmatpush2.bf16.xpose.msra.mxu0 0
        %3681 = vmatprep.subr.bf16.mxu0 0
        %3682 = vmatpush2.bf16.xpose.msra.mxu0 0
        %3683 = vmatprep.subr.bf16.mxu0 0
        %3684 = vmatpush2.bf16.xpose.msra.mxu0 0
        %3685 = vmatprep.subr.bf16.mxu0 0
        %3686 = vmatpush2.bf16.xpose.msra.mxu0 0
        %3687 = vmatprep.subr.bf16.mxu0 0
        %3688 = vmatpush2.bf16.xpose.msra.mxu0 0
        %3689 = vmatprep.subr.bf16.mxu0 0
        %3690 = vmatpush2.bf16.xpose.msra.mxu0 0
        %3691 = vmatprep.mubr.bf16.mxu0 0
        %3692 = vmatmul.mubr.bf16.gmra.mxu0 %v3654
        %v3693 = vpop.f32.mrf.mxu0
        %v3694 = vadd.f32 0.0, %v3693
        %v3695 = vpop.f32.mrf.mxu0
        %v3696 = vpop.f32.mrf.mxu0
        %v3697 = vpop.f32.mrf.mxu0
        %3698 = vdwg.mxu0
        %v3699 = vmul.f32 %v2944, 0.17677669
        %v3700 = vmul.f32 %v2994, 0.17677669
        %v3701 = vmul.f32 %v3044, 0.17677669
        %v3702 = vmul.f32 %v3094, 0.17677669
        %v3703 = vmul.f32 %v3144, 0.17677669
        %v3704 = vmul.f32 %v3194, 0.17677669
        %v3705 = vmul.f32 %v3244, 0.17677669
        %v3706 = vmul.f32 %v3294, 0.17677669
        %v3707 = vmul.f32 %v3344, 0.17677669
        %v3708 = vmul.f32 %v3394, 0.17677669
        %v3709 = vmul.f32 %v3444, 0.17677669
        %v3710 = vmul.f32 %v3494, 0.17677669
        %v3711 = vmul.f32 %v3544, 0.17677669
        %v3712 = vmul.f32 %v3594, 0.17677669
        %v3713 = vmul.f32 %v3644, 0.17677669
        %v3714 = vmul.f32 %v3694, 0.17677669
        %v3715 = vsel %vm1961, %v3699, -inf
        %3716 = vmax.xlane.f32.xlu0 %v3715
        %v3717 = vpop.xlane.xlu0 %3716
        %v3718 = vsel %vm1961, %v3700, -inf
        %3719 = vmax.xlane.f32.xlu0 %v3718
        %v3720 = vpop.xlane.xlu0 %3719
        %v3721 = vsel %vm1961, %v3701, -inf
        %3722 = vmax.xlane.f32.xlu0 %v3721
        %v3723 = vpop.xlane.xlu0 %3722
        %v3724 = vsel %vm1961, %v3702, -inf
        %3725 = vmax.xlane.f32.xlu0 %v3724
        %v3726 = vpop.xlane.xlu0 %3725
        %v3727 = vsel %vm1961, %v3703, -inf
        %3728 = vmax.xlane.f32.xlu0 %v3727
        %v3729 = vpop.xlane.xlu0 %3728
        %v3730 = vsel %vm1961, %v3704, -inf
        %3731 = vmax.xlane.f32.xlu0 %v3730
        %v3732 = vpop.xlane.xlu0 %3731
        %v3733 = vsel %vm1961, %v3705, -inf
        %3734 = vmax.xlane.f32.xlu0 %v3733
        %v3735 = vpop.xlane.xlu0 %3734
        %v3736 = vsel %vm1961, %v3706, -inf
        %3737 = vmax.xlane.f32.xlu0 %v3736
        %v3738 = vpop.xlane.xlu0 %3737
        %v3739 = vsel %vm1961, %v3707, -inf
        %3740 = vmax.xlane.f32.xlu0 %v3739
        %v3741 = vpop.xlane.xlu0 %3740
        %v3742 = vsel %vm1961, %v3708, -inf
        %3743 = vmax.xlane.f32.xlu0 %v3742
        %v3744 = vpop.xlane.xlu0 %3743
        %v3745 = vsel %vm1961, %v3709, -inf
        %3746 = vmax.xlane.f32.xlu0 %v3745
        %v3747 = vpop.xlane.xlu0 %3746
        %v3748 = vsel %vm1961, %v3710, -inf
        %3749 = vmax.xlane.f32.xlu0 %v3748
        %v3750 = vpop.xlane.xlu0 %3749
        %v3751 = vsel %vm1961, %v3711, -inf
        %3752 = vmax.xlane.f32.xlu0 %v3751
        %v3753 = vpop.xlane.xlu0 %3752
        %v3754 = vsel %vm1961, %v3712, -inf
        %3755 = vmax.xlane.f32.xlu0 %v3754
        %v3756 = vpop.xlane.xlu0 %3755
        %v3757 = vsel %vm1961, %v3713, -inf
        %3758 = vmax.xlane.f32.xlu0 %v3757
        %v3759 = vpop.xlane.xlu0 %3758
        %v3760 = vsel %vm1961, %v3714, -inf
        %3761 = vmax.xlane.f32.xlu0 %v3760
        %v3762 = vpop.xlane.xlu0 %3761
        %v3763 = vsub.f32 %v3699, %v3717
        %v3764 = vsub.f32 %v3700, %v3720
        %v3765 = vsub.f32 %v3701, %v3723
        %v3766 = vsub.f32 %v3702, %v3726
        %v3767 = vsub.f32 %v3703, %v3729
        %v3768 = vsub.f32 %v3704, %v3732
        %v3769 = vsub.f32 %v3705, %v3735
        %v3770 = vsub.f32 %v3706, %v3738
        %v3771 = vsub.f32 %v3707, %v3741
        %v3772 = vsub.f32 %v3708, %v3744
        %v3773 = vsub.f32 %v3709, %v3747
        %v3774 = vsub.f32 %v3710, %v3750
        %v3775 = vsub.f32 %v3711, %v3753
        %v3776 = vsub.f32 %v3712, %v3756
        %v3777 = vsub.f32 %v3713, %v3759
        %v3778 = vsub.f32 %v3714, %v3762
        %v3779 = vmul.f32 %v3763, 1.442695
        %v3780 = vpow.pop %v3779
        %v3781 = vmul.f32 %v3764, 1.442695
        %v3782 = vpow.pop %v3781
        %v3783 = vmul.f32 %v3765, 1.442695
        %v3784 = vpow.pop %v3783
        %v3785 = vmul.f32 %v3766, 1.442695
        %v3786 = vpow.pop %v3785
        %v3787 = vmul.f32 %v3767, 1.442695
        %v3788 = vpow.pop %v3787
        %v3789 = vmul.f32 %v3768, 1.442695
        %v3790 = vpow.pop %v3789
        %v3791 = vmul.f32 %v3769, 1.442695
        %v3792 = vpow.pop %v3791
        %v3793 = vmul.f32 %v3770, 1.442695
        %v3794 = vpow.pop %v3793
        %v3795 = vmul.f32 %v3771, 1.442695
        %v3796 = vpow.pop %v3795
        %v3797 = vmul.f32 %v3772, 1.442695
        %v3798 = vpow.pop %v3797
        %v3799 = vmul.f32 %v3773, 1.442695
        %v3800 = vpow.pop %v3799
        %v3801 = vmul.f32 %v3774, 1.442695
        %v3802 = vpow.pop %v3801
        %v3803 = vmul.f32 %v3775, 1.442695
        %v3804 = vpow.pop %v3803
        %v3805 = vmul.f32 %v3776, 1.442695
        %v3806 = vpow.pop %v3805
        %v3807 = vmul.f32 %v3777, 1.442695
        %v3808 = vpow.pop %v3807
        %v3809 = vmul.f32 %v3778, 1.442695
        %v3810 = vpow.pop %v3809
        %v3811 = vsel %vm1961, %v3780, 0.0
        %3812 = vadd.xlane.f32.xlu0 %v3811
        %v3813 = vpop.xlane.xlu0 %3812
        %v3814 = vsel %vm1961, %v3782, 0.0
        %3815 = vadd.xlane.f32.xlu0 %v3814
        %v3816 = vpop.xlane.xlu0 %3815
        %v3817 = vsel %vm1961, %v3784, 0.0
        %3818 = vadd.xlane.f32.xlu0 %v3817
        %v3819 = vpop.xlane.xlu0 %3818
        %v3820 = vsel %vm1961, %v3786, 0.0
        %3821 = vadd.xlane.f32.xlu0 %v3820
        %v3822 = vpop.xlane.xlu0 %3821
        %v3823 = vsel %vm1961, %v3788, 0.0
        %3824 = vadd.xlane.f32.xlu0 %v3823
        %v3825 = vpop.xlane.xlu0 %3824
        %v3826 = vsel %vm1961, %v3790, 0.0
        %3827 = vadd.xlane.f32.xlu0 %v3826
        %v3828 = vpop.xlane.xlu0 %3827
        %v3829 = vsel %vm1961, %v3792, 0.0
        %3830 = vadd.xlane.f32.xlu0 %v3829
        %v3831 = vpop.xlane.xlu0 %3830
        %v3832 = vsel %vm1961, %v3794, 0.0
        %3833 = vadd.xlane.f32.xlu0 %v3832
        %v3834 = vpop.xlane.xlu0 %3833
        %v3835 = vsel %vm1961, %v3796, 0.0
        %3836 = vadd.xlane.f32.xlu0 %v3835
        %v3837 = vpop.xlane.xlu0 %3836
        %v3838 = vsel %vm1961, %v3798, 0.0
        %3839 = vadd.xlane.f32.xlu0 %v3838
        %v3840 = vpop.xlane.xlu0 %3839
        %v3841 = vsel %vm1961, %v3800, 0.0
        %3842 = vadd.xlane.f32.xlu0 %v3841
        %v3843 = vpop.xlane.xlu0 %3842
        %v3844 = vsel %vm1961, %v3802, 0.0
        %3845 = vadd.xlane.f32.xlu0 %v3844
        %v3846 = vpop.xlane.xlu0 %3845
        %v3847 = vsel %vm1961, %v3804, 0.0
        %3848 = vadd.xlane.f32.xlu0 %v3847
        %v3849 = vpop.xlane.xlu0 %3848
        %v3850 = vsel %vm1961, %v3806, 0.0
        %3851 = vadd.xlane.f32.xlu0 %v3850
        %v3852 = vpop.xlane.xlu0 %3851
        %v3853 = vsel %vm1961, %v3808, 0.0
        %3854 = vadd.xlane.f32.xlu0 %v3853
        %v3855 = vpop.xlane.xlu0 %3854
        %v3856 = vsel %vm1961, %v3810, 0.0
        %3857 = vadd.xlane.f32.xlu0 %v3856
        %v3858 = vpop.xlane.xlu0 %3857
        %v3859 = vrcp.pop %v3813
        %v3860 = vrcp.pop %v3816
        %v3861 = vrcp.pop %v3819
        %v3862 = vrcp.pop %v3822
        %v3863 = vrcp.pop %v3825
        %v3864 = vrcp.pop %v3828
        %v3865 = vrcp.pop %v3831
        %v3866 = vrcp.pop %v3834
        %v3867 = vrcp.pop %v3837
        %v3868 = vrcp.pop %v3840
        %v3869 = vrcp.pop %v3843
        %v3870 = vrcp.pop %v3846
        %v3871 = vrcp.pop %v3849
        %v3872 = vrcp.pop %v3852
        %v3873 = vrcp.pop %v3855
        %v3874 = vrcp.pop %v3858
        %v3875 = vmul.f32 %v3780, %v3859
        %v3876 = vmul.f32 %v3782, %v3860
        %v3877 = vmul.f32 %v3784, %v3861
        %v3878 = vmul.f32 %v3786, %v3862
        %v3879 = vmul.f32 %v3788, %v3863
        %v3880 = vmul.f32 %v3790, %v3864
        %v3881 = vmul.f32 %v3792, %v3865
        %v3882 = vmul.f32 %v3794, %v3866
        %v3883 = vmul.f32 %v3796, %v3867
        %v3884 = vmul.f32 %v3798, %v3868
        %v3885 = vmul.f32 %v3800, %v3869
        %v3886 = vmul.f32 %v3802, %v3870
        %v3887 = vmul.f32 %v3804, %v3871
        %v3888 = vmul.f32 %v3806, %v3872
        %v3889 = vmul.f32 %v3808, %v3873
        %v3890 = vmul.f32 %v3810, %v3874
        %v3891 = vpack.c.bf16 %v3875, %v3875
        %v3892 = vpack.c.bf16 %v3876, %v3876
        %v3893 = vpack.c.bf16 %v3877, %v3877
        %v3894 = vpack.c.bf16 %v3878, %v3878
        %v3895 = vpack.c.bf16 %v3879, %v3879
        %v3896 = vpack.c.bf16 %v3880, %v3880
        %v3897 = vpack.c.bf16 %v3881, %v3881
        %v3898 = vpack.c.bf16 %v3882, %v3882
        %v3899 = vpack.c.bf16 %v3883, %v3883
        %v3900 = vpack.c.bf16 %v3884, %v3884
        %v3901 = vpack.c.bf16 %v3885, %v3885
        %v3902 = vpack.c.bf16 %v3886, %v3886
        %v3903 = vpack.c.bf16 %v3887, %v3887
        %v3904 = vpack.c.bf16 %v3888, %v3888
        %v3905 = vpack.c.bf16 %v3889, %v3889
        %v3906 = vpack.c.bf16 %v3890, %v3890
        %3907 = vrot.lane.b32.xlu0 %v1192, 96
        %v3908 = vpop.permute.xlu0 %3907
        %v3910 = vsel %vm1961, %v3891, 0
        %v3913 = vsel %vm2157, %v3908, 0
        %3915 = vmatprep.subr.bf16.mxu0 0
        %3916 = vmatpush1.bf16.msra.mxu0 0
        %3917 = vmatprep.subr.bf16.mxu0 0
        %3918 = vmatpush1.bf16.msra.mxu0 0
        %3919 = vmatprep.subr.bf16.mxu0 0
        %3920 = vmatpush1.bf16.msra.mxu0 0
        %3921 = vmatprep.subr.bf16.mxu0 0
        %3922 = vmatpush1.bf16.msra.mxu0 0
        %3923 = vmatprep.subr.bf16.mxu0 0
        %3924 = vmatpush1.bf16.msra.mxu0 0
        %3925 = vmatprep.subr.bf16.mxu0 0
        %3926 = vmatpush1.bf16.msra.mxu0 0
        %3927 = vmatprep.subr.bf16.mxu0 0
        %3928 = vmatpush1.bf16.msra.mxu0 0
        %3929 = vmatprep.subr.bf16.mxu0 0
        %3930 = vmatpush1.bf16.msra.mxu0 %v3913
        %3931 = vmatprep.subr.bf16.mxu0 0
        %3932 = vmatpush2.bf16.msra.mxu0 0
        %3933 = vmatprep.subr.bf16.mxu0 0
        %3934 = vmatpush2.bf16.msra.mxu0 0
        %3935 = vmatprep.subr.bf16.mxu0 0
        %3936 = vmatpush2.bf16.msra.mxu0 0
        %3937 = vmatprep.subr.bf16.mxu0 0
        %3938 = vmatpush2.bf16.msra.mxu0 0
        %3939 = vmatprep.subr.bf16.mxu0 0
        %3940 = vmatpush2.bf16.msra.mxu0 0
        %3941 = vmatprep.subr.bf16.mxu0 0
        %3942 = vmatpush2.bf16.msra.mxu0 0
        %3943 = vmatprep.subr.bf16.mxu0 0
        %3944 = vmatpush2.bf16.msra.mxu0 0
        %3945 = vmatprep.subr.bf16.mxu0 0
        %3946 = vmatpush2.bf16.msra.mxu0 0
        %3947 = vmatprep.mubr.bf16.mxu0 0
        %3948 = vmatmul.mubr.bf16.gmra.mxu0 %v3910
        %v3949 = vpop.f32.mrf.mxu0
        %v3950 = vadd.f32 0.0, %v3949
        %v3951 = vpop.f32.mrf.mxu0
        %v3952 = vpop.f32.mrf.mxu0
        %v3953 = vpop.f32.mrf.mxu0
        %3954 = vdwg.mxu0
        %3955 = vrot.lane.b32.xlu0 %v1193, 96
        %v3956 = vpop.permute.xlu0 %3955
        %v3958 = vsel %vm1961, %v3892, 0
        %v3961 = vsel %vm2157, %v3956, 0
        %3963 = vmatprep.subr.bf16.mxu0 0
        %3964 = vmatpush1.bf16.msra.mxu0 0
        %3965 = vmatprep.subr.bf16.mxu0 0
        %3966 = vmatpush1.bf16.msra.mxu0 0
        %3967 = vmatprep.subr.bf16.mxu0 0
        %3968 = vmatpush1.bf16.msra.mxu0 0
        %3969 = vmatprep.subr.bf16.mxu0 0
        %3970 = vmatpush1.bf16.msra.mxu0 0
        %3971 = vmatprep.subr.bf16.mxu0 0
        %3972 = vmatpush1.bf16.msra.mxu0 0
        %3973 = vmatprep.subr.bf16.mxu0 0
        %3974 = vmatpush1.bf16.msra.mxu0 0
        %3975 = vmatprep.subr.bf16.mxu0 0
        %3976 = vmatpush1.bf16.msra.mxu0 0
        %3977 = vmatprep.subr.bf16.mxu0 0
        %3978 = vmatpush1.bf16.msra.mxu0 %v3961
        %3979 = vmatprep.subr.bf16.mxu0 0
        %3980 = vmatpush2.bf16.msra.mxu0 0
        %3981 = vmatprep.subr.bf16.mxu0 0
        %3982 = vmatpush2.bf16.msra.mxu0 0
        %3983 = vmatprep.subr.bf16.mxu0 0
        %3984 = vmatpush2.bf16.msra.mxu0 0
        %3985 = vmatprep.subr.bf16.mxu0 0
        %3986 = vmatpush2.bf16.msra.mxu0 0
        %3987 = vmatprep.subr.bf16.mxu0 0
        %3988 = vmatpush2.bf16.msra.mxu0 0
        %3989 = vmatprep.subr.bf16.mxu0 0
        %3990 = vmatpush2.bf16.msra.mxu0 0
        %3991 = vmatprep.subr.bf16.mxu0 0
        %3992 = vmatpush2.bf16.msra.mxu0 0
        %3993 = vmatprep.subr.bf16.mxu0 0
        %3994 = vmatpush2.bf16.msra.mxu0 0
        %3995 = vmatprep.mubr.bf16.mxu0 0
        %3996 = vmatmul.mubr.bf16.gmra.mxu0 %v3958
        %v3997 = vpop.f32.mrf.mxu0
        %v3998 = vadd.f32 0.0, %v3997
        %v3999 = vpop.f32.mrf.mxu0
        %v4000 = vpop.f32.mrf.mxu0
        %v4001 = vpop.f32.mrf.mxu0
        %4002 = vdwg.mxu0
        %4003 = vrot.lane.b32.xlu0 %v1194, 96
        %v4004 = vpop.permute.xlu0 %4003
        %v4006 = vsel %vm1961, %v3893, 0
        %v4009 = vsel %vm2157, %v4004, 0
        %4011 = vmatprep.subr.bf16.mxu0 0
        %4012 = vmatpush1.bf16.msra.mxu0 0
        %4013 = vmatprep.subr.bf16.mxu0 0
        %4014 = vmatpush1.bf16.msra.mxu0 0
        %4015 = vmatprep.subr.bf16.mxu0 0
        %4016 = vmatpush1.bf16.msra.mxu0 0
        %4017 = vmatprep.subr.bf16.mxu0 0
        %4018 = vmatpush1.bf16.msra.mxu0 0
        %4019 = vmatprep.subr.bf16.mxu0 0
        %4020 = vmatpush1.bf16.msra.mxu0 0
        %4021 = vmatprep.subr.bf16.mxu0 0
        %4022 = vmatpush1.bf16.msra.mxu0 0
        %4023 = vmatprep.subr.bf16.mxu0 0
        %4024 = vmatpush1.bf16.msra.mxu0 0
        %4025 = vmatprep.subr.bf16.mxu0 0
        %4026 = vmatpush1.bf16.msra.mxu0 %v4009
        %4027 = vmatprep.subr.bf16.mxu0 0
        %4028 = vmatpush2.bf16.msra.mxu0 0
        %4029 = vmatprep.subr.bf16.mxu0 0
        %4030 = vmatpush2.bf16.msra.mxu0 0
        %4031 = vmatprep.subr.bf16.mxu0 0
        %4032 = vmatpush2.bf16.msra.mxu0 0
        %4033 = vmatprep.subr.bf16.mxu0 0
        %4034 = vmatpush2.bf16.msra.mxu0 0
        %4035 = vmatprep.subr.bf16.mxu0 0
        %4036 = vmatpush2.bf16.msra.mxu0 0
        %4037 = vmatprep.subr.bf16.mxu0 0
        %4038 = vmatpush2.bf16.msra.mxu0 0
        %4039 = vmatprep.subr.bf16.mxu0 0
        %4040 = vmatpush2.bf16.msra.mxu0 0
        %4041 = vmatprep.subr.bf16.mxu0 0
        %4042 = vmatpush2.bf16.msra.mxu0 0
        %4043 = vmatprep.mubr.bf16.mxu0 0
        %4044 = vmatmul.mubr.bf16.gmra.mxu0 %v4006
        %v4045 = vpop.f32.mrf.mxu0
        %v4046 = vadd.f32 0.0, %v4045
        %v4047 = vpop.f32.mrf.mxu0
        %v4048 = vpop.f32.mrf.mxu0
        %v4049 = vpop.f32.mrf.mxu0
        %4050 = vdwg.mxu0
        %4051 = vrot.lane.b32.xlu0 %v1195, 96
        %v4052 = vpop.permute.xlu0 %4051
        %v4054 = vsel %vm1961, %v3894, 0
        %v4057 = vsel %vm2157, %v4052, 0
        %4059 = vmatprep.subr.bf16.mxu0 0
        %4060 = vmatpush1.bf16.msra.mxu0 0
        %4061 = vmatprep.subr.bf16.mxu0 0
        %4062 = vmatpush1.bf16.msra.mxu0 0
        %4063 = vmatprep.subr.bf16.mxu0 0
        %4064 = vmatpush1.bf16.msra.mxu0 0
        %4065 = vmatprep.subr.bf16.mxu0 0
        %4066 = vmatpush1.bf16.msra.mxu0 0
        %4067 = vmatprep.subr.bf16.mxu0 0
        %4068 = vmatpush1.bf16.msra.mxu0 0
        %4069 = vmatprep.subr.bf16.mxu0 0
        %4070 = vmatpush1.bf16.msra.mxu0 0
        %4071 = vmatprep.subr.bf16.mxu0 0
        %4072 = vmatpush1.bf16.msra.mxu0 0
        %4073 = vmatprep.subr.bf16.mxu0 0
        %4074 = vmatpush1.bf16.msra.mxu0 %v4057
        %4075 = vmatprep.subr.bf16.mxu0 0
        %4076 = vmatpush2.bf16.msra.mxu0 0
        %4077 = vmatprep.subr.bf16.mxu0 0
        %4078 = vmatpush2.bf16.msra.mxu0 0
        %4079 = vmatprep.subr.bf16.mxu0 0
        %4080 = vmatpush2.bf16.msra.mxu0 0
        %4081 = vmatprep.subr.bf16.mxu0 0
        %4082 = vmatpush2.bf16.msra.mxu0 0
        %4083 = vmatprep.subr.bf16.mxu0 0
        %4084 = vmatpush2.bf16.msra.mxu0 0
        %4085 = vmatprep.subr.bf16.mxu0 0
        %4086 = vmatpush2.bf16.msra.mxu0 0
        %4087 = vmatprep.subr.bf16.mxu0 0
        %4088 = vmatpush2.bf16.msra.mxu0 0
        %4089 = vmatprep.subr.bf16.mxu0 0
        %4090 = vmatpush2.bf16.msra.mxu0 0
        %4091 = vmatprep.mubr.bf16.mxu0 0
        %4092 = vmatmul.mubr.bf16.gmra.mxu0 %v4054
        %v4093 = vpop.f32.mrf.mxu0
        %v4094 = vadd.f32 0.0, %v4093
        %v4095 = vpop.f32.mrf.mxu0
        %v4096 = vpop.f32.mrf.mxu0
        %v4097 = vpop.f32.mrf.mxu0
        %4098 = vdwg.mxu0
        %4099 = vrot.lane.b32.xlu0 %v1196, 96
        %v4100 = vpop.permute.xlu0 %4099
        %v4102 = vsel %vm1961, %v3895, 0
        %v4105 = vsel %vm2157, %v4100, 0
        %4107 = vmatprep.subr.bf16.mxu0 0
        %4108 = vmatpush1.bf16.msra.mxu0 0
        %4109 = vmatprep.subr.bf16.mxu0 0
        %4110 = vmatpush1.bf16.msra.mxu0 0
        %4111 = vmatprep.subr.bf16.mxu0 0
        %4112 = vmatpush1.bf16.msra.mxu0 0
        %4113 = vmatprep.subr.bf16.mxu0 0
        %4114 = vmatpush1.bf16.msra.mxu0 0
        %4115 = vmatprep.subr.bf16.mxu0 0
        %4116 = vmatpush1.bf16.msra.mxu0 0
        %4117 = vmatprep.subr.bf16.mxu0 0
        %4118 = vmatpush1.bf16.msra.mxu0 0
        %4119 = vmatprep.subr.bf16.mxu0 0
        %4120 = vmatpush1.bf16.msra.mxu0 0
        %4121 = vmatprep.subr.bf16.mxu0 0
        %4122 = vmatpush1.bf16.msra.mxu0 %v4105
        %4123 = vmatprep.subr.bf16.mxu0 0
        %4124 = vmatpush2.bf16.msra.mxu0 0
        %4125 = vmatprep.subr.bf16.mxu0 0
        %4126 = vmatpush2.bf16.msra.mxu0 0
        %4127 = vmatprep.subr.bf16.mxu0 0
        %4128 = vmatpush2.bf16.msra.mxu0 0
        %4129 = vmatprep.subr.bf16.mxu0 0
        %4130 = vmatpush2.bf16.msra.mxu0 0
        %4131 = vmatprep.subr.bf16.mxu0 0
        %4132 = vmatpush2.bf16.msra.mxu0 0
        %4133 = vmatprep.subr.bf16.mxu0 0
        %4134 = vmatpush2.bf16.msra.mxu0 0
        %4135 = vmatprep.subr.bf16.mxu0 0
        %4136 = vmatpush2.bf16.msra.mxu0 0
        %4137 = vmatprep.subr.bf16.mxu0 0
        %4138 = vmatpush2.bf16.msra.mxu0 0
        %4139 = vmatprep.mubr.bf16.mxu0 0
        %4140 = vmatmul.mubr.bf16.gmra.mxu0 %v4102
        %v4141 = vpop.f32.mrf.mxu0
        %v4142 = vadd.f32 0.0, %v4141
        %v4143 = vpop.f32.mrf.mxu0
        %v4144 = vpop.f32.mrf.mxu0
        %v4145 = vpop.f32.mrf.mxu0
        %4146 = vdwg.mxu0
        %4147 = vrot.lane.b32.xlu0 %v1197, 96
        %v4148 = vpop.permute.xlu0 %4147
        %v4150 = vsel %vm1961, %v3896, 0
        %v4153 = vsel %vm2157, %v4148, 0
        %4155 = vmatprep.subr.bf16.mxu0 0
        %4156 = vmatpush1.bf16.msra.mxu0 0
        %4157 = vmatprep.subr.bf16.mxu0 0
        %4158 = vmatpush1.bf16.msra.mxu0 0
        %4159 = vmatprep.subr.bf16.mxu0 0
        %4160 = vmatpush1.bf16.msra.mxu0 0
        %4161 = vmatprep.subr.bf16.mxu0 0
        %4162 = vmatpush1.bf16.msra.mxu0 0
        %4163 = vmatprep.subr.bf16.mxu0 0
        %4164 = vmatpush1.bf16.msra.mxu0 0
        %4165 = vmatprep.subr.bf16.mxu0 0
        %4166 = vmatpush1.bf16.msra.mxu0 0
        %4167 = vmatprep.subr.bf16.mxu0 0
        %4168 = vmatpush1.bf16.msra.mxu0 0
        %4169 = vmatprep.subr.bf16.mxu0 0
        %4170 = vmatpush1.bf16.msra.mxu0 %v4153
        %4171 = vmatprep.subr.bf16.mxu0 0
        %4172 = vmatpush2.bf16.msra.mxu0 0
        %4173 = vmatprep.subr.bf16.mxu0 0
        %4174 = vmatpush2.bf16.msra.mxu0 0
        %4175 = vmatprep.subr.bf16.mxu0 0
        %4176 = vmatpush2.bf16.msra.mxu0 0
        %4177 = vmatprep.subr.bf16.mxu0 0
        %4178 = vmatpush2.bf16.msra.mxu0 0
        %4179 = vmatprep.subr.bf16.mxu0 0
        %4180 = vmatpush2.bf16.msra.mxu0 0
        %4181 = vmatprep.subr.bf16.mxu0 0
        %4182 = vmatpush2.bf16.msra.mxu0 0
        %4183 = vmatprep.subr.bf16.mxu0 0
        %4184 = vmatpush2.bf16.msra.mxu0 0
        %4185 = vmatprep.subr.bf16.mxu0 0
        %4186 = vmatpush2.bf16.msra.mxu0 0
        %4187 = vmatprep.mubr.bf16.mxu0 0
        %4188 = vmatmul.mubr.bf16.gmra.mxu0 %v4150
        %v4189 = vpop.f32.mrf.mxu0
        %v4190 = vadd.f32 0.0, %v4189
        %v4191 = vpop.f32.mrf.mxu0
        %v4192 = vpop.f32.mrf.mxu0
        %v4193 = vpop.f32.mrf.mxu0
        %4194 = vdwg.mxu0
        %4195 = vrot.lane.b32.xlu0 %v1198, 96
        %v4196 = vpop.permute.xlu0 %4195
        %v4198 = vsel %vm1961, %v3897, 0
        %v4201 = vsel %vm2157, %v4196, 0
        %4203 = vmatprep.subr.bf16.mxu0 0
        %4204 = vmatpush1.bf16.msra.mxu0 0
        %4205 = vmatprep.subr.bf16.mxu0 0
        %4206 = vmatpush1.bf16.msra.mxu0 0
        %4207 = vmatprep.subr.bf16.mxu0 0
        %4208 = vmatpush1.bf16.msra.mxu0 0
        %4209 = vmatprep.subr.bf16.mxu0 0
        %4210 = vmatpush1.bf16.msra.mxu0 0
        %4211 = vmatprep.subr.bf16.mxu0 0
        %4212 = vmatpush1.bf16.msra.mxu0 0
        %4213 = vmatprep.subr.bf16.mxu0 0
        %4214 = vmatpush1.bf16.msra.mxu0 0
        %4215 = vmatprep.subr.bf16.mxu0 0
        %4216 = vmatpush1.bf16.msra.mxu0 0
        %4217 = vmatprep.subr.bf16.mxu0 0
        %4218 = vmatpush1.bf16.msra.mxu0 %v4201
        %4219 = vmatprep.subr.bf16.mxu0 0
        %4220 = vmatpush2.bf16.msra.mxu0 0
        %4221 = vmatprep.subr.bf16.mxu0 0
        %4222 = vmatpush2.bf16.msra.mxu0 0
        %4223 = vmatprep.subr.bf16.mxu0 0
        %4224 = vmatpush2.bf16.msra.mxu0 0
        %4225 = vmatprep.subr.bf16.mxu0 0
        %4226 = vmatpush2.bf16.msra.mxu0 0
        %4227 = vmatprep.subr.bf16.mxu0 0
        %4228 = vmatpush2.bf16.msra.mxu0 0
        %4229 = vmatprep.subr.bf16.mxu0 0
        %4230 = vmatpush2.bf16.msra.mxu0 0
        %4231 = vmatprep.subr.bf16.mxu0 0
        %4232 = vmatpush2.bf16.msra.mxu0 0
        %4233 = vmatprep.subr.bf16.mxu0 0
        %4234 = vmatpush2.bf16.msra.mxu0 0
        %4235 = vmatprep.mubr.bf16.mxu0 0
        %4236 = vmatmul.mubr.bf16.gmra.mxu0 %v4198
        %v4237 = vpop.f32.mrf.mxu0
        %v4238 = vadd.f32 0.0, %v4237
        %v4239 = vpop.f32.mrf.mxu0
        %v4240 = vpop.f32.mrf.mxu0
        %v4241 = vpop.f32.mrf.mxu0
        %4242 = vdwg.mxu0
        %4243 = vrot.lane.b32.xlu0 %v1199, 96
        %v4244 = vpop.permute.xlu0 %4243
        %v4246 = vsel %vm1961, %v3898, 0
        %v4249 = vsel %vm2157, %v4244, 0
        %4251 = vmatprep.subr.bf16.mxu0 0
        %4252 = vmatpush1.bf16.msra.mxu0 0
        %4253 = vmatprep.subr.bf16.mxu0 0
        %4254 = vmatpush1.bf16.msra.mxu0 0
        %4255 = vmatprep.subr.bf16.mxu0 0
        %4256 = vmatpush1.bf16.msra.mxu0 0
        %4257 = vmatprep.subr.bf16.mxu0 0
        %4258 = vmatpush1.bf16.msra.mxu0 0
        %4259 = vmatprep.subr.bf16.mxu0 0
        %4260 = vmatpush1.bf16.msra.mxu0 0
        %4261 = vmatprep.subr.bf16.mxu0 0
        %4262 = vmatpush1.bf16.msra.mxu0 0
        %4263 = vmatprep.subr.bf16.mxu0 0
        %4264 = vmatpush1.bf16.msra.mxu0 0
        %4265 = vmatprep.subr.bf16.mxu0 0
        %4266 = vmatpush1.bf16.msra.mxu0 %v4249
        %4267 = vmatprep.subr.bf16.mxu0 0
        %4268 = vmatpush2.bf16.msra.mxu0 0
        %4269 = vmatprep.subr.bf16.mxu0 0
        %4270 = vmatpush2.bf16.msra.mxu0 0
        %4271 = vmatprep.subr.bf16.mxu0 0
        %4272 = vmatpush2.bf16.msra.mxu0 0
        %4273 = vmatprep.subr.bf16.mxu0 0
        %4274 = vmatpush2.bf16.msra.mxu0 0
        %4275 = vmatprep.subr.bf16.mxu0 0
        %4276 = vmatpush2.bf16.msra.mxu0 0
        %4277 = vmatprep.subr.bf16.mxu0 0
        %4278 = vmatpush2.bf16.msra.mxu0 0
        %4279 = vmatprep.subr.bf16.mxu0 0
        %4280 = vmatpush2.bf16.msra.mxu0 0
        %4281 = vmatprep.subr.bf16.mxu0 0
        %4282 = vmatpush2.bf16.msra.mxu0 0
        %4283 = vmatprep.mubr.bf16.mxu0 0
        %4284 = vmatmul.mubr.bf16.gmra.mxu0 %v4246
        %v4285 = vpop.f32.mrf.mxu0
        %v4286 = vadd.f32 0.0, %v4285
        %v4287 = vpop.f32.mrf.mxu0
        %v4288 = vpop.f32.mrf.mxu0
        %v4289 = vpop.f32.mrf.mxu0
        %4290 = vdwg.mxu0
        %4291 = vrot.lane.b32.xlu0 %v1200, 96
        %v4292 = vpop.permute.xlu0 %4291
        %v4294 = vsel %vm1961, %v3899, 0
        %v4297 = vsel %vm2157, %v4292, 0
        %4299 = vmatprep.subr.bf16.mxu0 0
        %4300 = vmatpush1.bf16.msra.mxu0 0
        %4301 = vmatprep.subr.bf16.mxu0 0
        %4302 = vmatpush1.bf16.msra.mxu0 0
        %4303 = vmatprep.subr.bf16.mxu0 0
        %4304 = vmatpush1.bf16.msra.mxu0 0
        %4305 = vmatprep.subr.bf16.mxu0 0
        %4306 = vmatpush1.bf16.msra.mxu0 0
        %4307 = vmatprep.subr.bf16.mxu0 0
        %4308 = vmatpush1.bf16.msra.mxu0 0
        %4309 = vmatprep.subr.bf16.mxu0 0
        %4310 = vmatpush1.bf16.msra.mxu0 0
        %4311 = vmatprep.subr.bf16.mxu0 0
        %4312 = vmatpush1.bf16.msra.mxu0 0
        %4313 = vmatprep.subr.bf16.mxu0 0
        %4314 = vmatpush1.bf16.msra.mxu0 %v4297
        %4315 = vmatprep.subr.bf16.mxu0 0
        %4316 = vmatpush2.bf16.msra.mxu0 0
        %4317 = vmatprep.subr.bf16.mxu0 0
        %4318 = vmatpush2.bf16.msra.mxu0 0
        %4319 = vmatprep.subr.bf16.mxu0 0
        %4320 = vmatpush2.bf16.msra.mxu0 0
        %4321 = vmatprep.subr.bf16.mxu0 0
        %4322 = vmatpush2.bf16.msra.mxu0 0
        %4323 = vmatprep.subr.bf16.mxu0 0
        %4324 = vmatpush2.bf16.msra.mxu0 0
        %4325 = vmatprep.subr.bf16.mxu0 0
        %4326 = vmatpush2.bf16.msra.mxu0 0
        %4327 = vmatprep.subr.bf16.mxu0 0
        %4328 = vmatpush2.bf16.msra.mxu0 0
        %4329 = vmatprep.subr.bf16.mxu0 0
        %4330 = vmatpush2.bf16.msra.mxu0 0
        %4331 = vmatprep.mubr.bf16.mxu0 0
        %4332 = vmatmul.mubr.bf16.gmra.mxu0 %v4294
        %v4333 = vpop.f32.mrf.mxu0
        %v4334 = vadd.f32 0.0, %v4333
        %v4335 = vpop.f32.mrf.mxu0
        %v4336 = vpop.f32.mrf.mxu0
        %v4337 = vpop.f32.mrf.mxu0
        %4338 = vdwg.mxu0
        %4339 = vrot.lane.b32.xlu0 %v1201, 96
        %v4340 = vpop.permute.xlu0 %4339
        %v4342 = vsel %vm1961, %v3900, 0
        %v4345 = vsel %vm2157, %v4340, 0
        %4347 = vmatprep.subr.bf16.mxu0 0
        %4348 = vmatpush1.bf16.msra.mxu0 0
        %4349 = vmatprep.subr.bf16.mxu0 0
        %4350 = vmatpush1.bf16.msra.mxu0 0
        %4351 = vmatprep.subr.bf16.mxu0 0
        %4352 = vmatpush1.bf16.msra.mxu0 0
        %4353 = vmatprep.subr.bf16.mxu0 0
        %4354 = vmatpush1.bf16.msra.mxu0 0
        %4355 = vmatprep.subr.bf16.mxu0 0
        %4356 = vmatpush1.bf16.msra.mxu0 0
        %4357 = vmatprep.subr.bf16.mxu0 0
        %4358 = vmatpush1.bf16.msra.mxu0 0
        %4359 = vmatprep.subr.bf16.mxu0 0
        %4360 = vmatpush1.bf16.msra.mxu0 0
        %4361 = vmatprep.subr.bf16.mxu0 0
        %4362 = vmatpush1.bf16.msra.mxu0 %v4345
        %4363 = vmatprep.subr.bf16.mxu0 0
        %4364 = vmatpush2.bf16.msra.mxu0 0
        %4365 = vmatprep.subr.bf16.mxu0 0
        %4366 = vmatpush2.bf16.msra.mxu0 0
        %4367 = vmatprep.subr.bf16.mxu0 0
        %4368 = vmatpush2.bf16.msra.mxu0 0
        %4369 = vmatprep.subr.bf16.mxu0 0
        %4370 = vmatpush2.bf16.msra.mxu0 0
        %4371 = vmatprep.subr.bf16.mxu0 0
        %4372 = vmatpush2.bf16.msra.mxu0 0
        %4373 = vmatprep.subr.bf16.mxu0 0
        %4374 = vmatpush2.bf16.msra.mxu0 0
        %4375 = vmatprep.subr.bf16.mxu0 0
        %4376 = vmatpush2.bf16.msra.mxu0 0
        %4377 = vmatprep.subr.bf16.mxu0 0
        %4378 = vmatpush2.bf16.msra.mxu0 0
        %4379 = vmatprep.mubr.bf16.mxu0 0
        %4380 = vmatmul.mubr.bf16.gmra.mxu0 %v4342
        %v4381 = vpop.f32.mrf.mxu0
        %v4382 = vadd.f32 0.0, %v4381
        %v4383 = vpop.f32.mrf.mxu0
        %v4384 = vpop.f32.mrf.mxu0
        %v4385 = vpop.f32.mrf.mxu0
        %4386 = vdwg.mxu0
        %4387 = vrot.lane.b32.xlu0 %v1202, 96
        %v4388 = vpop.permute.xlu0 %4387
        %v4390 = vsel %vm1961, %v3901, 0
        %v4393 = vsel %vm2157, %v4388, 0
        %4395 = vmatprep.subr.bf16.mxu0 0
        %4396 = vmatpush1.bf16.msra.mxu0 0
        %4397 = vmatprep.subr.bf16.mxu0 0
        %4398 = vmatpush1.bf16.msra.mxu0 0
        %4399 = vmatprep.subr.bf16.mxu0 0
        %4400 = vmatpush1.bf16.msra.mxu0 0
        %4401 = vmatprep.subr.bf16.mxu0 0
        %4402 = vmatpush1.bf16.msra.mxu0 0
        %4403 = vmatprep.subr.bf16.mxu0 0
        %4404 = vmatpush1.bf16.msra.mxu0 0
        %4405 = vmatprep.subr.bf16.mxu0 0
        %4406 = vmatpush1.bf16.msra.mxu0 0
        %4407 = vmatprep.subr.bf16.mxu0 0
        %4408 = vmatpush1.bf16.msra.mxu0 0
        %4409 = vmatprep.subr.bf16.mxu0 0
        %4410 = vmatpush1.bf16.msra.mxu0 %v4393
        %4411 = vmatprep.subr.bf16.mxu0 0
        %4412 = vmatpush2.bf16.msra.mxu0 0
        %4413 = vmatprep.subr.bf16.mxu0 0
        %4414 = vmatpush2.bf16.msra.mxu0 0
        %4415 = vmatprep.subr.bf16.mxu0 0
        %4416 = vmatpush2.bf16.msra.mxu0 0
        %4417 = vmatprep.subr.bf16.mxu0 0
        %4418 = vmatpush2.bf16.msra.mxu0 0
        %4419 = vmatprep.subr.bf16.mxu0 0
        %4420 = vmatpush2.bf16.msra.mxu0 0
        %4421 = vmatprep.subr.bf16.mxu0 0
        %4422 = vmatpush2.bf16.msra.mxu0 0
        %4423 = vmatprep.subr.bf16.mxu0 0
        %4424 = vmatpush2.bf16.msra.mxu0 0
        %4425 = vmatprep.subr.bf16.mxu0 0
        %4426 = vmatpush2.bf16.msra.mxu0 0
        %4427 = vmatprep.mubr.bf16.mxu0 0
        %4428 = vmatmul.mubr.bf16.gmra.mxu0 %v4390
        %v4429 = vpop.f32.mrf.mxu0
        %v4430 = vadd.f32 0.0, %v4429
        %v4431 = vpop.f32.mrf.mxu0
        %v4432 = vpop.f32.mrf.mxu0
        %v4433 = vpop.f32.mrf.mxu0
        %4434 = vdwg.mxu0
        %4435 = vrot.lane.b32.xlu0 %v1203, 96
        %v4436 = vpop.permute.xlu0 %4435
        %v4438 = vsel %vm1961, %v3902, 0
        %v4441 = vsel %vm2157, %v4436, 0
        %4443 = vmatprep.subr.bf16.mxu0 0
        %4444 = vmatpush1.bf16.msra.mxu0 0
        %4445 = vmatprep.subr.bf16.mxu0 0
        %4446 = vmatpush1.bf16.msra.mxu0 0
        %4447 = vmatprep.subr.bf16.mxu0 0
        %4448 = vmatpush1.bf16.msra.mxu0 0
        %4449 = vmatprep.subr.bf16.mxu0 0
        %4450 = vmatpush1.bf16.msra.mxu0 0
        %4451 = vmatprep.subr.bf16.mxu0 0
        %4452 = vmatpush1.bf16.msra.mxu0 0
        %4453 = vmatprep.subr.bf16.mxu0 0
        %4454 = vmatpush1.bf16.msra.mxu0 0
        %4455 = vmatprep.subr.bf16.mxu0 0
        %4456 = vmatpush1.bf16.msra.mxu0 0
        %4457 = vmatprep.subr.bf16.mxu0 0
        %4458 = vmatpush1.bf16.msra.mxu0 %v4441
        %4459 = vmatprep.subr.bf16.mxu0 0
        %4460 = vmatpush2.bf16.msra.mxu0 0
        %4461 = vmatprep.subr.bf16.mxu0 0
        %4462 = vmatpush2.bf16.msra.mxu0 0
        %4463 = vmatprep.subr.bf16.mxu0 0
        %4464 = vmatpush2.bf16.msra.mxu0 0
        %4465 = vmatprep.subr.bf16.mxu0 0
        %4466 = vmatpush2.bf16.msra.mxu0 0
        %4467 = vmatprep.subr.bf16.mxu0 0
        %4468 = vmatpush2.bf16.msra.mxu0 0
        %4469 = vmatprep.subr.bf16.mxu0 0
        %4470 = vmatpush2.bf16.msra.mxu0 0
        %4471 = vmatprep.subr.bf16.mxu0 0
        %4472 = vmatpush2.bf16.msra.mxu0 0
        %4473 = vmatprep.subr.bf16.mxu0 0
        %4474 = vmatpush2.bf16.msra.mxu0 0
        %4475 = vmatprep.mubr.bf16.mxu0 0
        %4476 = vmatmul.mubr.bf16.gmra.mxu0 %v4438
        %v4477 = vpop.f32.mrf.mxu0
        %v4478 = vadd.f32 0.0, %v4477
        %v4479 = vpop.f32.mrf.mxu0
        %v4480 = vpop.f32.mrf.mxu0
        %v4481 = vpop.f32.mrf.mxu0
        %4482 = vdwg.mxu0
        %4483 = vrot.lane.b32.xlu0 %v1204, 96
        %v4484 = vpop.permute.xlu0 %4483
        %v4486 = vsel %vm1961, %v3903, 0
        %v4489 = vsel %vm2157, %v4484, 0
        %4491 = vmatprep.subr.bf16.mxu0 0
        %4492 = vmatpush1.bf16.msra.mxu0 0
        %4493 = vmatprep.subr.bf16.mxu0 0
        %4494 = vmatpush1.bf16.msra.mxu0 0
        %4495 = vmatprep.subr.bf16.mxu0 0
        %4496 = vmatpush1.bf16.msra.mxu0 0
        %4497 = vmatprep.subr.bf16.mxu0 0
        %4498 = vmatpush1.bf16.msra.mxu0 0
        %4499 = vmatprep.subr.bf16.mxu0 0
        %4500 = vmatpush1.bf16.msra.mxu0 0
        %4501 = vmatprep.subr.bf16.mxu0 0
        %4502 = vmatpush1.bf16.msra.mxu0 0
        %4503 = vmatprep.subr.bf16.mxu0 0
        %4504 = vmatpush1.bf16.msra.mxu0 0
        %4505 = vmatprep.subr.bf16.mxu0 0
        %4506 = vmatpush1.bf16.msra.mxu0 %v4489
        %4507 = vmatprep.subr.bf16.mxu0 0
        %4508 = vmatpush2.bf16.msra.mxu0 0
        %4509 = vmatprep.subr.bf16.mxu0 0
        %4510 = vmatpush2.bf16.msra.mxu0 0
        %4511 = vmatprep.subr.bf16.mxu0 0
        %4512 = vmatpush2.bf16.msra.mxu0 0
        %4513 = vmatprep.subr.bf16.mxu0 0
        %4514 = vmatpush2.bf16.msra.mxu0 0
        %4515 = vmatprep.subr.bf16.mxu0 0
        %4516 = vmatpush2.bf16.msra.mxu0 0
        %4517 = vmatprep.subr.bf16.mxu0 0
        %4518 = vmatpush2.bf16.msra.mxu0 0
        %4519 = vmatprep.subr.bf16.mxu0 0
        %4520 = vmatpush2.bf16.msra.mxu0 0
        %4521 = vmatprep.subr.bf16.mxu0 0
        %4522 = vmatpush2.bf16.msra.mxu0 0
        %4523 = vmatprep.mubr.bf16.mxu0 0
        %4524 = vmatmul.mubr.bf16.gmra.mxu0 %v4486
        %v4525 = vpop.f32.mrf.mxu0
        %v4526 = vadd.f32 0.0, %v4525
        %v4527 = vpop.f32.mrf.mxu0
        %v4528 = vpop.f32.mrf.mxu0
        %v4529 = vpop.f32.mrf.mxu0
        %4530 = vdwg.mxu0
        %4531 = vrot.lane.b32.xlu0 %v1205, 96
        %v4532 = vpop.permute.xlu0 %4531
        %v4534 = vsel %vm1961, %v3904, 0
        %v4537 = vsel %vm2157, %v4532, 0
        %4539 = vmatprep.subr.bf16.mxu0 0
        %4540 = vmatpush1.bf16.msra.mxu0 0
        %4541 = vmatprep.subr.bf16.mxu0 0
        %4542 = vmatpush1.bf16.msra.mxu0 0
        %4543 = vmatprep.subr.bf16.mxu0 0
        %4544 = vmatpush1.bf16.msra.mxu0 0
        %4545 = vmatprep.subr.bf16.mxu0 0
        %4546 = vmatpush1.bf16.msra.mxu0 0
        %4547 = vmatprep.subr.bf16.mxu0 0
        %4548 = vmatpush1.bf16.msra.mxu0 0
        %4549 = vmatprep.subr.bf16.mxu0 0
        %4550 = vmatpush1.bf16.msra.mxu0 0
        %4551 = vmatprep.subr.bf16.mxu0 0
        %4552 = vmatpush1.bf16.msra.mxu0 0
        %4553 = vmatprep.subr.bf16.mxu0 0
        %4554 = vmatpush1.bf16.msra.mxu0 %v4537
        %4555 = vmatprep.subr.bf16.mxu0 0
        %4556 = vmatpush2.bf16.msra.mxu0 0
        %4557 = vmatprep.subr.bf16.mxu0 0
        %4558 = vmatpush2.bf16.msra.mxu0 0
        %4559 = vmatprep.subr.bf16.mxu0 0
        %4560 = vmatpush2.bf16.msra.mxu0 0
        %4561 = vmatprep.subr.bf16.mxu0 0
        %4562 = vmatpush2.bf16.msra.mxu0 0
        %4563 = vmatprep.subr.bf16.mxu0 0
        %4564 = vmatpush2.bf16.msra.mxu0 0
        %4565 = vmatprep.subr.bf16.mxu0 0
        %4566 = vmatpush2.bf16.msra.mxu0 0
        %4567 = vmatprep.subr.bf16.mxu0 0
        %4568 = vmatpush2.bf16.msra.mxu0 0
        %4569 = vmatprep.subr.bf16.mxu0 0
        %4570 = vmatpush2.bf16.msra.mxu0 0
        %4571 = vmatprep.mubr.bf16.mxu0 0
        %4572 = vmatmul.mubr.bf16.gmra.mxu0 %v4534
        %v4573 = vpop.f32.mrf.mxu0
        %v4574 = vadd.f32 0.0, %v4573
        %v4575 = vpop.f32.mrf.mxu0
        %v4576 = vpop.f32.mrf.mxu0
        %v4577 = vpop.f32.mrf.mxu0
        %4578 = vdwg.mxu0
        %4579 = vrot.lane.b32.xlu0 %v1206, 96
        %v4580 = vpop.permute.xlu0 %4579
        %v4582 = vsel %vm1961, %v3905, 0
        %v4585 = vsel %vm2157, %v4580, 0
        %4587 = vmatprep.subr.bf16.mxu0 0
        %4588 = vmatpush1.bf16.msra.mxu0 0
        %4589 = vmatprep.subr.bf16.mxu0 0
        %4590 = vmatpush1.bf16.msra.mxu0 0
        %4591 = vmatprep.subr.bf16.mxu0 0
        %4592 = vmatpush1.bf16.msra.mxu0 0
        %4593 = vmatprep.subr.bf16.mxu0 0
        %4594 = vmatpush1.bf16.msra.mxu0 0
        %4595 = vmatprep.subr.bf16.mxu0 0
        %4596 = vmatpush1.bf16.msra.mxu0 0
        %4597 = vmatprep.subr.bf16.mxu0 0
        %4598 = vmatpush1.bf16.msra.mxu0 0
        %4599 = vmatprep.subr.bf16.mxu0 0
        %4600 = vmatpush1.bf16.msra.mxu0 0
        %4601 = vmatprep.subr.bf16.mxu0 0
        %4602 = vmatpush1.bf16.msra.mxu0 %v4585
        %4603 = vmatprep.subr.bf16.mxu0 0
        %4604 = vmatpush2.bf16.msra.mxu0 0
        %4605 = vmatprep.subr.bf16.mxu0 0
        %4606 = vmatpush2.bf16.msra.mxu0 0
        %4607 = vmatprep.subr.bf16.mxu0 0
        %4608 = vmatpush2.bf16.msra.mxu0 0
        %4609 = vmatprep.subr.bf16.mxu0 0
        %4610 = vmatpush2.bf16.msra.mxu0 0
        %4611 = vmatprep.subr.bf16.mxu0 0
        %4612 = vmatpush2.bf16.msra.mxu0 0
        %4613 = vmatprep.subr.bf16.mxu0 0
        %4614 = vmatpush2.bf16.msra.mxu0 0
        %4615 = vmatprep.subr.bf16.mxu0 0
        %4616 = vmatpush2.bf16.msra.mxu0 0
        %4617 = vmatprep.subr.bf16.mxu0 0
        %4618 = vmatpush2.bf16.msra.mxu0 0
        %4619 = vmatprep.mubr.bf16.mxu0 0
        %4620 = vmatmul.mubr.bf16.gmra.mxu0 %v4582
        %v4621 = vpop.f32.mrf.mxu0
        %v4622 = vadd.f32 0.0, %v4621
        %v4623 = vpop.f32.mrf.mxu0
        %v4624 = vpop.f32.mrf.mxu0
        %v4625 = vpop.f32.mrf.mxu0
        %4626 = vdwg.mxu0
        %4627 = vrot.lane.b32.xlu0 %v1207, 96
        %v4628 = vpop.permute.xlu0 %4627
        %v4630 = vsel %vm1961, %v3906, 0
        %v4633 = vsel %vm2157, %v4628, 0
        %4635 = vmatprep.subr.bf16.mxu0 0
        %4636 = vmatpush1.bf16.msra.mxu0 0
        %4637 = vmatprep.subr.bf16.mxu0 0
        %4638 = vmatpush1.bf16.msra.mxu0 0
        %4639 = vmatprep.subr.bf16.mxu0 0
        %4640 = vmatpush1.bf16.msra.mxu0 0
        %4641 = vmatprep.subr.bf16.mxu0 0
        %4642 = vmatpush1.bf16.msra.mxu0 0
        %4643 = vmatprep.subr.bf16.mxu0 0
        %4644 = vmatpush1.bf16.msra.mxu0 0
        %4645 = vmatprep.subr.bf16.mxu0 0
        %4646 = vmatpush1.bf16.msra.mxu0 0
        %4647 = vmatprep.subr.bf16.mxu0 0
        %4648 = vmatpush1.bf16.msra.mxu0 0
        %4649 = vmatprep.subr.bf16.mxu0 0
        %4650 = vmatpush1.bf16.msra.mxu0 %v4633
        %4651 = vmatprep.subr.bf16.mxu0 0
        %4652 = vmatpush2.bf16.msra.mxu0 0
        %4653 = vmatprep.subr.bf16.mxu0 0
        %4654 = vmatpush2.bf16.msra.mxu0 0
        %4655 = vmatprep.subr.bf16.mxu0 0
        %4656 = vmatpush2.bf16.msra.mxu0 0
        %4657 = vmatprep.subr.bf16.mxu0 0
        %4658 = vmatpush2.bf16.msra.mxu0 0
        %4659 = vmatprep.subr.bf16.mxu0 0
        %4660 = vmatpush2.bf16.msra.mxu0 0
        %4661 = vmatprep.subr.bf16.mxu0 0
        %4662 = vmatpush2.bf16.msra.mxu0 0
        %4663 = vmatprep.subr.bf16.mxu0 0
        %4664 = vmatpush2.bf16.msra.mxu0 0
        %4665 = vmatprep.subr.bf16.mxu0 0
        %4666 = vmatpush2.bf16.msra.mxu0 0
        %4667 = vmatprep.mubr.bf16.mxu0 0
        %4668 = vmatmul.mubr.bf16.gmra.mxu0 %v4630
        %v4669 = vpop.f32.mrf.mxu0
        %v4670 = vadd.f32 0.0, %v4669
        %v4671 = vpop.f32.mrf.mxu0
        %v4672 = vpop.f32.mrf.mxu0
        %v4673 = vpop.f32.mrf.mxu0
        %4674 = vdwg.mxu0
        %v4675 = vpack.c.bf16 %v3998, %v3950
        %v4676 = vpack.c.bf16 %v4094, %v4046
        %v4677 = vpack.c.bf16 %v4190, %v4142
        %v4678 = vpack.c.bf16 %v4286, %v4238
        %v4679 = vpack.c.bf16 %v4382, %v4334
        %v4680 = vpack.c.bf16 %v4478, %v4430
        %v4681 = vpack.c.bf16 %v4574, %v4526
        %v4682 = vpack.c.bf16 %v4670, %v4622
        %v4687 = vunpack.c.l.b16 %v595
        %v4688 = vunpack.c.l.b16 %v596
        %v4689 = vunpack.c.l.b16 %v597
        %v4690 = vunpack.c.l.b16 %v598
        %v4691 = vpack.c.b16 %v4688, %v4687
        %v4692 = vpack.c.b16 %v4690, %v4689
        %v4696 = vsel %vm1208, %v4675, 0
        %v4699 = vsel %vm1208, %v4676, 0
        %v4702 = vsel %vm1208, %v4677, 0
        %v4705 = vsel %vm1208, %v4678, 0
        %v4708 = vsel %vm1208, %v4679, 0
        %v4711 = vsel %vm1208, %v4680, 0
        %v4714 = vsel %vm1208, %v4681, 0
        %v4717 = vsel %vm1208, %v4682, 0
        %4719 = vmatprep.subr.bf16.mxu0 0
        %4720 = vmatpush1.bf16.msra.mxu0 0
        %4721 = vmatprep.subr.bf16.mxu0 0
        %4722 = vmatpush1.bf16.msra.mxu0 0
        %4723 = vmatprep.subr.bf16.mxu0 0
        %4724 = vmatpush1.bf16.msra.mxu0 0
        %4725 = vmatprep.subr.bf16.mxu0 0
        %4726 = vmatpush1.bf16.msra.mxu0 0
        %4727 = vmatprep.subr.bf16.mxu0 0
        %4728 = vmatpush1.bf16.msra.mxu0 0
        %4729 = vmatprep.subr.bf16.mxu0 0
        %4730 = vmatpush1.bf16.msra.mxu0 0
        %4731 = vmatprep.subr.bf16.mxu0 0
        %4732 = vmatpush1.bf16.msra.mxu0 %v4692
        %4733 = vmatprep.subr.bf16.mxu0 0
        %4734 = vmatpush1.bf16.msra.mxu0 %v4691
        %4735 = vmatprep.subr.bf16.mxu0 0
        %4736 = vmatpush2.bf16.msra.mxu0 0
        %4737 = vmatprep.subr.bf16.mxu0 0
        %4738 = vmatpush2.bf16.msra.mxu0 0
        %4739 = vmatprep.subr.bf16.mxu0 0
        %4740 = vmatpush2.bf16.msra.mxu0 0
        %4741 = vmatprep.subr.bf16.mxu0 0
        %4742 = vmatpush2.bf16.msra.mxu0 0
        %4743 = vmatprep.subr.bf16.mxu0 0
        %4744 = vmatpush2.bf16.msra.mxu0 0
        %4745 = vmatprep.subr.bf16.mxu0 0
        %4746 = vmatpush2.bf16.msra.mxu0 0
        %4747 = vmatprep.subr.bf16.mxu0 0
        %4748 = vmatpush2.bf16.msra.mxu0 0
        %4749 = vmatprep.subr.bf16.mxu0 0
        %4750 = vmatpush2.bf16.msra.mxu0 0
        %4751 = vmatprep.mubr.bf16.mxu0 0
        %4752 = vmatmul.mubr.bf16.gmra.mxu0 %v4696
        %v4753 = vpop.f32.mrf.mxu0
        %v4754 = vadd.f32 0.0, %v4753
        %v4755 = vpop.f32.mrf.mxu0
        %v4756 = vpop.f32.mrf.mxu0
        %v4757 = vadd.f32 0.0, %v4756
        %v4758 = vpop.f32.mrf.mxu0
        %4759 = vmatprep.mubr.bf16.mxu0 0
        %4760 = vmatmul.mubr.bf16.gmra.mxu0 %v4699
        %v4761 = vpop.f32.mrf.mxu0
        %v4762 = vadd.f32 0.0, %v4761
        %v4763 = vpop.f32.mrf.mxu0
        %v4764 = vpop.f32.mrf.mxu0
        %v4765 = vadd.f32 0.0, %v4764
        %v4766 = vpop.f32.mrf.mxu0
        %4767 = vmatprep.mubr.bf16.mxu0 0
        %4768 = vmatmul.mubr.bf16.gmra.mxu0 %v4702
        %v4769 = vpop.f32.mrf.mxu0
        %v4770 = vadd.f32 0.0, %v4769
        %v4771 = vpop.f32.mrf.mxu0
        %v4772 = vpop.f32.mrf.mxu0
        %v4773 = vadd.f32 0.0, %v4772
        %v4774 = vpop.f32.mrf.mxu0
        %4775 = vmatprep.mubr.bf16.mxu0 0
        %4776 = vmatmul.mubr.bf16.gmra.mxu0 %v4705
        %v4777 = vpop.f32.mrf.mxu0
        %v4778 = vadd.f32 0.0, %v4777
        %v4779 = vpop.f32.mrf.mxu0
        %v4780 = vpop.f32.mrf.mxu0
        %v4781 = vadd.f32 0.0, %v4780
        %v4782 = vpop.f32.mrf.mxu0
        %4783 = vmatprep.mubr.bf16.mxu0 0
        %4784 = vmatmul.mubr.bf16.gmra.mxu0 %v4708
        %v4785 = vpop.f32.mrf.mxu0
        %v4786 = vadd.f32 0.0, %v4785
        %v4787 = vpop.f32.mrf.mxu0
        %v4788 = vpop.f32.mrf.mxu0
        %v4789 = vadd.f32 0.0, %v4788
        %v4790 = vpop.f32.mrf.mxu0
        %4791 = vmatprep.mubr.bf16.mxu0 0
        %4792 = vmatmul.mubr.bf16.gmra.mxu0 %v4711
        %v4793 = vpop.f32.mrf.mxu0
        %v4794 = vadd.f32 0.0, %v4793
        %v4795 = vpop.f32.mrf.mxu0
        %v4796 = vpop.f32.mrf.mxu0
        %v4797 = vadd.f32 0.0, %v4796
        %v4798 = vpop.f32.mrf.mxu0
        %4799 = vmatprep.mubr.bf16.mxu0 0
        %4800 = vmatmul.mubr.bf16.gmra.mxu0 %v4714
        %v4801 = vpop.f32.mrf.mxu0
        %v4802 = vadd.f32 0.0, %v4801
        %v4803 = vpop.f32.mrf.mxu0
        %v4804 = vpop.f32.mrf.mxu0
        %v4805 = vadd.f32 0.0, %v4804
        %v4806 = vpop.f32.mrf.mxu0
        %4807 = vmatprep.mubr.bf16.mxu0 0
        %4808 = vmatmul.mubr.bf16.gmra.mxu0 %v4717
        %v4809 = vpop.f32.mrf.mxu0
        %v4810 = vadd.f32 0.0, %v4809
        %v4811 = vpop.f32.mrf.mxu0
        %v4812 = vpop.f32.mrf.mxu0
        %v4813 = vadd.f32 0.0, %v4812
        %v4814 = vpop.f32.mrf.mxu0
        %4815 = vdwg.mxu0
        %v4820 = vunpack.c.l.b16 %v591
        %v4821 = vunpack.c.l.b16 %v592
        %v4822 = vunpack.c.l.b16 %v593
        %v4823 = vunpack.c.l.b16 %v594
        %v4824 = vpack.c.b16 %v4821, %v4820
        %v4825 = vpack.c.b16 %v4823, %v4822
        %v4829 = vsel %vm1208, %v2891, 0
        %v4832 = vsel %vm1208, %v2892, 0
        %v4835 = vsel %vm1208, %v2893, 0
        %v4838 = vsel %vm1208, %v2894, 0
        %v4841 = vsel %vm1208, %v2895, 0
        %v4844 = vsel %vm1208, %v2896, 0
        %v4847 = vsel %vm1208, %v2897, 0
        %v4850 = vsel %vm1208, %v2898, 0
        %4852 = vmatprep.subr.bf16.mxu0 0
        %4853 = vmatpush1.bf16.msra.mxu0 0
        %4854 = vmatprep.subr.bf16.mxu0 0
        %4855 = vmatpush1.bf16.msra.mxu0 0
        %4856 = vmatprep.subr.bf16.mxu0 0
        %4857 = vmatpush1.bf16.msra.mxu0 0
        %4858 = vmatprep.subr.bf16.mxu0 0
        %4859 = vmatpush1.bf16.msra.mxu0 0
        %4860 = vmatprep.subr.bf16.mxu0 0
        %4861 = vmatpush1.bf16.msra.mxu0 0
        %4862 = vmatprep.subr.bf16.mxu0 0
        %4863 = vmatpush1.bf16.msra.mxu0 0
        %4864 = vmatprep.subr.bf16.mxu0 0
        %4865 = vmatpush1.bf16.msra.mxu0 %v4825
        %4866 = vmatprep.subr.bf16.mxu0 0
        %4867 = vmatpush1.bf16.msra.mxu0 %v4824
        %4868 = vmatprep.subr.bf16.mxu0 0
        %4869 = vmatpush2.bf16.msra.mxu0 0
        %4870 = vmatprep.subr.bf16.mxu0 0
        %4871 = vmatpush2.bf16.msra.mxu0 0
        %4872 = vmatprep.subr.bf16.mxu0 0
        %4873 = vmatpush2.bf16.msra.mxu0 0
        %4874 = vmatprep.subr.bf16.mxu0 0
        %4875 = vmatpush2.bf16.msra.mxu0 0
        %4876 = vmatprep.subr.bf16.mxu0 0
        %4877 = vmatpush2.bf16.msra.mxu0 0
        %4878 = vmatprep.subr.bf16.mxu0 0
        %4879 = vmatpush2.bf16.msra.mxu0 0
        %4880 = vmatprep.subr.bf16.mxu0 0
        %4881 = vmatpush2.bf16.msra.mxu0 0
        %4882 = vmatprep.subr.bf16.mxu0 0
        %4883 = vmatpush2.bf16.msra.mxu0 0
        %4884 = vmatprep.mubr.bf16.mxu0 0
        %4885 = vmatmul.mubr.bf16.gmra.mxu0 %v4829
        %v4886 = vpop.f32.mrf.mxu0
        %v4887 = vadd.f32 %v4754, %v4886
        %v4888 = vpop.f32.mrf.mxu0
        %v4889 = vpop.f32.mrf.mxu0
        %v4890 = vadd.f32 %v4757, %v4889
        %v4891 = vpop.f32.mrf.mxu0
        %4892 = vmatprep.mubr.bf16.mxu0 0
        %4893 = vmatmul.mubr.bf16.gmra.mxu0 %v4832
        %v4894 = vpop.f32.mrf.mxu0
        %v4895 = vadd.f32 %v4762, %v4894
        %v4896 = vpop.f32.mrf.mxu0
        %v4897 = vpop.f32.mrf.mxu0
        %v4898 = vadd.f32 %v4765, %v4897
        %v4899 = vpop.f32.mrf.mxu0
        %4900 = vmatprep.mubr.bf16.mxu0 0
        %4901 = vmatmul.mubr.bf16.gmra.mxu0 %v4835
        %v4902 = vpop.f32.mrf.mxu0
        %v4903 = vadd.f32 %v4770, %v4902
        %v4904 = vpop.f32.mrf.mxu0
        %v4905 = vpop.f32.mrf.mxu0
        %v4906 = vadd.f32 %v4773, %v4905
        %v4907 = vpop.f32.mrf.mxu0
        %4908 = vmatprep.mubr.bf16.mxu0 0
        %4909 = vmatmul.mubr.bf16.gmra.mxu0 %v4838
        %v4910 = vpop.f32.mrf.mxu0
        %v4911 = vadd.f32 %v4778, %v4910
        %v4912 = vpop.f32.mrf.mxu0
        %v4913 = vpop.f32.mrf.mxu0
        %v4914 = vadd.f32 %v4781, %v4913
        %v4915 = vpop.f32.mrf.mxu0
        %4916 = vmatprep.mubr.bf16.mxu0 0
        %4917 = vmatmul.mubr.bf16.gmra.mxu0 %v4841
        %v4918 = vpop.f32.mrf.mxu0
        %v4919 = vadd.f32 %v4786, %v4918
        %v4920 = vpop.f32.mrf.mxu0
        %v4921 = vpop.f32.mrf.mxu0
        %v4922 = vadd.f32 %v4789, %v4921
        %v4923 = vpop.f32.mrf.mxu0
        %4924 = vmatprep.mubr.bf16.mxu0 0
        %4925 = vmatmul.mubr.bf16.gmra.mxu0 %v4844
        %v4926 = vpop.f32.mrf.mxu0
        %v4927 = vadd.f32 %v4794, %v4926
        %v4928 = vpop.f32.mrf.mxu0
        %v4929 = vpop.f32.mrf.mxu0
        %v4930 = vadd.f32 %v4797, %v4929
        %v4931 = vpop.f32.mrf.mxu0
        %4932 = vmatprep.mubr.bf16.mxu0 0
        %4933 = vmatmul.mubr.bf16.gmra.mxu0 %v4847
        %v4934 = vpop.f32.mrf.mxu0
        %v4935 = vadd.f32 %v4802, %v4934
        %v4936 = vpop.f32.mrf.mxu0
        %v4937 = vpop.f32.mrf.mxu0
        %v4938 = vadd.f32 %v4805, %v4937
        %v4939 = vpop.f32.mrf.mxu0
        %4940 = vmatprep.mubr.bf16.mxu0 0
        %4941 = vmatmul.mubr.bf16.gmra.mxu0 %v4850
        %v4942 = vpop.f32.mrf.mxu0
        %v4943 = vadd.f32 %v4810, %v4942
        %v4944 = vpop.f32.mrf.mxu0
        %v4945 = vpop.f32.mrf.mxu0
        %v4946 = vadd.f32 %v4813, %v4945
        %v4947 = vpop.f32.mrf.mxu0
        %4948 = vdwg.mxu0
        %4949 = vrot.lane.b32.xlu0 %v1112, 64
        %v4950 = vpop.permute.xlu0 %4949
        %4951 = vrot.lane.b32.xlu0 %v1152, 64
        %v4952 = vpop.permute.xlu0 %4951
        %v4954 = vsel %vm1208, %v4950, 0
        %v4957 = vsel %vm1208, %v4952, 0
        %4959 = vmatprep.subr.bf16.mxu0 0
        %4960 = vmatpush1.bf16.xpose.msra.mxu0 0
        %4961 = vmatprep.subr.bf16.mxu0 0
        %4962 = vmatpush1.bf16.xpose.msra.mxu0 0
        %4963 = vmatprep.subr.bf16.mxu0 0
        %4964 = vmatpush1.bf16.xpose.msra.mxu0 0
        %4965 = vmatprep.subr.bf16.mxu0 0
        %4966 = vmatpush1.bf16.xpose.msra.mxu0 0
        %4967 = vmatprep.subr.bf16.mxu0 0
        %4968 = vmatpush1.bf16.xpose.msra.mxu0 0
        %4969 = vmatprep.subr.bf16.mxu0 0
        %4970 = vmatpush1.bf16.xpose.msra.mxu0 0
        %4971 = vmatprep.subr.bf16.mxu0 0
        %4972 = vmatpush1.bf16.xpose.msra.mxu0 0
        %4973 = vmatprep.subr.bf16.mxu0 0
        %4974 = vmatpush1.bf16.xpose.msra.mxu0 %v4957
        %4975 = vmatprep.subr.bf16.mxu0 0
        %4976 = vmatpush2.bf16.xpose.msra.mxu0 0
        %4977 = vmatprep.subr.bf16.mxu0 0
        %4978 = vmatpush2.bf16.xpose.msra.mxu0 0
        %4979 = vmatprep.subr.bf16.mxu0 0
        %4980 = vmatpush2.bf16.xpose.msra.mxu0 0
        %4981 = vmatprep.subr.bf16.mxu0 0
        %4982 = vmatpush2.bf16.xpose.msra.mxu0 0
        %4983 = vmatprep.subr.bf16.mxu0 0
        %4984 = vmatpush2.bf16.xpose.msra.mxu0 0
        %4985 = vmatprep.subr.bf16.mxu0 0
        %4986 = vmatpush2.bf16.xpose.msra.mxu0 0
        %4987 = vmatprep.subr.bf16.mxu0 0
        %4988 = vmatpush2.bf16.xpose.msra.mxu0 0
        %4989 = vmatprep.subr.bf16.mxu0 0
        %4990 = vmatpush2.bf16.xpose.msra.mxu0 0
        %4991 = vmatprep.mubr.bf16.mxu0 0
        %4992 = vmatmul.mubr.bf16.gmra.mxu0 %v4954
        %v4993 = vpop.f32.mrf.mxu0
        %v4994 = vadd.f32 0.0, %v4993
        %v4995 = vpop.f32.mrf.mxu0
        %v4996 = vpop.f32.mrf.mxu0
        %v4997 = vpop.f32.mrf.mxu0
        %4998 = vdwg.mxu0
        %4999 = vrot.lane.b32.xlu0 %v1113, 64
        %v5000 = vpop.permute.xlu0 %4999
        %5001 = vrot.lane.b32.xlu0 %v1153, 64
        %v5002 = vpop.permute.xlu0 %5001
        %v5004 = vsel %vm1208, %v5000, 0
        %v5007 = vsel %vm1208, %v5002, 0
        %5009 = vmatprep.subr.bf16.mxu0 0
        %5010 = vmatpush1.bf16.xpose.msra.mxu0 0
        %5011 = vmatprep.subr.bf16.mxu0 0
        %5012 = vmatpush1.bf16.xpose.msra.mxu0 0
        %5013 = vmatprep.subr.bf16.mxu0 0
        %5014 = vmatpush1.bf16.xpose.msra.mxu0 0
        %5015 = vmatprep.subr.bf16.mxu0 0
        %5016 = vmatpush1.bf16.xpose.msra.mxu0 0
        %5017 = vmatprep.subr.bf16.mxu0 0
        %5018 = vmatpush1.bf16.xpose.msra.mxu0 0
        %5019 = vmatprep.subr.bf16.mxu0 0
        %5020 = vmatpush1.bf16.xpose.msra.mxu0 0
        %5021 = vmatprep.subr.bf16.mxu0 0
        %5022 = vmatpush1.bf16.xpose.msra.mxu0 0
        %5023 = vmatprep.subr.bf16.mxu0 0
        %5024 = vmatpush1.bf16.xpose.msra.mxu0 %v5007
        %5025 = vmatprep.subr.bf16.mxu0 0
        %5026 = vmatpush2.bf16.xpose.msra.mxu0 0
        %5027 = vmatprep.subr.bf16.mxu0 0
        %5028 = vmatpush2.bf16.xpose.msra.mxu0 0
        %5029 = vmatprep.subr.bf16.mxu0 0
        %5030 = vmatpush2.bf16.xpose.msra.mxu0 0
        %5031 = vmatprep.subr.bf16.mxu0 0
        %5032 = vmatpush2.bf16.xpose.msra.mxu0 0
        %5033 = vmatprep.subr.bf16.mxu0 0
        %5034 = vmatpush2.bf16.xpose.msra.mxu0 0
        %5035 = vmatprep.subr.bf16.mxu0 0
        %5036 = vmatpush2.bf16.xpose.msra.mxu0 0
        %5037 = vmatprep.subr.bf16.mxu0 0
        %5038 = vmatpush2.bf16.xpose.msra.mxu0 0
        %5039 = vmatprep.subr.bf16.mxu0 0
        %5040 = vmatpush2.bf16.xpose.msra.mxu0 0
        %5041 = vmatprep.mubr.bf16.mxu0 0
        %5042 = vmatmul.mubr.bf16.gmra.mxu0 %v5004
        %v5043 = vpop.f32.mrf.mxu0
        %v5044 = vadd.f32 0.0, %v5043
        %v5045 = vpop.f32.mrf.mxu0
        %v5046 = vpop.f32.mrf.mxu0
        %v5047 = vpop.f32.mrf.mxu0
        %5048 = vdwg.mxu0
        %5049 = vrot.lane.b32.xlu0 %v1114, 64
        %v5050 = vpop.permute.xlu0 %5049
        %5051 = vrot.lane.b32.xlu0 %v1154, 64
        %v5052 = vpop.permute.xlu0 %5051
        %v5054 = vsel %vm1208, %v5050, 0
        %v5057 = vsel %vm1208, %v5052, 0
        %5059 = vmatprep.subr.bf16.mxu0 0
        %5060 = vmatpush1.bf16.xpose.msra.mxu0 0
        %5061 = vmatprep.subr.bf16.mxu0 0
        %5062 = vmatpush1.bf16.xpose.msra.mxu0 0
        %5063 = vmatprep.subr.bf16.mxu0 0
        %5064 = vmatpush1.bf16.xpose.msra.mxu0 0
        %5065 = vmatprep.subr.bf16.mxu0 0
        %5066 = vmatpush1.bf16.xpose.msra.mxu0 0
        %5067 = vmatprep.subr.bf16.mxu0 0
        %5068 = vmatpush1.bf16.xpose.msra.mxu0 0
        %5069 = vmatprep.subr.bf16.mxu0 0
        %5070 = vmatpush1.bf16.xpose.msra.mxu0 0
        %5071 = vmatprep.subr.bf16.mxu0 0
        %5072 = vmatpush1.bf16.xpose.msra.mxu0 0
        %5073 = vmatprep.subr.bf16.mxu0 0
        %5074 = vmatpush1.bf16.xpose.msra.mxu0 %v5057
        %5075 = vmatprep.subr.bf16.mxu0 0
        %5076 = vmatpush2.bf16.xpose.msra.mxu0 0
        %5077 = vmatprep.subr.bf16.mxu0 0
        %5078 = vmatpush2.bf16.xpose.msra.mxu0 0
        %5079 = vmatprep.subr.bf16.mxu0 0
        %5080 = vmatpush2.bf16.xpose.msra.mxu0 0
        %5081 = vmatprep.subr.bf16.mxu0 0
        %5082 = vmatpush2.bf16.xpose.msra.mxu0 0
        %5083 = vmatprep.subr.bf16.mxu0 0
        %5084 = vmatpush2.bf16.xpose.msra.mxu0 0
        %5085 = vmatprep.subr.bf16.mxu0 0
        %5086 = vmatpush2.bf16.xpose.msra.mxu0 0
        %5087 = vmatprep.subr.bf16.mxu0 0
        %5088 = vmatpush2.bf16.xpose.msra.mxu0 0
        %5089 = vmatprep.subr.bf16.mxu0 0
        %5090 = vmatpush2.bf16.xpose.msra.mxu0 0
        %5091 = vmatprep.mubr.bf16.mxu0 0
        %5092 = vmatmul.mubr.bf16.gmra.mxu0 %v5054
        %v5093 = vpop.f32.mrf.mxu0
        %v5094 = vadd.f32 0.0, %v5093
        %v5095 = vpop.f32.mrf.mxu0
        %v5096 = vpop.f32.mrf.mxu0
        %v5097 = vpop.f32.mrf.mxu0
        %5098 = vdwg.mxu0
        %5099 = vrot.lane.b32.xlu0 %v1115, 64
        %v5100 = vpop.permute.xlu0 %5099
        %5101 = vrot.lane.b32.xlu0 %v1155, 64
        %v5102 = vpop.permute.xlu0 %5101
        %v5104 = vsel %vm1208, %v5100, 0
        %v5107 = vsel %vm1208, %v5102, 0
        %5109 = vmatprep.subr.bf16.mxu0 0
        %5110 = vmatpush1.bf16.xpose.msra.mxu0 0
        %5111 = vmatprep.subr.bf16.mxu0 0
        %5112 = vmatpush1.bf16.xpose.msra.mxu0 0
        %5113 = vmatprep.subr.bf16.mxu0 0
        %5114 = vmatpush1.bf16.xpose.msra.mxu0 0
        %5115 = vmatprep.subr.bf16.mxu0 0
        %5116 = vmatpush1.bf16.xpose.msra.mxu0 0
        %5117 = vmatprep.subr.bf16.mxu0 0
        %5118 = vmatpush1.bf16.xpose.msra.mxu0 0
        %5119 = vmatprep.subr.bf16.mxu0 0
        %5120 = vmatpush1.bf16.xpose.msra.mxu0 0
        %5121 = vmatprep.subr.bf16.mxu0 0
        %5122 = vmatpush1.bf16.xpose.msra.mxu0 0
        %5123 = vmatprep.subr.bf16.mxu0 0
        %5124 = vmatpush1.bf16.xpose.msra.mxu0 %v5107
        %5125 = vmatprep.subr.bf16.mxu0 0
        %5126 = vmatpush2.bf16.xpose.msra.mxu0 0
        %5127 = vmatprep.subr.bf16.mxu0 0
        %5128 = vmatpush2.bf16.xpose.msra.mxu0 0
        %5129 = vmatprep.subr.bf16.mxu0 0
        %5130 = vmatpush2.bf16.xpose.msra.mxu0 0
        %5131 = vmatprep.subr.bf16.mxu0 0
        %5132 = vmatpush2.bf16.xpose.msra.mxu0 0
        %5133 = vmatprep.subr.bf16.mxu0 0
        %5134 = vmatpush2.bf16.xpose.msra.mxu0 0
        %5135 = vmatprep.subr.bf16.mxu0 0
        %5136 = vmatpush2.bf16.xpose.msra.mxu0 0
        %5137 = vmatprep.subr.bf16.mxu0 0
        %5138 = vmatpush2.bf16.xpose.msra.mxu0 0
        %5139 = vmatprep.subr.bf16.mxu0 0
        %5140 = vmatpush2.bf16.xpose.msra.mxu0 0
        %5141 = vmatprep.mubr.bf16.mxu0 0
        %5142 = vmatmul.mubr.bf16.gmra.mxu0 %v5104
        %v5143 = vpop.f32.mrf.mxu0
        %v5144 = vadd.f32 0.0, %v5143
        %v5145 = vpop.f32.mrf.mxu0
        %v5146 = vpop.f32.mrf.mxu0
        %v5147 = vpop.f32.mrf.mxu0
        %5148 = vdwg.mxu0
        %5149 = vrot.lane.b32.xlu0 %v1116, 64
        %v5150 = vpop.permute.xlu0 %5149
        %5151 = vrot.lane.b32.xlu0 %v1156, 64
        %v5152 = vpop.permute.xlu0 %5151
        %v5154 = vsel %vm1208, %v5150, 0
        %v5157 = vsel %vm1208, %v5152, 0
        %5159 = vmatprep.subr.bf16.mxu0 0
        %5160 = vmatpush1.bf16.xpose.msra.mxu0 0
        %5161 = vmatprep.subr.bf16.mxu0 0
        %5162 = vmatpush1.bf16.xpose.msra.mxu0 0
        %5163 = vmatprep.subr.bf16.mxu0 0
        %5164 = vmatpush1.bf16.xpose.msra.mxu0 0
        %5165 = vmatprep.subr.bf16.mxu0 0
        %5166 = vmatpush1.bf16.xpose.msra.mxu0 0
        %5167 = vmatprep.subr.bf16.mxu0 0
        %5168 = vmatpush1.bf16.xpose.msra.mxu0 0
        %5169 = vmatprep.subr.bf16.mxu0 0
        %5170 = vmatpush1.bf16.xpose.msra.mxu0 0
        %5171 = vmatprep.subr.bf16.mxu0 0
        %5172 = vmatpush1.bf16.xpose.msra.mxu0 0
        %5173 = vmatprep.subr.bf16.mxu0 0
        %5174 = vmatpush1.bf16.xpose.msra.mxu0 %v5157
        %5175 = vmatprep.subr.bf16.mxu0 0
        %5176 = vmatpush2.bf16.xpose.msra.mxu0 0
        %5177 = vmatprep.subr.bf16.mxu0 0
        %5178 = vmatpush2.bf16.xpose.msra.mxu0 0
        %5179 = vmatprep.subr.bf16.mxu0 0
        %5180 = vmatpush2.bf16.xpose.msra.mxu0 0
        %5181 = vmatprep.subr.bf16.mxu0 0
        %5182 = vmatpush2.bf16.xpose.msra.mxu0 0
        %5183 = vmatprep.subr.bf16.mxu0 0
        %5184 = vmatpush2.bf16.xpose.msra.mxu0 0
        %5185 = vmatprep.subr.bf16.mxu0 0
        %5186 = vmatpush2.bf16.xpose.msra.mxu0 0
        %5187 = vmatprep.subr.bf16.mxu0 0
        %5188 = vmatpush2.bf16.xpose.msra.mxu0 0
        %5189 = vmatprep.subr.bf16.mxu0 0
        %5190 = vmatpush2.bf16.xpose.msra.mxu0 0
        %5191 = vmatprep.mubr.bf16.mxu0 0
        %5192 = vmatmul.mubr.bf16.gmra.mxu0 %v5154
        %v5193 = vpop.f32.mrf.mxu0
        %v5194 = vadd.f32 0.0, %v5193
        %v5195 = vpop.f32.mrf.mxu0
        %v5196 = vpop.f32.mrf.mxu0
        %v5197 = vpop.f32.mrf.mxu0
        %5198 = vdwg.mxu0
        %5199 = vrot.lane.b32.xlu0 %v1117, 64
        %v5200 = vpop.permute.xlu0 %5199
        %5201 = vrot.lane.b32.xlu0 %v1157, 64
        %v5202 = vpop.permute.xlu0 %5201
        %v5204 = vsel %vm1208, %v5200, 0
        %v5207 = vsel %vm1208, %v5202, 0
        %5209 = vmatprep.subr.bf16.mxu0 0
        %5210 = vmatpush1.bf16.xpose.msra.mxu0 0
        %5211 = vmatprep.subr.bf16.mxu0 0
        %5212 = vmatpush1.bf16.xpose.msra.mxu0 0
        %5213 = vmatprep.subr.bf16.mxu0 0
        %5214 = vmatpush1.bf16.xpose.msra.mxu0 0
        %5215 = vmatprep.subr.bf16.mxu0 0
        %5216 = vmatpush1.bf16.xpose.msra.mxu0 0
        %5217 = vmatprep.subr.bf16.mxu0 0
        %5218 = vmatpush1.bf16.xpose.msra.mxu0 0
        %5219 = vmatprep.subr.bf16.mxu0 0
        %5220 = vmatpush1.bf16.xpose.msra.mxu0 0
        %5221 = vmatprep.subr.bf16.mxu0 0
        %5222 = vmatpush1.bf16.xpose.msra.mxu0 0
        %5223 = vmatprep.subr.bf16.mxu0 0
        %5224 = vmatpush1.bf16.xpose.msra.mxu0 %v5207
        %5225 = vmatprep.subr.bf16.mxu0 0
        %5226 = vmatpush2.bf16.xpose.msra.mxu0 0
        %5227 = vmatprep.subr.bf16.mxu0 0
        %5228 = vmatpush2.bf16.xpose.msra.mxu0 0
        %5229 = vmatprep.subr.bf16.mxu0 0
        %5230 = vmatpush2.bf16.xpose.msra.mxu0 0
        %5231 = vmatprep.subr.bf16.mxu0 0
        %5232 = vmatpush2.bf16.xpose.msra.mxu0 0
        %5233 = vmatprep.subr.bf16.mxu0 0
        %5234 = vmatpush2.bf16.xpose.msra.mxu0 0
        %5235 = vmatprep.subr.bf16.mxu0 0
        %5236 = vmatpush2.bf16.xpose.msra.mxu0 0
        %5237 = vmatprep.subr.bf16.mxu0 0
        %5238 = vmatpush2.bf16.xpose.msra.mxu0 0
        %5239 = vmatprep.subr.bf16.mxu0 0
        %5240 = vmatpush2.bf16.xpose.msra.mxu0 0
        %5241 = vmatprep.mubr.bf16.mxu0 0
        %5242 = vmatmul.mubr.bf16.gmra.mxu0 %v5204
        %v5243 = vpop.f32.mrf.mxu0
        %v5244 = vadd.f32 0.0, %v5243
        %v5245 = vpop.f32.mrf.mxu0
        %v5246 = vpop.f32.mrf.mxu0
        %v5247 = vpop.f32.mrf.mxu0
        %5248 = vdwg.mxu0
        %5249 = vrot.lane.b32.xlu0 %v1118, 64
        %v5250 = vpop.permute.xlu0 %5249
        %5251 = vrot.lane.b32.xlu0 %v1158, 64
        %v5252 = vpop.permute.xlu0 %5251
        %v5254 = vsel %vm1208, %v5250, 0
        %v5257 = vsel %vm1208, %v5252, 0
        %5259 = vmatprep.subr.bf16.mxu0 0
        %5260 = vmatpush1.bf16.xpose.msra.mxu0 0
        %5261 = vmatprep.subr.bf16.mxu0 0
        %5262 = vmatpush1.bf16.xpose.msra.mxu0 0
        %5263 = vmatprep.subr.bf16.mxu0 0
        %5264 = vmatpush1.bf16.xpose.msra.mxu0 0
        %5265 = vmatprep.subr.bf16.mxu0 0
        %5266 = vmatpush1.bf16.xpose.msra.mxu0 0
        %5267 = vmatprep.subr.bf16.mxu0 0
        %5268 = vmatpush1.bf16.xpose.msra.mxu0 0
        %5269 = vmatprep.subr.bf16.mxu0 0
        %5270 = vmatpush1.bf16.xpose.msra.mxu0 0
        %5271 = vmatprep.subr.bf16.mxu0 0
        %5272 = vmatpush1.bf16.xpose.msra.mxu0 0
        %5273 = vmatprep.subr.bf16.mxu0 0
        %5274 = vmatpush1.bf16.xpose.msra.mxu0 %v5257
        %5275 = vmatprep.subr.bf16.mxu0 0
        %5276 = vmatpush2.bf16.xpose.msra.mxu0 0
        %5277 = vmatprep.subr.bf16.mxu0 0
        %5278 = vmatpush2.bf16.xpose.msra.mxu0 0
        %5279 = vmatprep.subr.bf16.mxu0 0
        %5280 = vmatpush2.bf16.xpose.msra.mxu0 0
        %5281 = vmatprep.subr.bf16.mxu0 0
        %5282 = vmatpush2.bf16.xpose.msra.mxu0 0
        %5283 = vmatprep.subr.bf16.mxu0 0
        %5284 = vmatpush2.bf16.xpose.msra.mxu0 0
        %5285 = vmatprep.subr.bf16.mxu0 0
        %5286 = vmatpush2.bf16.xpose.msra.mxu0 0
        %5287 = vmatprep.subr.bf16.mxu0 0
        %5288 = vmatpush2.bf16.xpose.msra.mxu0 0
        %5289 = vmatprep.subr.bf16.mxu0 0
        %5290 = vmatpush2.bf16.xpose.msra.mxu0 0
        %5291 = vmatprep.mubr.bf16.mxu0 0
        %5292 = vmatmul.mubr.bf16.gmra.mxu0 %v5254
        %v5293 = vpop.f32.mrf.mxu0
        %v5294 = vadd.f32 0.0, %v5293
        %v5295 = vpop.f32.mrf.mxu0
        %v5296 = vpop.f32.mrf.mxu0
        %v5297 = vpop.f32.mrf.mxu0
        %5298 = vdwg.mxu0
        %5299 = vrot.lane.b32.xlu0 %v1119, 64
        %v5300 = vpop.permute.xlu0 %5299
        %5301 = vrot.lane.b32.xlu0 %v1159, 64
        %v5302 = vpop.permute.xlu0 %5301
        %v5304 = vsel %vm1208, %v5300, 0
        %v5307 = vsel %vm1208, %v5302, 0
        %5309 = vmatprep.subr.bf16.mxu0 0
        %5310 = vmatpush1.bf16.xpose.msra.mxu0 0
        %5311 = vmatprep.subr.bf16.mxu0 0
        %5312 = vmatpush1.bf16.xpose.msra.mxu0 0
        %5313 = vmatprep.subr.bf16.mxu0 0
        %5314 = vmatpush1.bf16.xpose.msra.mxu0 0
        %5315 = vmatprep.subr.bf16.mxu0 0
        %5316 = vmatpush1.bf16.xpose.msra.mxu0 0
        %5317 = vmatprep.subr.bf16.mxu0 0
        %5318 = vmatpush1.bf16.xpose.msra.mxu0 0
        %5319 = vmatprep.subr.bf16.mxu0 0
        %5320 = vmatpush1.bf16.xpose.msra.mxu0 0
        %5321 = vmatprep.subr.bf16.mxu0 0
        %5322 = vmatpush1.bf16.xpose.msra.mxu0 0
        %5323 = vmatprep.subr.bf16.mxu0 0
        %5324 = vmatpush1.bf16.xpose.msra.mxu0 %v5307
        %5325 = vmatprep.subr.bf16.mxu0 0
        %5326 = vmatpush2.bf16.xpose.msra.mxu0 0
        %5327 = vmatprep.subr.bf16.mxu0 0
        %5328 = vmatpush2.bf16.xpose.msra.mxu0 0
        %5329 = vmatprep.subr.bf16.mxu0 0
        %5330 = vmatpush2.bf16.xpose.msra.mxu0 0
        %5331 = vmatprep.subr.bf16.mxu0 0
        %5332 = vmatpush2.bf16.xpose.msra.mxu0 0
        %5333 = vmatprep.subr.bf16.mxu0 0
        %5334 = vmatpush2.bf16.xpose.msra.mxu0 0
        %5335 = vmatprep.subr.bf16.mxu0 0
        %5336 = vmatpush2.bf16.xpose.msra.mxu0 0
        %5337 = vmatprep.subr.bf16.mxu0 0
        %5338 = vmatpush2.bf16.xpose.msra.mxu0 0
        %5339 = vmatprep.subr.bf16.mxu0 0
        %5340 = vmatpush2.bf16.xpose.msra.mxu0 0
        %5341 = vmatprep.mubr.bf16.mxu0 0
        %5342 = vmatmul.mubr.bf16.gmra.mxu0 %v5304
        %v5343 = vpop.f32.mrf.mxu0
        %v5344 = vadd.f32 0.0, %v5343
        %v5345 = vpop.f32.mrf.mxu0
        %v5346 = vpop.f32.mrf.mxu0
        %v5347 = vpop.f32.mrf.mxu0
        %5348 = vdwg.mxu0
        %5349 = vrot.lane.b32.xlu0 %v1120, 64
        %v5350 = vpop.permute.xlu0 %5349
        %5351 = vrot.lane.b32.xlu0 %v1160, 64
        %v5352 = vpop.permute.xlu0 %5351
        %v5354 = vsel %vm1208, %v5350, 0
        %v5357 = vsel %vm1208, %v5352, 0
        %5359 = vmatprep.subr.bf16.mxu0 0
        %5360 = vmatpush1.bf16.xpose.msra.mxu0 0
        %5361 = vmatprep.subr.bf16.mxu0 0
        %5362 = vmatpush1.bf16.xpose.msra.mxu0 0
        %5363 = vmatprep.subr.bf16.mxu0 0
        %5364 = vmatpush1.bf16.xpose.msra.mxu0 0
        %5365 = vmatprep.subr.bf16.mxu0 0
        %5366 = vmatpush1.bf16.xpose.msra.mxu0 0
        %5367 = vmatprep.subr.bf16.mxu0 0
        %5368 = vmatpush1.bf16.xpose.msra.mxu0 0
        %5369 = vmatprep.subr.bf16.mxu0 0
        %5370 = vmatpush1.bf16.xpose.msra.mxu0 0
        %5371 = vmatprep.subr.bf16.mxu0 0
        %5372 = vmatpush1.bf16.xpose.msra.mxu0 0
        %5373 = vmatprep.subr.bf16.mxu0 0
        %5374 = vmatpush1.bf16.xpose.msra.mxu0 %v5357
        %5375 = vmatprep.subr.bf16.mxu0 0
        %5376 = vmatpush2.bf16.xpose.msra.mxu0 0
        %5377 = vmatprep.subr.bf16.mxu0 0
        %5378 = vmatpush2.bf16.xpose.msra.mxu0 0
        %5379 = vmatprep.subr.bf16.mxu0 0
        %5380 = vmatpush2.bf16.xpose.msra.mxu0 0
        %5381 = vmatprep.subr.bf16.mxu0 0
        %5382 = vmatpush2.bf16.xpose.msra.mxu0 0
        %5383 = vmatprep.subr.bf16.mxu0 0
        %5384 = vmatpush2.bf16.xpose.msra.mxu0 0
        %5385 = vmatprep.subr.bf16.mxu0 0
        %5386 = vmatpush2.bf16.xpose.msra.mxu0 0
        %5387 = vmatprep.subr.bf16.mxu0 0
        %5388 = vmatpush2.bf16.xpose.msra.mxu0 0
        %5389 = vmatprep.subr.bf16.mxu0 0
        %5390 = vmatpush2.bf16.xpose.msra.mxu0 0
        %5391 = vmatprep.mubr.bf16.mxu0 0
        %5392 = vmatmul.mubr.bf16.gmra.mxu0 %v5354
        %v5393 = vpop.f32.mrf.mxu0
        %v5394 = vadd.f32 0.0, %v5393
        %v5395 = vpop.f32.mrf.mxu0
        %v5396 = vpop.f32.mrf.mxu0
        %v5397 = vpop.f32.mrf.mxu0
        %5398 = vdwg.mxu0
        %5399 = vrot.lane.b32.xlu0 %v1121, 64
        %v5400 = vpop.permute.xlu0 %5399
        %5401 = vrot.lane.b32.xlu0 %v1161, 64
        %v5402 = vpop.permute.xlu0 %5401
        %v5404 = vsel %vm1208, %v5400, 0
        %v5407 = vsel %vm1208, %v5402, 0
        %5409 = vmatprep.subr.bf16.mxu0 0
        %5410 = vmatpush1.bf16.xpose.msra.mxu0 0
        %5411 = vmatprep.subr.bf16.mxu0 0
        %5412 = vmatpush1.bf16.xpose.msra.mxu0 0
        %5413 = vmatprep.subr.bf16.mxu0 0
        %5414 = vmatpush1.bf16.xpose.msra.mxu0 0
        %5415 = vmatprep.subr.bf16.mxu0 0
        %5416 = vmatpush1.bf16.xpose.msra.mxu0 0
        %5417 = vmatprep.subr.bf16.mxu0 0
        %5418 = vmatpush1.bf16.xpose.msra.mxu0 0
        %5419 = vmatprep.subr.bf16.mxu0 0
        %5420 = vmatpush1.bf16.xpose.msra.mxu0 0
        %5421 = vmatprep.subr.bf16.mxu0 0
        %5422 = vmatpush1.bf16.xpose.msra.mxu0 0
        %5423 = vmatprep.subr.bf16.mxu0 0
        %5424 = vmatpush1.bf16.xpose.msra.mxu0 %v5407
        %5425 = vmatprep.subr.bf16.mxu0 0
        %5426 = vmatpush2.bf16.xpose.msra.mxu0 0
        %5427 = vmatprep.subr.bf16.mxu0 0
        %5428 = vmatpush2.bf16.xpose.msra.mxu0 0
        %5429 = vmatprep.subr.bf16.mxu0 0
        %5430 = vmatpush2.bf16.xpose.msra.mxu0 0
        %5431 = vmatprep.subr.bf16.mxu0 0
        %5432 = vmatpush2.bf16.xpose.msra.mxu0 0
        %5433 = vmatprep.subr.bf16.mxu0 0
        %5434 = vmatpush2.bf16.xpose.msra.mxu0 0
        %5435 = vmatprep.subr.bf16.mxu0 0
        %5436 = vmatpush2.bf16.xpose.msra.mxu0 0
        %5437 = vmatprep.subr.bf16.mxu0 0
        %5438 = vmatpush2.bf16.xpose.msra.mxu0 0
        %5439 = vmatprep.subr.bf16.mxu0 0
        %5440 = vmatpush2.bf16.xpose.msra.mxu0 0
        %5441 = vmatprep.mubr.bf16.mxu0 0
        %5442 = vmatmul.mubr.bf16.gmra.mxu0 %v5404
        %v5443 = vpop.f32.mrf.mxu0
        %v5444 = vadd.f32 0.0, %v5443
        %v5445 = vpop.f32.mrf.mxu0
        %v5446 = vpop.f32.mrf.mxu0
        %v5447 = vpop.f32.mrf.mxu0
        %5448 = vdwg.mxu0
        %5449 = vrot.lane.b32.xlu0 %v1122, 64
        %v5450 = vpop.permute.xlu0 %5449
        %5451 = vrot.lane.b32.xlu0 %v1162, 64
        %v5452 = vpop.permute.xlu0 %5451
        %v5454 = vsel %vm1208, %v5450, 0
        %v5457 = vsel %vm1208, %v5452, 0
        %5459 = vmatprep.subr.bf16.mxu0 0
        %5460 = vmatpush1.bf16.xpose.msra.mxu0 0
        %5461 = vmatprep.subr.bf16.mxu0 0
        %5462 = vmatpush1.bf16.xpose.msra.mxu0 0
        %5463 = vmatprep.subr.bf16.mxu0 0
        %5464 = vmatpush1.bf16.xpose.msra.mxu0 0
        %5465 = vmatprep.subr.bf16.mxu0 0
        %5466 = vmatpush1.bf16.xpose.msra.mxu0 0
        %5467 = vmatprep.subr.bf16.mxu0 0
        %5468 = vmatpush1.bf16.xpose.msra.mxu0 0
        %5469 = vmatprep.subr.bf16.mxu0 0
        %5470 = vmatpush1.bf16.xpose.msra.mxu0 0
        %5471 = vmatprep.subr.bf16.mxu0 0
        %5472 = vmatpush1.bf16.xpose.msra.mxu0 0
        %5473 = vmatprep.subr.bf16.mxu0 0
        %5474 = vmatpush1.bf16.xpose.msra.mxu0 %v5457
        %5475 = vmatprep.subr.bf16.mxu0 0
        %5476 = vmatpush2.bf16.xpose.msra.mxu0 0
        %5477 = vmatprep.subr.bf16.mxu0 0
        %5478 = vmatpush2.bf16.xpose.msra.mxu0 0
        %5479 = vmatprep.subr.bf16.mxu0 0
        %5480 = vmatpush2.bf16.xpose.msra.mxu0 0
        %5481 = vmatprep.subr.bf16.mxu0 0
        %5482 = vmatpush2.bf16.xpose.msra.mxu0 0
        %5483 = vmatprep.subr.bf16.mxu0 0
        %5484 = vmatpush2.bf16.xpose.msra.mxu0 0
        %5485 = vmatprep.subr.bf16.mxu0 0
        %5486 = vmatpush2.bf16.xpose.msra.mxu0 0
        %5487 = vmatprep.subr.bf16.mxu0 0
        %5488 = vmatpush2.bf16.xpose.msra.mxu0 0
        %5489 = vmatprep.subr.bf16.mxu0 0
        %5490 = vmatpush2.bf16.xpose.msra.mxu0 0
        %5491 = vmatprep.mubr.bf16.mxu0 0
        %5492 = vmatmul.mubr.bf16.gmra.mxu0 %v5454
        %v5493 = vpop.f32.mrf.mxu0
        %v5494 = vadd.f32 0.0, %v5493
        %v5495 = vpop.f32.mrf.mxu0
        %v5496 = vpop.f32.mrf.mxu0
        %v5497 = vpop.f32.mrf.mxu0
        %5498 = vdwg.mxu0
        %5499 = vrot.lane.b32.xlu0 %v1123, 64
        %v5500 = vpop.permute.xlu0 %5499
        %5501 = vrot.lane.b32.xlu0 %v1163, 64
        %v5502 = vpop.permute.xlu0 %5501
        %v5504 = vsel %vm1208, %v5500, 0
        %v5507 = vsel %vm1208, %v5502, 0
        %5509 = vmatprep.subr.bf16.mxu0 0
        %5510 = vmatpush1.bf16.xpose.msra.mxu0 0
        %5511 = vmatprep.subr.bf16.mxu0 0
        %5512 = vmatpush1.bf16.xpose.msra.mxu0 0
        %5513 = vmatprep.subr.bf16.mxu0 0
        %5514 = vmatpush1.bf16.xpose.msra.mxu0 0
        %5515 = vmatprep.subr.bf16.mxu0 0
        %5516 = vmatpush1.bf16.xpose.msra.mxu0 0
        %5517 = vmatprep.subr.bf16.mxu0 0
        %5518 = vmatpush1.bf16.xpose.msra.mxu0 0
        %5519 = vmatprep.subr.bf16.mxu0 0
        %5520 = vmatpush1.bf16.xpose.msra.mxu0 0
        %5521 = vmatprep.subr.bf16.mxu0 0
        %5522 = vmatpush1.bf16.xpose.msra.mxu0 0
        %5523 = vmatprep.subr.bf16.mxu0 0
        %5524 = vmatpush1.bf16.xpose.msra.mxu0 %v5507
        %5525 = vmatprep.subr.bf16.mxu0 0
        %5526 = vmatpush2.bf16.xpose.msra.mxu0 0
        %5527 = vmatprep.subr.bf16.mxu0 0
        %5528 = vmatpush2.bf16.xpose.msra.mxu0 0
        %5529 = vmatprep.subr.bf16.mxu0 0
        %5530 = vmatpush2.bf16.xpose.msra.mxu0 0
        %5531 = vmatprep.subr.bf16.mxu0 0
        %5532 = vmatpush2.bf16.xpose.msra.mxu0 0
        %5533 = vmatprep.subr.bf16.mxu0 0
        %5534 = vmatpush2.bf16.xpose.msra.mxu0 0
        %5535 = vmatprep.subr.bf16.mxu0 0
        %5536 = vmatpush2.bf16.xpose.msra.mxu0 0
        %5537 = vmatprep.subr.bf16.mxu0 0
        %5538 = vmatpush2.bf16.xpose.msra.mxu0 0
        %5539 = vmatprep.subr.bf16.mxu0 0
        %5540 = vmatpush2.bf16.xpose.msra.mxu0 0
        %5541 = vmatprep.mubr.bf16.mxu0 0
        %5542 = vmatmul.mubr.bf16.gmra.mxu0 %v5504
        %v5543 = vpop.f32.mrf.mxu0
        %v5544 = vadd.f32 0.0, %v5543
        %v5545 = vpop.f32.mrf.mxu0
        %v5546 = vpop.f32.mrf.mxu0
        %v5547 = vpop.f32.mrf.mxu0
        %5548 = vdwg.mxu0
        %5549 = vrot.lane.b32.xlu0 %v1124, 64
        %v5550 = vpop.permute.xlu0 %5549
        %5551 = vrot.lane.b32.xlu0 %v1164, 64
        %v5552 = vpop.permute.xlu0 %5551
        %v5554 = vsel %vm1208, %v5550, 0
        %v5557 = vsel %vm1208, %v5552, 0
        %5559 = vmatprep.subr.bf16.mxu0 0
        %5560 = vmatpush1.bf16.xpose.msra.mxu0 0
        %5561 = vmatprep.subr.bf16.mxu0 0
        %5562 = vmatpush1.bf16.xpose.msra.mxu0 0
        %5563 = vmatprep.subr.bf16.mxu0 0
        %5564 = vmatpush1.bf16.xpose.msra.mxu0 0
        %5565 = vmatprep.subr.bf16.mxu0 0
        %5566 = vmatpush1.bf16.xpose.msra.mxu0 0
        %5567 = vmatprep.subr.bf16.mxu0 0
        %5568 = vmatpush1.bf16.xpose.msra.mxu0 0
        %5569 = vmatprep.subr.bf16.mxu0 0
        %5570 = vmatpush1.bf16.xpose.msra.mxu0 0
        %5571 = vmatprep.subr.bf16.mxu0 0
        %5572 = vmatpush1.bf16.xpose.msra.mxu0 0
        %5573 = vmatprep.subr.bf16.mxu0 0
        %5574 = vmatpush1.bf16.xpose.msra.mxu0 %v5557
        %5575 = vmatprep.subr.bf16.mxu0 0
        %5576 = vmatpush2.bf16.xpose.msra.mxu0 0
        %5577 = vmatprep.subr.bf16.mxu0 0
        %5578 = vmatpush2.bf16.xpose.msra.mxu0 0
        %5579 = vmatprep.subr.bf16.mxu0 0
        %5580 = vmatpush2.bf16.xpose.msra.mxu0 0
        %5581 = vmatprep.subr.bf16.mxu0 0
        %5582 = vmatpush2.bf16.xpose.msra.mxu0 0
        %5583 = vmatprep.subr.bf16.mxu0 0
        %5584 = vmatpush2.bf16.xpose.msra.mxu0 0
        %5585 = vmatprep.subr.bf16.mxu0 0
        %5586 = vmatpush2.bf16.xpose.msra.mxu0 0
        %5587 = vmatprep.subr.bf16.mxu0 0
        %5588 = vmatpush2.bf16.xpose.msra.mxu0 0
        %5589 = vmatprep.subr.bf16.mxu0 0
        %5590 = vmatpush2.bf16.xpose.msra.mxu0 0
        %5591 = vmatprep.mubr.bf16.mxu0 0
        %5592 = vmatmul.mubr.bf16.gmra.mxu0 %v5554
        %v5593 = vpop.f32.mrf.mxu0
        %v5594 = vadd.f32 0.0, %v5593
        %v5595 = vpop.f32.mrf.mxu0
        %v5596 = vpop.f32.mrf.mxu0
        %v5597 = vpop.f32.mrf.mxu0
        %5598 = vdwg.mxu0
        %5599 = vrot.lane.b32.xlu0 %v1125, 64
        %v5600 = vpop.permute.xlu0 %5599
        %5601 = vrot.lane.b32.xlu0 %v1165, 64
        %v5602 = vpop.permute.xlu0 %5601
        %v5604 = vsel %vm1208, %v5600, 0
        %v5607 = vsel %vm1208, %v5602, 0
        %5609 = vmatprep.subr.bf16.mxu0 0
        %5610 = vmatpush1.bf16.xpose.msra.mxu0 0
        %5611 = vmatprep.subr.bf16.mxu0 0
        %5612 = vmatpush1.bf16.xpose.msra.mxu0 0
        %5613 = vmatprep.subr.bf16.mxu0 0
        %5614 = vmatpush1.bf16.xpose.msra.mxu0 0
        %5615 = vmatprep.subr.bf16.mxu0 0
        %5616 = vmatpush1.bf16.xpose.msra.mxu0 0
        %5617 = vmatprep.subr.bf16.mxu0 0
        %5618 = vmatpush1.bf16.xpose.msra.mxu0 0
        %5619 = vmatprep.subr.bf16.mxu0 0
        %5620 = vmatpush1.bf16.xpose.msra.mxu0 0
        %5621 = vmatprep.subr.bf16.mxu0 0
        %5622 = vmatpush1.bf16.xpose.msra.mxu0 0
        %5623 = vmatprep.subr.bf16.mxu0 0
        %5624 = vmatpush1.bf16.xpose.msra.mxu0 %v5607
        %5625 = vmatprep.subr.bf16.mxu0 0
        %5626 = vmatpush2.bf16.xpose.msra.mxu0 0
        %5627 = vmatprep.subr.bf16.mxu0 0
        %5628 = vmatpush2.bf16.xpose.msra.mxu0 0
        %5629 = vmatprep.subr.bf16.mxu0 0
        %5630 = vmatpush2.bf16.xpose.msra.mxu0 0
        %5631 = vmatprep.subr.bf16.mxu0 0
        %5632 = vmatpush2.bf16.xpose.msra.mxu0 0
        %5633 = vmatprep.subr.bf16.mxu0 0
        %5634 = vmatpush2.bf16.xpose.msra.mxu0 0
        %5635 = vmatprep.subr.bf16.mxu0 0
        %5636 = vmatpush2.bf16.xpose.msra.mxu0 0
        %5637 = vmatprep.subr.bf16.mxu0 0
        %5638 = vmatpush2.bf16.xpose.msra.mxu0 0
        %5639 = vmatprep.subr.bf16.mxu0 0
        %5640 = vmatpush2.bf16.xpose.msra.mxu0 0
        %5641 = vmatprep.mubr.bf16.mxu0 0
        %5642 = vmatmul.mubr.bf16.gmra.mxu0 %v5604
        %v5643 = vpop.f32.mrf.mxu0
        %v5644 = vadd.f32 0.0, %v5643
        %v5645 = vpop.f32.mrf.mxu0
        %v5646 = vpop.f32.mrf.mxu0
        %v5647 = vpop.f32.mrf.mxu0
        %5648 = vdwg.mxu0
        %5649 = vrot.lane.b32.xlu0 %v1126, 64
        %v5650 = vpop.permute.xlu0 %5649
        %5651 = vrot.lane.b32.xlu0 %v1166, 64
        %v5652 = vpop.permute.xlu0 %5651
        %v5654 = vsel %vm1208, %v5650, 0
        %v5657 = vsel %vm1208, %v5652, 0
        %5659 = vmatprep.subr.bf16.mxu0 0
        %5660 = vmatpush1.bf16.xpose.msra.mxu0 0
        %5661 = vmatprep.subr.bf16.mxu0 0
        %5662 = vmatpush1.bf16.xpose.msra.mxu0 0
        %5663 = vmatprep.subr.bf16.mxu0 0
        %5664 = vmatpush1.bf16.xpose.msra.mxu0 0
        %5665 = vmatprep.subr.bf16.mxu0 0
        %5666 = vmatpush1.bf16.xpose.msra.mxu0 0
        %5667 = vmatprep.subr.bf16.mxu0 0
        %5668 = vmatpush1.bf16.xpose.msra.mxu0 0
        %5669 = vmatprep.subr.bf16.mxu0 0
        %5670 = vmatpush1.bf16.xpose.msra.mxu0 0
        %5671 = vmatprep.subr.bf16.mxu0 0
        %5672 = vmatpush1.bf16.xpose.msra.mxu0 0
        %5673 = vmatprep.subr.bf16.mxu0 0
        %5674 = vmatpush1.bf16.xpose.msra.mxu0 %v5657
        %5675 = vmatprep.subr.bf16.mxu0 0
        %5676 = vmatpush2.bf16.xpose.msra.mxu0 0
        %5677 = vmatprep.subr.bf16.mxu0 0
        %5678 = vmatpush2.bf16.xpose.msra.mxu0 0
        %5679 = vmatprep.subr.bf16.mxu0 0
        %5680 = vmatpush2.bf16.xpose.msra.mxu0 0
        %5681 = vmatprep.subr.bf16.mxu0 0
        %5682 = vmatpush2.bf16.xpose.msra.mxu0 0
        %5683 = vmatprep.subr.bf16.mxu0 0
        %5684 = vmatpush2.bf16.xpose.msra.mxu0 0
        %5685 = vmatprep.subr.bf16.mxu0 0
        %5686 = vmatpush2.bf16.xpose.msra.mxu0 0
        %5687 = vmatprep.subr.bf16.mxu0 0
        %5688 = vmatpush2.bf16.xpose.msra.mxu0 0
        %5689 = vmatprep.subr.bf16.mxu0 0
        %5690 = vmatpush2.bf16.xpose.msra.mxu0 0
        %5691 = vmatprep.mubr.bf16.mxu0 0
        %5692 = vmatmul.mubr.bf16.gmra.mxu0 %v5654
        %v5693 = vpop.f32.mrf.mxu0
        %v5694 = vadd.f32 0.0, %v5693
        %v5695 = vpop.f32.mrf.mxu0
        %v5696 = vpop.f32.mrf.mxu0
        %v5697 = vpop.f32.mrf.mxu0
        %5698 = vdwg.mxu0
        %5699 = vrot.lane.b32.xlu0 %v1127, 64
        %v5700 = vpop.permute.xlu0 %5699
        %5701 = vrot.lane.b32.xlu0 %v1167, 64
        %v5702 = vpop.permute.xlu0 %5701
        %v5704 = vsel %vm1208, %v5700, 0
        %v5707 = vsel %vm1208, %v5702, 0
        %5709 = vmatprep.subr.bf16.mxu0 0
        %5710 = vmatpush1.bf16.xpose.msra.mxu0 0
        %5711 = vmatprep.subr.bf16.mxu0 0
        %5712 = vmatpush1.bf16.xpose.msra.mxu0 0
        %5713 = vmatprep.subr.bf16.mxu0 0
        %5714 = vmatpush1.bf16.xpose.msra.mxu0 0
        %5715 = vmatprep.subr.bf16.mxu0 0
        %5716 = vmatpush1.bf16.xpose.msra.mxu0 0
        %5717 = vmatprep.subr.bf16.mxu0 0
        %5718 = vmatpush1.bf16.xpose.msra.mxu0 0
        %5719 = vmatprep.subr.bf16.mxu0 0
        %5720 = vmatpush1.bf16.xpose.msra.mxu0 0
        %5721 = vmatprep.subr.bf16.mxu0 0
        %5722 = vmatpush1.bf16.xpose.msra.mxu0 0
        %5723 = vmatprep.subr.bf16.mxu0 0
        %5724 = vmatpush1.bf16.xpose.msra.mxu0 %v5707
        %5725 = vmatprep.subr.bf16.mxu0 0
        %5726 = vmatpush2.bf16.xpose.msra.mxu0 0
        %5727 = vmatprep.subr.bf16.mxu0 0
        %5728 = vmatpush2.bf16.xpose.msra.mxu0 0
        %5729 = vmatprep.subr.bf16.mxu0 0
        %5730 = vmatpush2.bf16.xpose.msra.mxu0 0
        %5731 = vmatprep.subr.bf16.mxu0 0
        %5732 = vmatpush2.bf16.xpose.msra.mxu0 0
        %5733 = vmatprep.subr.bf16.mxu0 0
        %5734 = vmatpush2.bf16.xpose.msra.mxu0 0
        %5735 = vmatprep.subr.bf16.mxu0 0
        %5736 = vmatpush2.bf16.xpose.msra.mxu0 0
        %5737 = vmatprep.subr.bf16.mxu0 0
        %5738 = vmatpush2.bf16.xpose.msra.mxu0 0
        %5739 = vmatprep.subr.bf16.mxu0 0
        %5740 = vmatpush2.bf16.xpose.msra.mxu0 0
        %5741 = vmatprep.mubr.bf16.mxu0 0
        %5742 = vmatmul.mubr.bf16.gmra.mxu0 %v5704
        %v5743 = vpop.f32.mrf.mxu0
        %v5744 = vadd.f32 0.0, %v5743
        %v5745 = vpop.f32.mrf.mxu0
        %v5746 = vpop.f32.mrf.mxu0
        %v5747 = vpop.f32.mrf.mxu0
        %5748 = vdwg.mxu0
        %v5749 = vmul.f32 %v4994, 0.17677669
        %v5750 = vmul.f32 %v5044, 0.17677669
        %v5751 = vmul.f32 %v5094, 0.17677669
        %v5752 = vmul.f32 %v5144, 0.17677669
        %v5753 = vmul.f32 %v5194, 0.17677669
        %v5754 = vmul.f32 %v5244, 0.17677669
        %v5755 = vmul.f32 %v5294, 0.17677669
        %v5756 = vmul.f32 %v5344, 0.17677669
        %v5757 = vmul.f32 %v5394, 0.17677669
        %v5758 = vmul.f32 %v5444, 0.17677669
        %v5759 = vmul.f32 %v5494, 0.17677669
        %v5760 = vmul.f32 %v5544, 0.17677669
        %v5761 = vmul.f32 %v5594, 0.17677669
        %v5762 = vmul.f32 %v5644, 0.17677669
        %v5763 = vmul.f32 %v5694, 0.17677669
        %v5764 = vmul.f32 %v5744, 0.17677669
        %v5765 = vsel %vm1961, %v5749, -inf
        %5766 = vmax.xlane.f32.xlu0 %v5765
        %v5767 = vpop.xlane.xlu0 %5766
        %v5768 = vsel %vm1961, %v5750, -inf
        %5769 = vmax.xlane.f32.xlu0 %v5768
        %v5770 = vpop.xlane.xlu0 %5769
        %v5771 = vsel %vm1961, %v5751, -inf
        %5772 = vmax.xlane.f32.xlu0 %v5771
        %v5773 = vpop.xlane.xlu0 %5772
        %v5774 = vsel %vm1961, %v5752, -inf
        %5775 = vmax.xlane.f32.xlu0 %v5774
        %v5776 = vpop.xlane.xlu0 %5775
        %v5777 = vsel %vm1961, %v5753, -inf
        %5778 = vmax.xlane.f32.xlu0 %v5777
        %v5779 = vpop.xlane.xlu0 %5778
        %v5780 = vsel %vm1961, %v5754, -inf
        %5781 = vmax.xlane.f32.xlu0 %v5780
        %v5782 = vpop.xlane.xlu0 %5781
        %v5783 = vsel %vm1961, %v5755, -inf
        %5784 = vmax.xlane.f32.xlu0 %v5783
        %v5785 = vpop.xlane.xlu0 %5784
        %v5786 = vsel %vm1961, %v5756, -inf
        %5787 = vmax.xlane.f32.xlu0 %v5786
        %v5788 = vpop.xlane.xlu0 %5787
        %v5789 = vsel %vm1961, %v5757, -inf
        %5790 = vmax.xlane.f32.xlu0 %v5789
        %v5791 = vpop.xlane.xlu0 %5790
        %v5792 = vsel %vm1961, %v5758, -inf
        %5793 = vmax.xlane.f32.xlu0 %v5792
        %v5794 = vpop.xlane.xlu0 %5793
        %v5795 = vsel %vm1961, %v5759, -inf
        %5796 = vmax.xlane.f32.xlu0 %v5795
        %v5797 = vpop.xlane.xlu0 %5796
        %v5798 = vsel %vm1961, %v5760, -inf
        %5799 = vmax.xlane.f32.xlu0 %v5798
        %v5800 = vpop.xlane.xlu0 %5799
        %v5801 = vsel %vm1961, %v5761, -inf
        %5802 = vmax.xlane.f32.xlu0 %v5801
        %v5803 = vpop.xlane.xlu0 %5802
        %v5804 = vsel %vm1961, %v5762, -inf
        %5805 = vmax.xlane.f32.xlu0 %v5804
        %v5806 = vpop.xlane.xlu0 %5805
        %v5807 = vsel %vm1961, %v5763, -inf
        %5808 = vmax.xlane.f32.xlu0 %v5807
        %v5809 = vpop.xlane.xlu0 %5808
        %v5810 = vsel %vm1961, %v5764, -inf
        %5811 = vmax.xlane.f32.xlu0 %v5810
        %v5812 = vpop.xlane.xlu0 %5811
        %v5813 = vsub.f32 %v5749, %v5767
        %v5814 = vsub.f32 %v5750, %v5770
        %v5815 = vsub.f32 %v5751, %v5773
        %v5816 = vsub.f32 %v5752, %v5776
        %v5817 = vsub.f32 %v5753, %v5779
        %v5818 = vsub.f32 %v5754, %v5782
        %v5819 = vsub.f32 %v5755, %v5785
        %v5820 = vsub.f32 %v5756, %v5788
        %v5821 = vsub.f32 %v5757, %v5791
        %v5822 = vsub.f32 %v5758, %v5794
        %v5823 = vsub.f32 %v5759, %v5797
        %v5824 = vsub.f32 %v5760, %v5800
        %v5825 = vsub.f32 %v5761, %v5803
        %v5826 = vsub.f32 %v5762, %v5806
        %v5827 = vsub.f32 %v5763, %v5809
        %v5828 = vsub.f32 %v5764, %v5812
        %v5829 = vmul.f32 %v5813, 1.442695
        %v5830 = vpow.pop %v5829
        %v5831 = vmul.f32 %v5814, 1.442695
        %v5832 = vpow.pop %v5831
        %v5833 = vmul.f32 %v5815, 1.442695
        %v5834 = vpow.pop %v5833
        %v5835 = vmul.f32 %v5816, 1.442695
        %v5836 = vpow.pop %v5835
        %v5837 = vmul.f32 %v5817, 1.442695
        %v5838 = vpow.pop %v5837
        %v5839 = vmul.f32 %v5818, 1.442695
        %v5840 = vpow.pop %v5839
        %v5841 = vmul.f32 %v5819, 1.442695
        %v5842 = vpow.pop %v5841
        %v5843 = vmul.f32 %v5820, 1.442695
        %v5844 = vpow.pop %v5843
        %v5845 = vmul.f32 %v5821, 1.442695
        %v5846 = vpow.pop %v5845
        %v5847 = vmul.f32 %v5822, 1.442695
        %v5848 = vpow.pop %v5847
        %v5849 = vmul.f32 %v5823, 1.442695
        %v5850 = vpow.pop %v5849
        %v5851 = vmul.f32 %v5824, 1.442695
        %v5852 = vpow.pop %v5851
        %v5853 = vmul.f32 %v5825, 1.442695
        %v5854 = vpow.pop %v5853
        %v5855 = vmul.f32 %v5826, 1.442695
        %v5856 = vpow.pop %v5855
        %v5857 = vmul.f32 %v5827, 1.442695
        %v5858 = vpow.pop %v5857
        %v5859 = vmul.f32 %v5828, 1.442695
        %v5860 = vpow.pop %v5859
        %v5861 = vsel %vm1961, %v5830, 0.0
        %5862 = vadd.xlane.f32.xlu0 %v5861
        %v5863 = vpop.xlane.xlu0 %5862
        %v5864 = vsel %vm1961, %v5832, 0.0
        %5865 = vadd.xlane.f32.xlu0 %v5864
        %v5866 = vpop.xlane.xlu0 %5865
        %v5867 = vsel %vm1961, %v5834, 0.0
        %5868 = vadd.xlane.f32.xlu0 %v5867
        %v5869 = vpop.xlane.xlu0 %5868
        %v5870 = vsel %vm1961, %v5836, 0.0
        %5871 = vadd.xlane.f32.xlu0 %v5870
        %v5872 = vpop.xlane.xlu0 %5871
        %v5873 = vsel %vm1961, %v5838, 0.0
        %5874 = vadd.xlane.f32.xlu0 %v5873
        %v5875 = vpop.xlane.xlu0 %5874
        %v5876 = vsel %vm1961, %v5840, 0.0
        %5877 = vadd.xlane.f32.xlu0 %v5876
        %v5878 = vpop.xlane.xlu0 %5877
        %v5879 = vsel %vm1961, %v5842, 0.0
        %5880 = vadd.xlane.f32.xlu0 %v5879
        %v5881 = vpop.xlane.xlu0 %5880
        %v5882 = vsel %vm1961, %v5844, 0.0
        %5883 = vadd.xlane.f32.xlu0 %v5882
        %v5884 = vpop.xlane.xlu0 %5883
        %v5885 = vsel %vm1961, %v5846, 0.0
        %5886 = vadd.xlane.f32.xlu0 %v5885
        %v5887 = vpop.xlane.xlu0 %5886
        %v5888 = vsel %vm1961, %v5848, 0.0
        %5889 = vadd.xlane.f32.xlu0 %v5888
        %v5890 = vpop.xlane.xlu0 %5889
        %v5891 = vsel %vm1961, %v5850, 0.0
        %5892 = vadd.xlane.f32.xlu0 %v5891
        %v5893 = vpop.xlane.xlu0 %5892
        %v5894 = vsel %vm1961, %v5852, 0.0
        %5895 = vadd.xlane.f32.xlu0 %v5894
        %v5896 = vpop.xlane.xlu0 %5895
        %v5897 = vsel %vm1961, %v5854, 0.0
        %5898 = vadd.xlane.f32.xlu0 %v5897
        %v5899 = vpop.xlane.xlu0 %5898
        %v5900 = vsel %vm1961, %v5856, 0.0
        %5901 = vadd.xlane.f32.xlu0 %v5900
        %v5902 = vpop.xlane.xlu0 %5901
        %v5903 = vsel %vm1961, %v5858, 0.0
        %5904 = vadd.xlane.f32.xlu0 %v5903
        %v5905 = vpop.xlane.xlu0 %5904
        %v5906 = vsel %vm1961, %v5860, 0.0
        %5907 = vadd.xlane.f32.xlu0 %v5906
        %v5908 = vpop.xlane.xlu0 %5907
        %v5909 = vrcp.pop %v5863
        %v5910 = vrcp.pop %v5866
        %v5911 = vrcp.pop %v5869
        %v5912 = vrcp.pop %v5872
        %v5913 = vrcp.pop %v5875
        %v5914 = vrcp.pop %v5878
        %v5915 = vrcp.pop %v5881
        %v5916 = vrcp.pop %v5884
        %v5917 = vrcp.pop %v5887
        %v5918 = vrcp.pop %v5890
        %v5919 = vrcp.pop %v5893
        %v5920 = vrcp.pop %v5896
        %v5921 = vrcp.pop %v5899
        %v5922 = vrcp.pop %v5902
        %v5923 = vrcp.pop %v5905
        %v5924 = vrcp.pop %v5908
        %v5925 = vmul.f32 %v5830, %v5909
        %v5926 = vmul.f32 %v5832, %v5910
        %v5927 = vmul.f32 %v5834, %v5911
        %v5928 = vmul.f32 %v5836, %v5912
        %v5929 = vmul.f32 %v5838, %v5913
        %v5930 = vmul.f32 %v5840, %v5914
        %v5931 = vmul.f32 %v5842, %v5915
        %v5932 = vmul.f32 %v5844, %v5916
        %v5933 = vmul.f32 %v5846, %v5917
        %v5934 = vmul.f32 %v5848, %v5918
        %v5935 = vmul.f32 %v5850, %v5919
        %v5936 = vmul.f32 %v5852, %v5920
        %v5937 = vmul.f32 %v5854, %v5921
        %v5938 = vmul.f32 %v5856, %v5922
        %v5939 = vmul.f32 %v5858, %v5923
        %v5940 = vmul.f32 %v5860, %v5924
        %v5941 = vpack.c.bf16 %v5925, %v5925
        %v5942 = vpack.c.bf16 %v5926, %v5926
        %v5943 = vpack.c.bf16 %v5927, %v5927
        %v5944 = vpack.c.bf16 %v5928, %v5928
        %v5945 = vpack.c.bf16 %v5929, %v5929
        %v5946 = vpack.c.bf16 %v5930, %v5930
        %v5947 = vpack.c.bf16 %v5931, %v5931
        %v5948 = vpack.c.bf16 %v5932, %v5932
        %v5949 = vpack.c.bf16 %v5933, %v5933
        %v5950 = vpack.c.bf16 %v5934, %v5934
        %v5951 = vpack.c.bf16 %v5935, %v5935
        %v5952 = vpack.c.bf16 %v5936, %v5936
        %v5953 = vpack.c.bf16 %v5937, %v5937
        %v5954 = vpack.c.bf16 %v5938, %v5938
        %v5955 = vpack.c.bf16 %v5939, %v5939
        %v5956 = vpack.c.bf16 %v5940, %v5940
        %5957 = vrot.lane.b32.xlu0 %v1192, 64
        %v5958 = vpop.permute.xlu0 %5957
        %v5960 = vsel %vm1961, %v5941, 0
        %v5963 = vsel %vm2157, %v5958, 0
        %5965 = vmatprep.subr.bf16.mxu0 0
        %5966 = vmatpush1.bf16.msra.mxu0 0
        %5967 = vmatprep.subr.bf16.mxu0 0
        %5968 = vmatpush1.bf16.msra.mxu0 0
        %5969 = vmatprep.subr.bf16.mxu0 0
        %5970 = vmatpush1.bf16.msra.mxu0 0
        %5971 = vmatprep.subr.bf16.mxu0 0
        %5972 = vmatpush1.bf16.msra.mxu0 0
        %5973 = vmatprep.subr.bf16.mxu0 0
        %5974 = vmatpush1.bf16.msra.mxu0 0
        %5975 = vmatprep.subr.bf16.mxu0 0
        %5976 = vmatpush1.bf16.msra.mxu0 0
        %5977 = vmatprep.subr.bf16.mxu0 0
        %5978 = vmatpush1.bf16.msra.mxu0 0
        %5979 = vmatprep.subr.bf16.mxu0 0
        %5980 = vmatpush1.bf16.msra.mxu0 %v5963
        %5981 = vmatprep.subr.bf16.mxu0 0
        %5982 = vmatpush2.bf16.msra.mxu0 0
        %5983 = vmatprep.subr.bf16.mxu0 0
        %5984 = vmatpush2.bf16.msra.mxu0 0
        %5985 = vmatprep.subr.bf16.mxu0 0
        %5986 = vmatpush2.bf16.msra.mxu0 0
        %5987 = vmatprep.subr.bf16.mxu0 0
        %5988 = vmatpush2.bf16.msra.mxu0 0
        %5989 = vmatprep.subr.bf16.mxu0 0
        %5990 = vmatpush2.bf16.msra.mxu0 0
        %5991 = vmatprep.subr.bf16.mxu0 0
        %5992 = vmatpush2.bf16.msra.mxu0 0
        %5993 = vmatprep.subr.bf16.mxu0 0
        %5994 = vmatpush2.bf16.msra.mxu0 0
        %5995 = vmatprep.subr.bf16.mxu0 0
        %5996 = vmatpush2.bf16.msra.mxu0 0
        %5997 = vmatprep.mubr.bf16.mxu0 0
        %5998 = vmatmul.mubr.bf16.gmra.mxu0 %v5960
        %v5999 = vpop.f32.mrf.mxu0
        %v6000 = vadd.f32 0.0, %v5999
        %v6001 = vpop.f32.mrf.mxu0
        %v6002 = vpop.f32.mrf.mxu0
        %v6003 = vpop.f32.mrf.mxu0
        %6004 = vdwg.mxu0
        %6005 = vrot.lane.b32.xlu0 %v1193, 64
        %v6006 = vpop.permute.xlu0 %6005
        %v6008 = vsel %vm1961, %v5942, 0
        %v6011 = vsel %vm2157, %v6006, 0
        %6013 = vmatprep.subr.bf16.mxu0 0
        %6014 = vmatpush1.bf16.msra.mxu0 0
        %6015 = vmatprep.subr.bf16.mxu0 0
        %6016 = vmatpush1.bf16.msra.mxu0 0
        %6017 = vmatprep.subr.bf16.mxu0 0
        %6018 = vmatpush1.bf16.msra.mxu0 0
        %6019 = vmatprep.subr.bf16.mxu0 0
        %6020 = vmatpush1.bf16.msra.mxu0 0
        %6021 = vmatprep.subr.bf16.mxu0 0
        %6022 = vmatpush1.bf16.msra.mxu0 0
        %6023 = vmatprep.subr.bf16.mxu0 0
        %6024 = vmatpush1.bf16.msra.mxu0 0
        %6025 = vmatprep.subr.bf16.mxu0 0
        %6026 = vmatpush1.bf16.msra.mxu0 0
        %6027 = vmatprep.subr.bf16.mxu0 0
        %6028 = vmatpush1.bf16.msra.mxu0 %v6011
        %6029 = vmatprep.subr.bf16.mxu0 0
        %6030 = vmatpush2.bf16.msra.mxu0 0
        %6031 = vmatprep.subr.bf16.mxu0 0
        %6032 = vmatpush2.bf16.msra.mxu0 0
        %6033 = vmatprep.subr.bf16.mxu0 0
        %6034 = vmatpush2.bf16.msra.mxu0 0
        %6035 = vmatprep.subr.bf16.mxu0 0
        %6036 = vmatpush2.bf16.msra.mxu0 0
        %6037 = vmatprep.subr.bf16.mxu0 0
        %6038 = vmatpush2.bf16.msra.mxu0 0
        %6039 = vmatprep.subr.bf16.mxu0 0
        %6040 = vmatpush2.bf16.msra.mxu0 0
        %6041 = vmatprep.subr.bf16.mxu0 0
        %6042 = vmatpush2.bf16.msra.mxu0 0
        %6043 = vmatprep.subr.bf16.mxu0 0
        %6044 = vmatpush2.bf16.msra.mxu0 0
        %6045 = vmatprep.mubr.bf16.mxu0 0
        %6046 = vmatmul.mubr.bf16.gmra.mxu0 %v6008
        %v6047 = vpop.f32.mrf.mxu0
        %v6048 = vadd.f32 0.0, %v6047
        %v6049 = vpop.f32.mrf.mxu0
        %v6050 = vpop.f32.mrf.mxu0
        %v6051 = vpop.f32.mrf.mxu0
        %6052 = vdwg.mxu0
        %6053 = vrot.lane.b32.xlu0 %v1194, 64
        %v6054 = vpop.permute.xlu0 %6053
        %v6056 = vsel %vm1961, %v5943, 0
        %v6059 = vsel %vm2157, %v6054, 0
        %6061 = vmatprep.subr.bf16.mxu0 0
        %6062 = vmatpush1.bf16.msra.mxu0 0
        %6063 = vmatprep.subr.bf16.mxu0 0
        %6064 = vmatpush1.bf16.msra.mxu0 0
        %6065 = vmatprep.subr.bf16.mxu0 0
        %6066 = vmatpush1.bf16.msra.mxu0 0
        %6067 = vmatprep.subr.bf16.mxu0 0
        %6068 = vmatpush1.bf16.msra.mxu0 0
        %6069 = vmatprep.subr.bf16.mxu0 0
        %6070 = vmatpush1.bf16.msra.mxu0 0
        %6071 = vmatprep.subr.bf16.mxu0 0
        %6072 = vmatpush1.bf16.msra.mxu0 0
        %6073 = vmatprep.subr.bf16.mxu0 0
        %6074 = vmatpush1.bf16.msra.mxu0 0
        %6075 = vmatprep.subr.bf16.mxu0 0
        %6076 = vmatpush1.bf16.msra.mxu0 %v6059
        %6077 = vmatprep.subr.bf16.mxu0 0
        %6078 = vmatpush2.bf16.msra.mxu0 0
        %6079 = vmatprep.subr.bf16.mxu0 0
        %6080 = vmatpush2.bf16.msra.mxu0 0
        %6081 = vmatprep.subr.bf16.mxu0 0
        %6082 = vmatpush2.bf16.msra.mxu0 0
        %6083 = vmatprep.subr.bf16.mxu0 0
        %6084 = vmatpush2.bf16.msra.mxu0 0
        %6085 = vmatprep.subr.bf16.mxu0 0
        %6086 = vmatpush2.bf16.msra.mxu0 0
        %6087 = vmatprep.subr.bf16.mxu0 0
        %6088 = vmatpush2.bf16.msra.mxu0 0
        %6089 = vmatprep.subr.bf16.mxu0 0
        %6090 = vmatpush2.bf16.msra.mxu0 0
        %6091 = vmatprep.subr.bf16.mxu0 0
        %6092 = vmatpush2.bf16.msra.mxu0 0
        %6093 = vmatprep.mubr.bf16.mxu0 0
        %6094 = vmatmul.mubr.bf16.gmra.mxu0 %v6056
        %v6095 = vpop.f32.mrf.mxu0
        %v6096 = vadd.f32 0.0, %v6095
        %v6097 = vpop.f32.mrf.mxu0
        %v6098 = vpop.f32.mrf.mxu0
        %v6099 = vpop.f32.mrf.mxu0
        %6100 = vdwg.mxu0
        %6101 = vrot.lane.b32.xlu0 %v1195, 64
        %v6102 = vpop.permute.xlu0 %6101
        %v6104 = vsel %vm1961, %v5944, 0
        %v6107 = vsel %vm2157, %v6102, 0
        %6109 = vmatprep.subr.bf16.mxu0 0
        %6110 = vmatpush1.bf16.msra.mxu0 0
        %6111 = vmatprep.subr.bf16.mxu0 0
        %6112 = vmatpush1.bf16.msra.mxu0 0
        %6113 = vmatprep.subr.bf16.mxu0 0
        %6114 = vmatpush1.bf16.msra.mxu0 0
        %6115 = vmatprep.subr.bf16.mxu0 0
        %6116 = vmatpush1.bf16.msra.mxu0 0
        %6117 = vmatprep.subr.bf16.mxu0 0
        %6118 = vmatpush1.bf16.msra.mxu0 0
        %6119 = vmatprep.subr.bf16.mxu0 0
        %6120 = vmatpush1.bf16.msra.mxu0 0
        %6121 = vmatprep.subr.bf16.mxu0 0
        %6122 = vmatpush1.bf16.msra.mxu0 0
        %6123 = vmatprep.subr.bf16.mxu0 0
        %6124 = vmatpush1.bf16.msra.mxu0 %v6107
        %6125 = vmatprep.subr.bf16.mxu0 0
        %6126 = vmatpush2.bf16.msra.mxu0 0
        %6127 = vmatprep.subr.bf16.mxu0 0
        %6128 = vmatpush2.bf16.msra.mxu0 0
        %6129 = vmatprep.subr.bf16.mxu0 0
        %6130 = vmatpush2.bf16.msra.mxu0 0
        %6131 = vmatprep.subr.bf16.mxu0 0
        %6132 = vmatpush2.bf16.msra.mxu0 0
        %6133 = vmatprep.subr.bf16.mxu0 0
        %6134 = vmatpush2.bf16.msra.mxu0 0
        %6135 = vmatprep.subr.bf16.mxu0 0
        %6136 = vmatpush2.bf16.msra.mxu0 0
        %6137 = vmatprep.subr.bf16.mxu0 0
        %6138 = vmatpush2.bf16.msra.mxu0 0
        %6139 = vmatprep.subr.bf16.mxu0 0
        %6140 = vmatpush2.bf16.msra.mxu0 0
        %6141 = vmatprep.mubr.bf16.mxu0 0
        %6142 = vmatmul.mubr.bf16.gmra.mxu0 %v6104
        %v6143 = vpop.f32.mrf.mxu0
        %v6144 = vadd.f32 0.0, %v6143
        %v6145 = vpop.f32.mrf.mxu0
        %v6146 = vpop.f32.mrf.mxu0
        %v6147 = vpop.f32.mrf.mxu0
        %6148 = vdwg.mxu0
        %6149 = vrot.lane.b32.xlu0 %v1196, 64
        %v6150 = vpop.permute.xlu0 %6149
        %v6152 = vsel %vm1961, %v5945, 0
        %v6155 = vsel %vm2157, %v6150, 0
        %6157 = vmatprep.subr.bf16.mxu0 0
        %6158 = vmatpush1.bf16.msra.mxu0 0
        %6159 = vmatprep.subr.bf16.mxu0 0
        %6160 = vmatpush1.bf16.msra.mxu0 0
        %6161 = vmatprep.subr.bf16.mxu0 0
        %6162 = vmatpush1.bf16.msra.mxu0 0
        %6163 = vmatprep.subr.bf16.mxu0 0
        %6164 = vmatpush1.bf16.msra.mxu0 0
        %6165 = vmatprep.subr.bf16.mxu0 0
        %6166 = vmatpush1.bf16.msra.mxu0 0
        %6167 = vmatprep.subr.bf16.mxu0 0
        %6168 = vmatpush1.bf16.msra.mxu0 0
        %6169 = vmatprep.subr.bf16.mxu0 0
        %6170 = vmatpush1.bf16.msra.mxu0 0
        %6171 = vmatprep.subr.bf16.mxu0 0
        %6172 = vmatpush1.bf16.msra.mxu0 %v6155
        %6173 = vmatprep.subr.bf16.mxu0 0
        %6174 = vmatpush2.bf16.msra.mxu0 0
        %6175 = vmatprep.subr.bf16.mxu0 0
        %6176 = vmatpush2.bf16.msra.mxu0 0
        %6177 = vmatprep.subr.bf16.mxu0 0
        %6178 = vmatpush2.bf16.msra.mxu0 0
        %6179 = vmatprep.subr.bf16.mxu0 0
        %6180 = vmatpush2.bf16.msra.mxu0 0
        %6181 = vmatprep.subr.bf16.mxu0 0
        %6182 = vmatpush2.bf16.msra.mxu0 0
        %6183 = vmatprep.subr.bf16.mxu0 0
        %6184 = vmatpush2.bf16.msra.mxu0 0
        %6185 = vmatprep.subr.bf16.mxu0 0
        %6186 = vmatpush2.bf16.msra.mxu0 0
        %6187 = vmatprep.subr.bf16.mxu0 0
        %6188 = vmatpush2.bf16.msra.mxu0 0
        %6189 = vmatprep.mubr.bf16.mxu0 0
        %6190 = vmatmul.mubr.bf16.gmra.mxu0 %v6152
        %v6191 = vpop.f32.mrf.mxu0
        %v6192 = vadd.f32 0.0, %v6191
        %v6193 = vpop.f32.mrf.mxu0
        %v6194 = vpop.f32.mrf.mxu0
        %v6195 = vpop.f32.mrf.mxu0
        %6196 = vdwg.mxu0
        %6197 = vrot.lane.b32.xlu0 %v1197, 64
        %v6198 = vpop.permute.xlu0 %6197
        %v6200 = vsel %vm1961, %v5946, 0
        %v6203 = vsel %vm2157, %v6198, 0
        %6205 = vmatprep.subr.bf16.mxu0 0
        %6206 = vmatpush1.bf16.msra.mxu0 0
        %6207 = vmatprep.subr.bf16.mxu0 0
        %6208 = vmatpush1.bf16.msra.mxu0 0
        %6209 = vmatprep.subr.bf16.mxu0 0
        %6210 = vmatpush1.bf16.msra.mxu0 0
        %6211 = vmatprep.subr.bf16.mxu0 0
        %6212 = vmatpush1.bf16.msra.mxu0 0
        %6213 = vmatprep.subr.bf16.mxu0 0
        %6214 = vmatpush1.bf16.msra.mxu0 0
        %6215 = vmatprep.subr.bf16.mxu0 0
        %6216 = vmatpush1.bf16.msra.mxu0 0
        %6217 = vmatprep.subr.bf16.mxu0 0
        %6218 = vmatpush1.bf16.msra.mxu0 0
        %6219 = vmatprep.subr.bf16.mxu0 0
        %6220 = vmatpush1.bf16.msra.mxu0 %v6203
        %6221 = vmatprep.subr.bf16.mxu0 0
        %6222 = vmatpush2.bf16.msra.mxu0 0
        %6223 = vmatprep.subr.bf16.mxu0 0
        %6224 = vmatpush2.bf16.msra.mxu0 0
        %6225 = vmatprep.subr.bf16.mxu0 0
        %6226 = vmatpush2.bf16.msra.mxu0 0
        %6227 = vmatprep.subr.bf16.mxu0 0
        %6228 = vmatpush2.bf16.msra.mxu0 0
        %6229 = vmatprep.subr.bf16.mxu0 0
        %6230 = vmatpush2.bf16.msra.mxu0 0
        %6231 = vmatprep.subr.bf16.mxu0 0
        %6232 = vmatpush2.bf16.msra.mxu0 0
        %6233 = vmatprep.subr.bf16.mxu0 0
        %6234 = vmatpush2.bf16.msra.mxu0 0
        %6235 = vmatprep.subr.bf16.mxu0 0
        %6236 = vmatpush2.bf16.msra.mxu0 0
        %6237 = vmatprep.mubr.bf16.mxu0 0
        %6238 = vmatmul.mubr.bf16.gmra.mxu0 %v6200
        %v6239 = vpop.f32.mrf.mxu0
        %v6240 = vadd.f32 0.0, %v6239
        %v6241 = vpop.f32.mrf.mxu0
        %v6242 = vpop.f32.mrf.mxu0
        %v6243 = vpop.f32.mrf.mxu0
        %6244 = vdwg.mxu0
        %6245 = vrot.lane.b32.xlu0 %v1198, 64
        %v6246 = vpop.permute.xlu0 %6245
        %v6248 = vsel %vm1961, %v5947, 0
        %v6251 = vsel %vm2157, %v6246, 0
        %6253 = vmatprep.subr.bf16.mxu0 0
        %6254 = vmatpush1.bf16.msra.mxu0 0
        %6255 = vmatprep.subr.bf16.mxu0 0
        %6256 = vmatpush1.bf16.msra.mxu0 0
        %6257 = vmatprep.subr.bf16.mxu0 0
        %6258 = vmatpush1.bf16.msra.mxu0 0
        %6259 = vmatprep.subr.bf16.mxu0 0
        %6260 = vmatpush1.bf16.msra.mxu0 0
        %6261 = vmatprep.subr.bf16.mxu0 0
        %6262 = vmatpush1.bf16.msra.mxu0 0
        %6263 = vmatprep.subr.bf16.mxu0 0
        %6264 = vmatpush1.bf16.msra.mxu0 0
        %6265 = vmatprep.subr.bf16.mxu0 0
        %6266 = vmatpush1.bf16.msra.mxu0 0
        %6267 = vmatprep.subr.bf16.mxu0 0
        %6268 = vmatpush1.bf16.msra.mxu0 %v6251
        %6269 = vmatprep.subr.bf16.mxu0 0
        %6270 = vmatpush2.bf16.msra.mxu0 0
        %6271 = vmatprep.subr.bf16.mxu0 0
        %6272 = vmatpush2.bf16.msra.mxu0 0
        %6273 = vmatprep.subr.bf16.mxu0 0
        %6274 = vmatpush2.bf16.msra.mxu0 0
        %6275 = vmatprep.subr.bf16.mxu0 0
        %6276 = vmatpush2.bf16.msra.mxu0 0
        %6277 = vmatprep.subr.bf16.mxu0 0
        %6278 = vmatpush2.bf16.msra.mxu0 0
        %6279 = vmatprep.subr.bf16.mxu0 0
        %6280 = vmatpush2.bf16.msra.mxu0 0
        %6281 = vmatprep.subr.bf16.mxu0 0
        %6282 = vmatpush2.bf16.msra.mxu0 0
        %6283 = vmatprep.subr.bf16.mxu0 0
        %6284 = vmatpush2.bf16.msra.mxu0 0
        %6285 = vmatprep.mubr.bf16.mxu0 0
        %6286 = vmatmul.mubr.bf16.gmra.mxu0 %v6248
        %v6287 = vpop.f32.mrf.mxu0
        %v6288 = vadd.f32 0.0, %v6287
        %v6289 = vpop.f32.mrf.mxu0
        %v6290 = vpop.f32.mrf.mxu0
        %v6291 = vpop.f32.mrf.mxu0
        %6292 = vdwg.mxu0
        %6293 = vrot.lane.b32.xlu0 %v1199, 64
        %v6294 = vpop.permute.xlu0 %6293
        %v6296 = vsel %vm1961, %v5948, 0
        %v6299 = vsel %vm2157, %v6294, 0
        %6301 = vmatprep.subr.bf16.mxu0 0
        %6302 = vmatpush1.bf16.msra.mxu0 0
        %6303 = vmatprep.subr.bf16.mxu0 0
        %6304 = vmatpush1.bf16.msra.mxu0 0
        %6305 = vmatprep.subr.bf16.mxu0 0
        %6306 = vmatpush1.bf16.msra.mxu0 0
        %6307 = vmatprep.subr.bf16.mxu0 0
        %6308 = vmatpush1.bf16.msra.mxu0 0
        %6309 = vmatprep.subr.bf16.mxu0 0
        %6310 = vmatpush1.bf16.msra.mxu0 0
        %6311 = vmatprep.subr.bf16.mxu0 0
        %6312 = vmatpush1.bf16.msra.mxu0 0
        %6313 = vmatprep.subr.bf16.mxu0 0
        %6314 = vmatpush1.bf16.msra.mxu0 0
        %6315 = vmatprep.subr.bf16.mxu0 0
        %6316 = vmatpush1.bf16.msra.mxu0 %v6299
        %6317 = vmatprep.subr.bf16.mxu0 0
        %6318 = vmatpush2.bf16.msra.mxu0 0
        %6319 = vmatprep.subr.bf16.mxu0 0
        %6320 = vmatpush2.bf16.msra.mxu0 0
        %6321 = vmatprep.subr.bf16.mxu0 0
        %6322 = vmatpush2.bf16.msra.mxu0 0
        %6323 = vmatprep.subr.bf16.mxu0 0
        %6324 = vmatpush2.bf16.msra.mxu0 0
        %6325 = vmatprep.subr.bf16.mxu0 0
        %6326 = vmatpush2.bf16.msra.mxu0 0
        %6327 = vmatprep.subr.bf16.mxu0 0
        %6328 = vmatpush2.bf16.msra.mxu0 0
        %6329 = vmatprep.subr.bf16.mxu0 0
        %6330 = vmatpush2.bf16.msra.mxu0 0
        %6331 = vmatprep.subr.bf16.mxu0 0
        %6332 = vmatpush2.bf16.msra.mxu0 0
        %6333 = vmatprep.mubr.bf16.mxu0 0
        %6334 = vmatmul.mubr.bf16.gmra.mxu0 %v6296
        %v6335 = vpop.f32.mrf.mxu0
        %v6336 = vadd.f32 0.0, %v6335
        %v6337 = vpop.f32.mrf.mxu0
        %v6338 = vpop.f32.mrf.mxu0
        %v6339 = vpop.f32.mrf.mxu0
        %6340 = vdwg.mxu0
        %6341 = vrot.lane.b32.xlu0 %v1200, 64
        %v6342 = vpop.permute.xlu0 %6341
        %v6344 = vsel %vm1961, %v5949, 0
        %v6347 = vsel %vm2157, %v6342, 0
        %6349 = vmatprep.subr.bf16.mxu0 0
        %6350 = vmatpush1.bf16.msra.mxu0 0
        %6351 = vmatprep.subr.bf16.mxu0 0
        %6352 = vmatpush1.bf16.msra.mxu0 0
        %6353 = vmatprep.subr.bf16.mxu0 0
        %6354 = vmatpush1.bf16.msra.mxu0 0
        %6355 = vmatprep.subr.bf16.mxu0 0
        %6356 = vmatpush1.bf16.msra.mxu0 0
        %6357 = vmatprep.subr.bf16.mxu0 0
        %6358 = vmatpush1.bf16.msra.mxu0 0
        %6359 = vmatprep.subr.bf16.mxu0 0
        %6360 = vmatpush1.bf16.msra.mxu0 0
        %6361 = vmatprep.subr.bf16.mxu0 0
        %6362 = vmatpush1.bf16.msra.mxu0 0
        %6363 = vmatprep.subr.bf16.mxu0 0
        %6364 = vmatpush1.bf16.msra.mxu0 %v6347
        %6365 = vmatprep.subr.bf16.mxu0 0
        %6366 = vmatpush2.bf16.msra.mxu0 0
        %6367 = vmatprep.subr.bf16.mxu0 0
        %6368 = vmatpush2.bf16.msra.mxu0 0
        %6369 = vmatprep.subr.bf16.mxu0 0
        %6370 = vmatpush2.bf16.msra.mxu0 0
        %6371 = vmatprep.subr.bf16.mxu0 0
        %6372 = vmatpush2.bf16.msra.mxu0 0
        %6373 = vmatprep.subr.bf16.mxu0 0
        %6374 = vmatpush2.bf16.msra.mxu0 0
        %6375 = vmatprep.subr.bf16.mxu0 0
        %6376 = vmatpush2.bf16.msra.mxu0 0
        %6377 = vmatprep.subr.bf16.mxu0 0
        %6378 = vmatpush2.bf16.msra.mxu0 0
        %6379 = vmatprep.subr.bf16.mxu0 0
        %6380 = vmatpush2.bf16.msra.mxu0 0
        %6381 = vmatprep.mubr.bf16.mxu0 0
        %6382 = vmatmul.mubr.bf16.gmra.mxu0 %v6344
        %v6383 = vpop.f32.mrf.mxu0
        %v6384 = vadd.f32 0.0, %v6383
        %v6385 = vpop.f32.mrf.mxu0
        %v6386 = vpop.f32.mrf.mxu0
        %v6387 = vpop.f32.mrf.mxu0
        %6388 = vdwg.mxu0
        %6389 = vrot.lane.b32.xlu0 %v1201, 64
        %v6390 = vpop.permute.xlu0 %6389
        %v6392 = vsel %vm1961, %v5950, 0
        %v6395 = vsel %vm2157, %v6390, 0
        %6397 = vmatprep.subr.bf16.mxu0 0
        %6398 = vmatpush1.bf16.msra.mxu0 0
        %6399 = vmatprep.subr.bf16.mxu0 0
        %6400 = vmatpush1.bf16.msra.mxu0 0
        %6401 = vmatprep.subr.bf16.mxu0 0
        %6402 = vmatpush1.bf16.msra.mxu0 0
        %6403 = vmatprep.subr.bf16.mxu0 0
        %6404 = vmatpush1.bf16.msra.mxu0 0
        %6405 = vmatprep.subr.bf16.mxu0 0
        %6406 = vmatpush1.bf16.msra.mxu0 0
        %6407 = vmatprep.subr.bf16.mxu0 0
        %6408 = vmatpush1.bf16.msra.mxu0 0
        %6409 = vmatprep.subr.bf16.mxu0 0
        %6410 = vmatpush1.bf16.msra.mxu0 0
        %6411 = vmatprep.subr.bf16.mxu0 0
        %6412 = vmatpush1.bf16.msra.mxu0 %v6395
        %6413 = vmatprep.subr.bf16.mxu0 0
        %6414 = vmatpush2.bf16.msra.mxu0 0
        %6415 = vmatprep.subr.bf16.mxu0 0
        %6416 = vmatpush2.bf16.msra.mxu0 0
        %6417 = vmatprep.subr.bf16.mxu0 0
        %6418 = vmatpush2.bf16.msra.mxu0 0
        %6419 = vmatprep.subr.bf16.mxu0 0
        %6420 = vmatpush2.bf16.msra.mxu0 0
        %6421 = vmatprep.subr.bf16.mxu0 0
        %6422 = vmatpush2.bf16.msra.mxu0 0
        %6423 = vmatprep.subr.bf16.mxu0 0
        %6424 = vmatpush2.bf16.msra.mxu0 0
        %6425 = vmatprep.subr.bf16.mxu0 0
        %6426 = vmatpush2.bf16.msra.mxu0 0
        %6427 = vmatprep.subr.bf16.mxu0 0
        %6428 = vmatpush2.bf16.msra.mxu0 0
        %6429 = vmatprep.mubr.bf16.mxu0 0
        %6430 = vmatmul.mubr.bf16.gmra.mxu0 %v6392
        %v6431 = vpop.f32.mrf.mxu0
        %v6432 = vadd.f32 0.0, %v6431
        %v6433 = vpop.f32.mrf.mxu0
        %v6434 = vpop.f32.mrf.mxu0
        %v6435 = vpop.f32.mrf.mxu0
        %6436 = vdwg.mxu0
        %6437 = vrot.lane.b32.xlu0 %v1202, 64
        %v6438 = vpop.permute.xlu0 %6437
        %v6440 = vsel %vm1961, %v5951, 0
        %v6443 = vsel %vm2157, %v6438, 0
        %6445 = vmatprep.subr.bf16.mxu0 0
        %6446 = vmatpush1.bf16.msra.mxu0 0
        %6447 = vmatprep.subr.bf16.mxu0 0
        %6448 = vmatpush1.bf16.msra.mxu0 0
        %6449 = vmatprep.subr.bf16.mxu0 0
        %6450 = vmatpush1.bf16.msra.mxu0 0
        %6451 = vmatprep.subr.bf16.mxu0 0
        %6452 = vmatpush1.bf16.msra.mxu0 0
        %6453 = vmatprep.subr.bf16.mxu0 0
        %6454 = vmatpush1.bf16.msra.mxu0 0
        %6455 = vmatprep.subr.bf16.mxu0 0
        %6456 = vmatpush1.bf16.msra.mxu0 0
        %6457 = vmatprep.subr.bf16.mxu0 0
        %6458 = vmatpush1.bf16.msra.mxu0 0
        %6459 = vmatprep.subr.bf16.mxu0 0
        %6460 = vmatpush1.bf16.msra.mxu0 %v6443
        %6461 = vmatprep.subr.bf16.mxu0 0
        %6462 = vmatpush2.bf16.msra.mxu0 0
        %6463 = vmatprep.subr.bf16.mxu0 0
        %6464 = vmatpush2.bf16.msra.mxu0 0
        %6465 = vmatprep.subr.bf16.mxu0 0
        %6466 = vmatpush2.bf16.msra.mxu0 0
        %6467 = vmatprep.subr.bf16.mxu0 0
        %6468 = vmatpush2.bf16.msra.mxu0 0
        %6469 = vmatprep.subr.bf16.mxu0 0
        %6470 = vmatpush2.bf16.msra.mxu0 0
        %6471 = vmatprep.subr.bf16.mxu0 0
        %6472 = vmatpush2.bf16.msra.mxu0 0
        %6473 = vmatprep.subr.bf16.mxu0 0
        %6474 = vmatpush2.bf16.msra.mxu0 0
        %6475 = vmatprep.subr.bf16.mxu0 0
        %6476 = vmatpush2.bf16.msra.mxu0 0
        %6477 = vmatprep.mubr.bf16.mxu0 0
        %6478 = vmatmul.mubr.bf16.gmra.mxu0 %v6440
        %v6479 = vpop.f32.mrf.mxu0
        %v6480 = vadd.f32 0.0, %v6479
        %v6481 = vpop.f32.mrf.mxu0
        %v6482 = vpop.f32.mrf.mxu0
        %v6483 = vpop.f32.mrf.mxu0
        %6484 = vdwg.mxu0
        %6485 = vrot.lane.b32.xlu0 %v1203, 64
        %v6486 = vpop.permute.xlu0 %6485
        %v6488 = vsel %vm1961, %v5952, 0
        %v6491 = vsel %vm2157, %v6486, 0
        %6493 = vmatprep.subr.bf16.mxu0 0
        %6494 = vmatpush1.bf16.msra.mxu0 0
        %6495 = vmatprep.subr.bf16.mxu0 0
        %6496 = vmatpush1.bf16.msra.mxu0 0
        %6497 = vmatprep.subr.bf16.mxu0 0
        %6498 = vmatpush1.bf16.msra.mxu0 0
        %6499 = vmatprep.subr.bf16.mxu0 0
        %6500 = vmatpush1.bf16.msra.mxu0 0
        %6501 = vmatprep.subr.bf16.mxu0 0
        %6502 = vmatpush1.bf16.msra.mxu0 0
        %6503 = vmatprep.subr.bf16.mxu0 0
        %6504 = vmatpush1.bf16.msra.mxu0 0
        %6505 = vmatprep.subr.bf16.mxu0 0
        %6506 = vmatpush1.bf16.msra.mxu0 0
        %6507 = vmatprep.subr.bf16.mxu0 0
        %6508 = vmatpush1.bf16.msra.mxu0 %v6491
        %6509 = vmatprep.subr.bf16.mxu0 0
        %6510 = vmatpush2.bf16.msra.mxu0 0
        %6511 = vmatprep.subr.bf16.mxu0 0
        %6512 = vmatpush2.bf16.msra.mxu0 0
        %6513 = vmatprep.subr.bf16.mxu0 0
        %6514 = vmatpush2.bf16.msra.mxu0 0
        %6515 = vmatprep.subr.bf16.mxu0 0
        %6516 = vmatpush2.bf16.msra.mxu0 0
        %6517 = vmatprep.subr.bf16.mxu0 0
        %6518 = vmatpush2.bf16.msra.mxu0 0
        %6519 = vmatprep.subr.bf16.mxu0 0
        %6520 = vmatpush2.bf16.msra.mxu0 0
        %6521 = vmatprep.subr.bf16.mxu0 0
        %6522 = vmatpush2.bf16.msra.mxu0 0
        %6523 = vmatprep.subr.bf16.mxu0 0
        %6524 = vmatpush2.bf16.msra.mxu0 0
        %6525 = vmatprep.mubr.bf16.mxu0 0
        %6526 = vmatmul.mubr.bf16.gmra.mxu0 %v6488
        %v6527 = vpop.f32.mrf.mxu0
        %v6528 = vadd.f32 0.0, %v6527
        %v6529 = vpop.f32.mrf.mxu0
        %v6530 = vpop.f32.mrf.mxu0
        %v6531 = vpop.f32.mrf.mxu0
        %6532 = vdwg.mxu0
        %6533 = vrot.lane.b32.xlu0 %v1204, 64
        %v6534 = vpop.permute.xlu0 %6533
        %v6536 = vsel %vm1961, %v5953, 0
        %v6539 = vsel %vm2157, %v6534, 0
        %6541 = vmatprep.subr.bf16.mxu0 0
        %6542 = vmatpush1.bf16.msra.mxu0 0
        %6543 = vmatprep.subr.bf16.mxu0 0
        %6544 = vmatpush1.bf16.msra.mxu0 0
        %6545 = vmatprep.subr.bf16.mxu0 0
        %6546 = vmatpush1.bf16.msra.mxu0 0
        %6547 = vmatprep.subr.bf16.mxu0 0
        %6548 = vmatpush1.bf16.msra.mxu0 0
        %6549 = vmatprep.subr.bf16.mxu0 0
        %6550 = vmatpush1.bf16.msra.mxu0 0
        %6551 = vmatprep.subr.bf16.mxu0 0
        %6552 = vmatpush1.bf16.msra.mxu0 0
        %6553 = vmatprep.subr.bf16.mxu0 0
        %6554 = vmatpush1.bf16.msra.mxu0 0
        %6555 = vmatprep.subr.bf16.mxu0 0
        %6556 = vmatpush1.bf16.msra.mxu0 %v6539
        %6557 = vmatprep.subr.bf16.mxu0 0
        %6558 = vmatpush2.bf16.msra.mxu0 0
        %6559 = vmatprep.subr.bf16.mxu0 0
        %6560 = vmatpush2.bf16.msra.mxu0 0
        %6561 = vmatprep.subr.bf16.mxu0 0
        %6562 = vmatpush2.bf16.msra.mxu0 0
        %6563 = vmatprep.subr.bf16.mxu0 0
        %6564 = vmatpush2.bf16.msra.mxu0 0
        %6565 = vmatprep.subr.bf16.mxu0 0
        %6566 = vmatpush2.bf16.msra.mxu0 0
        %6567 = vmatprep.subr.bf16.mxu0 0
        %6568 = vmatpush2.bf16.msra.mxu0 0
        %6569 = vmatprep.subr.bf16.mxu0 0
        %6570 = vmatpush2.bf16.msra.mxu0 0
        %6571 = vmatprep.subr.bf16.mxu0 0
        %6572 = vmatpush2.bf16.msra.mxu0 0
        %6573 = vmatprep.mubr.bf16.mxu0 0
        %6574 = vmatmul.mubr.bf16.gmra.mxu0 %v6536
        %v6575 = vpop.f32.mrf.mxu0
        %v6576 = vadd.f32 0.0, %v6575
        %v6577 = vpop.f32.mrf.mxu0
        %v6578 = vpop.f32.mrf.mxu0
        %v6579 = vpop.f32.mrf.mxu0
        %6580 = vdwg.mxu0
        %6581 = vrot.lane.b32.xlu0 %v1205, 64
        %v6582 = vpop.permute.xlu0 %6581
        %v6584 = vsel %vm1961, %v5954, 0
        %v6587 = vsel %vm2157, %v6582, 0
        %6589 = vmatprep.subr.bf16.mxu0 0
        %6590 = vmatpush1.bf16.msra.mxu0 0
        %6591 = vmatprep.subr.bf16.mxu0 0
        %6592 = vmatpush1.bf16.msra.mxu0 0
        %6593 = vmatprep.subr.bf16.mxu0 0
        %6594 = vmatpush1.bf16.msra.mxu0 0
        %6595 = vmatprep.subr.bf16.mxu0 0
        %6596 = vmatpush1.bf16.msra.mxu0 0
        %6597 = vmatprep.subr.bf16.mxu0 0
        %6598 = vmatpush1.bf16.msra.mxu0 0
        %6599 = vmatprep.subr.bf16.mxu0 0
        %6600 = vmatpush1.bf16.msra.mxu0 0
        %6601 = vmatprep.subr.bf16.mxu0 0
        %6602 = vmatpush1.bf16.msra.mxu0 0
        %6603 = vmatprep.subr.bf16.mxu0 0
        %6604 = vmatpush1.bf16.msra.mxu0 %v6587
        %6605 = vmatprep.subr.bf16.mxu0 0
        %6606 = vmatpush2.bf16.msra.mxu0 0
        %6607 = vmatprep.subr.bf16.mxu0 0
        %6608 = vmatpush2.bf16.msra.mxu0 0
        %6609 = vmatprep.subr.bf16.mxu0 0
        %6610 = vmatpush2.bf16.msra.mxu0 0
        %6611 = vmatprep.subr.bf16.mxu0 0
        %6612 = vmatpush2.bf16.msra.mxu0 0
        %6613 = vmatprep.subr.bf16.mxu0 0
        %6614 = vmatpush2.bf16.msra.mxu0 0
        %6615 = vmatprep.subr.bf16.mxu0 0
        %6616 = vmatpush2.bf16.msra.mxu0 0
        %6617 = vmatprep.subr.bf16.mxu0 0
        %6618 = vmatpush2.bf16.msra.mxu0 0
        %6619 = vmatprep.subr.bf16.mxu0 0
        %6620 = vmatpush2.bf16.msra.mxu0 0
        %6621 = vmatprep.mubr.bf16.mxu0 0
        %6622 = vmatmul.mubr.bf16.gmra.mxu0 %v6584
        %v6623 = vpop.f32.mrf.mxu0
        %v6624 = vadd.f32 0.0, %v6623
        %v6625 = vpop.f32.mrf.mxu0
        %v6626 = vpop.f32.mrf.mxu0
        %v6627 = vpop.f32.mrf.mxu0
        %6628 = vdwg.mxu0
        %6629 = vrot.lane.b32.xlu0 %v1206, 64
        %v6630 = vpop.permute.xlu0 %6629
        %v6632 = vsel %vm1961, %v5955, 0
        %v6635 = vsel %vm2157, %v6630, 0
        %6637 = vmatprep.subr.bf16.mxu0 0
        %6638 = vmatpush1.bf16.msra.mxu0 0
        %6639 = vmatprep.subr.bf16.mxu0 0
        %6640 = vmatpush1.bf16.msra.mxu0 0
        %6641 = vmatprep.subr.bf16.mxu0 0
        %6642 = vmatpush1.bf16.msra.mxu0 0
        %6643 = vmatprep.subr.bf16.mxu0 0
        %6644 = vmatpush1.bf16.msra.mxu0 0
        %6645 = vmatprep.subr.bf16.mxu0 0
        %6646 = vmatpush1.bf16.msra.mxu0 0
        %6647 = vmatprep.subr.bf16.mxu0 0
        %6648 = vmatpush1.bf16.msra.mxu0 0
        %6649 = vmatprep.subr.bf16.mxu0 0
        %6650 = vmatpush1.bf16.msra.mxu0 0
        %6651 = vmatprep.subr.bf16.mxu0 0
        %6652 = vmatpush1.bf16.msra.mxu0 %v6635
        %6653 = vmatprep.subr.bf16.mxu0 0
        %6654 = vmatpush2.bf16.msra.mxu0 0
        %6655 = vmatprep.subr.bf16.mxu0 0
        %6656 = vmatpush2.bf16.msra.mxu0 0
        %6657 = vmatprep.subr.bf16.mxu0 0
        %6658 = vmatpush2.bf16.msra.mxu0 0
        %6659 = vmatprep.subr.bf16.mxu0 0
        %6660 = vmatpush2.bf16.msra.mxu0 0
        %6661 = vmatprep.subr.bf16.mxu0 0
        %6662 = vmatpush2.bf16.msra.mxu0 0
        %6663 = vmatprep.subr.bf16.mxu0 0
        %6664 = vmatpush2.bf16.msra.mxu0 0
        %6665 = vmatprep.subr.bf16.mxu0 0
        %6666 = vmatpush2.bf16.msra.mxu0 0
        %6667 = vmatprep.subr.bf16.mxu0 0
        %6668 = vmatpush2.bf16.msra.mxu0 0
        %6669 = vmatprep.mubr.bf16.mxu0 0
        %6670 = vmatmul.mubr.bf16.gmra.mxu0 %v6632
        %v6671 = vpop.f32.mrf.mxu0
        %v6672 = vadd.f32 0.0, %v6671
        %v6673 = vpop.f32.mrf.mxu0
        %v6674 = vpop.f32.mrf.mxu0
        %v6675 = vpop.f32.mrf.mxu0
        %6676 = vdwg.mxu0
        %6677 = vrot.lane.b32.xlu0 %v1207, 64
        %v6678 = vpop.permute.xlu0 %6677
        %v6680 = vsel %vm1961, %v5956, 0
        %v6683 = vsel %vm2157, %v6678, 0
        %6685 = vmatprep.subr.bf16.mxu0 0
        %6686 = vmatpush1.bf16.msra.mxu0 0
        %6687 = vmatprep.subr.bf16.mxu0 0
        %6688 = vmatpush1.bf16.msra.mxu0 0
        %6689 = vmatprep.subr.bf16.mxu0 0
        %6690 = vmatpush1.bf16.msra.mxu0 0
        %6691 = vmatprep.subr.bf16.mxu0 0
        %6692 = vmatpush1.bf16.msra.mxu0 0
        %6693 = vmatprep.subr.bf16.mxu0 0
        %6694 = vmatpush1.bf16.msra.mxu0 0
        %6695 = vmatprep.subr.bf16.mxu0 0
        %6696 = vmatpush1.bf16.msra.mxu0 0
        %6697 = vmatprep.subr.bf16.mxu0 0
        %6698 = vmatpush1.bf16.msra.mxu0 0
        %6699 = vmatprep.subr.bf16.mxu0 0
        %6700 = vmatpush1.bf16.msra.mxu0 %v6683
        %6701 = vmatprep.subr.bf16.mxu0 0
        %6702 = vmatpush2.bf16.msra.mxu0 0
        %6703 = vmatprep.subr.bf16.mxu0 0
        %6704 = vmatpush2.bf16.msra.mxu0 0
        %6705 = vmatprep.subr.bf16.mxu0 0
        %6706 = vmatpush2.bf16.msra.mxu0 0
        %6707 = vmatprep.subr.bf16.mxu0 0
        %6708 = vmatpush2.bf16.msra.mxu0 0
        %6709 = vmatprep.subr.bf16.mxu0 0
        %6710 = vmatpush2.bf16.msra.mxu0 0
        %6711 = vmatprep.subr.bf16.mxu0 0
        %6712 = vmatpush2.bf16.msra.mxu0 0
        %6713 = vmatprep.subr.bf16.mxu0 0
        %6714 = vmatpush2.bf16.msra.mxu0 0
        %6715 = vmatprep.subr.bf16.mxu0 0
        %6716 = vmatpush2.bf16.msra.mxu0 0
        %6717 = vmatprep.mubr.bf16.mxu0 0
        %6718 = vmatmul.mubr.bf16.gmra.mxu0 %v6680
        %v6719 = vpop.f32.mrf.mxu0
        %v6720 = vadd.f32 0.0, %v6719
        %v6721 = vpop.f32.mrf.mxu0
        %v6722 = vpop.f32.mrf.mxu0
        %v6723 = vpop.f32.mrf.mxu0
        %6724 = vdwg.mxu0
        %v6725 = vpack.c.bf16 %v6048, %v6000
        %v6726 = vpack.c.bf16 %v6144, %v6096
        %v6727 = vpack.c.bf16 %v6240, %v6192
        %v6728 = vpack.c.bf16 %v6336, %v6288
        %v6729 = vpack.c.bf16 %v6432, %v6384
        %v6730 = vpack.c.bf16 %v6528, %v6480
        %v6731 = vpack.c.bf16 %v6624, %v6576
        %v6732 = vpack.c.bf16 %v6720, %v6672
        %v6737 = vunpack.c.l.b16 %v599
        %v6738 = vunpack.c.l.b16 %v600
        %v6739 = vunpack.c.l.b16 %v601
        %v6740 = vunpack.c.l.b16 %v602
        %v6741 = vpack.c.b16 %v6738, %v6737
        %v6742 = vpack.c.b16 %v6740, %v6739
        %v6746 = vsel %vm1208, %v6725, 0
        %v6749 = vsel %vm1208, %v6726, 0
        %v6752 = vsel %vm1208, %v6727, 0
        %v6755 = vsel %vm1208, %v6728, 0
        %v6758 = vsel %vm1208, %v6729, 0
        %v6761 = vsel %vm1208, %v6730, 0
        %v6764 = vsel %vm1208, %v6731, 0
        %v6767 = vsel %vm1208, %v6732, 0
        %6769 = vmatprep.subr.bf16.mxu0 0
        %6770 = vmatpush1.bf16.msra.mxu0 0
        %6771 = vmatprep.subr.bf16.mxu0 0
        %6772 = vmatpush1.bf16.msra.mxu0 0
        %6773 = vmatprep.subr.bf16.mxu0 0
        %6774 = vmatpush1.bf16.msra.mxu0 0
        %6775 = vmatprep.subr.bf16.mxu0 0
        %6776 = vmatpush1.bf16.msra.mxu0 0
        %6777 = vmatprep.subr.bf16.mxu0 0
        %6778 = vmatpush1.bf16.msra.mxu0 0
        %6779 = vmatprep.subr.bf16.mxu0 0
        %6780 = vmatpush1.bf16.msra.mxu0 0
        %6781 = vmatprep.subr.bf16.mxu0 0
        %6782 = vmatpush1.bf16.msra.mxu0 %v6742
        %6783 = vmatprep.subr.bf16.mxu0 0
        %6784 = vmatpush1.bf16.msra.mxu0 %v6741
        %6785 = vmatprep.subr.bf16.mxu0 0
        %6786 = vmatpush2.bf16.msra.mxu0 0
        %6787 = vmatprep.subr.bf16.mxu0 0
        %6788 = vmatpush2.bf16.msra.mxu0 0
        %6789 = vmatprep.subr.bf16.mxu0 0
        %6790 = vmatpush2.bf16.msra.mxu0 0
        %6791 = vmatprep.subr.bf16.mxu0 0
        %6792 = vmatpush2.bf16.msra.mxu0 0
        %6793 = vmatprep.subr.bf16.mxu0 0
        %6794 = vmatpush2.bf16.msra.mxu0 0
        %6795 = vmatprep.subr.bf16.mxu0 0
        %6796 = vmatpush2.bf16.msra.mxu0 0
        %6797 = vmatprep.subr.bf16.mxu0 0
        %6798 = vmatpush2.bf16.msra.mxu0 0
        %6799 = vmatprep.subr.bf16.mxu0 0
        %6800 = vmatpush2.bf16.msra.mxu0 0
        %6801 = vmatprep.mubr.bf16.mxu0 0
        %6802 = vmatmul.mubr.bf16.gmra.mxu0 %v6746
        %v6803 = vpop.f32.mrf.mxu0
        %v6804 = vadd.f32 0.0, %v6803
        %v6805 = vpop.f32.mrf.mxu0
        %v6806 = vpop.f32.mrf.mxu0
        %v6807 = vadd.f32 0.0, %v6806
        %v6808 = vpop.f32.mrf.mxu0
        %6809 = vmatprep.mubr.bf16.mxu0 0
        %6810 = vmatmul.mubr.bf16.gmra.mxu0 %v6749
        %v6811 = vpop.f32.mrf.mxu0
        %v6812 = vadd.f32 0.0, %v6811
        %v6813 = vpop.f32.mrf.mxu0
        %v6814 = vpop.f32.mrf.mxu0
        %v6815 = vadd.f32 0.0, %v6814
        %v6816 = vpop.f32.mrf.mxu0
        %6817 = vmatprep.mubr.bf16.mxu0 0
        %6818 = vmatmul.mubr.bf16.gmra.mxu0 %v6752
        %v6819 = vpop.f32.mrf.mxu0
        %v6820 = vadd.f32 0.0, %v6819
        %v6821 = vpop.f32.mrf.mxu0
        %v6822 = vpop.f32.mrf.mxu0
        %v6823 = vadd.f32 0.0, %v6822
        %v6824 = vpop.f32.mrf.mxu0
        %6825 = vmatprep.mubr.bf16.mxu0 0
        %6826 = vmatmul.mubr.bf16.gmra.mxu0 %v6755
        %v6827 = vpop.f32.mrf.mxu0
        %v6828 = vadd.f32 0.0, %v6827
        %v6829 = vpop.f32.mrf.mxu0
        %v6830 = vpop.f32.mrf.mxu0
        %v6831 = vadd.f32 0.0, %v6830
        %v6832 = vpop.f32.mrf.mxu0
        %6833 = vmatprep.mubr.bf16.mxu0 0
        %6834 = vmatmul.mubr.bf16.gmra.mxu0 %v6758
        %v6835 = vpop.f32.mrf.mxu0
        %v6836 = vadd.f32 0.0, %v6835
        %v6837 = vpop.f32.mrf.mxu0
        %v6838 = vpop.f32.mrf.mxu0
        %v6839 = vadd.f32 0.0, %v6838
        %v6840 = vpop.f32.mrf.mxu0
        %6841 = vmatprep.mubr.bf16.mxu0 0
        %6842 = vmatmul.mubr.bf16.gmra.mxu0 %v6761
        %v6843 = vpop.f32.mrf.mxu0
        %v6844 = vadd.f32 0.0, %v6843
        %v6845 = vpop.f32.mrf.mxu0
        %v6846 = vpop.f32.mrf.mxu0
        %v6847 = vadd.f32 0.0, %v6846
        %v6848 = vpop.f32.mrf.mxu0
        %6849 = vmatprep.mubr.bf16.mxu0 0
        %6850 = vmatmul.mubr.bf16.gmra.mxu0 %v6764
        %v6851 = vpop.f32.mrf.mxu0
        %v6852 = vadd.f32 0.0, %v6851
        %v6853 = vpop.f32.mrf.mxu0
        %v6854 = vpop.f32.mrf.mxu0
        %v6855 = vadd.f32 0.0, %v6854
        %v6856 = vpop.f32.mrf.mxu0
        %6857 = vmatprep.mubr.bf16.mxu0 0
        %6858 = vmatmul.mubr.bf16.gmra.mxu0 %v6767
        %v6859 = vpop.f32.mrf.mxu0
        %v6860 = vadd.f32 0.0, %v6859
        %v6861 = vpop.f32.mrf.mxu0
        %v6862 = vpop.f32.mrf.mxu0
        %v6863 = vadd.f32 0.0, %v6862
        %v6864 = vpop.f32.mrf.mxu0
        %6865 = vdwg.mxu0
        %v6866 = vadd.f32 %v4887, %v6804
        %v6867 = vadd.f32 %v4890, %v6807
        %v6868 = vadd.f32 %v4895, %v6812
        %v6869 = vadd.f32 %v4898, %v6815
        %v6870 = vadd.f32 %v4903, %v6820
        %v6871 = vadd.f32 %v4906, %v6823
        %v6872 = vadd.f32 %v4911, %v6828
        %v6873 = vadd.f32 %v4914, %v6831
        %v6874 = vadd.f32 %v4919, %v6836
        %v6875 = vadd.f32 %v4922, %v6839
        %v6876 = vadd.f32 %v4927, %v6844
        %v6877 = vadd.f32 %v4930, %v6847
        %v6878 = vadd.f32 %v4935, %v6852
        %v6879 = vadd.f32 %v4938, %v6855
        %v6880 = vadd.f32 %v4943, %v6860
        %v6881 = vadd.f32 %v4946, %v6863
        %6882 = vrot.lane.b32.xlu0 %v1112, 32
        %v6883 = vpop.permute.xlu0 %6882
        %6884 = vrot.lane.b32.xlu0 %v1152, 32
        %v6885 = vpop.permute.xlu0 %6884
        %v6887 = vsel %vm1208, %v6883, 0
        %v6890 = vsel %vm1208, %v6885, 0
        %6892 = vmatprep.subr.bf16.mxu0 0
        %6893 = vmatpush1.bf16.xpose.msra.mxu0 0
        %6894 = vmatprep.subr.bf16.mxu0 0
        %6895 = vmatpush1.bf16.xpose.msra.mxu0 0
        %6896 = vmatprep.subr.bf16.mxu0 0
        %6897 = vmatpush1.bf16.xpose.msra.mxu0 0
        %6898 = vmatprep.subr.bf16.mxu0 0
        %6899 = vmatpush1.bf16.xpose.msra.mxu0 0
        %6900 = vmatprep.subr.bf16.mxu0 0
        %6901 = vmatpush1.bf16.xpose.msra.mxu0 0
        %6902 = vmatprep.subr.bf16.mxu0 0
        %6903 = vmatpush1.bf16.xpose.msra.mxu0 0
        %6904 = vmatprep.subr.bf16.mxu0 0
        %6905 = vmatpush1.bf16.xpose.msra.mxu0 0
        %6906 = vmatprep.subr.bf16.mxu0 0
        %6907 = vmatpush1.bf16.xpose.msra.mxu0 %v6890
        %6908 = vmatprep.subr.bf16.mxu0 0
        %6909 = vmatpush2.bf16.xpose.msra.mxu0 0
        %6910 = vmatprep.subr.bf16.mxu0 0
        %6911 = vmatpush2.bf16.xpose.msra.mxu0 0
        %6912 = vmatprep.subr.bf16.mxu0 0
        %6913 = vmatpush2.bf16.xpose.msra.mxu0 0
        %6914 = vmatprep.subr.bf16.mxu0 0
        %6915 = vmatpush2.bf16.xpose.msra.mxu0 0
        %6916 = vmatprep.subr.bf16.mxu0 0
        %6917 = vmatpush2.bf16.xpose.msra.mxu0 0
        %6918 = vmatprep.subr.bf16.mxu0 0
        %6919 = vmatpush2.bf16.xpose.msra.mxu0 0
        %6920 = vmatprep.subr.bf16.mxu0 0
        %6921 = vmatpush2.bf16.xpose.msra.mxu0 0
        %6922 = vmatprep.subr.bf16.mxu0 0
        %6923 = vmatpush2.bf16.xpose.msra.mxu0 0
        %6924 = vmatprep.mubr.bf16.mxu0 0
        %6925 = vmatmul.mubr.bf16.gmra.mxu0 %v6887
        %v6926 = vpop.f32.mrf.mxu0
        %v6927 = vadd.f32 0.0, %v6926
        %v6928 = vpop.f32.mrf.mxu0
        %v6929 = vpop.f32.mrf.mxu0
        %v6930 = vpop.f32.mrf.mxu0
        %6931 = vdwg.mxu0
        %6932 = vrot.lane.b32.xlu0 %v1113, 32
        %v6933 = vpop.permute.xlu0 %6932
        %6934 = vrot.lane.b32.xlu0 %v1153, 32
        %v6935 = vpop.permute.xlu0 %6934
        %v6937 = vsel %vm1208, %v6933, 0
        %v6940 = vsel %vm1208, %v6935, 0
        %6942 = vmatprep.subr.bf16.mxu0 0
        %6943 = vmatpush1.bf16.xpose.msra.mxu0 0
        %6944 = vmatprep.subr.bf16.mxu0 0
        %6945 = vmatpush1.bf16.xpose.msra.mxu0 0
        %6946 = vmatprep.subr.bf16.mxu0 0
        %6947 = vmatpush1.bf16.xpose.msra.mxu0 0
        %6948 = vmatprep.subr.bf16.mxu0 0
        %6949 = vmatpush1.bf16.xpose.msra.mxu0 0
        %6950 = vmatprep.subr.bf16.mxu0 0
        %6951 = vmatpush1.bf16.xpose.msra.mxu0 0
        %6952 = vmatprep.subr.bf16.mxu0 0
        %6953 = vmatpush1.bf16.xpose.msra.mxu0 0
        %6954 = vmatprep.subr.bf16.mxu0 0
        %6955 = vmatpush1.bf16.xpose.msra.mxu0 0
        %6956 = vmatprep.subr.bf16.mxu0 0
        %6957 = vmatpush1.bf16.xpose.msra.mxu0 %v6940
        %6958 = vmatprep.subr.bf16.mxu0 0
        %6959 = vmatpush2.bf16.xpose.msra.mxu0 0
        %6960 = vmatprep.subr.bf16.mxu0 0
        %6961 = vmatpush2.bf16.xpose.msra.mxu0 0
        %6962 = vmatprep.subr.bf16.mxu0 0
        %6963 = vmatpush2.bf16.xpose.msra.mxu0 0
        %6964 = vmatprep.subr.bf16.mxu0 0
        %6965 = vmatpush2.bf16.xpose.msra.mxu0 0
        %6966 = vmatprep.subr.bf16.mxu0 0
        %6967 = vmatpush2.bf16.xpose.msra.mxu0 0
        %6968 = vmatprep.subr.bf16.mxu0 0
        %6969 = vmatpush2.bf16.xpose.msra.mxu0 0
        %6970 = vmatprep.subr.bf16.mxu0 0
        %6971 = vmatpush2.bf16.xpose.msra.mxu0 0
        %6972 = vmatprep.subr.bf16.mxu0 0
        %6973 = vmatpush2.bf16.xpose.msra.mxu0 0
        %6974 = vmatprep.mubr.bf16.mxu0 0
        %6975 = vmatmul.mubr.bf16.gmra.mxu0 %v6937
        %v6976 = vpop.f32.mrf.mxu0
        %v6977 = vadd.f32 0.0, %v6976
        %v6978 = vpop.f32.mrf.mxu0
        %v6979 = vpop.f32.mrf.mxu0
        %v6980 = vpop.f32.mrf.mxu0
        %6981 = vdwg.mxu0
        %6982 = vrot.lane.b32.xlu0 %v1114, 32
        %v6983 = vpop.permute.xlu0 %6982
        %6984 = vrot.lane.b32.xlu0 %v1154, 32
        %v6985 = vpop.permute.xlu0 %6984
        %v6987 = vsel %vm1208, %v6983, 0
        %v6990 = vsel %vm1208, %v6985, 0
        %6992 = vmatprep.subr.bf16.mxu0 0
        %6993 = vmatpush1.bf16.xpose.msra.mxu0 0
        %6994 = vmatprep.subr.bf16.mxu0 0
        %6995 = vmatpush1.bf16.xpose.msra.mxu0 0
        %6996 = vmatprep.subr.bf16.mxu0 0
        %6997 = vmatpush1.bf16.xpose.msra.mxu0 0
        %6998 = vmatprep.subr.bf16.mxu0 0
        %6999 = vmatpush1.bf16.xpose.msra.mxu0 0
        %7000 = vmatprep.subr.bf16.mxu0 0
        %7001 = vmatpush1.bf16.xpose.msra.mxu0 0
        %7002 = vmatprep.subr.bf16.mxu0 0
        %7003 = vmatpush1.bf16.xpose.msra.mxu0 0
        %7004 = vmatprep.subr.bf16.mxu0 0
        %7005 = vmatpush1.bf16.xpose.msra.mxu0 0
        %7006 = vmatprep.subr.bf16.mxu0 0
        %7007 = vmatpush1.bf16.xpose.msra.mxu0 %v6990
        %7008 = vmatprep.subr.bf16.mxu0 0
        %7009 = vmatpush2.bf16.xpose.msra.mxu0 0
        %7010 = vmatprep.subr.bf16.mxu0 0
        %7011 = vmatpush2.bf16.xpose.msra.mxu0 0
        %7012 = vmatprep.subr.bf16.mxu0 0
        %7013 = vmatpush2.bf16.xpose.msra.mxu0 0
        %7014 = vmatprep.subr.bf16.mxu0 0
        %7015 = vmatpush2.bf16.xpose.msra.mxu0 0
        %7016 = vmatprep.subr.bf16.mxu0 0
        %7017 = vmatpush2.bf16.xpose.msra.mxu0 0
        %7018 = vmatprep.subr.bf16.mxu0 0
        %7019 = vmatpush2.bf16.xpose.msra.mxu0 0
        %7020 = vmatprep.subr.bf16.mxu0 0
        %7021 = vmatpush2.bf16.xpose.msra.mxu0 0
        %7022 = vmatprep.subr.bf16.mxu0 0
        %7023 = vmatpush2.bf16.xpose.msra.mxu0 0
        %7024 = vmatprep.mubr.bf16.mxu0 0
        %7025 = vmatmul.mubr.bf16.gmra.mxu0 %v6987
        %v7026 = vpop.f32.mrf.mxu0
        %v7027 = vadd.f32 0.0, %v7026
        %v7028 = vpop.f32.mrf.mxu0
        %v7029 = vpop.f32.mrf.mxu0
        %v7030 = vpop.f32.mrf.mxu0
        %7031 = vdwg.mxu0
        %7032 = vrot.lane.b32.xlu0 %v1115, 32
        %v7033 = vpop.permute.xlu0 %7032
        %7034 = vrot.lane.b32.xlu0 %v1155, 32
        %v7035 = vpop.permute.xlu0 %7034
        %v7037 = vsel %vm1208, %v7033, 0
        %v7040 = vsel %vm1208, %v7035, 0
        %7042 = vmatprep.subr.bf16.mxu0 0
        %7043 = vmatpush1.bf16.xpose.msra.mxu0 0
        %7044 = vmatprep.subr.bf16.mxu0 0
        %7045 = vmatpush1.bf16.xpose.msra.mxu0 0
        %7046 = vmatprep.subr.bf16.mxu0 0
        %7047 = vmatpush1.bf16.xpose.msra.mxu0 0
        %7048 = vmatprep.subr.bf16.mxu0 0
        %7049 = vmatpush1.bf16.xpose.msra.mxu0 0
        %7050 = vmatprep.subr.bf16.mxu0 0
        %7051 = vmatpush1.bf16.xpose.msra.mxu0 0
        %7052 = vmatprep.subr.bf16.mxu0 0
        %7053 = vmatpush1.bf16.xpose.msra.mxu0 0
        %7054 = vmatprep.subr.bf16.mxu0 0
        %7055 = vmatpush1.bf16.xpose.msra.mxu0 0
        %7056 = vmatprep.subr.bf16.mxu0 0
        %7057 = vmatpush1.bf16.xpose.msra.mxu0 %v7040
        %7058 = vmatprep.subr.bf16.mxu0 0
        %7059 = vmatpush2.bf16.xpose.msra.mxu0 0
        %7060 = vmatprep.subr.bf16.mxu0 0
        %7061 = vmatpush2.bf16.xpose.msra.mxu0 0
        %7062 = vmatprep.subr.bf16.mxu0 0
        %7063 = vmatpush2.bf16.xpose.msra.mxu0 0
        %7064 = vmatprep.subr.bf16.mxu0 0
        %7065 = vmatpush2.bf16.xpose.msra.mxu0 0
        %7066 = vmatprep.subr.bf16.mxu0 0
        %7067 = vmatpush2.bf16.xpose.msra.mxu0 0
        %7068 = vmatprep.subr.bf16.mxu0 0
        %7069 = vmatpush2.bf16.xpose.msra.mxu0 0
        %7070 = vmatprep.subr.bf16.mxu0 0
        %7071 = vmatpush2.bf16.xpose.msra.mxu0 0
        %7072 = vmatprep.subr.bf16.mxu0 0
        %7073 = vmatpush2.bf16.xpose.msra.mxu0 0
        %7074 = vmatprep.mubr.bf16.mxu0 0
        %7075 = vmatmul.mubr.bf16.gmra.mxu0 %v7037
        %v7076 = vpop.f32.mrf.mxu0
        %v7077 = vadd.f32 0.0, %v7076
        %v7078 = vpop.f32.mrf.mxu0
        %v7079 = vpop.f32.mrf.mxu0
        %v7080 = vpop.f32.mrf.mxu0
        %7081 = vdwg.mxu0
        %7082 = vrot.lane.b32.xlu0 %v1116, 32
        %v7083 = vpop.permute.xlu0 %7082
        %7084 = vrot.lane.b32.xlu0 %v1156, 32
        %v7085 = vpop.permute.xlu0 %7084
        %v7087 = vsel %vm1208, %v7083, 0
        %v7090 = vsel %vm1208, %v7085, 0
        %7092 = vmatprep.subr.bf16.mxu0 0
        %7093 = vmatpush1.bf16.xpose.msra.mxu0 0
        %7094 = vmatprep.subr.bf16.mxu0 0
        %7095 = vmatpush1.bf16.xpose.msra.mxu0 0
        %7096 = vmatprep.subr.bf16.mxu0 0
        %7097 = vmatpush1.bf16.xpose.msra.mxu0 0
        %7098 = vmatprep.subr.bf16.mxu0 0
        %7099 = vmatpush1.bf16.xpose.msra.mxu0 0
        %7100 = vmatprep.subr.bf16.mxu0 0
        %7101 = vmatpush1.bf16.xpose.msra.mxu0 0
        %7102 = vmatprep.subr.bf16.mxu0 0
        %7103 = vmatpush1.bf16.xpose.msra.mxu0 0
        %7104 = vmatprep.subr.bf16.mxu0 0
        %7105 = vmatpush1.bf16.xpose.msra.mxu0 0
        %7106 = vmatprep.subr.bf16.mxu0 0
        %7107 = vmatpush1.bf16.xpose.msra.mxu0 %v7090
        %7108 = vmatprep.subr.bf16.mxu0 0
        %7109 = vmatpush2.bf16.xpose.msra.mxu0 0
        %7110 = vmatprep.subr.bf16.mxu0 0
        %7111 = vmatpush2.bf16.xpose.msra.mxu0 0
        %7112 = vmatprep.subr.bf16.mxu0 0
        %7113 = vmatpush2.bf16.xpose.msra.mxu0 0
        %7114 = vmatprep.subr.bf16.mxu0 0
        %7115 = vmatpush2.bf16.xpose.msra.mxu0 0
        %7116 = vmatprep.subr.bf16.mxu0 0
        %7117 = vmatpush2.bf16.xpose.msra.mxu0 0
        %7118 = vmatprep.subr.bf16.mxu0 0
        %7119 = vmatpush2.bf16.xpose.msra.mxu0 0
        %7120 = vmatprep.subr.bf16.mxu0 0
        %7121 = vmatpush2.bf16.xpose.msra.mxu0 0
        %7122 = vmatprep.subr.bf16.mxu0 0
        %7123 = vmatpush2.bf16.xpose.msra.mxu0 0
        %7124 = vmatprep.mubr.bf16.mxu0 0
        %7125 = vmatmul.mubr.bf16.gmra.mxu0 %v7087
        %v7126 = vpop.f32.mrf.mxu0
        %v7127 = vadd.f32 0.0, %v7126
        %v7128 = vpop.f32.mrf.mxu0
        %v7129 = vpop.f32.mrf.mxu0
        %v7130 = vpop.f32.mrf.mxu0
        %7131 = vdwg.mxu0
        %7132 = vrot.lane.b32.xlu0 %v1117, 32
        %v7133 = vpop.permute.xlu0 %7132
        %7134 = vrot.lane.b32.xlu0 %v1157, 32
        %v7135 = vpop.permute.xlu0 %7134
        %v7137 = vsel %vm1208, %v7133, 0
        %v7140 = vsel %vm1208, %v7135, 0
        %7142 = vmatprep.subr.bf16.mxu0 0
        %7143 = vmatpush1.bf16.xpose.msra.mxu0 0
        %7144 = vmatprep.subr.bf16.mxu0 0
        %7145 = vmatpush1.bf16.xpose.msra.mxu0 0
        %7146 = vmatprep.subr.bf16.mxu0 0
        %7147 = vmatpush1.bf16.xpose.msra.mxu0 0
        %7148 = vmatprep.subr.bf16.mxu0 0
        %7149 = vmatpush1.bf16.xpose.msra.mxu0 0
        %7150 = vmatprep.subr.bf16.mxu0 0
        %7151 = vmatpush1.bf16.xpose.msra.mxu0 0
        %7152 = vmatprep.subr.bf16.mxu0 0
        %7153 = vmatpush1.bf16.xpose.msra.mxu0 0
        %7154 = vmatprep.subr.bf16.mxu0 0
        %7155 = vmatpush1.bf16.xpose.msra.mxu0 0
        %7156 = vmatprep.subr.bf16.mxu0 0
        %7157 = vmatpush1.bf16.xpose.msra.mxu0 %v7140
        %7158 = vmatprep.subr.bf16.mxu0 0
        %7159 = vmatpush2.bf16.xpose.msra.mxu0 0
        %7160 = vmatprep.subr.bf16.mxu0 0
        %7161 = vmatpush2.bf16.xpose.msra.mxu0 0
        %7162 = vmatprep.subr.bf16.mxu0 0
        %7163 = vmatpush2.bf16.xpose.msra.mxu0 0
        %7164 = vmatprep.subr.bf16.mxu0 0
        %7165 = vmatpush2.bf16.xpose.msra.mxu0 0
        %7166 = vmatprep.subr.bf16.mxu0 0
        %7167 = vmatpush2.bf16.xpose.msra.mxu0 0
        %7168 = vmatprep.subr.bf16.mxu0 0
        %7169 = vmatpush2.bf16.xpose.msra.mxu0 0
        %7170 = vmatprep.subr.bf16.mxu0 0
        %7171 = vmatpush2.bf16.xpose.msra.mxu0 0
        %7172 = vmatprep.subr.bf16.mxu0 0
        %7173 = vmatpush2.bf16.xpose.msra.mxu0 0
        %7174 = vmatprep.mubr.bf16.mxu0 0
        %7175 = vmatmul.mubr.bf16.gmra.mxu0 %v7137
        %v7176 = vpop.f32.mrf.mxu0
        %v7177 = vadd.f32 0.0, %v7176
        %v7178 = vpop.f32.mrf.mxu0
        %v7179 = vpop.f32.mrf.mxu0
        %v7180 = vpop.f32.mrf.mxu0
        %7181 = vdwg.mxu0
        %7182 = vrot.lane.b32.xlu0 %v1118, 32
        %v7183 = vpop.permute.xlu0 %7182
        %7184 = vrot.lane.b32.xlu0 %v1158, 32
        %v7185 = vpop.permute.xlu0 %7184
        %v7187 = vsel %vm1208, %v7183, 0
        %v7190 = vsel %vm1208, %v7185, 0
        %7192 = vmatprep.subr.bf16.mxu0 0
        %7193 = vmatpush1.bf16.xpose.msra.mxu0 0
        %7194 = vmatprep.subr.bf16.mxu0 0
        %7195 = vmatpush1.bf16.xpose.msra.mxu0 0
        %7196 = vmatprep.subr.bf16.mxu0 0
        %7197 = vmatpush1.bf16.xpose.msra.mxu0 0
        %7198 = vmatprep.subr.bf16.mxu0 0
        %7199 = vmatpush1.bf16.xpose.msra.mxu0 0
        %7200 = vmatprep.subr.bf16.mxu0 0
        %7201 = vmatpush1.bf16.xpose.msra.mxu0 0
        %7202 = vmatprep.subr.bf16.mxu0 0
        %7203 = vmatpush1.bf16.xpose.msra.mxu0 0
        %7204 = vmatprep.subr.bf16.mxu0 0
        %7205 = vmatpush1.bf16.xpose.msra.mxu0 0
        %7206 = vmatprep.subr.bf16.mxu0 0
        %7207 = vmatpush1.bf16.xpose.msra.mxu0 %v7190
        %7208 = vmatprep.subr.bf16.mxu0 0
        %7209 = vmatpush2.bf16.xpose.msra.mxu0 0
        %7210 = vmatprep.subr.bf16.mxu0 0
        %7211 = vmatpush2.bf16.xpose.msra.mxu0 0
        %7212 = vmatprep.subr.bf16.mxu0 0
        %7213 = vmatpush2.bf16.xpose.msra.mxu0 0
        %7214 = vmatprep.subr.bf16.mxu0 0
        %7215 = vmatpush2.bf16.xpose.msra.mxu0 0
        %7216 = vmatprep.subr.bf16.mxu0 0
        %7217 = vmatpush2.bf16.xpose.msra.mxu0 0
        %7218 = vmatprep.subr.bf16.mxu0 0
        %7219 = vmatpush2.bf16.xpose.msra.mxu0 0
        %7220 = vmatprep.subr.bf16.mxu0 0
        %7221 = vmatpush2.bf16.xpose.msra.mxu0 0
        %7222 = vmatprep.subr.bf16.mxu0 0
        %7223 = vmatpush2.bf16.xpose.msra.mxu0 0
        %7224 = vmatprep.mubr.bf16.mxu0 0
        %7225 = vmatmul.mubr.bf16.gmra.mxu0 %v7187
        %v7226 = vpop.f32.mrf.mxu0
        %v7227 = vadd.f32 0.0, %v7226
        %v7228 = vpop.f32.mrf.mxu0
        %v7229 = vpop.f32.mrf.mxu0
        %v7230 = vpop.f32.mrf.mxu0
        %7231 = vdwg.mxu0
        %7232 = vrot.lane.b32.xlu0 %v1119, 32
        %v7233 = vpop.permute.xlu0 %7232
        %7234 = vrot.lane.b32.xlu0 %v1159, 32
        %v7235 = vpop.permute.xlu0 %7234
        %v7237 = vsel %vm1208, %v7233, 0
        %v7240 = vsel %vm1208, %v7235, 0
        %7242 = vmatprep.subr.bf16.mxu0 0
        %7243 = vmatpush1.bf16.xpose.msra.mxu0 0
        %7244 = vmatprep.subr.bf16.mxu0 0
        %7245 = vmatpush1.bf16.xpose.msra.mxu0 0
        %7246 = vmatprep.subr.bf16.mxu0 0
        %7247 = vmatpush1.bf16.xpose.msra.mxu0 0
        %7248 = vmatprep.subr.bf16.mxu0 0
        %7249 = vmatpush1.bf16.xpose.msra.mxu0 0
        %7250 = vmatprep.subr.bf16.mxu0 0
        %7251 = vmatpush1.bf16.xpose.msra.mxu0 0
        %7252 = vmatprep.subr.bf16.mxu0 0
        %7253 = vmatpush1.bf16.xpose.msra.mxu0 0
        %7254 = vmatprep.subr.bf16.mxu0 0
        %7255 = vmatpush1.bf16.xpose.msra.mxu0 0
        %7256 = vmatprep.subr.bf16.mxu0 0
        %7257 = vmatpush1.bf16.xpose.msra.mxu0 %v7240
        %7258 = vmatprep.subr.bf16.mxu0 0
        %7259 = vmatpush2.bf16.xpose.msra.mxu0 0
        %7260 = vmatprep.subr.bf16.mxu0 0
        %7261 = vmatpush2.bf16.xpose.msra.mxu0 0
        %7262 = vmatprep.subr.bf16.mxu0 0
        %7263 = vmatpush2.bf16.xpose.msra.mxu0 0
        %7264 = vmatprep.subr.bf16.mxu0 0
        %7265 = vmatpush2.bf16.xpose.msra.mxu0 0
        %7266 = vmatprep.subr.bf16.mxu0 0
        %7267 = vmatpush2.bf16.xpose.msra.mxu0 0
        %7268 = vmatprep.subr.bf16.mxu0 0
        %7269 = vmatpush2.bf16.xpose.msra.mxu0 0
        %7270 = vmatprep.subr.bf16.mxu0 0
        %7271 = vmatpush2.bf16.xpose.msra.mxu0 0
        %7272 = vmatprep.subr.bf16.mxu0 0
        %7273 = vmatpush2.bf16.xpose.msra.mxu0 0
        %7274 = vmatprep.mubr.bf16.mxu0 0
        %7275 = vmatmul.mubr.bf16.gmra.mxu0 %v7237
        %v7276 = vpop.f32.mrf.mxu0
        %v7277 = vadd.f32 0.0, %v7276
        %v7278 = vpop.f32.mrf.mxu0
        %v7279 = vpop.f32.mrf.mxu0
        %v7280 = vpop.f32.mrf.mxu0
        %7281 = vdwg.mxu0
        %7282 = vrot.lane.b32.xlu0 %v1120, 32
        %v7283 = vpop.permute.xlu0 %7282
        %7284 = vrot.lane.b32.xlu0 %v1160, 32
        %v7285 = vpop.permute.xlu0 %7284
        %v7287 = vsel %vm1208, %v7283, 0
        %v7290 = vsel %vm1208, %v7285, 0
        %7292 = vmatprep.subr.bf16.mxu0 0
        %7293 = vmatpush1.bf16.xpose.msra.mxu0 0
        %7294 = vmatprep.subr.bf16.mxu0 0
        %7295 = vmatpush1.bf16.xpose.msra.mxu0 0
        %7296 = vmatprep.subr.bf16.mxu0 0
        %7297 = vmatpush1.bf16.xpose.msra.mxu0 0
        %7298 = vmatprep.subr.bf16.mxu0 0
        %7299 = vmatpush1.bf16.xpose.msra.mxu0 0
        %7300 = vmatprep.subr.bf16.mxu0 0
        %7301 = vmatpush1.bf16.xpose.msra.mxu0 0
        %7302 = vmatprep.subr.bf16.mxu0 0
        %7303 = vmatpush1.bf16.xpose.msra.mxu0 0
        %7304 = vmatprep.subr.bf16.mxu0 0
        %7305 = vmatpush1.bf16.xpose.msra.mxu0 0
        %7306 = vmatprep.subr.bf16.mxu0 0
        %7307 = vmatpush1.bf16.xpose.msra.mxu0 %v7290
        %7308 = vmatprep.subr.bf16.mxu0 0
        %7309 = vmatpush2.bf16.xpose.msra.mxu0 0
        %7310 = vmatprep.subr.bf16.mxu0 0
        %7311 = vmatpush2.bf16.xpose.msra.mxu0 0
        %7312 = vmatprep.subr.bf16.mxu0 0
        %7313 = vmatpush2.bf16.xpose.msra.mxu0 0
        %7314 = vmatprep.subr.bf16.mxu0 0
        %7315 = vmatpush2.bf16.xpose.msra.mxu0 0
        %7316 = vmatprep.subr.bf16.mxu0 0
        %7317 = vmatpush2.bf16.xpose.msra.mxu0 0
        %7318 = vmatprep.subr.bf16.mxu0 0
        %7319 = vmatpush2.bf16.xpose.msra.mxu0 0
        %7320 = vmatprep.subr.bf16.mxu0 0
        %7321 = vmatpush2.bf16.xpose.msra.mxu0 0
        %7322 = vmatprep.subr.bf16.mxu0 0
        %7323 = vmatpush2.bf16.xpose.msra.mxu0 0
        %7324 = vmatprep.mubr.bf16.mxu0 0
        %7325 = vmatmul.mubr.bf16.gmra.mxu0 %v7287
        %v7326 = vpop.f32.mrf.mxu0
        %v7327 = vadd.f32 0.0, %v7326
        %v7328 = vpop.f32.mrf.mxu0
        %v7329 = vpop.f32.mrf.mxu0
        %v7330 = vpop.f32.mrf.mxu0
        %7331 = vdwg.mxu0
        %7332 = vrot.lane.b32.xlu0 %v1121, 32
        %v7333 = vpop.permute.xlu0 %7332
        %7334 = vrot.lane.b32.xlu0 %v1161, 32
        %v7335 = vpop.permute.xlu0 %7334
        %v7337 = vsel %vm1208, %v7333, 0
        %v7340 = vsel %vm1208, %v7335, 0
        %7342 = vmatprep.subr.bf16.mxu0 0
        %7343 = vmatpush1.bf16.xpose.msra.mxu0 0
        %7344 = vmatprep.subr.bf16.mxu0 0
        %7345 = vmatpush1.bf16.xpose.msra.mxu0 0
        %7346 = vmatprep.subr.bf16.mxu0 0
        %7347 = vmatpush1.bf16.xpose.msra.mxu0 0
        %7348 = vmatprep.subr.bf16.mxu0 0
        %7349 = vmatpush1.bf16.xpose.msra.mxu0 0
        %7350 = vmatprep.subr.bf16.mxu0 0
        %7351 = vmatpush1.bf16.xpose.msra.mxu0 0
        %7352 = vmatprep.subr.bf16.mxu0 0
        %7353 = vmatpush1.bf16.xpose.msra.mxu0 0
        %7354 = vmatprep.subr.bf16.mxu0 0
        %7355 = vmatpush1.bf16.xpose.msra.mxu0 0
        %7356 = vmatprep.subr.bf16.mxu0 0
        %7357 = vmatpush1.bf16.xpose.msra.mxu0 %v7340
        %7358 = vmatprep.subr.bf16.mxu0 0
        %7359 = vmatpush2.bf16.xpose.msra.mxu0 0
        %7360 = vmatprep.subr.bf16.mxu0 0
        %7361 = vmatpush2.bf16.xpose.msra.mxu0 0
        %7362 = vmatprep.subr.bf16.mxu0 0
        %7363 = vmatpush2.bf16.xpose.msra.mxu0 0
        %7364 = vmatprep.subr.bf16.mxu0 0
        %7365 = vmatpush2.bf16.xpose.msra.mxu0 0
        %7366 = vmatprep.subr.bf16.mxu0 0
        %7367 = vmatpush2.bf16.xpose.msra.mxu0 0
        %7368 = vmatprep.subr.bf16.mxu0 0
        %7369 = vmatpush2.bf16.xpose.msra.mxu0 0
        %7370 = vmatprep.subr.bf16.mxu0 0
        %7371 = vmatpush2.bf16.xpose.msra.mxu0 0
        %7372 = vmatprep.subr.bf16.mxu0 0
        %7373 = vmatpush2.bf16.xpose.msra.mxu0 0
        %7374 = vmatprep.mubr.bf16.mxu0 0
        %7375 = vmatmul.mubr.bf16.gmra.mxu0 %v7337
        %v7376 = vpop.f32.mrf.mxu0
        %v7377 = vadd.f32 0.0, %v7376
        %v7378 = vpop.f32.mrf.mxu0
        %v7379 = vpop.f32.mrf.mxu0
        %v7380 = vpop.f32.mrf.mxu0
        %7381 = vdwg.mxu0
        %7382 = vrot.lane.b32.xlu0 %v1122, 32
        %v7383 = vpop.permute.xlu0 %7382
        %7384 = vrot.lane.b32.xlu0 %v1162, 32
        %v7385 = vpop.permute.xlu0 %7384
        %v7387 = vsel %vm1208, %v7383, 0
        %v7390 = vsel %vm1208, %v7385, 0
        %7392 = vmatprep.subr.bf16.mxu0 0
        %7393 = vmatpush1.bf16.xpose.msra.mxu0 0
        %7394 = vmatprep.subr.bf16.mxu0 0
        %7395 = vmatpush1.bf16.xpose.msra.mxu0 0
        %7396 = vmatprep.subr.bf16.mxu0 0
        %7397 = vmatpush1.bf16.xpose.msra.mxu0 0
        %7398 = vmatprep.subr.bf16.mxu0 0
        %7399 = vmatpush1.bf16.xpose.msra.mxu0 0
        %7400 = vmatprep.subr.bf16.mxu0 0
        %7401 = vmatpush1.bf16.xpose.msra.mxu0 0
        %7402 = vmatprep.subr.bf16.mxu0 0
        %7403 = vmatpush1.bf16.xpose.msra.mxu0 0
        %7404 = vmatprep.subr.bf16.mxu0 0
        %7405 = vmatpush1.bf16.xpose.msra.mxu0 0
        %7406 = vmatprep.subr.bf16.mxu0 0
        %7407 = vmatpush1.bf16.xpose.msra.mxu0 %v7390
        %7408 = vmatprep.subr.bf16.mxu0 0
        %7409 = vmatpush2.bf16.xpose.msra.mxu0 0
        %7410 = vmatprep.subr.bf16.mxu0 0
        %7411 = vmatpush2.bf16.xpose.msra.mxu0 0
        %7412 = vmatprep.subr.bf16.mxu0 0
        %7413 = vmatpush2.bf16.xpose.msra.mxu0 0
        %7414 = vmatprep.subr.bf16.mxu0 0
        %7415 = vmatpush2.bf16.xpose.msra.mxu0 0
        %7416 = vmatprep.subr.bf16.mxu0 0
        %7417 = vmatpush2.bf16.xpose.msra.mxu0 0
        %7418 = vmatprep.subr.bf16.mxu0 0
        %7419 = vmatpush2.bf16.xpose.msra.mxu0 0
        %7420 = vmatprep.subr.bf16.mxu0 0
        %7421 = vmatpush2.bf16.xpose.msra.mxu0 0
        %7422 = vmatprep.subr.bf16.mxu0 0
        %7423 = vmatpush2.bf16.xpose.msra.mxu0 0
        %7424 = vmatprep.mubr.bf16.mxu0 0
        %7425 = vmatmul.mubr.bf16.gmra.mxu0 %v7387
        %v7426 = vpop.f32.mrf.mxu0
        %v7427 = vadd.f32 0.0, %v7426
        %v7428 = vpop.f32.mrf.mxu0
        %v7429 = vpop.f32.mrf.mxu0
        %v7430 = vpop.f32.mrf.mxu0
        %7431 = vdwg.mxu0
        %7432 = vrot.lane.b32.xlu0 %v1123, 32
        %v7433 = vpop.permute.xlu0 %7432
        %7434 = vrot.lane.b32.xlu0 %v1163, 32
        %v7435 = vpop.permute.xlu0 %7434
        %v7437 = vsel %vm1208, %v7433, 0
        %v7440 = vsel %vm1208, %v7435, 0
        %7442 = vmatprep.subr.bf16.mxu0 0
        %7443 = vmatpush1.bf16.xpose.msra.mxu0 0
        %7444 = vmatprep.subr.bf16.mxu0 0
        %7445 = vmatpush1.bf16.xpose.msra.mxu0 0
        %7446 = vmatprep.subr.bf16.mxu0 0
        %7447 = vmatpush1.bf16.xpose.msra.mxu0 0
        %7448 = vmatprep.subr.bf16.mxu0 0
        %7449 = vmatpush1.bf16.xpose.msra.mxu0 0
        %7450 = vmatprep.subr.bf16.mxu0 0
        %7451 = vmatpush1.bf16.xpose.msra.mxu0 0
        %7452 = vmatprep.subr.bf16.mxu0 0
        %7453 = vmatpush1.bf16.xpose.msra.mxu0 0
        %7454 = vmatprep.subr.bf16.mxu0 0
        %7455 = vmatpush1.bf16.xpose.msra.mxu0 0
        %7456 = vmatprep.subr.bf16.mxu0 0
        %7457 = vmatpush1.bf16.xpose.msra.mxu0 %v7440
        %7458 = vmatprep.subr.bf16.mxu0 0
        %7459 = vmatpush2.bf16.xpose.msra.mxu0 0
        %7460 = vmatprep.subr.bf16.mxu0 0
        %7461 = vmatpush2.bf16.xpose.msra.mxu0 0
        %7462 = vmatprep.subr.bf16.mxu0 0
        %7463 = vmatpush2.bf16.xpose.msra.mxu0 0
        %7464 = vmatprep.subr.bf16.mxu0 0
        %7465 = vmatpush2.bf16.xpose.msra.mxu0 0
        %7466 = vmatprep.subr.bf16.mxu0 0
        %7467 = vmatpush2.bf16.xpose.msra.mxu0 0
        %7468 = vmatprep.subr.bf16.mxu0 0
        %7469 = vmatpush2.bf16.xpose.msra.mxu0 0
        %7470 = vmatprep.subr.bf16.mxu0 0
        %7471 = vmatpush2.bf16.xpose.msra.mxu0 0
        %7472 = vmatprep.subr.bf16.mxu0 0
        %7473 = vmatpush2.bf16.xpose.msra.mxu0 0
        %7474 = vmatprep.mubr.bf16.mxu0 0
        %7475 = vmatmul.mubr.bf16.gmra.mxu0 %v7437
        %v7476 = vpop.f32.mrf.mxu0
        %v7477 = vadd.f32 0.0, %v7476
        %v7478 = vpop.f32.mrf.mxu0
        %v7479 = vpop.f32.mrf.mxu0
        %v7480 = vpop.f32.mrf.mxu0
        %7481 = vdwg.mxu0
        %7482 = vrot.lane.b32.xlu0 %v1124, 32
        %v7483 = vpop.permute.xlu0 %7482
        %7484 = vrot.lane.b32.xlu0 %v1164, 32
        %v7485 = vpop.permute.xlu0 %7484
        %v7487 = vsel %vm1208, %v7483, 0
        %v7490 = vsel %vm1208, %v7485, 0
        %7492 = vmatprep.subr.bf16.mxu0 0
        %7493 = vmatpush1.bf16.xpose.msra.mxu0 0
        %7494 = vmatprep.subr.bf16.mxu0 0
        %7495 = vmatpush1.bf16.xpose.msra.mxu0 0
        %7496 = vmatprep.subr.bf16.mxu0 0
        %7497 = vmatpush1.bf16.xpose.msra.mxu0 0
        %7498 = vmatprep.subr.bf16.mxu0 0
        %7499 = vmatpush1.bf16.xpose.msra.mxu0 0
        %7500 = vmatprep.subr.bf16.mxu0 0
        %7501 = vmatpush1.bf16.xpose.msra.mxu0 0
        %7502 = vmatprep.subr.bf16.mxu0 0
        %7503 = vmatpush1.bf16.xpose.msra.mxu0 0
        %7504 = vmatprep.subr.bf16.mxu0 0
        %7505 = vmatpush1.bf16.xpose.msra.mxu0 0
        %7506 = vmatprep.subr.bf16.mxu0 0
        %7507 = vmatpush1.bf16.xpose.msra.mxu0 %v7490
        %7508 = vmatprep.subr.bf16.mxu0 0
        %7509 = vmatpush2.bf16.xpose.msra.mxu0 0
        %7510 = vmatprep.subr.bf16.mxu0 0
        %7511 = vmatpush2.bf16.xpose.msra.mxu0 0
        %7512 = vmatprep.subr.bf16.mxu0 0
        %7513 = vmatpush2.bf16.xpose.msra.mxu0 0
        %7514 = vmatprep.subr.bf16.mxu0 0
        %7515 = vmatpush2.bf16.xpose.msra.mxu0 0
        %7516 = vmatprep.subr.bf16.mxu0 0
        %7517 = vmatpush2.bf16.xpose.msra.mxu0 0
        %7518 = vmatprep.subr.bf16.mxu0 0
        %7519 = vmatpush2.bf16.xpose.msra.mxu0 0
        %7520 = vmatprep.subr.bf16.mxu0 0
        %7521 = vmatpush2.bf16.xpose.msra.mxu0 0
        %7522 = vmatprep.subr.bf16.mxu0 0
        %7523 = vmatpush2.bf16.xpose.msra.mxu0 0
        %7524 = vmatprep.mubr.bf16.mxu0 0
        %7525 = vmatmul.mubr.bf16.gmra.mxu0 %v7487
        %v7526 = vpop.f32.mrf.mxu0
        %v7527 = vadd.f32 0.0, %v7526
        %v7528 = vpop.f32.mrf.mxu0
        %v7529 = vpop.f32.mrf.mxu0
        %v7530 = vpop.f32.mrf.mxu0
        %7531 = vdwg.mxu0
        %7532 = vrot.lane.b32.xlu0 %v1125, 32
        %v7533 = vpop.permute.xlu0 %7532
        %7534 = vrot.lane.b32.xlu0 %v1165, 32
        %v7535 = vpop.permute.xlu0 %7534
        %v7537 = vsel %vm1208, %v7533, 0
        %v7540 = vsel %vm1208, %v7535, 0
        %7542 = vmatprep.subr.bf16.mxu0 0
        %7543 = vmatpush1.bf16.xpose.msra.mxu0 0
        %7544 = vmatprep.subr.bf16.mxu0 0
        %7545 = vmatpush1.bf16.xpose.msra.mxu0 0
        %7546 = vmatprep.subr.bf16.mxu0 0
        %7547 = vmatpush1.bf16.xpose.msra.mxu0 0
        %7548 = vmatprep.subr.bf16.mxu0 0
        %7549 = vmatpush1.bf16.xpose.msra.mxu0 0
        %7550 = vmatprep.subr.bf16.mxu0 0
        %7551 = vmatpush1.bf16.xpose.msra.mxu0 0
        %7552 = vmatprep.subr.bf16.mxu0 0
        %7553 = vmatpush1.bf16.xpose.msra.mxu0 0
        %7554 = vmatprep.subr.bf16.mxu0 0
        %7555 = vmatpush1.bf16.xpose.msra.mxu0 0
        %7556 = vmatprep.subr.bf16.mxu0 0
        %7557 = vmatpush1.bf16.xpose.msra.mxu0 %v7540
        %7558 = vmatprep.subr.bf16.mxu0 0
        %7559 = vmatpush2.bf16.xpose.msra.mxu0 0
        %7560 = vmatprep.subr.bf16.mxu0 0
        %7561 = vmatpush2.bf16.xpose.msra.mxu0 0
        %7562 = vmatprep.subr.bf16.mxu0 0
        %7563 = vmatpush2.bf16.xpose.msra.mxu0 0
        %7564 = vmatprep.subr.bf16.mxu0 0
        %7565 = vmatpush2.bf16.xpose.msra.mxu0 0
        %7566 = vmatprep.subr.bf16.mxu0 0
        %7567 = vmatpush2.bf16.xpose.msra.mxu0 0
        %7568 = vmatprep.subr.bf16.mxu0 0
        %7569 = vmatpush2.bf16.xpose.msra.mxu0 0
        %7570 = vmatprep.subr.bf16.mxu0 0
        %7571 = vmatpush2.bf16.xpose.msra.mxu0 0
        %7572 = vmatprep.subr.bf16.mxu0 0
        %7573 = vmatpush2.bf16.xpose.msra.mxu0 0
        %7574 = vmatprep.mubr.bf16.mxu0 0
        %7575 = vmatmul.mubr.bf16.gmra.mxu0 %v7537
        %v7576 = vpop.f32.mrf.mxu0
        %v7577 = vadd.f32 0.0, %v7576
        %v7578 = vpop.f32.mrf.mxu0
        %v7579 = vpop.f32.mrf.mxu0
        %v7580 = vpop.f32.mrf.mxu0
        %7581 = vdwg.mxu0
        %7582 = vrot.lane.b32.xlu0 %v1126, 32
        %v7583 = vpop.permute.xlu0 %7582
        %7584 = vrot.lane.b32.xlu0 %v1166, 32
        %v7585 = vpop.permute.xlu0 %7584
        %v7587 = vsel %vm1208, %v7583, 0
        %v7590 = vsel %vm1208, %v7585, 0
        %7592 = vmatprep.subr.bf16.mxu0 0
        %7593 = vmatpush1.bf16.xpose.msra.mxu0 0
        %7594 = vmatprep.subr.bf16.mxu0 0
        %7595 = vmatpush1.bf16.xpose.msra.mxu0 0
        %7596 = vmatprep.subr.bf16.mxu0 0
        %7597 = vmatpush1.bf16.xpose.msra.mxu0 0
        %7598 = vmatprep.subr.bf16.mxu0 0
        %7599 = vmatpush1.bf16.xpose.msra.mxu0 0
        %7600 = vmatprep.subr.bf16.mxu0 0
        %7601 = vmatpush1.bf16.xpose.msra.mxu0 0
        %7602 = vmatprep.subr.bf16.mxu0 0
        %7603 = vmatpush1.bf16.xpose.msra.mxu0 0
        %7604 = vmatprep.subr.bf16.mxu0 0
        %7605 = vmatpush1.bf16.xpose.msra.mxu0 0
        %7606 = vmatprep.subr.bf16.mxu0 0
        %7607 = vmatpush1.bf16.xpose.msra.mxu0 %v7590
        %7608 = vmatprep.subr.bf16.mxu0 0
        %7609 = vmatpush2.bf16.xpose.msra.mxu0 0
        %7610 = vmatprep.subr.bf16.mxu0 0
        %7611 = vmatpush2.bf16.xpose.msra.mxu0 0
        %7612 = vmatprep.subr.bf16.mxu0 0
        %7613 = vmatpush2.bf16.xpose.msra.mxu0 0
        %7614 = vmatprep.subr.bf16.mxu0 0
        %7615 = vmatpush2.bf16.xpose.msra.mxu0 0
        %7616 = vmatprep.subr.bf16.mxu0 0
        %7617 = vmatpush2.bf16.xpose.msra.mxu0 0
        %7618 = vmatprep.subr.bf16.mxu0 0
        %7619 = vmatpush2.bf16.xpose.msra.mxu0 0
        %7620 = vmatprep.subr.bf16.mxu0 0
        %7621 = vmatpush2.bf16.xpose.msra.mxu0 0
        %7622 = vmatprep.subr.bf16.mxu0 0
        %7623 = vmatpush2.bf16.xpose.msra.mxu0 0
        %7624 = vmatprep.mubr.bf16.mxu0 0
        %7625 = vmatmul.mubr.bf16.gmra.mxu0 %v7587
        %v7626 = vpop.f32.mrf.mxu0
        %v7627 = vadd.f32 0.0, %v7626
        %v7628 = vpop.f32.mrf.mxu0
        %v7629 = vpop.f32.mrf.mxu0
        %v7630 = vpop.f32.mrf.mxu0
        %7631 = vdwg.mxu0
        %7632 = vrot.lane.b32.xlu0 %v1127, 32
        %v7633 = vpop.permute.xlu0 %7632
        %7634 = vrot.lane.b32.xlu0 %v1167, 32
        %v7635 = vpop.permute.xlu0 %7634
        %v7637 = vsel %vm1208, %v7633, 0
        %v7640 = vsel %vm1208, %v7635, 0
        %7642 = vmatprep.subr.bf16.mxu0 0
        %7643 = vmatpush1.bf16.xpose.msra.mxu0 0
        %7644 = vmatprep.subr.bf16.mxu0 0
        %7645 = vmatpush1.bf16.xpose.msra.mxu0 0
        %7646 = vmatprep.subr.bf16.mxu0 0
        %7647 = vmatpush1.bf16.xpose.msra.mxu0 0
        %7648 = vmatprep.subr.bf16.mxu0 0
        %7649 = vmatpush1.bf16.xpose.msra.mxu0 0
        %7650 = vmatprep.subr.bf16.mxu0 0
        %7651 = vmatpush1.bf16.xpose.msra.mxu0 0
        %7652 = vmatprep.subr.bf16.mxu0 0
        %7653 = vmatpush1.bf16.xpose.msra.mxu0 0
        %7654 = vmatprep.subr.bf16.mxu0 0
        %7655 = vmatpush1.bf16.xpose.msra.mxu0 0
        %7656 = vmatprep.subr.bf16.mxu0 0
        %7657 = vmatpush1.bf16.xpose.msra.mxu0 %v7640
        %7658 = vmatprep.subr.bf16.mxu0 0
        %7659 = vmatpush2.bf16.xpose.msra.mxu0 0
        %7660 = vmatprep.subr.bf16.mxu0 0
        %7661 = vmatpush2.bf16.xpose.msra.mxu0 0
        %7662 = vmatprep.subr.bf16.mxu0 0
        %7663 = vmatpush2.bf16.xpose.msra.mxu0 0
        %7664 = vmatprep.subr.bf16.mxu0 0
        %7665 = vmatpush2.bf16.xpose.msra.mxu0 0
        %7666 = vmatprep.subr.bf16.mxu0 0
        %7667 = vmatpush2.bf16.xpose.msra.mxu0 0
        %7668 = vmatprep.subr.bf16.mxu0 0
        %7669 = vmatpush2.bf16.xpose.msra.mxu0 0
        %7670 = vmatprep.subr.bf16.mxu0 0
        %7671 = vmatpush2.bf16.xpose.msra.mxu0 0
        %7672 = vmatprep.subr.bf16.mxu0 0
        %7673 = vmatpush2.bf16.xpose.msra.mxu0 0
        %7674 = vmatprep.mubr.bf16.mxu0 0
        %7675 = vmatmul.mubr.bf16.gmra.mxu0 %v7637
        %v7676 = vpop.f32.mrf.mxu0
        %v7677 = vadd.f32 0.0, %v7676
        %v7678 = vpop.f32.mrf.mxu0
        %v7679 = vpop.f32.mrf.mxu0
        %v7680 = vpop.f32.mrf.mxu0
        %7681 = vdwg.mxu0
        %v7682 = vmul.f32 %v6927, 0.17677669
        %v7683 = vmul.f32 %v6977, 0.17677669
        %v7684 = vmul.f32 %v7027, 0.17677669
        %v7685 = vmul.f32 %v7077, 0.17677669
        %v7686 = vmul.f32 %v7127, 0.17677669
        %v7687 = vmul.f32 %v7177, 0.17677669
        %v7688 = vmul.f32 %v7227, 0.17677669
        %v7689 = vmul.f32 %v7277, 0.17677669
        %v7690 = vmul.f32 %v7327, 0.17677669
        %v7691 = vmul.f32 %v7377, 0.17677669
        %v7692 = vmul.f32 %v7427, 0.17677669
        %v7693 = vmul.f32 %v7477, 0.17677669
        %v7694 = vmul.f32 %v7527, 0.17677669
        %v7695 = vmul.f32 %v7577, 0.17677669
        %v7696 = vmul.f32 %v7627, 0.17677669
        %v7697 = vmul.f32 %v7677, 0.17677669
        %v7698 = vsel %vm1961, %v7682, -inf
        %7699 = vmax.xlane.f32.xlu0 %v7698
        %v7700 = vpop.xlane.xlu0 %7699
        %v7701 = vsel %vm1961, %v7683, -inf
        %7702 = vmax.xlane.f32.xlu0 %v7701
        %v7703 = vpop.xlane.xlu0 %7702
        %v7704 = vsel %vm1961, %v7684, -inf
        %7705 = vmax.xlane.f32.xlu0 %v7704
        %v7706 = vpop.xlane.xlu0 %7705
        %v7707 = vsel %vm1961, %v7685, -inf
        %7708 = vmax.xlane.f32.xlu0 %v7707
        %v7709 = vpop.xlane.xlu0 %7708
        %v7710 = vsel %vm1961, %v7686, -inf
        %7711 = vmax.xlane.f32.xlu0 %v7710
        %v7712 = vpop.xlane.xlu0 %7711
        %v7713 = vsel %vm1961, %v7687, -inf
        %7714 = vmax.xlane.f32.xlu0 %v7713
        %v7715 = vpop.xlane.xlu0 %7714
        %v7716 = vsel %vm1961, %v7688, -inf
        %7717 = vmax.xlane.f32.xlu0 %v7716
        %v7718 = vpop.xlane.xlu0 %7717
        %v7719 = vsel %vm1961, %v7689, -inf
        %7720 = vmax.xlane.f32.xlu0 %v7719
        %v7721 = vpop.xlane.xlu0 %7720
        %v7722 = vsel %vm1961, %v7690, -inf
        %7723 = vmax.xlane.f32.xlu0 %v7722
        %v7724 = vpop.xlane.xlu0 %7723
        %v7725 = vsel %vm1961, %v7691, -inf
        %7726 = vmax.xlane.f32.xlu0 %v7725
        %v7727 = vpop.xlane.xlu0 %7726
        %v7728 = vsel %vm1961, %v7692, -inf
        %7729 = vmax.xlane.f32.xlu0 %v7728
        %v7730 = vpop.xlane.xlu0 %7729
        %v7731 = vsel %vm1961, %v7693, -inf
        %7732 = vmax.xlane.f32.xlu0 %v7731
        %v7733 = vpop.xlane.xlu0 %7732
        %v7734 = vsel %vm1961, %v7694, -inf
        %7735 = vmax.xlane.f32.xlu0 %v7734
        %v7736 = vpop.xlane.xlu0 %7735
        %v7737 = vsel %vm1961, %v7695, -inf
        %7738 = vmax.xlane.f32.xlu0 %v7737
        %v7739 = vpop.xlane.xlu0 %7738
        %v7740 = vsel %vm1961, %v7696, -inf
        %7741 = vmax.xlane.f32.xlu0 %v7740
        %v7742 = vpop.xlane.xlu0 %7741
        %v7743 = vsel %vm1961, %v7697, -inf
        %7744 = vmax.xlane.f32.xlu0 %v7743
        %v7745 = vpop.xlane.xlu0 %7744
        %v7746 = vsub.f32 %v7682, %v7700
        %v7747 = vsub.f32 %v7683, %v7703
        %v7748 = vsub.f32 %v7684, %v7706
        %v7749 = vsub.f32 %v7685, %v7709
        %v7750 = vsub.f32 %v7686, %v7712
        %v7751 = vsub.f32 %v7687, %v7715
        %v7752 = vsub.f32 %v7688, %v7718
        %v7753 = vsub.f32 %v7689, %v7721
        %v7754 = vsub.f32 %v7690, %v7724
        %v7755 = vsub.f32 %v7691, %v7727
        %v7756 = vsub.f32 %v7692, %v7730
        %v7757 = vsub.f32 %v7693, %v7733
        %v7758 = vsub.f32 %v7694, %v7736
        %v7759 = vsub.f32 %v7695, %v7739
        %v7760 = vsub.f32 %v7696, %v7742
        %v7761 = vsub.f32 %v7697, %v7745
        %v7762 = vmul.f32 %v7746, 1.442695
        %v7763 = vpow.pop %v7762
        %v7764 = vmul.f32 %v7747, 1.442695
        %v7765 = vpow.pop %v7764
        %v7766 = vmul.f32 %v7748, 1.442695
        %v7767 = vpow.pop %v7766
        %v7768 = vmul.f32 %v7749, 1.442695
        %v7769 = vpow.pop %v7768
        %v7770 = vmul.f32 %v7750, 1.442695
        %v7771 = vpow.pop %v7770
        %v7772 = vmul.f32 %v7751, 1.442695
        %v7773 = vpow.pop %v7772
        %v7774 = vmul.f32 %v7752, 1.442695
        %v7775 = vpow.pop %v7774
        %v7776 = vmul.f32 %v7753, 1.442695
        %v7777 = vpow.pop %v7776
        %v7778 = vmul.f32 %v7754, 1.442695
        %v7779 = vpow.pop %v7778
        %v7780 = vmul.f32 %v7755, 1.442695
        %v7781 = vpow.pop %v7780
        %v7782 = vmul.f32 %v7756, 1.442695
        %v7783 = vpow.pop %v7782
        %v7784 = vmul.f32 %v7757, 1.442695
        %v7785 = vpow.pop %v7784
        %v7786 = vmul.f32 %v7758, 1.442695
        %v7787 = vpow.pop %v7786
        %v7788 = vmul.f32 %v7759, 1.442695
        %v7789 = vpow.pop %v7788
        %v7790 = vmul.f32 %v7760, 1.442695
        %v7791 = vpow.pop %v7790
        %v7792 = vmul.f32 %v7761, 1.442695
        %v7793 = vpow.pop %v7792
        %v7794 = vsel %vm1961, %v7763, 0.0
        %7795 = vadd.xlane.f32.xlu0 %v7794
        %v7796 = vpop.xlane.xlu0 %7795
        %v7797 = vsel %vm1961, %v7765, 0.0
        %7798 = vadd.xlane.f32.xlu0 %v7797
        %v7799 = vpop.xlane.xlu0 %7798
        %v7800 = vsel %vm1961, %v7767, 0.0
        %7801 = vadd.xlane.f32.xlu0 %v7800
        %v7802 = vpop.xlane.xlu0 %7801
        %v7803 = vsel %vm1961, %v7769, 0.0
        %7804 = vadd.xlane.f32.xlu0 %v7803
        %v7805 = vpop.xlane.xlu0 %7804
        %v7806 = vsel %vm1961, %v7771, 0.0
        %7807 = vadd.xlane.f32.xlu0 %v7806
        %v7808 = vpop.xlane.xlu0 %7807
        %v7809 = vsel %vm1961, %v7773, 0.0
        %7810 = vadd.xlane.f32.xlu0 %v7809
        %v7811 = vpop.xlane.xlu0 %7810
        %v7812 = vsel %vm1961, %v7775, 0.0
        %7813 = vadd.xlane.f32.xlu0 %v7812
        %v7814 = vpop.xlane.xlu0 %7813
        %v7815 = vsel %vm1961, %v7777, 0.0
        %7816 = vadd.xlane.f32.xlu0 %v7815
        %v7817 = vpop.xlane.xlu0 %7816
        %v7818 = vsel %vm1961, %v7779, 0.0
        %7819 = vadd.xlane.f32.xlu0 %v7818
        %v7820 = vpop.xlane.xlu0 %7819
        %v7821 = vsel %vm1961, %v7781, 0.0
        %7822 = vadd.xlane.f32.xlu0 %v7821
        %v7823 = vpop.xlane.xlu0 %7822
        %v7824 = vsel %vm1961, %v7783, 0.0
        %7825 = vadd.xlane.f32.xlu0 %v7824
        %v7826 = vpop.xlane.xlu0 %7825
        %v7827 = vsel %vm1961, %v7785, 0.0
        %7828 = vadd.xlane.f32.xlu0 %v7827
        %v7829 = vpop.xlane.xlu0 %7828
        %v7830 = vsel %vm1961, %v7787, 0.0
        %7831 = vadd.xlane.f32.xlu0 %v7830
        %v7832 = vpop.xlane.xlu0 %7831
        %v7833 = vsel %vm1961, %v7789, 0.0
        %7834 = vadd.xlane.f32.xlu0 %v7833
        %v7835 = vpop.xlane.xlu0 %7834
        %v7836 = vsel %vm1961, %v7791, 0.0
        %7837 = vadd.xlane.f32.xlu0 %v7836
        %v7838 = vpop.xlane.xlu0 %7837
        %v7839 = vsel %vm1961, %v7793, 0.0
        %7840 = vadd.xlane.f32.xlu0 %v7839
        %v7841 = vpop.xlane.xlu0 %7840
        %v7842 = vrcp.pop %v7796
        %v7843 = vrcp.pop %v7799
        %v7844 = vrcp.pop %v7802
        %v7845 = vrcp.pop %v7805
        %v7846 = vrcp.pop %v7808
        %v7847 = vrcp.pop %v7811
        %v7848 = vrcp.pop %v7814
        %v7849 = vrcp.pop %v7817
        %v7850 = vrcp.pop %v7820
        %v7851 = vrcp.pop %v7823
        %v7852 = vrcp.pop %v7826
        %v7853 = vrcp.pop %v7829
        %v7854 = vrcp.pop %v7832
        %v7855 = vrcp.pop %v7835
        %v7856 = vrcp.pop %v7838
        %v7857 = vrcp.pop %v7841
        %v7858 = vmul.f32 %v7763, %v7842
        %v7859 = vmul.f32 %v7765, %v7843
        %v7860 = vmul.f32 %v7767, %v7844
        %v7861 = vmul.f32 %v7769, %v7845
        %v7862 = vmul.f32 %v7771, %v7846
        %v7863 = vmul.f32 %v7773, %v7847
        %v7864 = vmul.f32 %v7775, %v7848
        %v7865 = vmul.f32 %v7777, %v7849
        %v7866 = vmul.f32 %v7779, %v7850
        %v7867 = vmul.f32 %v7781, %v7851
        %v7868 = vmul.f32 %v7783, %v7852
        %v7869 = vmul.f32 %v7785, %v7853
        %v7870 = vmul.f32 %v7787, %v7854
        %v7871 = vmul.f32 %v7789, %v7855
        %v7872 = vmul.f32 %v7791, %v7856
        %v7873 = vmul.f32 %v7793, %v7857
        %v7874 = vpack.c.bf16 %v7858, %v7858
        %v7875 = vpack.c.bf16 %v7859, %v7859
        %v7876 = vpack.c.bf16 %v7860, %v7860
        %v7877 = vpack.c.bf16 %v7861, %v7861
        %v7878 = vpack.c.bf16 %v7862, %v7862
        %v7879 = vpack.c.bf16 %v7863, %v7863
        %v7880 = vpack.c.bf16 %v7864, %v7864
        %v7881 = vpack.c.bf16 %v7865, %v7865
        %v7882 = vpack.c.bf16 %v7866, %v7866
        %v7883 = vpack.c.bf16 %v7867, %v7867
        %v7884 = vpack.c.bf16 %v7868, %v7868
        %v7885 = vpack.c.bf16 %v7869, %v7869
        %v7886 = vpack.c.bf16 %v7870, %v7870
        %v7887 = vpack.c.bf16 %v7871, %v7871
        %v7888 = vpack.c.bf16 %v7872, %v7872
        %v7889 = vpack.c.bf16 %v7873, %v7873
        %7890 = vrot.lane.b32.xlu0 %v1192, 32
        %v7891 = vpop.permute.xlu0 %7890
        %v7893 = vsel %vm1961, %v7874, 0
        %v7896 = vsel %vm2157, %v7891, 0
        %7898 = vmatprep.subr.bf16.mxu0 0
        %7899 = vmatpush1.bf16.msra.mxu0 0
        %7900 = vmatprep.subr.bf16.mxu0 0
        %7901 = vmatpush1.bf16.msra.mxu0 0
        %7902 = vmatprep.subr.bf16.mxu0 0
        %7903 = vmatpush1.bf16.msra.mxu0 0
        %7904 = vmatprep.subr.bf16.mxu0 0
        %7905 = vmatpush1.bf16.msra.mxu0 0
        %7906 = vmatprep.subr.bf16.mxu0 0
        %7907 = vmatpush1.bf16.msra.mxu0 0
        %7908 = vmatprep.subr.bf16.mxu0 0
        %7909 = vmatpush1.bf16.msra.mxu0 0
        %7910 = vmatprep.subr.bf16.mxu0 0
        %7911 = vmatpush1.bf16.msra.mxu0 0
        %7912 = vmatprep.subr.bf16.mxu0 0
        %7913 = vmatpush1.bf16.msra.mxu0 %v7896
        %7914 = vmatprep.subr.bf16.mxu0 0
        %7915 = vmatpush2.bf16.msra.mxu0 0
        %7916 = vmatprep.subr.bf16.mxu0 0
        %7917 = vmatpush2.bf16.msra.mxu0 0
        %7918 = vmatprep.subr.bf16.mxu0 0
        %7919 = vmatpush2.bf16.msra.mxu0 0
        %7920 = vmatprep.subr.bf16.mxu0 0
        %7921 = vmatpush2.bf16.msra.mxu0 0
        %7922 = vmatprep.subr.bf16.mxu0 0
        %7923 = vmatpush2.bf16.msra.mxu0 0
        %7924 = vmatprep.subr.bf16.mxu0 0
        %7925 = vmatpush2.bf16.msra.mxu0 0
        %7926 = vmatprep.subr.bf16.mxu0 0
        %7927 = vmatpush2.bf16.msra.mxu0 0
        %7928 = vmatprep.subr.bf16.mxu0 0
        %7929 = vmatpush2.bf16.msra.mxu0 0
        %7930 = vmatprep.mubr.bf16.mxu0 0
        %7931 = vmatmul.mubr.bf16.gmra.mxu0 %v7893
        %v7932 = vpop.f32.mrf.mxu0
        %v7933 = vadd.f32 0.0, %v7932
        %v7934 = vpop.f32.mrf.mxu0
        %v7935 = vpop.f32.mrf.mxu0
        %v7936 = vpop.f32.mrf.mxu0
        %7937 = vdwg.mxu0
        %7938 = vrot.lane.b32.xlu0 %v1193, 32
        %v7939 = vpop.permute.xlu0 %7938
        %v7941 = vsel %vm1961, %v7875, 0
        %v7944 = vsel %vm2157, %v7939, 0
        %7946 = vmatprep.subr.bf16.mxu0 0
        %7947 = vmatpush1.bf16.msra.mxu0 0
        %7948 = vmatprep.subr.bf16.mxu0 0
        %7949 = vmatpush1.bf16.msra.mxu0 0
        %7950 = vmatprep.subr.bf16.mxu0 0
        %7951 = vmatpush1.bf16.msra.mxu0 0
        %7952 = vmatprep.subr.bf16.mxu0 0
        %7953 = vmatpush1.bf16.msra.mxu0 0
        %7954 = vmatprep.subr.bf16.mxu0 0
        %7955 = vmatpush1.bf16.msra.mxu0 0
        %7956 = vmatprep.subr.bf16.mxu0 0
        %7957 = vmatpush1.bf16.msra.mxu0 0
        %7958 = vmatprep.subr.bf16.mxu0 0
        %7959 = vmatpush1.bf16.msra.mxu0 0
        %7960 = vmatprep.subr.bf16.mxu0 0
        %7961 = vmatpush1.bf16.msra.mxu0 %v7944
        %7962 = vmatprep.subr.bf16.mxu0 0
        %7963 = vmatpush2.bf16.msra.mxu0 0
        %7964 = vmatprep.subr.bf16.mxu0 0
        %7965 = vmatpush2.bf16.msra.mxu0 0
        %7966 = vmatprep.subr.bf16.mxu0 0
        %7967 = vmatpush2.bf16.msra.mxu0 0
        %7968 = vmatprep.subr.bf16.mxu0 0
        %7969 = vmatpush2.bf16.msra.mxu0 0
        %7970 = vmatprep.subr.bf16.mxu0 0
        %7971 = vmatpush2.bf16.msra.mxu0 0
        %7972 = vmatprep.subr.bf16.mxu0 0
        %7973 = vmatpush2.bf16.msra.mxu0 0
        %7974 = vmatprep.subr.bf16.mxu0 0
        %7975 = vmatpush2.bf16.msra.mxu0 0
        %7976 = vmatprep.subr.bf16.mxu0 0
        %7977 = vmatpush2.bf16.msra.mxu0 0
        %7978 = vmatprep.mubr.bf16.mxu0 0
        %7979 = vmatmul.mubr.bf16.gmra.mxu0 %v7941
        %v7980 = vpop.f32.mrf.mxu0
        %v7981 = vadd.f32 0.0, %v7980
        %v7982 = vpop.f32.mrf.mxu0
        %v7983 = vpop.f32.mrf.mxu0
        %v7984 = vpop.f32.mrf.mxu0
        %7985 = vdwg.mxu0
        %7986 = vrot.lane.b32.xlu0 %v1194, 32
        %v7987 = vpop.permute.xlu0 %7986
        %v7989 = vsel %vm1961, %v7876, 0
        %v7992 = vsel %vm2157, %v7987, 0
        %7994 = vmatprep.subr.bf16.mxu0 0
        %7995 = vmatpush1.bf16.msra.mxu0 0
        %7996 = vmatprep.subr.bf16.mxu0 0
        %7997 = vmatpush1.bf16.msra.mxu0 0
        %7998 = vmatprep.subr.bf16.mxu0 0
        %7999 = vmatpush1.bf16.msra.mxu0 0
        %8000 = vmatprep.subr.bf16.mxu0 0
        %8001 = vmatpush1.bf16.msra.mxu0 0
        %8002 = vmatprep.subr.bf16.mxu0 0
        %8003 = vmatpush1.bf16.msra.mxu0 0
        %8004 = vmatprep.subr.bf16.mxu0 0
        %8005 = vmatpush1.bf16.msra.mxu0 0
        %8006 = vmatprep.subr.bf16.mxu0 0
        %8007 = vmatpush1.bf16.msra.mxu0 0
        %8008 = vmatprep.subr.bf16.mxu0 0
        %8009 = vmatpush1.bf16.msra.mxu0 %v7992
        %8010 = vmatprep.subr.bf16.mxu0 0
        %8011 = vmatpush2.bf16.msra.mxu0 0
        %8012 = vmatprep.subr.bf16.mxu0 0
        %8013 = vmatpush2.bf16.msra.mxu0 0
        %8014 = vmatprep.subr.bf16.mxu0 0
        %8015 = vmatpush2.bf16.msra.mxu0 0
        %8016 = vmatprep.subr.bf16.mxu0 0
        %8017 = vmatpush2.bf16.msra.mxu0 0
        %8018 = vmatprep.subr.bf16.mxu0 0
        %8019 = vmatpush2.bf16.msra.mxu0 0
        %8020 = vmatprep.subr.bf16.mxu0 0
        %8021 = vmatpush2.bf16.msra.mxu0 0
        %8022 = vmatprep.subr.bf16.mxu0 0
        %8023 = vmatpush2.bf16.msra.mxu0 0
        %8024 = vmatprep.subr.bf16.mxu0 0
        %8025 = vmatpush2.bf16.msra.mxu0 0
        %8026 = vmatprep.mubr.bf16.mxu0 0
        %8027 = vmatmul.mubr.bf16.gmra.mxu0 %v7989
        %v8028 = vpop.f32.mrf.mxu0
        %v8029 = vadd.f32 0.0, %v8028
        %v8030 = vpop.f32.mrf.mxu0
        %v8031 = vpop.f32.mrf.mxu0
        %v8032 = vpop.f32.mrf.mxu0
        %8033 = vdwg.mxu0
        %8034 = vrot.lane.b32.xlu0 %v1195, 32
        %v8035 = vpop.permute.xlu0 %8034
        %v8037 = vsel %vm1961, %v7877, 0
        %v8040 = vsel %vm2157, %v8035, 0
        %8042 = vmatprep.subr.bf16.mxu0 0
        %8043 = vmatpush1.bf16.msra.mxu0 0
        %8044 = vmatprep.subr.bf16.mxu0 0
        %8045 = vmatpush1.bf16.msra.mxu0 0
        %8046 = vmatprep.subr.bf16.mxu0 0
        %8047 = vmatpush1.bf16.msra.mxu0 0
        %8048 = vmatprep.subr.bf16.mxu0 0
        %8049 = vmatpush1.bf16.msra.mxu0 0
        %8050 = vmatprep.subr.bf16.mxu0 0
        %8051 = vmatpush1.bf16.msra.mxu0 0
        %8052 = vmatprep.subr.bf16.mxu0 0
        %8053 = vmatpush1.bf16.msra.mxu0 0
        %8054 = vmatprep.subr.bf16.mxu0 0
        %8055 = vmatpush1.bf16.msra.mxu0 0
        %8056 = vmatprep.subr.bf16.mxu0 0
        %8057 = vmatpush1.bf16.msra.mxu0 %v8040
        %8058 = vmatprep.subr.bf16.mxu0 0
        %8059 = vmatpush2.bf16.msra.mxu0 0
        %8060 = vmatprep.subr.bf16.mxu0 0
        %8061 = vmatpush2.bf16.msra.mxu0 0
        %8062 = vmatprep.subr.bf16.mxu0 0
        %8063 = vmatpush2.bf16.msra.mxu0 0
        %8064 = vmatprep.subr.bf16.mxu0 0
        %8065 = vmatpush2.bf16.msra.mxu0 0
        %8066 = vmatprep.subr.bf16.mxu0 0
        %8067 = vmatpush2.bf16.msra.mxu0 0
        %8068 = vmatprep.subr.bf16.mxu0 0
        %8069 = vmatpush2.bf16.msra.mxu0 0
        %8070 = vmatprep.subr.bf16.mxu0 0
        %8071 = vmatpush2.bf16.msra.mxu0 0
        %8072 = vmatprep.subr.bf16.mxu0 0
        %8073 = vmatpush2.bf16.msra.mxu0 0
        %8074 = vmatprep.mubr.bf16.mxu0 0
        %8075 = vmatmul.mubr.bf16.gmra.mxu0 %v8037
        %v8076 = vpop.f32.mrf.mxu0
        %v8077 = vadd.f32 0.0, %v8076
        %v8078 = vpop.f32.mrf.mxu0
        %v8079 = vpop.f32.mrf.mxu0
        %v8080 = vpop.f32.mrf.mxu0
        %8081 = vdwg.mxu0
        %8082 = vrot.lane.b32.xlu0 %v1196, 32
        %v8083 = vpop.permute.xlu0 %8082
        %v8085 = vsel %vm1961, %v7878, 0
        %v8088 = vsel %vm2157, %v8083, 0
        %8090 = vmatprep.subr.bf16.mxu0 0
        %8091 = vmatpush1.bf16.msra.mxu0 0
        %8092 = vmatprep.subr.bf16.mxu0 0
        %8093 = vmatpush1.bf16.msra.mxu0 0
        %8094 = vmatprep.subr.bf16.mxu0 0
        %8095 = vmatpush1.bf16.msra.mxu0 0
        %8096 = vmatprep.subr.bf16.mxu0 0
        %8097 = vmatpush1.bf16.msra.mxu0 0
        %8098 = vmatprep.subr.bf16.mxu0 0
        %8099 = vmatpush1.bf16.msra.mxu0 0
        %8100 = vmatprep.subr.bf16.mxu0 0
        %8101 = vmatpush1.bf16.msra.mxu0 0
        %8102 = vmatprep.subr.bf16.mxu0 0
        %8103 = vmatpush1.bf16.msra.mxu0 0
        %8104 = vmatprep.subr.bf16.mxu0 0
        %8105 = vmatpush1.bf16.msra.mxu0 %v8088
        %8106 = vmatprep.subr.bf16.mxu0 0
        %8107 = vmatpush2.bf16.msra.mxu0 0
        %8108 = vmatprep.subr.bf16.mxu0 0
        %8109 = vmatpush2.bf16.msra.mxu0 0
        %8110 = vmatprep.subr.bf16.mxu0 0
        %8111 = vmatpush2.bf16.msra.mxu0 0
        %8112 = vmatprep.subr.bf16.mxu0 0
        %8113 = vmatpush2.bf16.msra.mxu0 0
        %8114 = vmatprep.subr.bf16.mxu0 0
        %8115 = vmatpush2.bf16.msra.mxu0 0
        %8116 = vmatprep.subr.bf16.mxu0 0
        %8117 = vmatpush2.bf16.msra.mxu0 0
        %8118 = vmatprep.subr.bf16.mxu0 0
        %8119 = vmatpush2.bf16.msra.mxu0 0
        %8120 = vmatprep.subr.bf16.mxu0 0
        %8121 = vmatpush2.bf16.msra.mxu0 0
        %8122 = vmatprep.mubr.bf16.mxu0 0
        %8123 = vmatmul.mubr.bf16.gmra.mxu0 %v8085
        %v8124 = vpop.f32.mrf.mxu0
        %v8125 = vadd.f32 0.0, %v8124
        %v8126 = vpop.f32.mrf.mxu0
        %v8127 = vpop.f32.mrf.mxu0
        %v8128 = vpop.f32.mrf.mxu0
        %8129 = vdwg.mxu0
        %8130 = vrot.lane.b32.xlu0 %v1197, 32
        %v8131 = vpop.permute.xlu0 %8130
        %v8133 = vsel %vm1961, %v7879, 0
        %v8136 = vsel %vm2157, %v8131, 0
        %8138 = vmatprep.subr.bf16.mxu0 0
        %8139 = vmatpush1.bf16.msra.mxu0 0
        %8140 = vmatprep.subr.bf16.mxu0 0
        %8141 = vmatpush1.bf16.msra.mxu0 0
        %8142 = vmatprep.subr.bf16.mxu0 0
        %8143 = vmatpush1.bf16.msra.mxu0 0
        %8144 = vmatprep.subr.bf16.mxu0 0
        %8145 = vmatpush1.bf16.msra.mxu0 0
        %8146 = vmatprep.subr.bf16.mxu0 0
        %8147 = vmatpush1.bf16.msra.mxu0 0
        %8148 = vmatprep.subr.bf16.mxu0 0
        %8149 = vmatpush1.bf16.msra.mxu0 0
        %8150 = vmatprep.subr.bf16.mxu0 0
        %8151 = vmatpush1.bf16.msra.mxu0 0
        %8152 = vmatprep.subr.bf16.mxu0 0
        %8153 = vmatpush1.bf16.msra.mxu0 %v8136
        %8154 = vmatprep.subr.bf16.mxu0 0
        %8155 = vmatpush2.bf16.msra.mxu0 0
        %8156 = vmatprep.subr.bf16.mxu0 0
        %8157 = vmatpush2.bf16.msra.mxu0 0
        %8158 = vmatprep.subr.bf16.mxu0 0
        %8159 = vmatpush2.bf16.msra.mxu0 0
        %8160 = vmatprep.subr.bf16.mxu0 0
        %8161 = vmatpush2.bf16.msra.mxu0 0
        %8162 = vmatprep.subr.bf16.mxu0 0
        %8163 = vmatpush2.bf16.msra.mxu0 0
        %8164 = vmatprep.subr.bf16.mxu0 0
        %8165 = vmatpush2.bf16.msra.mxu0 0
        %8166 = vmatprep.subr.bf16.mxu0 0
        %8167 = vmatpush2.bf16.msra.mxu0 0
        %8168 = vmatprep.subr.bf16.mxu0 0
        %8169 = vmatpush2.bf16.msra.mxu0 0
        %8170 = vmatprep.mubr.bf16.mxu0 0
        %8171 = vmatmul.mubr.bf16.gmra.mxu0 %v8133
        %v8172 = vpop.f32.mrf.mxu0
        %v8173 = vadd.f32 0.0, %v8172
        %v8174 = vpop.f32.mrf.mxu0
        %v8175 = vpop.f32.mrf.mxu0
        %v8176 = vpop.f32.mrf.mxu0
        %8177 = vdwg.mxu0
        %8178 = vrot.lane.b32.xlu0 %v1198, 32
        %v8179 = vpop.permute.xlu0 %8178
        %v8181 = vsel %vm1961, %v7880, 0
        %v8184 = vsel %vm2157, %v8179, 0
        %8186 = vmatprep.subr.bf16.mxu0 0
        %8187 = vmatpush1.bf16.msra.mxu0 0
        %8188 = vmatprep.subr.bf16.mxu0 0
        %8189 = vmatpush1.bf16.msra.mxu0 0
        %8190 = vmatprep.subr.bf16.mxu0 0
        %8191 = vmatpush1.bf16.msra.mxu0 0
        %8192 = vmatprep.subr.bf16.mxu0 0
        %8193 = vmatpush1.bf16.msra.mxu0 0
        %8194 = vmatprep.subr.bf16.mxu0 0
        %8195 = vmatpush1.bf16.msra.mxu0 0
        %8196 = vmatprep.subr.bf16.mxu0 0
        %8197 = vmatpush1.bf16.msra.mxu0 0
        %8198 = vmatprep.subr.bf16.mxu0 0
        %8199 = vmatpush1.bf16.msra.mxu0 0
        %8200 = vmatprep.subr.bf16.mxu0 0
        %8201 = vmatpush1.bf16.msra.mxu0 %v8184
        %8202 = vmatprep.subr.bf16.mxu0 0
        %8203 = vmatpush2.bf16.msra.mxu0 0
        %8204 = vmatprep.subr.bf16.mxu0 0
        %8205 = vmatpush2.bf16.msra.mxu0 0
        %8206 = vmatprep.subr.bf16.mxu0 0
        %8207 = vmatpush2.bf16.msra.mxu0 0
        %8208 = vmatprep.subr.bf16.mxu0 0
        %8209 = vmatpush2.bf16.msra.mxu0 0
        %8210 = vmatprep.subr.bf16.mxu0 0
        %8211 = vmatpush2.bf16.msra.mxu0 0
        %8212 = vmatprep.subr.bf16.mxu0 0
        %8213 = vmatpush2.bf16.msra.mxu0 0
        %8214 = vmatprep.subr.bf16.mxu0 0
        %8215 = vmatpush2.bf16.msra.mxu0 0
        %8216 = vmatprep.subr.bf16.mxu0 0
        %8217 = vmatpush2.bf16.msra.mxu0 0
        %8218 = vmatprep.mubr.bf16.mxu0 0
        %8219 = vmatmul.mubr.bf16.gmra.mxu0 %v8181
        %v8220 = vpop.f32.mrf.mxu0
        %v8221 = vadd.f32 0.0, %v8220
        %v8222 = vpop.f32.mrf.mxu0
        %v8223 = vpop.f32.mrf.mxu0
        %v8224 = vpop.f32.mrf.mxu0
        %8225 = vdwg.mxu0
        %8226 = vrot.lane.b32.xlu0 %v1199, 32
        %v8227 = vpop.permute.xlu0 %8226
        %v8229 = vsel %vm1961, %v7881, 0
        %v8232 = vsel %vm2157, %v8227, 0
        %8234 = vmatprep.subr.bf16.mxu0 0
        %8235 = vmatpush1.bf16.msra.mxu0 0
        %8236 = vmatprep.subr.bf16.mxu0 0
        %8237 = vmatpush1.bf16.msra.mxu0 0
        %8238 = vmatprep.subr.bf16.mxu0 0
        %8239 = vmatpush1.bf16.msra.mxu0 0
        %8240 = vmatprep.subr.bf16.mxu0 0
        %8241 = vmatpush1.bf16.msra.mxu0 0
        %8242 = vmatprep.subr.bf16.mxu0 0
        %8243 = vmatpush1.bf16.msra.mxu0 0
        %8244 = vmatprep.subr.bf16.mxu0 0
        %8245 = vmatpush1.bf16.msra.mxu0 0
        %8246 = vmatprep.subr.bf16.mxu0 0
        %8247 = vmatpush1.bf16.msra.mxu0 0
        %8248 = vmatprep.subr.bf16.mxu0 0
        %8249 = vmatpush1.bf16.msra.mxu0 %v8232
        %8250 = vmatprep.subr.bf16.mxu0 0
        %8251 = vmatpush2.bf16.msra.mxu0 0
        %8252 = vmatprep.subr.bf16.mxu0 0
        %8253 = vmatpush2.bf16.msra.mxu0 0
        %8254 = vmatprep.subr.bf16.mxu0 0
        %8255 = vmatpush2.bf16.msra.mxu0 0
        %8256 = vmatprep.subr.bf16.mxu0 0
        %8257 = vmatpush2.bf16.msra.mxu0 0
        %8258 = vmatprep.subr.bf16.mxu0 0
        %8259 = vmatpush2.bf16.msra.mxu0 0
        %8260 = vmatprep.subr.bf16.mxu0 0
        %8261 = vmatpush2.bf16.msra.mxu0 0
        %8262 = vmatprep.subr.bf16.mxu0 0
        %8263 = vmatpush2.bf16.msra.mxu0 0
        %8264 = vmatprep.subr.bf16.mxu0 0
        %8265 = vmatpush2.bf16.msra.mxu0 0
        %8266 = vmatprep.mubr.bf16.mxu0 0
        %8267 = vmatmul.mubr.bf16.gmra.mxu0 %v8229
        %v8268 = vpop.f32.mrf.mxu0
        %v8269 = vadd.f32 0.0, %v8268
        %v8270 = vpop.f32.mrf.mxu0
        %v8271 = vpop.f32.mrf.mxu0
        %v8272 = vpop.f32.mrf.mxu0
        %8273 = vdwg.mxu0
        %8274 = vrot.lane.b32.xlu0 %v1200, 32
        %v8275 = vpop.permute.xlu0 %8274
        %v8277 = vsel %vm1961, %v7882, 0
        %v8280 = vsel %vm2157, %v8275, 0
        %8282 = vmatprep.subr.bf16.mxu0 0
        %8283 = vmatpush1.bf16.msra.mxu0 0
        %8284 = vmatprep.subr.bf16.mxu0 0
        %8285 = vmatpush1.bf16.msra.mxu0 0
        %8286 = vmatprep.subr.bf16.mxu0 0
        %8287 = vmatpush1.bf16.msra.mxu0 0
        %8288 = vmatprep.subr.bf16.mxu0 0
        %8289 = vmatpush1.bf16.msra.mxu0 0
        %8290 = vmatprep.subr.bf16.mxu0 0
        %8291 = vmatpush1.bf16.msra.mxu0 0
        %8292 = vmatprep.subr.bf16.mxu0 0
        %8293 = vmatpush1.bf16.msra.mxu0 0
        %8294 = vmatprep.subr.bf16.mxu0 0
        %8295 = vmatpush1.bf16.msra.mxu0 0
        %8296 = vmatprep.subr.bf16.mxu0 0
        %8297 = vmatpush1.bf16.msra.mxu0 %v8280
        %8298 = vmatprep.subr.bf16.mxu0 0
        %8299 = vmatpush2.bf16.msra.mxu0 0
        %8300 = vmatprep.subr.bf16.mxu0 0
        %8301 = vmatpush2.bf16.msra.mxu0 0
        %8302 = vmatprep.subr.bf16.mxu0 0
        %8303 = vmatpush2.bf16.msra.mxu0 0
        %8304 = vmatprep.subr.bf16.mxu0 0
        %8305 = vmatpush2.bf16.msra.mxu0 0
        %8306 = vmatprep.subr.bf16.mxu0 0
        %8307 = vmatpush2.bf16.msra.mxu0 0
        %8308 = vmatprep.subr.bf16.mxu0 0
        %8309 = vmatpush2.bf16.msra.mxu0 0
        %8310 = vmatprep.subr.bf16.mxu0 0
        %8311 = vmatpush2.bf16.msra.mxu0 0
        %8312 = vmatprep.subr.bf16.mxu0 0
        %8313 = vmatpush2.bf16.msra.mxu0 0
        %8314 = vmatprep.mubr.bf16.mxu0 0
        %8315 = vmatmul.mubr.bf16.gmra.mxu0 %v8277
        %v8316 = vpop.f32.mrf.mxu0
        %v8317 = vadd.f32 0.0, %v8316
        %v8318 = vpop.f32.mrf.mxu0
        %v8319 = vpop.f32.mrf.mxu0
        %v8320 = vpop.f32.mrf.mxu0
        %8321 = vdwg.mxu0
        %8322 = vrot.lane.b32.xlu0 %v1201, 32
        %v8323 = vpop.permute.xlu0 %8322
        %v8325 = vsel %vm1961, %v7883, 0
        %v8328 = vsel %vm2157, %v8323, 0
        %8330 = vmatprep.subr.bf16.mxu0 0
        %8331 = vmatpush1.bf16.msra.mxu0 0
        %8332 = vmatprep.subr.bf16.mxu0 0
        %8333 = vmatpush1.bf16.msra.mxu0 0
        %8334 = vmatprep.subr.bf16.mxu0 0
        %8335 = vmatpush1.bf16.msra.mxu0 0
        %8336 = vmatprep.subr.bf16.mxu0 0
        %8337 = vmatpush1.bf16.msra.mxu0 0
        %8338 = vmatprep.subr.bf16.mxu0 0
        %8339 = vmatpush1.bf16.msra.mxu0 0
        %8340 = vmatprep.subr.bf16.mxu0 0
        %8341 = vmatpush1.bf16.msra.mxu0 0
        %8342 = vmatprep.subr.bf16.mxu0 0
        %8343 = vmatpush1.bf16.msra.mxu0 0
        %8344 = vmatprep.subr.bf16.mxu0 0
        %8345 = vmatpush1.bf16.msra.mxu0 %v8328
        %8346 = vmatprep.subr.bf16.mxu0 0
        %8347 = vmatpush2.bf16.msra.mxu0 0
        %8348 = vmatprep.subr.bf16.mxu0 0
        %8349 = vmatpush2.bf16.msra.mxu0 0
        %8350 = vmatprep.subr.bf16.mxu0 0
        %8351 = vmatpush2.bf16.msra.mxu0 0
        %8352 = vmatprep.subr.bf16.mxu0 0
        %8353 = vmatpush2.bf16.msra.mxu0 0
        %8354 = vmatprep.subr.bf16.mxu0 0
        %8355 = vmatpush2.bf16.msra.mxu0 0
        %8356 = vmatprep.subr.bf16.mxu0 0
        %8357 = vmatpush2.bf16.msra.mxu0 0
        %8358 = vmatprep.subr.bf16.mxu0 0
        %8359 = vmatpush2.bf16.msra.mxu0 0
        %8360 = vmatprep.subr.bf16.mxu0 0
        %8361 = vmatpush2.bf16.msra.mxu0 0
        %8362 = vmatprep.mubr.bf16.mxu0 0
        %8363 = vmatmul.mubr.bf16.gmra.mxu0 %v8325
        %v8364 = vpop.f32.mrf.mxu0
        %v8365 = vadd.f32 0.0, %v8364
        %v8366 = vpop.f32.mrf.mxu0
        %v8367 = vpop.f32.mrf.mxu0
        %v8368 = vpop.f32.mrf.mxu0
        %8369 = vdwg.mxu0
        %8370 = vrot.lane.b32.xlu0 %v1202, 32
        %v8371 = vpop.permute.xlu0 %8370
        %v8373 = vsel %vm1961, %v7884, 0
        %v8376 = vsel %vm2157, %v8371, 0
        %8378 = vmatprep.subr.bf16.mxu0 0
        %8379 = vmatpush1.bf16.msra.mxu0 0
        %8380 = vmatprep.subr.bf16.mxu0 0
        %8381 = vmatpush1.bf16.msra.mxu0 0
        %8382 = vmatprep.subr.bf16.mxu0 0
        %8383 = vmatpush1.bf16.msra.mxu0 0
        %8384 = vmatprep.subr.bf16.mxu0 0
        %8385 = vmatpush1.bf16.msra.mxu0 0
        %8386 = vmatprep.subr.bf16.mxu0 0
        %8387 = vmatpush1.bf16.msra.mxu0 0
        %8388 = vmatprep.subr.bf16.mxu0 0
        %8389 = vmatpush1.bf16.msra.mxu0 0
        %8390 = vmatprep.subr.bf16.mxu0 0
        %8391 = vmatpush1.bf16.msra.mxu0 0
        %8392 = vmatprep.subr.bf16.mxu0 0
        %8393 = vmatpush1.bf16.msra.mxu0 %v8376
        %8394 = vmatprep.subr.bf16.mxu0 0
        %8395 = vmatpush2.bf16.msra.mxu0 0
        %8396 = vmatprep.subr.bf16.mxu0 0
        %8397 = vmatpush2.bf16.msra.mxu0 0
        %8398 = vmatprep.subr.bf16.mxu0 0
        %8399 = vmatpush2.bf16.msra.mxu0 0
        %8400 = vmatprep.subr.bf16.mxu0 0
        %8401 = vmatpush2.bf16.msra.mxu0 0
        %8402 = vmatprep.subr.bf16.mxu0 0
        %8403 = vmatpush2.bf16.msra.mxu0 0
        %8404 = vmatprep.subr.bf16.mxu0 0
        %8405 = vmatpush2.bf16.msra.mxu0 0
        %8406 = vmatprep.subr.bf16.mxu0 0
        %8407 = vmatpush2.bf16.msra.mxu0 0
        %8408 = vmatprep.subr.bf16.mxu0 0
        %8409 = vmatpush2.bf16.msra.mxu0 0
        %8410 = vmatprep.mubr.bf16.mxu0 0
        %8411 = vmatmul.mubr.bf16.gmra.mxu0 %v8373
        %v8412 = vpop.f32.mrf.mxu0
        %v8413 = vadd.f32 0.0, %v8412
        %v8414 = vpop.f32.mrf.mxu0
        %v8415 = vpop.f32.mrf.mxu0
        %v8416 = vpop.f32.mrf.mxu0
        %8417 = vdwg.mxu0
        %8418 = vrot.lane.b32.xlu0 %v1203, 32
        %v8419 = vpop.permute.xlu0 %8418
        %v8421 = vsel %vm1961, %v7885, 0
        %v8424 = vsel %vm2157, %v8419, 0
        %8426 = vmatprep.subr.bf16.mxu0 0
        %8427 = vmatpush1.bf16.msra.mxu0 0
        %8428 = vmatprep.subr.bf16.mxu0 0
        %8429 = vmatpush1.bf16.msra.mxu0 0
        %8430 = vmatprep.subr.bf16.mxu0 0
        %8431 = vmatpush1.bf16.msra.mxu0 0
        %8432 = vmatprep.subr.bf16.mxu0 0
        %8433 = vmatpush1.bf16.msra.mxu0 0
        %8434 = vmatprep.subr.bf16.mxu0 0
        %8435 = vmatpush1.bf16.msra.mxu0 0
        %8436 = vmatprep.subr.bf16.mxu0 0
        %8437 = vmatpush1.bf16.msra.mxu0 0
        %8438 = vmatprep.subr.bf16.mxu0 0
        %8439 = vmatpush1.bf16.msra.mxu0 0
        %8440 = vmatprep.subr.bf16.mxu0 0
        %8441 = vmatpush1.bf16.msra.mxu0 %v8424
        %8442 = vmatprep.subr.bf16.mxu0 0
        %8443 = vmatpush2.bf16.msra.mxu0 0
        %8444 = vmatprep.subr.bf16.mxu0 0
        %8445 = vmatpush2.bf16.msra.mxu0 0
        %8446 = vmatprep.subr.bf16.mxu0 0
        %8447 = vmatpush2.bf16.msra.mxu0 0
        %8448 = vmatprep.subr.bf16.mxu0 0
        %8449 = vmatpush2.bf16.msra.mxu0 0
        %8450 = vmatprep.subr.bf16.mxu0 0
        %8451 = vmatpush2.bf16.msra.mxu0 0
        %8452 = vmatprep.subr.bf16.mxu0 0
        %8453 = vmatpush2.bf16.msra.mxu0 0
        %8454 = vmatprep.subr.bf16.mxu0 0
        %8455 = vmatpush2.bf16.msra.mxu0 0
        %8456 = vmatprep.subr.bf16.mxu0 0
        %8457 = vmatpush2.bf16.msra.mxu0 0
        %8458 = vmatprep.mubr.bf16.mxu0 0
        %8459 = vmatmul.mubr.bf16.gmra.mxu0 %v8421
        %v8460 = vpop.f32.mrf.mxu0
        %v8461 = vadd.f32 0.0, %v8460
        %v8462 = vpop.f32.mrf.mxu0
        %v8463 = vpop.f32.mrf.mxu0
        %v8464 = vpop.f32.mrf.mxu0
        %8465 = vdwg.mxu0
        %8466 = vrot.lane.b32.xlu0 %v1204, 32
        %v8467 = vpop.permute.xlu0 %8466
        %v8469 = vsel %vm1961, %v7886, 0
        %v8472 = vsel %vm2157, %v8467, 0
        %8474 = vmatprep.subr.bf16.mxu0 0
        %8475 = vmatpush1.bf16.msra.mxu0 0
        %8476 = vmatprep.subr.bf16.mxu0 0
        %8477 = vmatpush1.bf16.msra.mxu0 0
        %8478 = vmatprep.subr.bf16.mxu0 0
        %8479 = vmatpush1.bf16.msra.mxu0 0
        %8480 = vmatprep.subr.bf16.mxu0 0
        %8481 = vmatpush1.bf16.msra.mxu0 0
        %8482 = vmatprep.subr.bf16.mxu0 0
        %8483 = vmatpush1.bf16.msra.mxu0 0
        %8484 = vmatprep.subr.bf16.mxu0 0
        %8485 = vmatpush1.bf16.msra.mxu0 0
        %8486 = vmatprep.subr.bf16.mxu0 0
        %8487 = vmatpush1.bf16.msra.mxu0 0
        %8488 = vmatprep.subr.bf16.mxu0 0
        %8489 = vmatpush1.bf16.msra.mxu0 %v8472
        %8490 = vmatprep.subr.bf16.mxu0 0
        %8491 = vmatpush2.bf16.msra.mxu0 0
        %8492 = vmatprep.subr.bf16.mxu0 0
        %8493 = vmatpush2.bf16.msra.mxu0 0
        %8494 = vmatprep.subr.bf16.mxu0 0
        %8495 = vmatpush2.bf16.msra.mxu0 0
        %8496 = vmatprep.subr.bf16.mxu0 0
        %8497 = vmatpush2.bf16.msra.mxu0 0
        %8498 = vmatprep.subr.bf16.mxu0 0
        %8499 = vmatpush2.bf16.msra.mxu0 0
        %8500 = vmatprep.subr.bf16.mxu0 0
        %8501 = vmatpush2.bf16.msra.mxu0 0
        %8502 = vmatprep.subr.bf16.mxu0 0
        %8503 = vmatpush2.bf16.msra.mxu0 0
        %8504 = vmatprep.subr.bf16.mxu0 0
        %8505 = vmatpush2.bf16.msra.mxu0 0
        %8506 = vmatprep.mubr.bf16.mxu0 0
        %8507 = vmatmul.mubr.bf16.gmra.mxu0 %v8469
        %v8508 = vpop.f32.mrf.mxu0
        %v8509 = vadd.f32 0.0, %v8508
        %v8510 = vpop.f32.mrf.mxu0
        %v8511 = vpop.f32.mrf.mxu0
        %v8512 = vpop.f32.mrf.mxu0
        %8513 = vdwg.mxu0
        %8514 = vrot.lane.b32.xlu0 %v1205, 32
        %v8515 = vpop.permute.xlu0 %8514
        %v8517 = vsel %vm1961, %v7887, 0
        %v8520 = vsel %vm2157, %v8515, 0
        %8522 = vmatprep.subr.bf16.mxu0 0
        %8523 = vmatpush1.bf16.msra.mxu0 0
        %8524 = vmatprep.subr.bf16.mxu0 0
        %8525 = vmatpush1.bf16.msra.mxu0 0
        %8526 = vmatprep.subr.bf16.mxu0 0
        %8527 = vmatpush1.bf16.msra.mxu0 0
        %8528 = vmatprep.subr.bf16.mxu0 0
        %8529 = vmatpush1.bf16.msra.mxu0 0
        %8530 = vmatprep.subr.bf16.mxu0 0
        %8531 = vmatpush1.bf16.msra.mxu0 0
        %8532 = vmatprep.subr.bf16.mxu0 0
        %8533 = vmatpush1.bf16.msra.mxu0 0
        %8534 = vmatprep.subr.bf16.mxu0 0
        %8535 = vmatpush1.bf16.msra.mxu0 0
        %8536 = vmatprep.subr.bf16.mxu0 0
        %8537 = vmatpush1.bf16.msra.mxu0 %v8520
        %8538 = vmatprep.subr.bf16.mxu0 0
        %8539 = vmatpush2.bf16.msra.mxu0 0
        %8540 = vmatprep.subr.bf16.mxu0 0
        %8541 = vmatpush2.bf16.msra.mxu0 0
        %8542 = vmatprep.subr.bf16.mxu0 0
        %8543 = vmatpush2.bf16.msra.mxu0 0
        %8544 = vmatprep.subr.bf16.mxu0 0
        %8545 = vmatpush2.bf16.msra.mxu0 0
        %8546 = vmatprep.subr.bf16.mxu0 0
        %8547 = vmatpush2.bf16.msra.mxu0 0
        %8548 = vmatprep.subr.bf16.mxu0 0
        %8549 = vmatpush2.bf16.msra.mxu0 0
        %8550 = vmatprep.subr.bf16.mxu0 0
        %8551 = vmatpush2.bf16.msra.mxu0 0
        %8552 = vmatprep.subr.bf16.mxu0 0
        %8553 = vmatpush2.bf16.msra.mxu0 0
        %8554 = vmatprep.mubr.bf16.mxu0 0
        %8555 = vmatmul.mubr.bf16.gmra.mxu0 %v8517
        %v8556 = vpop.f32.mrf.mxu0
        %v8557 = vadd.f32 0.0, %v8556
        %v8558 = vpop.f32.mrf.mxu0
        %v8559 = vpop.f32.mrf.mxu0
        %v8560 = vpop.f32.mrf.mxu0
        %8561 = vdwg.mxu0
        %8562 = vrot.lane.b32.xlu0 %v1206, 32
        %v8563 = vpop.permute.xlu0 %8562
        %v8565 = vsel %vm1961, %v7888, 0
        %v8568 = vsel %vm2157, %v8563, 0
        %8570 = vmatprep.subr.bf16.mxu0 0
        %8571 = vmatpush1.bf16.msra.mxu0 0
        %8572 = vmatprep.subr.bf16.mxu0 0
        %8573 = vmatpush1.bf16.msra.mxu0 0
        %8574 = vmatprep.subr.bf16.mxu0 0
        %8575 = vmatpush1.bf16.msra.mxu0 0
        %8576 = vmatprep.subr.bf16.mxu0 0
        %8577 = vmatpush1.bf16.msra.mxu0 0
        %8578 = vmatprep.subr.bf16.mxu0 0
        %8579 = vmatpush1.bf16.msra.mxu0 0
        %8580 = vmatprep.subr.bf16.mxu0 0
        %8581 = vmatpush1.bf16.msra.mxu0 0
        %8582 = vmatprep.subr.bf16.mxu0 0
        %8583 = vmatpush1.bf16.msra.mxu0 0
        %8584 = vmatprep.subr.bf16.mxu0 0
        %8585 = vmatpush1.bf16.msra.mxu0 %v8568
        %8586 = vmatprep.subr.bf16.mxu0 0
        %8587 = vmatpush2.bf16.msra.mxu0 0
        %8588 = vmatprep.subr.bf16.mxu0 0
        %8589 = vmatpush2.bf16.msra.mxu0 0
        %8590 = vmatprep.subr.bf16.mxu0 0
        %8591 = vmatpush2.bf16.msra.mxu0 0
        %8592 = vmatprep.subr.bf16.mxu0 0
        %8593 = vmatpush2.bf16.msra.mxu0 0
        %8594 = vmatprep.subr.bf16.mxu0 0
        %8595 = vmatpush2.bf16.msra.mxu0 0
        %8596 = vmatprep.subr.bf16.mxu0 0
        %8597 = vmatpush2.bf16.msra.mxu0 0
        %8598 = vmatprep.subr.bf16.mxu0 0
        %8599 = vmatpush2.bf16.msra.mxu0 0
        %8600 = vmatprep.subr.bf16.mxu0 0
        %8601 = vmatpush2.bf16.msra.mxu0 0
        %8602 = vmatprep.mubr.bf16.mxu0 0
        %8603 = vmatmul.mubr.bf16.gmra.mxu0 %v8565
        %v8604 = vpop.f32.mrf.mxu0
        %v8605 = vadd.f32 0.0, %v8604
        %v8606 = vpop.f32.mrf.mxu0
        %v8607 = vpop.f32.mrf.mxu0
        %v8608 = vpop.f32.mrf.mxu0
        %8609 = vdwg.mxu0
        %8610 = vrot.lane.b32.xlu0 %v1207, 32
        %v8611 = vpop.permute.xlu0 %8610
        %v8613 = vsel %vm1961, %v7889, 0
        %v8616 = vsel %vm2157, %v8611, 0
        %8618 = vmatprep.subr.bf16.mxu0 0
        %8619 = vmatpush1.bf16.msra.mxu0 0
        %8620 = vmatprep.subr.bf16.mxu0 0
        %8621 = vmatpush1.bf16.msra.mxu0 0
        %8622 = vmatprep.subr.bf16.mxu0 0
        %8623 = vmatpush1.bf16.msra.mxu0 0
        %8624 = vmatprep.subr.bf16.mxu0 0
        %8625 = vmatpush1.bf16.msra.mxu0 0
        %8626 = vmatprep.subr.bf16.mxu0 0
        %8627 = vmatpush1.bf16.msra.mxu0 0
        %8628 = vmatprep.subr.bf16.mxu0 0
        %8629 = vmatpush1.bf16.msra.mxu0 0
        %8630 = vmatprep.subr.bf16.mxu0 0
        %8631 = vmatpush1.bf16.msra.mxu0 0
        %8632 = vmatprep.subr.bf16.mxu0 0
        %8633 = vmatpush1.bf16.msra.mxu0 %v8616
        %8634 = vmatprep.subr.bf16.mxu0 0
        %8635 = vmatpush2.bf16.msra.mxu0 0
        %8636 = vmatprep.subr.bf16.mxu0 0
        %8637 = vmatpush2.bf16.msra.mxu0 0
        %8638 = vmatprep.subr.bf16.mxu0 0
        %8639 = vmatpush2.bf16.msra.mxu0 0
        %8640 = vmatprep.subr.bf16.mxu0 0
        %8641 = vmatpush2.bf16.msra.mxu0 0
        %8642 = vmatprep.subr.bf16.mxu0 0
        %8643 = vmatpush2.bf16.msra.mxu0 0
        %8644 = vmatprep.subr.bf16.mxu0 0
        %8645 = vmatpush2.bf16.msra.mxu0 0
        %8646 = vmatprep.subr.bf16.mxu0 0
        %8647 = vmatpush2.bf16.msra.mxu0 0
        %8648 = vmatprep.subr.bf16.mxu0 0
        %8649 = vmatpush2.bf16.msra.mxu0 0
        %8650 = vmatprep.mubr.bf16.mxu0 0
        %8651 = vmatmul.mubr.bf16.gmra.mxu0 %v8613
        %v8652 = vpop.f32.mrf.mxu0
        %v8653 = vadd.f32 0.0, %v8652
        %v8654 = vpop.f32.mrf.mxu0
        %v8655 = vpop.f32.mrf.mxu0
        %v8656 = vpop.f32.mrf.mxu0
        %8657 = vdwg.mxu0
        %v8658 = vpack.c.bf16 %v7981, %v7933
        %v8659 = vpack.c.bf16 %v8077, %v8029
        %v8660 = vpack.c.bf16 %v8173, %v8125
        %v8661 = vpack.c.bf16 %v8269, %v8221
        %v8662 = vpack.c.bf16 %v8365, %v8317
        %v8663 = vpack.c.bf16 %v8461, %v8413
        %v8664 = vpack.c.bf16 %v8557, %v8509
        %v8665 = vpack.c.bf16 %v8653, %v8605
        %v8670 = vunpack.c.l.b16 %v603
        %v8671 = vunpack.c.l.b16 %v604
        %v8672 = vunpack.c.l.b16 %v605
        %v8673 = vunpack.c.l.b16 %v606
        %v8674 = vpack.c.b16 %v8671, %v8670
        %v8675 = vpack.c.b16 %v8673, %v8672
        %v8679 = vsel %vm1208, %v8658, 0
        %v8682 = vsel %vm1208, %v8659, 0
        %v8685 = vsel %vm1208, %v8660, 0
        %v8688 = vsel %vm1208, %v8661, 0
        %v8691 = vsel %vm1208, %v8662, 0
        %v8694 = vsel %vm1208, %v8663, 0
        %v8697 = vsel %vm1208, %v8664, 0
        %v8700 = vsel %vm1208, %v8665, 0
        %8702 = vmatprep.subr.bf16.mxu0 0
        %8703 = vmatpush1.bf16.msra.mxu0 0
        %8704 = vmatprep.subr.bf16.mxu0 0
        %8705 = vmatpush1.bf16.msra.mxu0 0
        %8706 = vmatprep.subr.bf16.mxu0 0
        %8707 = vmatpush1.bf16.msra.mxu0 0
        %8708 = vmatprep.subr.bf16.mxu0 0
        %8709 = vmatpush1.bf16.msra.mxu0 0
        %8710 = vmatprep.subr.bf16.mxu0 0
        %8711 = vmatpush1.bf16.msra.mxu0 0
        %8712 = vmatprep.subr.bf16.mxu0 0
        %8713 = vmatpush1.bf16.msra.mxu0 0
        %8714 = vmatprep.subr.bf16.mxu0 0
        %8715 = vmatpush1.bf16.msra.mxu0 %v8675
        %8716 = vmatprep.subr.bf16.mxu0 0
        %8717 = vmatpush1.bf16.msra.mxu0 %v8674
        %8718 = vmatprep.subr.bf16.mxu0 0
        %8719 = vmatpush2.bf16.msra.mxu0 0
        %8720 = vmatprep.subr.bf16.mxu0 0
        %8721 = vmatpush2.bf16.msra.mxu0 0
        %8722 = vmatprep.subr.bf16.mxu0 0
        %8723 = vmatpush2.bf16.msra.mxu0 0
        %8724 = vmatprep.subr.bf16.mxu0 0
        %8725 = vmatpush2.bf16.msra.mxu0 0
        %8726 = vmatprep.subr.bf16.mxu0 0
        %8727 = vmatpush2.bf16.msra.mxu0 0
        %8728 = vmatprep.subr.bf16.mxu0 0
        %8729 = vmatpush2.bf16.msra.mxu0 0
        %8730 = vmatprep.subr.bf16.mxu0 0
        %8731 = vmatpush2.bf16.msra.mxu0 0
        %8732 = vmatprep.subr.bf16.mxu0 0
        %8733 = vmatpush2.bf16.msra.mxu0 0
        %8734 = vmatprep.mubr.bf16.mxu0 0
        %8735 = vmatmul.mubr.bf16.gmra.mxu0 %v8679
        %v8736 = vpop.f32.mrf.mxu0
        %v8737 = vadd.f32 0.0, %v8736
        %v8738 = vpop.f32.mrf.mxu0
        %v8739 = vpop.f32.mrf.mxu0
        %v8740 = vadd.f32 0.0, %v8739
        %v8741 = vpop.f32.mrf.mxu0
        %8742 = vmatprep.mubr.bf16.mxu0 0
        %8743 = vmatmul.mubr.bf16.gmra.mxu0 %v8682
        %v8744 = vpop.f32.mrf.mxu0
        %v8745 = vadd.f32 0.0, %v8744
        %v8746 = vpop.f32.mrf.mxu0
        %v8747 = vpop.f32.mrf.mxu0
        %v8748 = vadd.f32 0.0, %v8747
        %v8749 = vpop.f32.mrf.mxu0
        %8750 = vmatprep.mubr.bf16.mxu0 0
        %8751 = vmatmul.mubr.bf16.gmra.mxu0 %v8685
        %v8752 = vpop.f32.mrf.mxu0
        %v8753 = vadd.f32 0.0, %v8752
        %v8754 = vpop.f32.mrf.mxu0
        %v8755 = vpop.f32.mrf.mxu0
        %v8756 = vadd.f32 0.0, %v8755
        %v8757 = vpop.f32.mrf.mxu0
        %8758 = vmatprep.mubr.bf16.mxu0 0
        %8759 = vmatmul.mubr.bf16.gmra.mxu0 %v8688
        %v8760 = vpop.f32.mrf.mxu0
        %v8761 = vadd.f32 0.0, %v8760
        %v8762 = vpop.f32.mrf.mxu0
        %v8763 = vpop.f32.mrf.mxu0
        %v8764 = vadd.f32 0.0, %v8763
        %v8765 = vpop.f32.mrf.mxu0
        %8766 = vmatprep.mubr.bf16.mxu0 0
        %8767 = vmatmul.mubr.bf16.gmra.mxu0 %v8691
        %v8768 = vpop.f32.mrf.mxu0
        %v8769 = vadd.f32 0.0, %v8768
        %v8770 = vpop.f32.mrf.mxu0
        %v8771 = vpop.f32.mrf.mxu0
        %v8772 = vadd.f32 0.0, %v8771
        %v8773 = vpop.f32.mrf.mxu0
        %8774 = vmatprep.mubr.bf16.mxu0 0
        %8775 = vmatmul.mubr.bf16.gmra.mxu0 %v8694
        %v8776 = vpop.f32.mrf.mxu0
        %v8777 = vadd.f32 0.0, %v8776
        %v8778 = vpop.f32.mrf.mxu0
        %v8779 = vpop.f32.mrf.mxu0
        %v8780 = vadd.f32 0.0, %v8779
        %v8781 = vpop.f32.mrf.mxu0
        %8782 = vmatprep.mubr.bf16.mxu0 0
        %8783 = vmatmul.mubr.bf16.gmra.mxu0 %v8697
        %v8784 = vpop.f32.mrf.mxu0
        %v8785 = vadd.f32 0.0, %v8784
        %v8786 = vpop.f32.mrf.mxu0
        %v8787 = vpop.f32.mrf.mxu0
        %v8788 = vadd.f32 0.0, %v8787
        %v8789 = vpop.f32.mrf.mxu0
        %8790 = vmatprep.mubr.bf16.mxu0 0
        %8791 = vmatmul.mubr.bf16.gmra.mxu0 %v8700
        %v8792 = vpop.f32.mrf.mxu0
        %v8793 = vadd.f32 0.0, %v8792
        %v8794 = vpop.f32.mrf.mxu0
        %v8795 = vpop.f32.mrf.mxu0
        %v8796 = vadd.f32 0.0, %v8795
        %v8797 = vpop.f32.mrf.mxu0
        %8798 = vdwg.mxu0
        %v8799 = vadd.f32 %v6866, %v8737
        %v8800 = vadd.f32 %v6867, %v8740
        %v8801 = vadd.f32 %v6868, %v8745
        %v8802 = vadd.f32 %v6869, %v8748
        %v8803 = vadd.f32 %v6870, %v8753
        %v8804 = vadd.f32 %v6871, %v8756
        %v8805 = vadd.f32 %v6872, %v8761
        %v8806 = vadd.f32 %v6873, %v8764
        %v8807 = vadd.f32 %v6874, %v8769
        %v8808 = vadd.f32 %v6875, %v8772
        %v8809 = vadd.f32 %v6876, %v8777
        %v8810 = vadd.f32 %v6877, %v8780
        %v8811 = vadd.f32 %v6878, %v8785
        %v8812 = vadd.f32 %v6879, %v8788
        %v8813 = vadd.f32 %v6880, %v8793
        %v8814 = vadd.f32 %v6881, %v8796
        %v8816 = vlaneseq
        %v8817 = vshrl.u32 %v8816, 7
        %v8818 = vsub.s32 0, %v8817
        %v8819 = vrot.slane %v610, %v8818
        %v8821 = vadd.f32 %v8799, %v8819
        %v8822 = vadd.f32 %v8800, %v8819
        %v8823 = vadd.f32 %v8801, %v8819
        %v8824 = vadd.f32 %v8802, %v8819
        %v8825 = vadd.f32 %v8803, %v8819
        %v8826 = vadd.f32 %v8804, %v8819
        %v8827 = vadd.f32 %v8805, %v8819
        %v8828 = vadd.f32 %v8806, %v8819
        %v8829 = vadd.f32 %v8807, %v8819
        %v8830 = vadd.f32 %v8808, %v8819
        %v8831 = vadd.f32 %v8809, %v8819
        %v8832 = vadd.f32 %v8810, %v8819
        %v8833 = vadd.f32 %v8811, %v8819
        %v8834 = vadd.f32 %v8812, %v8819
        %v8835 = vadd.f32 %v8813, %v8819
        %v8836 = vadd.f32 %v8814, %v8819
        %v8837 = vpack.c.bf16 %v8822, %v8821
        %v8838 = vpack.c.bf16 %v8824, %v8823
        %v8839 = vpack.c.bf16 %v8826, %v8825
        %v8840 = vpack.c.bf16 %v8828, %v8827
        %v8841 = vpack.c.bf16 %v8830, %v8829
        %v8842 = vpack.c.bf16 %v8832, %v8831
        %v8843 = vpack.c.bf16 %v8834, %v8833
        %v8844 = vpack.c.bf16 %v8836, %v8835
        %v8845 = vld [vmem:[%s10] sm:$0xf]
        %v8846 = vld [vmem:[%s10 + $0x4] sm:$0xf]
        %v8847 = vld [vmem:[%s10 + $0x8] sm:$0xf]
        %v8848 = vld [vmem:[%s10 + $0xc] sm:$0xf]
        %v8849 = vld [vmem:[%s10 + $0x10] sm:$0xf]
        %v8850 = vld [vmem:[%s10 + $0x14] sm:$0xf]
        %v8851 = vld [vmem:[%s10 + $0x18] sm:$0xf]
        %v8852 = vld [vmem:[%s10 + $0x1c] sm:$0xf]
        %v8853 = vld [vmem:[%s10 + $0x20] sm:$0xf]
        %v8854 = vld [vmem:[%s10 + $0x24] sm:$0xf]
        %v8855 = vld [vmem:[%s10 + $0x28] sm:$0xf]
        %v8856 = vld [vmem:[%s10 + $0x2c] sm:$0xf]
        %v8857 = vld [vmem:[%s10 + $0x30] sm:$0xf]
        %v8858 = vld [vmem:[%s10 + $0x34] sm:$0xf]
        %v8859 = vld [vmem:[%s10 + $0x38] sm:$0xf]
        %v8860 = vld [vmem:[%s10 + $0x3c] sm:$0xf]
        %v8861 = vld [vmem:[%s11] sm:$0x1]
        %v8863 = vlaneseq
        %v8864 = vshrl.u32 %v8863, 7
        %v8865 = vsub.s32 0, %v8864
        %v8866 = vrot.slane %v8861, %v8865
        %v8884 = vunpack.c.l.b16 %v8845
        %v8885 = vunpack.c.l.b16 %v8846
        %v8886 = vunpack.c.l.b16 %v8847
        %v8887 = vunpack.c.l.b16 %v8848
        %v8888 = vunpack.c.l.b16 %v8849
        %v8889 = vunpack.c.l.b16 %v8850
        %v8890 = vunpack.c.l.b16 %v8851
        %v8891 = vunpack.c.l.b16 %v8852
        %v8892 = vunpack.c.l.b16 %v8853
        %v8893 = vunpack.c.l.b16 %v8854
        %v8894 = vunpack.c.l.b16 %v8855
        %v8895 = vunpack.c.l.b16 %v8856
        %v8896 = vunpack.c.l.b16 %v8857
        %v8897 = vunpack.c.l.b16 %v8858
        %v8898 = vunpack.c.l.b16 %v8859
        %v8899 = vunpack.c.l.b16 %v8860
        %v8900 = vpack.c.b16 %v8885, %v8884
        %v8901 = vpack.c.b16 %v8887, %v8886
        %v8902 = vpack.c.b16 %v8889, %v8888
        %v8903 = vpack.c.b16 %v8891, %v8890
        %v8904 = vpack.c.b16 %v8893, %v8892
        %v8905 = vpack.c.b16 %v8895, %v8894
        %v8906 = vpack.c.b16 %v8897, %v8896
        %v8907 = vpack.c.b16 %v8899, %v8898
        %8916 = vmatprep.subr.bf16.mxu0 0
        %8917 = vmatpush1.bf16.msra.mxu0 %v8907
        %8918 = vmatprep.subr.bf16.mxu0 0
        %8919 = vmatpush1.bf16.msra.mxu0 %v8906
        %8920 = vmatprep.subr.bf16.mxu0 0
        %8921 = vmatpush1.bf16.msra.mxu0 %v8905
        %8922 = vmatprep.subr.bf16.mxu0 0
        %8923 = vmatpush1.bf16.msra.mxu0 %v8904
        %8924 = vmatprep.subr.bf16.mxu0 0
        %8925 = vmatpush1.bf16.msra.mxu0 %v8903
        %8926 = vmatprep.subr.bf16.mxu0 0
        %8927 = vmatpush1.bf16.msra.mxu0 %v8902
        %8928 = vmatprep.subr.bf16.mxu0 0
        %8929 = vmatpush1.bf16.msra.mxu0 %v8901
        %8930 = vmatprep.subr.bf16.mxu0 0
        %8931 = vmatpush1.bf16.msra.mxu0 %v8900
        %8932 = vmatprep.subr.bf16.mxu0 0
        %8933 = vmatpush2.bf16.msra.mxu0 0
        %8934 = vmatprep.subr.bf16.mxu0 0
        %8935 = vmatpush2.bf16.msra.mxu0 0
        %8936 = vmatprep.subr.bf16.mxu0 0
        %8937 = vmatpush2.bf16.msra.mxu0 0
        %8938 = vmatprep.subr.bf16.mxu0 0
        %8939 = vmatpush2.bf16.msra.mxu0 0
        %8940 = vmatprep.subr.bf16.mxu0 0
        %8941 = vmatpush2.bf16.msra.mxu0 0
        %8942 = vmatprep.subr.bf16.mxu0 0
        %8943 = vmatpush2.bf16.msra.mxu0 0
        %8944 = vmatprep.subr.bf16.mxu0 0
        %8945 = vmatpush2.bf16.msra.mxu0 0
        %8946 = vmatprep.subr.bf16.mxu0 0
        %8947 = vmatpush2.bf16.msra.mxu0 0
        %8948 = vmatprep.mubr.bf16.mxu0 0
        %8949 = vmatmul.mubr.bf16.gmra.mxu0 %v8837
        %v8950 = vpop.f32.mrf.mxu0
        %v8951 = vadd.f32 %v8866, %v8950
        %v8952 = vpop.f32.mrf.mxu0
        %v8953 = vpop.f32.mrf.mxu0
        %v8954 = vadd.f32 %v8866, %v8953
        %v8955 = vpop.f32.mrf.mxu0
        %8956 = vmatprep.mubr.bf16.mxu0 0
        %8957 = vmatmul.mubr.bf16.gmra.mxu0 %v8838
        %v8958 = vpop.f32.mrf.mxu0
        %v8959 = vadd.f32 %v8866, %v8958
        %v8960 = vpop.f32.mrf.mxu0
        %v8961 = vpop.f32.mrf.mxu0
        %v8962 = vadd.f32 %v8866, %v8961
        %v8963 = vpop.f32.mrf.mxu0
        %8964 = vmatprep.mubr.bf16.mxu0 0
        %8965 = vmatmul.mubr.bf16.gmra.mxu0 %v8839
        %v8966 = vpop.f32.mrf.mxu0
        %v8967 = vadd.f32 %v8866, %v8966
        %v8968 = vpop.f32.mrf.mxu0
        %v8969 = vpop.f32.mrf.mxu0
        %v8970 = vadd.f32 %v8866, %v8969
        %v8971 = vpop.f32.mrf.mxu0
        %8972 = vmatprep.mubr.bf16.mxu0 0
        %8973 = vmatmul.mubr.bf16.gmra.mxu0 %v8840
        %v8974 = vpop.f32.mrf.mxu0
        %v8975 = vadd.f32 %v8866, %v8974
        %v8976 = vpop.f32.mrf.mxu0
        %v8977 = vpop.f32.mrf.mxu0
        %v8978 = vadd.f32 %v8866, %v8977
        %v8979 = vpop.f32.mrf.mxu0
        %8980 = vmatprep.mubr.bf16.mxu0 0
        %8981 = vmatmul.mubr.bf16.gmra.mxu0 %v8841
        %v8982 = vpop.f32.mrf.mxu0
        %v8983 = vadd.f32 %v8866, %v8982
        %v8984 = vpop.f32.mrf.mxu0
        %v8985 = vpop.f32.mrf.mxu0
        %v8986 = vadd.f32 %v8866, %v8985
        %v8987 = vpop.f32.mrf.mxu0
        %8988 = vmatprep.mubr.bf16.mxu0 0
        %8989 = vmatmul.mubr.bf16.gmra.mxu0 %v8842
        %v8990 = vpop.f32.mrf.mxu0
        %v8991 = vadd.f32 %v8866, %v8990
        %v8992 = vpop.f32.mrf.mxu0
        %v8993 = vpop.f32.mrf.mxu0
        %v8994 = vadd.f32 %v8866, %v8993
        %v8995 = vpop.f32.mrf.mxu0
        %8996 = vmatprep.mubr.bf16.mxu0 0
        %8997 = vmatmul.mubr.bf16.gmra.mxu0 %v8843
        %v8998 = vpop.f32.mrf.mxu0
        %v8999 = vadd.f32 %v8866, %v8998
        %v9000 = vpop.f32.mrf.mxu0
        %v9001 = vpop.f32.mrf.mxu0
        %v9002 = vadd.f32 %v8866, %v9001
        %v9003 = vpop.f32.mrf.mxu0
        %9004 = vmatprep.mubr.bf16.mxu0 0
        %9005 = vmatmul.mubr.bf16.gmra.mxu0 %v8844
        %v9006 = vpop.f32.mrf.mxu0
        %v9007 = vadd.f32 %v8866, %v9006
        %v9008 = vpop.f32.mrf.mxu0
        %v9009 = vpop.f32.mrf.mxu0
        %v9010 = vadd.f32 %v8866, %v9009
        %v9011 = vpop.f32.mrf.mxu0
        %9012 = vdwg.mxu0
        %v9013 = vxor.u32 %v8951, 2147483648
        %v9014 = vxor.u32 %v8954, 2147483648
        %v9015 = vxor.u32 %v8959, 2147483648
        %v9016 = vxor.u32 %v8962, 2147483648
        %v9017 = vxor.u32 %v8967, 2147483648
        %v9018 = vxor.u32 %v8970, 2147483648
        %v9019 = vxor.u32 %v8975, 2147483648
        %v9020 = vxor.u32 %v8978, 2147483648
        %v9021 = vmul.f32 %v9013, 1.442695
        %v9022 = vpow.pop %v9021
        %v9023 = vmul.f32 %v9014, 1.442695
        %v9024 = vpow.pop %v9023
        %v9025 = vmul.f32 %v9015, 1.442695
        %v9026 = vpow.pop %v9025
        %v9027 = vmul.f32 %v9016, 1.442695
        %v9028 = vpow.pop %v9027
        %v9029 = vmul.f32 %v9017, 1.442695
        %v9030 = vpow.pop %v9029
        %v9031 = vmul.f32 %v9018, 1.442695
        %v9032 = vpow.pop %v9031
        %v9033 = vmul.f32 %v9019, 1.442695
        %v9034 = vpow.pop %v9033
        %v9035 = vmul.f32 %v9020, 1.442695
        %v9036 = vpow.pop %v9035
        %v9037 = vadd.f32 %v9022, 1.0
        %v9038 = vadd.f32 %v9024, 1.0
        %v9039 = vadd.f32 %v9026, 1.0
        %v9040 = vadd.f32 %v9028, 1.0
        %v9041 = vadd.f32 %v9030, 1.0
        %v9042 = vadd.f32 %v9032, 1.0
        %v9043 = vadd.f32 %v9034, 1.0
        %v9044 = vadd.f32 %v9036, 1.0
        %v9045 = vrcp.pop %v9037
        %v9046 = vmul.f32 1.0, %v9045
        %v9047 = vrcp.pop %v9038
        %v9048 = vmul.f32 1.0, %v9047
        %v9049 = vrcp.pop %v9039
        %v9050 = vmul.f32 1.0, %v9049
        %v9051 = vrcp.pop %v9040
        %v9052 = vmul.f32 1.0, %v9051
        %v9053 = vrcp.pop %v9041
        %v9054 = vmul.f32 1.0, %v9053
        %v9055 = vrcp.pop %v9042
        %v9056 = vmul.f32 1.0, %v9055
        %v9057 = vrcp.pop %v9043
        %v9058 = vmul.f32 1.0, %v9057
        %v9059 = vrcp.pop %v9044
        %v9060 = vmul.f32 1.0, %v9059
        %v9061 = vxor.u32 %v8983, 2147483648
        %v9062 = vxor.u32 %v8986, 2147483648
        %v9063 = vxor.u32 %v8991, 2147483648
        %v9064 = vxor.u32 %v8994, 2147483648
        %v9065 = vxor.u32 %v8999, 2147483648
        %v9066 = vxor.u32 %v9002, 2147483648
        %v9067 = vxor.u32 %v9007, 2147483648
        %v9068 = vxor.u32 %v9010, 2147483648
        %v9069 = vmul.f32 %v9061, 1.442695
        %v9070 = vpow.pop %v9069
        %v9071 = vmul.f32 %v9062, 1.442695
        %v9072 = vpow.pop %v9071
        %v9073 = vmul.f32 %v9063, 1.442695
        %v9074 = vpow.pop %v9073
        %v9075 = vmul.f32 %v9064, 1.442695
        %v9076 = vpow.pop %v9075
        %v9077 = vmul.f32 %v9065, 1.442695
        %v9078 = vpow.pop %v9077
        %v9079 = vmul.f32 %v9066, 1.442695
        %v9080 = vpow.pop %v9079
        %v9081 = vmul.f32 %v9067, 1.442695
        %v9082 = vpow.pop %v9081
        %v9083 = vmul.f32 %v9068, 1.442695
        %v9084 = vpow.pop %v9083
        %v9085 = vadd.f32 %v9070, 1.0
        %v9086 = vadd.f32 %v9072, 1.0
        %v9087 = vadd.f32 %v9074, 1.0
        %v9088 = vadd.f32 %v9076, 1.0
        %v9089 = vadd.f32 %v9078, 1.0
        %v9090 = vadd.f32 %v9080, 1.0
        %v9091 = vadd.f32 %v9082, 1.0
        %v9092 = vadd.f32 %v9084, 1.0
        %v9093 = vrcp.pop %v9085
        %v9094 = vmul.f32 1.0, %v9093
        %v9095 = vrcp.pop %v9086
        %v9096 = vmul.f32 1.0, %v9095
        %v9097 = vrcp.pop %v9087
        %v9098 = vmul.f32 1.0, %v9097
        %v9099 = vrcp.pop %v9088
        %v9100 = vmul.f32 1.0, %v9099
        %v9101 = vrcp.pop %v9089
        %v9102 = vmul.f32 1.0, %v9101
        %v9103 = vrcp.pop %v9090
        %v9104 = vmul.f32 1.0, %v9103
        %v9105 = vrcp.pop %v9091
        %v9106 = vmul.f32 1.0, %v9105
        %v9107 = vrcp.pop %v9092
        %v9108 = vmul.f32 1.0, %v9107
        %9117 = vrot.lane.b32.xlu0 %v9094, 127
        %v9118 = vpop.permute.xlu0 %9117
        %9119 = vrot.lane.b32.xlu0 %v9096, 127
        %v9120 = vpop.permute.xlu0 %9119
        %9121 = vrot.lane.b32.xlu0 %v9098, 127
        %v9122 = vpop.permute.xlu0 %9121
        %9123 = vrot.lane.b32.xlu0 %v9100, 127
        %v9124 = vpop.permute.xlu0 %9123
        %9125 = vrot.lane.b32.xlu0 %v9102, 127
        %v9126 = vpop.permute.xlu0 %9125
        %9127 = vrot.lane.b32.xlu0 %v9104, 127
        %v9128 = vpop.permute.xlu0 %9127
        %9129 = vrot.lane.b32.xlu0 %v9106, 127
        %v9130 = vpop.permute.xlu0 %9129
        %9131 = vrot.lane.b32.xlu0 %v9108, 127
        %v9132 = vpop.permute.xlu0 %9131
        %v9141 = vmax.f32 %v9046, %v9118
        %v9142 = vmax.f32 %v9048, %v9120
        %v9143 = vmax.f32 %v9050, %v9122
        %v9144 = vmax.f32 %v9052, %v9124
        %v9145 = vmax.f32 %v9054, %v9126
        %v9146 = vmax.f32 %v9056, %v9128
        %v9147 = vmax.f32 %v9058, %v9130
        %v9148 = vmax.f32 %v9060, %v9132
        %v9149 = vsub.f32 %v9046, %v9141
        %v9150 = vsub.f32 %v9048, %v9142
        %v9151 = vsub.f32 %v9050, %v9143
        %v9152 = vsub.f32 %v9052, %v9144
        %v9153 = vsub.f32 %v9054, %v9145
        %v9154 = vsub.f32 %v9056, %v9146
        %v9155 = vsub.f32 %v9058, %v9147
        %v9156 = vsub.f32 %v9060, %v9148
        %v9157 = vmul.f32 %v9149, 1.442695
        %v9158 = vpow.pop %v9157
        %v9159 = vmul.f32 %v9150, 1.442695
        %v9160 = vpow.pop %v9159
        %v9161 = vmul.f32 %v9151, 1.442695
        %v9162 = vpow.pop %v9161
        %v9163 = vmul.f32 %v9152, 1.442695
        %v9164 = vpow.pop %v9163
        %v9165 = vmul.f32 %v9153, 1.442695
        %v9166 = vpow.pop %v9165
        %v9167 = vmul.f32 %v9154, 1.442695
        %v9168 = vpow.pop %v9167
        %v9169 = vmul.f32 %v9155, 1.442695
        %v9170 = vpow.pop %v9169
        %v9171 = vmul.f32 %v9156, 1.442695
        %v9172 = vpow.pop %v9171
        %9181 = vrot.lane.b32.xlu0 %v9141, 1
        %v9182 = vpop.permute.xlu0 %9181
        %9183 = vrot.lane.b32.xlu0 %v9142, 1
        %v9184 = vpop.permute.xlu0 %9183
        %9185 = vrot.lane.b32.xlu0 %v9143, 1
        %v9186 = vpop.permute.xlu0 %9185
        %9187 = vrot.lane.b32.xlu0 %v9144, 1
        %v9188 = vpop.permute.xlu0 %9187
        %9189 = vrot.lane.b32.xlu0 %v9145, 1
        %v9190 = vpop.permute.xlu0 %9189
        %9191 = vrot.lane.b32.xlu0 %v9146, 1
        %v9192 = vpop.permute.xlu0 %9191
        %9193 = vrot.lane.b32.xlu0 %v9147, 1
        %v9194 = vpop.permute.xlu0 %9193
        %9195 = vrot.lane.b32.xlu0 %v9148, 1
        %v9196 = vpop.permute.xlu0 %9195
        %v9205 = vsub.f32 %v9094, %v9182
        %v9206 = vsub.f32 %v9096, %v9184
        %v9207 = vsub.f32 %v9098, %v9186
        %v9208 = vsub.f32 %v9100, %v9188
        %v9209 = vsub.f32 %v9102, %v9190
        %v9210 = vsub.f32 %v9104, %v9192
        %v9211 = vsub.f32 %v9106, %v9194
        %v9212 = vsub.f32 %v9108, %v9196
        %v9213 = vmul.f32 %v9205, 1.442695
        %v9214 = vpow.pop %v9213
        %v9215 = vmul.f32 %v9206, 1.442695
        %v9216 = vpow.pop %v9215
        %v9217 = vmul.f32 %v9207, 1.442695
        %v9218 = vpow.pop %v9217
        %v9219 = vmul.f32 %v9208, 1.442695
        %v9220 = vpow.pop %v9219
        %v9221 = vmul.f32 %v9209, 1.442695
        %v9222 = vpow.pop %v9221
        %v9223 = vmul.f32 %v9210, 1.442695
        %v9224 = vpow.pop %v9223
        %v9225 = vmul.f32 %v9211, 1.442695
        %v9226 = vpow.pop %v9225
        %v9227 = vmul.f32 %v9212, 1.442695
        %v9228 = vpow.pop %v9227
        %9237 = vrot.lane.b32.xlu0 %v9214, 127
        %v9238 = vpop.permute.xlu0 %9237
        %9239 = vrot.lane.b32.xlu0 %v9216, 127
        %v9240 = vpop.permute.xlu0 %9239
        %9241 = vrot.lane.b32.xlu0 %v9218, 127
        %v9242 = vpop.permute.xlu0 %9241
        %9243 = vrot.lane.b32.xlu0 %v9220, 127
        %v9244 = vpop.permute.xlu0 %9243
        %9245 = vrot.lane.b32.xlu0 %v9222, 127
        %v9246 = vpop.permute.xlu0 %9245
        %9247 = vrot.lane.b32.xlu0 %v9224, 127
        %v9248 = vpop.permute.xlu0 %9247
        %9249 = vrot.lane.b32.xlu0 %v9226, 127
        %v9250 = vpop.permute.xlu0 %9249
        %9251 = vrot.lane.b32.xlu0 %v9228, 127
        %v9252 = vpop.permute.xlu0 %9251
        %v9261 = vadd.f32 %v9158, %v9238
        %v9262 = vadd.f32 %v9160, %v9240
        %v9263 = vadd.f32 %v9162, %v9242
        %v9264 = vadd.f32 %v9164, %v9244
        %v9265 = vadd.f32 %v9166, %v9246
        %v9266 = vadd.f32 %v9168, %v9248
        %v9267 = vadd.f32 %v9170, %v9250
        %v9268 = vadd.f32 %v9172, %v9252
        %v9269 = vrcp.pop %v9261
        %v9270 = vmul.f32 %v9158, %v9269
        %v9271 = vrcp.pop %v9262
        %v9272 = vmul.f32 %v9160, %v9271
        %v9273 = vrcp.pop %v9263
        %v9274 = vmul.f32 %v9162, %v9273
        %v9275 = vrcp.pop %v9264
        %v9276 = vmul.f32 %v9164, %v9275
        %v9277 = vrcp.pop %v9265
        %v9278 = vmul.f32 %v9166, %v9277
        %v9279 = vrcp.pop %v9266
        %v9280 = vmul.f32 %v9168, %v9279
        %v9281 = vrcp.pop %v9267
        %v9282 = vmul.f32 %v9170, %v9281
        %v9283 = vrcp.pop %v9268
        %v9284 = vmul.f32 %v9172, %v9283
        %9293 = vrot.lane.b32.xlu0 %v9261, 1
        %v9294 = vpop.permute.xlu0 %9293
        %9295 = vrot.lane.b32.xlu0 %v9262, 1
        %v9296 = vpop.permute.xlu0 %9295
        %9297 = vrot.lane.b32.xlu0 %v9263, 1
        %v9298 = vpop.permute.xlu0 %9297
        %9299 = vrot.lane.b32.xlu0 %v9264, 1
        %v9300 = vpop.permute.xlu0 %9299
        %9301 = vrot.lane.b32.xlu0 %v9265, 1
        %v9302 = vpop.permute.xlu0 %9301
        %9303 = vrot.lane.b32.xlu0 %v9266, 1
        %v9304 = vpop.permute.xlu0 %9303
        %9305 = vrot.lane.b32.xlu0 %v9267, 1
        %v9306 = vpop.permute.xlu0 %9305
        %9307 = vrot.lane.b32.xlu0 %v9268, 1
        %v9308 = vpop.permute.xlu0 %9307
        %v9317 = vrcp.pop %v9294
        %v9318 = vmul.f32 %v9214, %v9317
        %v9319 = vrcp.pop %v9296
        %v9320 = vmul.f32 %v9216, %v9319
        %v9321 = vrcp.pop %v9298
        %v9322 = vmul.f32 %v9218, %v9321
        %v9323 = vrcp.pop %v9300
        %v9324 = vmul.f32 %v9220, %v9323
        %v9325 = vrcp.pop %v9302
        %v9326 = vmul.f32 %v9222, %v9325
        %v9327 = vrcp.pop %v9304
        %v9328 = vmul.f32 %v9224, %v9327
        %v9329 = vrcp.pop %v9306
        %v9330 = vmul.f32 %v9226, %v9329
        %v9331 = vrcp.pop %v9308
        %v9332 = vmul.f32 %v9228, %v9331
        %9334 = vset.pattern.permute.xlu0 0
        %9335 = vperm.xlu0 %9334, %v9270
        %v9336 = vpop.permute.xlu0 %9335
        %9339 = vset.pattern.permute.xlu0 0
        %9340 = vperm.xlu0 %9339, %v9272
        %v9341 = vpop.permute.xlu0 %9340
        %9344 = vset.pattern.permute.xlu0 0
        %9345 = vperm.xlu0 %9344, %v9274
        %v9346 = vpop.permute.xlu0 %9345
        %9349 = vset.pattern.permute.xlu0 0
        %9350 = vperm.xlu0 %9349, %v9276
        %v9351 = vpop.permute.xlu0 %9350
        %9354 = vset.pattern.permute.xlu0 0
        %9355 = vperm.xlu0 %9354, %v9278
        %v9356 = vpop.permute.xlu0 %9355
        %9359 = vset.pattern.permute.xlu0 0
        %9360 = vperm.xlu0 %9359, %v9280
        %v9361 = vpop.permute.xlu0 %9360
        %9364 = vset.pattern.permute.xlu0 0
        %9365 = vperm.xlu0 %9364, %v9282
        %v9366 = vpop.permute.xlu0 %9365
        %9369 = vset.pattern.permute.xlu0 0
        %9370 = vperm.xlu0 %9369, %v9284
        %v9371 = vpop.permute.xlu0 %9370
        %v9373 = vmul.f32 %v9336, %v519
        %v9374 = vmul.f32 %v9341, %v520
        %v9375 = vmul.f32 %v9346, %v521
        %v9376 = vmul.f32 %v9351, %v522
        %v9377 = vmul.f32 %v9356, %v523
        %v9378 = vmul.f32 %v9361, %v524
        %v9379 = vmul.f32 %v9366, %v525
        %v9380 = vmul.f32 %v9371, %v526
        %9382 = vset.pattern.permute.xlu0 1
        %9383 = vperm.xlu0 %9382, %v9318
        %v9384 = vpop.permute.xlu0 %9383
        %9387 = vset.pattern.permute.xlu0 1
        %9388 = vperm.xlu0 %9387, %v9320
        %v9389 = vpop.permute.xlu0 %9388
        %9392 = vset.pattern.permute.xlu0 1
        %9393 = vperm.xlu0 %9392, %v9322
        %v9394 = vpop.permute.xlu0 %9393
        %9397 = vset.pattern.permute.xlu0 1
        %9398 = vperm.xlu0 %9397, %v9324
        %v9399 = vpop.permute.xlu0 %9398
        %9402 = vset.pattern.permute.xlu0 1
        %9403 = vperm.xlu0 %9402, %v9326
        %v9404 = vpop.permute.xlu0 %9403
        %9407 = vset.pattern.permute.xlu0 1
        %9408 = vperm.xlu0 %9407, %v9328
        %v9409 = vpop.permute.xlu0 %9408
        %9412 = vset.pattern.permute.xlu0 1
        %9413 = vperm.xlu0 %9412, %v9330
        %v9414 = vpop.permute.xlu0 %9413
        %9417 = vset.pattern.permute.xlu0 1
        %9418 = vperm.xlu0 %9417, %v9332
        %v9419 = vpop.permute.xlu0 %9418
        %v9421 = vmul.f32 %v9384, %v527
        %v9422 = vmul.f32 %v9389, %v528
        %v9423 = vmul.f32 %v9394, %v529
        %v9424 = vmul.f32 %v9399, %v530
        %v9425 = vmul.f32 %v9404, %v531
        %v9426 = vmul.f32 %v9409, %v532
        %v9427 = vmul.f32 %v9414, %v533
        %v9428 = vmul.f32 %v9419, %v534
        %v9429 = vadd.f32 %v9373, %v9421
        %v9430 = vadd.f32 %v9374, %v9422
        %v9431 = vadd.f32 %v9375, %v9423
        %v9432 = vadd.f32 %v9376, %v9424
        %v9433 = vadd.f32 %v9377, %v9425
        %v9434 = vadd.f32 %v9378, %v9426
        %v9435 = vadd.f32 %v9379, %v9427
        %v9436 = vadd.f32 %v9380, %v9428
        %9437 = vst [vmem:[%s514] sm:$0xff] %v9429
        %9438 = vst [vmem:[%s514 + $0x8] sm:$0xff] %v9430
        %9439 = vst [vmem:[%s514 + $0x10] sm:$0xff] %v9431
        %9440 = vst [vmem:[%s514 + $0x18] sm:$0xff] %v9432
        %9441 = vst [vmem:[%s514 + $0x20] sm:$0xff] %v9433
        %9442 = vst [vmem:[%s514 + $0x28] sm:$0xff] %v9434
        %9443 = vst [vmem:[%s514 + $0x30] sm:$0xff] %v9435
        %9444 = vst [vmem:[%s514 + $0x38] sm:$0xff] %v9436
        %s9445 = sand.u32 %s303, 1
        %s9446 = scalar_lea.sflag [#allocation4], %s9445
        %s9447 = sand.u32 %s303, 1
        %s9448 = smul.addr %s9447, 64
        %s9449 = scalar_lea.vmem [#allocation11], %s9448
        // Predicated region
        $region89: #{tpu_custom_call.1} parent=67 // pred_check
          %p9450 = pneg %p313
        $region90: #{tpu_custom_call.1} parent=67 // pred_check_branch
          %9452 = sbr.rel (%p9450) target = $region92
        $region91: #{tpu_custom_call.1} parent=67 // pred_region
          %s9453 = smul.u32 8, %s33
          %s9455 = ssub.s32 1024, 1024
          %9456 = vsyncadd %s9446, %s9455
          %s9457 = smul.addr %s9453, 128
          %s9458 = scalar_lea.hbm %s12, %s9457
          %s9459 = sshll.u32 %s9449, 4
          %s9460 = int_to_ptr.vmem [resolvable:$true] %s9459
          %9465 = dma.vmem_to_hbm [thread:$0]  %s9460, 1024, %s9458, %s9446, 128, 128, 8
        $region92: #{tpu_custom_call.1} parent=67 // pred_fallthru
          _
      $region68: #{tpu_custom_call.1} parent=5 // pred_fallthru
        _
      %p9466 = scmp.le.s32.totalorder 2, %s28
      // Predicated region
      $region93: #{tpu_custom_call.1} parent=5 // pred_check
        %p9467 = pneg %p9466
      $region94: #{tpu_custom_call.1} parent=5 // pred_check_branch
        %9469 = sbr.rel (%p9467) target = $region96
      $region95: #{tpu_custom_call.1} parent=5 // pred_region
        %s9470 = ssub.s32 %s28, 2
        // Predicated region
        $region97: #{tpu_custom_call.1} parent=95 // pred_check
          %p9471 = pneg %p319
        $region98: #{tpu_custom_call.1} parent=95 // pred_check_branch
          %9473 = sbr.rel (%p9471) target = $region100
        $region99: #{tpu_custom_call.1} parent=95 // pred_region
          %s9474 = sand.u32 %s304, 1
          %s9475 = scalar_lea.sflag [#allocation4], %s9474
          %s9476 = sand.u32 %s304, 1
          %s9477 = smul.addr %s9476, 64
          %s9478 = scalar_lea.vmem [#allocation11], %s9477
          %9479 = dma.done %s9475, 1024
        $region100: #{tpu_custom_call.1} parent=95 // pred_fallthru
          _
      $region96: #{tpu_custom_call.1} parent=5 // pred_fallthru
        _
    $region6: #{tpu_custom_call.1} parent=1 // loop_footer
      %s32 = sadd.s32 1, %s28
    $region7: #{tpu_custom_call.1} parent=1 // loop_footer_branch
      %27 = sbr.rel target = $region3
    $region8: #{tpu_custom_call.1} parent=1 // loop_exit
      _
    %9480 = vsyncpa [#allocation3], 1
    %s9481 = scalar_lea.sflag [#allocation3], 1
    %9482 = vsyncpa %s9481, 1
    %9483 = vsyncpa [#allocation6], 1
    %s9484 = scalar_lea.sflag [#allocation6], 1
    %9485 = vsyncpa %s9484, 1
    %9486 = vsyncpa [#allocation9], 1
    %9487 = vsyncpa [#allocation4], 1
    %s9488 = scalar_lea.sflag [#allocation4], 1
    %9489 = vsyncpa %s9488, 1

</llo_original>
